<compile_context>
chip_gen: v7x
topology: tpu7x:2x2x1
jax: 0.10.0
libtpu: 0.0.40
codegen_flags: <defaults>
</compile_context>

<pallas_src>
import functools

import jax
import jax.numpy as jnp
from jax.experimental import pallas as pl
from jax.experimental.pallas import tpu as pltpu

HIDDEN = 32
FACE_ATTR_DIM = 14
EDGE_ATTR_DIM = 15
FACE_GRID_DIM = 7
EDGE_GRID_DIM = 12
EMB = 32                      # all encoder embedding widths
CAT_DIM = 18
NUM_DIM = 3
NODE_DIM = 2 * HIDDEN         # 64
GENCONV_EPS = 1e-7

_VMEM = pl.BlockSpec(memory_space=pltpu.MemorySpace.VMEM)


def _dot_bf16(act, w_bf16):
    """Activation cast to bf16, weight already bf16, f32 accumulation (MXU)."""
    return jnp.dot(act.astype(jnp.bfloat16), w_bf16,
                   preferred_element_type=jnp.float32)


# ----------------------------------------------------------------------------
# Kernel 1: fused face path
#   face-attr MLP  +  2D grid encoder (conv3x3+relu, conv3x3+relu, GAP, fc)
#   -> (N, 64) node features, all intermediates stay in VMEM.
# ----------------------------------------------------------------------------
def _face_path_kernel(x_ref, g_ref,
                      few1, feb1, few2, feb2,
                      cw1, cb1, cw2, cb2, gfw, gfb,
                      o_ref, pad2_ref, *, hh, ww):
    n = x_ref.shape[0]

    # ---- face attribute MLP: 14 -> 32 -> 32 ---------------------------------
    a = jnp.maximum(_dot_bf16(x_ref[...], few1[...]) + feb1[...], 0.0)
    face_emb = _dot_bf16(a, few2[...]) + feb2[...]                    # (N, 32)

    # ---- conv stage 1 (3x3 'same', Cin=7 -> 32): single im2col matmul -------
    g = g_ref[...]                                   # (N, H+2, W+2, Cin) padded
    cin = g.shape[3]
    m = n * hh * ww
    col1 = jnp.concatenate(
        [g[:, dy:dy + hh, dx:dx + ww, :].reshape(m, cin)
         for dy in range(3) for dx in range(3)], axis=1)              # (M, 9*Cin)
    h1 = jnp.maximum(_dot_bf16(col1, cw1[...]) + cb1[...], 0.0)       # (M, 32)

    # ---- conv stage 2 (3x3 'same', 32 -> 32): in-kernel pad via VMEM scratch -
    pad2_ref[...] = jnp.zeros_like(pad2_ref)
    pad2_ref[:, 1:hh + 1, 1:ww + 1, :] = h1.reshape(n, hh, ww, 32)
    gp2 = pad2_ref[...]
    col2 = jnp.concatenate(
        [gp2[:, dy:dy + hh, dx:dx + ww, :].reshape(m, 32)
         for dy in range(3) for dx in range(3)], axis=1)              # (M, 288)
    h2 = jnp.maximum(_dot_bf16(col2, cw2[...]) + cb2[...], 0.0)       # (M, 32)

    # ---- global average pool (reshape + mean) + fc ---------------------------
    pooled = jnp.mean(h2.reshape(n, hh * ww, 32), axis=1)             # (N, 32)
    grid_emb = _dot_bf16(pooled, gfw[...]) + gfb[...]                 # (N, 32)

    o_ref[...] = jnp.concatenate([face_emb, grid_emb], axis=1)        # (N, 64)


def face_path(x, g_padded, p):
    n, hp, wp, _ = g_padded.shape
    hh, ww = hp - 2, wp - 2
    return pl.pallas_call(
        functools.partial(_face_path_kernel, hh=hh, ww=ww),
        out_shape=jax.ShapeDtypeStruct((n, NODE_DIM), jnp.float32),
        in_specs=[_VMEM] * 12,
        out_specs=_VMEM,
        scratch_shapes=[pltpu.VMEM((n, hh + 2, ww + 2, 32), jnp.float32)],
    )(x, g_padded, p["fe_w1"], p["fe_b1"], p["fe_w2"], p["fe_b2"],
      p["cv1_w"], p["cv1_b"], p["cv2_w"], p["cv2_b"], p["gfc_w"], p["gfc_b"])


# ----------------------------------------------------------------------------
# Kernel 2: fused edge path
#   edge-attr MLP + 1D grid encoder (conv3+relu, conv3+relu, GAP, fc) -> (E, 64)
# ----------------------------------------------------------------------------
def _edge_path_kernel(ea_ref, g_ref,
                      eew1, eeb1, eew2, eeb2,
                      cw1, cb1, cw2, cb2, gfw, gfb,
                      o_ref, pad2_ref, *, ll):
    e = ea_ref.shape[0]

    # ---- edge attribute MLP: 15 -> 32 -> 32 ----------------------------------
    a = jnp.maximum(_dot_bf16(ea_ref[...], eew1[...]) + eeb1[...], 0.0)
    edge_emb = _dot_bf16(a, eew2[...]) + eeb2[...]                    # (E, 32)

    # ---- conv1d stage 1 (k=3 'same', Cin=12 -> 32): single im2col matmul -----
    g = g_ref[...]                                   # (E, L+2, Cin) padded
    cin = g.shape[2]
    m = e * ll
    col1 = jnp.concatenate(
        [g[:, d:d + ll, :].reshape(m, cin) for d in range(3)], axis=1)  # (M, 36)
    h1 = jnp.maximum(_dot_bf16(col1, cw1[...]) + cb1[...], 0.0)

    # ---- conv1d stage 2 (32 -> 32): in-kernel pad via VMEM scratch -----------
    pad2_ref[...] = jnp.zeros_like(pad2_ref)
    pad2_ref[:, 1:ll + 1, :] = h1.reshape(e, ll, 32)
    gp2 = pad2_ref[...]
    col2 = jnp.concatenate(
        [gp2[:, d:d + ll, :].reshape(m, 32) for d in range(3)], axis=1)  # (M, 96)
    h2 = jnp.maximum(_dot_bf16(col2, cw2[...]) + cb2[...], 0.0)

    # ---- GAP + fc -------------------------------------------------------------
    pooled = jnp.mean(h2.reshape(e, ll, 32), axis=1)                  # (E, 32)
    grid_emb = _dot_bf16(pooled, gfw[...]) + gfb[...]
    o_ref[...] = jnp.concatenate([edge_emb, grid_emb], axis=1)        # (E, 64)


def edge_path(edge_attr, g_padded, p):
    e, lp, _ = g_padded.shape
    ll = lp - 2
    return pl.pallas_call(
        functools.partial(_edge_path_kernel, ll=ll),
        out_shape=jax.ShapeDtypeStruct((e, NODE_DIM), jnp.float32),
        in_specs=[_VMEM] * 12,
        out_specs=_VMEM,
        scratch_shapes=[pltpu.VMEM((e, ll + 2, 32), jnp.float32)],
    )(edge_attr, g_padded, p["ee_w1"], p["ee_b1"], p["ee_w2"], p["ee_b2"],
      p["ec1_w"], p["ec1_b"], p["ec2_w"], p["ec2_b"], p["egfc_w"], p["egfc_b"])


# ----------------------------------------------------------------------------
# Kernel 3: fused graph network + head
#   GENConv x2 (gather + relu(x_j + e_ij)+eps + mean aggregation + residual
#   + 2-layer update MLP) + global mean pool + 3-layer regression head.
#   Gather/scatter/pool one-hots are built in bf16 (0/1 exact), f32 accumulation.
# ----------------------------------------------------------------------------
def _graph_head_kernel(h_ref, ef_ref, src_ref, dst_ref, batch_ref, catnum_ref,
                       g1w1, g1b1, g1w2, g1b2,
                       g2w1, g2b1, g2w2, g2b2,
                       w1g, w1cn, b1, w2, b2, w3, b3,
                       o_ref, *, eps):
    h = h_ref[...]                                   # (N, 64)
    ef = ef_ref[...]                                 # (E, 64)
    n = h.shape[0]
    e = ef.shape[0]

    # gather / scatter matrices built once, reused by both GENConv layers.
    # TODO(synk): replace with scalar-prefetch DMA gather + segment accumulation
    #             for large graphs (O(E*N) does not scale, esp. v7x 64 MiB VMEM).
    en_iota = jax.lax.broadcasted_iota(jnp.int32, (e, n), 1)
    gmat = (en_iota == src_ref[...]).astype(jnp.bfloat16)             # (E, N)
    ne_iota = jax.lax.broadcasted_iota(jnp.int32, (n, e), 0)
    smat_f = (ne_iota == dst_ref[...]).astype(jnp.float32)            # (N, E)
    inv_deg = 1.0 / jnp.maximum(jnp.sum(smat_f, axis=1, keepdims=True), 1.0)
    smat = smat_f.astype(jnp.bfloat16)

    def gen_layer(hc, w1_, b1_, w2_, b2_, out_relu):
        x_src = jnp.dot(gmat, hc.astype(jnp.bfloat16),
                        preferred_element_type=jnp.float32)           # (E, D)
        msg = jnp.maximum(x_src + ef, 0.0) + eps
        aggr = jnp.dot(smat, msg.astype(jnp.bfloat16),
                       preferred_element_type=jnp.float32) * inv_deg  # (N, D)
        z = hc + aggr                                                 # residual
        z = jnp.maximum(_dot_bf16(z, w1_) + b1_, 0.0)
        z = _dot_bf16(z, w2_) + b2_
        return jnp.maximum(z, 0.0) if out_relu else z

    h = gen_layer(h, g1w1[...], g1b1[...], g1w2[...], g1b2[...], True)
    h = gen_layer(h, g2w1[...], g2b1[...], g2w2[...], g2b2[...], False)

    # global mean pool over graphs
    bsz = catnum_ref.shape[0]
    bn_iota = jax.lax.broadcasted_iota(jnp.int32, (bsz, n), 0)
    pmat_f = (bn_iota == batch_ref[...]).astype(jnp.float32)          # (B, N)
    inv_cnt = 1.0 / jnp.maximum(jnp.sum(pmat_f, axis=1, keepdims=True), 1.0)
    pooled = jnp.dot(pmat_f.astype(jnp.bfloat16), h.astype(jnp.bfloat16),
                     preferred_element_type=jnp.float32) * inv_cnt    # (B, 64)

    # regression head: concat([pooled, cat, num]) @ W1 as two MXU pushes
    r = (_dot_bf16(pooled, w1g[...]) + _dot_bf16(catnum_ref[...], w1cn[...])
         + b1[...])
    r = jnp.maximum(r, 0.0)
    r = jnp.maximum(_dot_bf16(r, w2[...]) + b2[...], 0.0)
    o_ref[...] = _dot_bf16(r, w3[...]) + b3[...]                      # (B, 1)


def graph_head(h, ef, src_col, dst_row, batch_row, cat_num, p):
    bsz = cat_num.shape[0]
    return pl.pallas_call(
        functools.partial(_graph_head_kernel, eps=GENCONV_EPS),
        out_shape=jax.ShapeDtypeStruct((bsz, 1), jnp.float32),
        in_specs=[_VMEM] * 21,
        out_specs=_VMEM,
    )(h, ef, src_col, dst_row, batch_row, cat_num,
      p["gc1_w1"], p["gc1_b1"], p["gc1_w2"], p["gc1_b2"],
      p["gc2_w1"], p["gc2_b1"], p["gc2_w2"], p["gc2_b2"],
      p["rg_w1g"], p["rg_w1cn"], p["rg_b1"],
      p["rg_w2"], p["rg_b2"], p["rg_w3"], p["rg_b3"])


# ----------------------------------------------------------------------------
# Parameters (deterministic, synthetic). Matmul weights pre-cast to bf16 once.
# ----------------------------------------------------------------------------
def _glorot(key, shape):
    fan_in = 1
    for d in shape[:-1]:
        fan_in *= d
    return jax.random.normal(key, shape, dtype=jnp.float32) / jnp.sqrt(float(fan_in))


def init_params(key):
    ks = iter(jax.random.split(key, 32))
    bf = lambda a: a.astype(jnp.bfloat16)
    zb = lambda n: jnp.zeros((1, n), jnp.float32)
    p = {}
    # FaceAttributeEncoderMLP: 14 -> 32 -> 32       TODO(synk): exact depth unknown
    p["fe_w1"], p["fe_b1"] = bf(_glorot(next(ks), (FACE_ATTR_DIM, EMB))), zb(EMB)
    p["fe_w2"], p["fe_b2"] = bf(_glorot(next(ks), (EMB, EMB))), zb(EMB)
    # EdgeAttributeEncoderMLP: 15 -> 32 -> 32
    p["ee_w1"], p["ee_b1"] = bf(_glorot(next(ks), (EDGE_ATTR_DIM, EMB))), zb(EMB)
    p["ee_w2"], p["ee_b2"] = bf(_glorot(next(ks), (EMB, EMB))), zb(EMB)
    # FaceGridEncoder2D: conv3x3(7->32), conv3x3(32->32), GAP, fc 32->32
    # conv weights stored pre-flattened (ntaps*Cin, Cout), tap order k = dy*3+dx
    p["cv1_w"], p["cv1_b"] = bf(_glorot(next(ks), (9 * FACE_GRID_DIM, 32))), zb(32)
    p["cv2_w"], p["cv2_b"] = bf(_glorot(next(ks), (9 * 32, 32))), zb(32)
    p["gfc_w"], p["gfc_b"] = bf(_glorot(next(ks), (32, EMB))), zb(EMB)
    # EdgeGridEncoder1D: conv3(12->32), conv3(32->32), GAP, fc 32->32
    p["ec1_w"], p["ec1_b"] = bf(_glorot(next(ks), (3 * EDGE_GRID_DIM, 32))), zb(32)
    p["ec2_w"], p["ec2_b"] = bf(_glorot(next(ks), (3 * 32, 32))), zb(32)
    p["egfc_w"], p["egfc_b"] = bf(_glorot(next(ks), (32, EMB))), zb(EMB)
    # GraphNetworkGENConv: 2 GENConv layers, update MLP 64 -> 128 -> 64
    for l in (1, 2):
        p[f"gc{l}_w1"] = bf(_glorot(next(ks), (NODE_DIM, 2 * NODE_DIM)))
        p[f"gc{l}_b1"] = zb(2 * NODE_DIM)
        p[f"gc{l}_w2"] = bf(_glorot(next(ks), (2 * NODE_DIM, NODE_DIM)))
        p[f"gc{l}_b2"] = zb(NODE_DIM)
    # RegressionModel: (64 + 18 + 3) -> 64 -> 32 -> 1 (W1 stored split)
    p["rg_w1g"] = bf(_glorot(next(ks), (NODE_DIM, 64)))
    p["rg_w1cn"] = bf(_glorot(next(ks), (CAT_DIM + NUM_DIM, 64)))
    p["rg_b1"] = zb(64)
    p["rg_w2"], p["rg_b2"] = bf(_glorot(next(ks), (64, 32))), zb(32)
    p["rg_w3"], p["rg_b3"] = bf(_glorot(next(ks), (32, 1))), zb(1)
    return p


# ----------------------------------------------------------------------------
# Forward pass: 3 pallas_calls total, only cheap transpose/pad/concat in glue.
# ----------------------------------------------------------------------------
def forward(params, x, edge_index, edge_attr, face_grid, edge_grid,
            features_categorical, features_numerical, batch):
    p = params
    n = x.shape[0]
    e = edge_attr.shape[0]

    # -- face path: attr MLP + 2D grid encoder in one fused kernel -------------
    g = jnp.transpose(face_grid, (0, 2, 3, 1))                       # NCHW -> NHWC
    gp = jnp.pad(g, ((0, 0), (1, 1), (1, 1), (0, 0)))                # single pad
    node_feat = face_path(x, gp, p)                                  # (N, 64)

    # -- edge path: attr MLP + 1D grid encoder in one fused kernel -------------
    eg = jnp.transpose(edge_grid, (0, 2, 1))                         # NCL -> NLC
    egp = jnp.pad(eg, ((0, 0), (1, 1), (0, 0)))
    edge_feat = edge_path(edge_attr, egp, p)                         # (E, 64)

    # -- GENConv x2 + global mean pool + regression head: one fused kernel -----
    # TODO(synk): PyG GENConv defaults to softmax aggregation; mean is used here.
    src_col = edge_index[0].reshape(e, 1).astype(jnp.int32)
    dst_row = edge_index[1].reshape(1, e).astype(jnp.int32)
    batch_row = batch.reshape(1, n).astype(jnp.int32)
    cat_num = jnp.concatenate([features_categorical, features_numerical], axis=1)
    return graph_head(node_feat, edge_feat, src_col, dst_row, batch_row, cat_num, p)


# ----------------------------------------------------------------------------
if __name__ == "__main__":
    key = jax.random.PRNGKey(0)
    k_x, k_ei, k_ea, k_fg, k_eg, k_cat, k_num, k_par = jax.random.split(key, 8)

    N_FACES, N_EDGES, N_GRAPHS, GRID = 8, 16, 2, 8

    x = jax.random.normal(k_x, (N_FACES, FACE_ATTR_DIM), jnp.float32)
    edge_index = jax.random.randint(k_ei, (2, N_EDGES), 0, N_FACES, jnp.int32)
    edge_attr = jax.random.normal(k_ea, (N_EDGES, EDGE_ATTR_DIM), jnp.float32)
    face_grid = jax.random.normal(k_fg, (N_FACES, FACE_GRID_DIM, GRID, GRID), jnp.float32)
    edge_grid = jax.random.normal(k_eg, (N_EDGES, EDGE_GRID_DIM, GRID), jnp.float32)
    features_categorical = jax.random.normal(k_cat, (N_GRAPHS, CAT_DIM), jnp.float32)
    features_numerical = jax.random.normal(k_num, (N_GRAPHS, NUM_DIM), jnp.float32)
    batch = jnp.array([0, 0, 0, 0, 1, 1, 1, 1], jnp.int32)

    params = init_params(k_par)

    fwd = jax.jit(forward)
    out = fwd(params, x, edge_index, edge_attr, face_grid, edge_grid,
              features_categorical, features_numerical, batch)
    out = jax.block_until_ready(out)
    assert out.shape == (N_GRAPHS, 1) and out.dtype == jnp.float32
    print("KERNEL_OK")
</pallas_src>

<mosaic_0001>
module attributes {stable_mosaic.version = 11 : i64} {
  func.func @_face_path_kernel(%arg0: memref<8x14xf32, #tpu.memory_space<vmem>>, %arg1: memref<8x10x10x7xf32, #tpu.memory_space<vmem>>, %arg2: memref<14x32xbf16, #tpu.memory_space<vmem>>, %arg3: memref<1x32xf32, #tpu.memory_space<vmem>>, %arg4: memref<32x32xbf16, #tpu.memory_space<vmem>>, %arg5: memref<1x32xf32, #tpu.memory_space<vmem>>, %arg6: memref<63x32xbf16, #tpu.memory_space<vmem>>, %arg7: memref<1x32xf32, #tpu.memory_space<vmem>>, %arg8: memref<288x32xbf16, #tpu.memory_space<vmem>>, %arg9: memref<1x32xf32, #tpu.memory_space<vmem>>, %arg10: memref<32x32xbf16, #tpu.memory_space<vmem>>, %arg11: memref<1x32xf32, #tpu.memory_space<vmem>>, %arg12: memref<8x64xf32, #tpu.memory_space<vmem>>, %arg13: memref<8x10x10x32xf32, #tpu.memory_space<vmem>>) attributes {dimension_semantics = [], scalar_prefetch = 0 : i64, scratch_operands = 1 : i64, tpu.core_type = #tpu.core_type<tc>} {
    %c0 = arith.constant 0 : index
    %c0_0 = arith.constant 0 : index
    %0 = vector.load %arg0[%c0, %c0_0] : memref<8x14xf32, #tpu.memory_space<vmem>>, vector<8x14xf32>
    %c0_1 = arith.constant 0 : index
    %c0_2 = arith.constant 0 : index
    %1 = vector.load %arg2[%c0_1, %c0_2] : memref<14x32xbf16, #tpu.memory_space<vmem>>, vector<14x32xbf16>
    %2 = arith.truncf %0 : vector<8x14xf32> to vector<8x14xbf16>
    %cst = arith.constant dense<0.000000e+00> : vector<8x32xf32>
    %3 = tpu.matmul %2, %1, %cst {dimension_numbers = #tpu.dot_dimension_numbers<[1], [0], [0], [1], [0, 0, 1, 1], [], []>} : vector<8x14xbf16>, vector<14x32xbf16>, vector<8x32xf32> -> vector<8x32xf32>
    %c0_3 = arith.constant 0 : index
    %c0_4 = arith.constant 0 : index
    %4 = vector.load %arg3[%c0_3, %c0_4] : memref<1x32xf32, #tpu.memory_space<vmem>>, vector<1x32xf32>
    %5 = vector.broadcast %4 : vector<1x32xf32> to vector<8x32xf32>
    %6 = arith.addf %3, %5 : vector<8x32xf32>
    %cst_5 = arith.constant 0.000000e+00 : f32
    %7 = vector.broadcast %cst_5 : f32 to vector<8x32xf32>
    %8 = arith.maximumf %6, %7 : vector<8x32xf32>
    %c0_6 = arith.constant 0 : index
    %c0_7 = arith.constant 0 : index
    %9 = vector.load %arg4[%c0_6, %c0_7] : memref<32x32xbf16, #tpu.memory_space<vmem>>, vector<32x32xbf16>
    %10 = arith.truncf %8 : vector<8x32xf32> to vector<8x32xbf16>
    %cst_8 = arith.constant dense<0.000000e+00> : vector<8x32xf32>
    %11 = tpu.matmul %10, %9, %cst_8 {dimension_numbers = #tpu.dot_dimension_numbers<[1], [0], [0], [1], [0, 0, 1, 1], [], []>} : vector<8x32xbf16>, vector<32x32xbf16>, vector<8x32xf32> -> vector<8x32xf32>
    %c0_9 = arith.constant 0 : index
    %c0_10 = arith.constant 0 : index
    %12 = vector.load %arg5[%c0_9, %c0_10] : memref<1x32xf32, #tpu.memory_space<vmem>>, vector<1x32xf32>
    %13 = vector.broadcast %12 : vector<1x32xf32> to vector<8x32xf32>
    %14 = arith.addf %11, %13 : vector<8x32xf32>
    %c0_11 = arith.constant 0 : index
    %c0_12 = arith.constant 0 : index
    %c0_13 = arith.constant 0 : index
    %c0_14 = arith.constant 0 : index
    %15 = vector.load %arg1[%c0_11, %c0_12, %c0_13, %c0_14] : memref<8x10x10x7xf32, #tpu.memory_space<vmem>>, vector<8x10x10x7xf32>
    %16 = vector.extract_strided_slice %15 {offsets = [0, 0, 0, 0], sizes = [8, 8, 8, 7], strides = [1, 1, 1, 1]} : vector<8x10x10x7xf32> to vector<8x8x8x7xf32>
    %17 = vector.shape_cast %16 : vector<8x8x8x7xf32> to vector<512x7xf32>
    %18 = vector.extract_strided_slice %15 {offsets = [0, 0, 1, 0], sizes = [8, 8, 8, 7], strides = [1, 1, 1, 1]} : vector<8x10x10x7xf32> to vector<8x8x8x7xf32>
    %19 = vector.shape_cast %18 : vector<8x8x8x7xf32> to vector<512x7xf32>
    %20 = vector.extract_strided_slice %15 {offsets = [0, 0, 2, 0], sizes = [8, 8, 8, 7], strides = [1, 1, 1, 1]} : vector<8x10x10x7xf32> to vector<8x8x8x7xf32>
    %21 = vector.shape_cast %20 : vector<8x8x8x7xf32> to vector<512x7xf32>
    %22 = vector.extract_strided_slice %15 {offsets = [0, 1, 0, 0], sizes = [8, 8, 8, 7], strides = [1, 1, 1, 1]} : vector<8x10x10x7xf32> to vector<8x8x8x7xf32>
    %23 = vector.shape_cast %22 : vector<8x8x8x7xf32> to vector<512x7xf32>
    %24 = vector.extract_strided_slice %15 {offsets = [0, 1, 1, 0], sizes = [8, 8, 8, 7], strides = [1, 1, 1, 1]} : vector<8x10x10x7xf32> to vector<8x8x8x7xf32>
    %25 = vector.shape_cast %24 : vector<8x8x8x7xf32> to vector<512x7xf32>
    %26 = vector.extract_strided_slice %15 {offsets = [0, 1, 2, 0], sizes = [8, 8, 8, 7], strides = [1, 1, 1, 1]} : vector<8x10x10x7xf32> to vector<8x8x8x7xf32>
    %27 = vector.shape_cast %26 : vector<8x8x8x7xf32> to vector<512x7xf32>
    %28 = vector.extract_strided_slice %15 {offsets = [0, 2, 0, 0], sizes = [8, 8, 8, 7], strides = [1, 1, 1, 1]} : vector<8x10x10x7xf32> to vector<8x8x8x7xf32>
    %29 = vector.shape_cast %28 : vector<8x8x8x7xf32> to vector<512x7xf32>
    %30 = vector.extract_strided_slice %15 {offsets = [0, 2, 1, 0], sizes = [8, 8, 8, 7], strides = [1, 1, 1, 1]} : vector<8x10x10x7xf32> to vector<8x8x8x7xf32>
    %31 = vector.shape_cast %30 : vector<8x8x8x7xf32> to vector<512x7xf32>
    %32 = vector.extract_strided_slice %15 {offsets = [0, 2, 2, 0], sizes = [8, 8, 8, 7], strides = [1, 1, 1, 1]} : vector<8x10x10x7xf32> to vector<8x8x8x7xf32>
    %33 = vector.shape_cast %32 : vector<8x8x8x7xf32> to vector<512x7xf32>
    %34 = tpu.concatenate %17, %19, %21, %23, %25, %27, %29, %31, %33 in 1 : vector<512x7xf32>, vector<512x7xf32>, vector<512x7xf32>, vector<512x7xf32>, vector<512x7xf32>, vector<512x7xf32>, vector<512x7xf32>, vector<512x7xf32>, vector<512x7xf32> -> vector<512x63xf32>
    %c0_15 = arith.constant 0 : index
    %c0_16 = arith.constant 0 : index
    %35 = vector.load %arg6[%c0_15, %c0_16] : memref<63x32xbf16, #tpu.memory_space<vmem>>, vector<63x32xbf16>
    %36 = arith.truncf %34 : vector<512x63xf32> to vector<512x63xbf16>
    %cst_17 = arith.constant dense<0.000000e+00> : vector<512x32xf32>
    %37 = tpu.matmul %36, %35, %cst_17 {dimension_numbers = #tpu.dot_dimension_numbers<[1], [0], [0], [1], [0, 0, 1, 1], [], []>} : vector<512x63xbf16>, vector<63x32xbf16>, vector<512x32xf32> -> vector<512x32xf32>
    %c0_18 = arith.constant 0 : index
    %c0_19 = arith.constant 0 : index
    %38 = vector.load %arg7[%c0_18, %c0_19] : memref<1x32xf32, #tpu.memory_space<vmem>>, vector<1x32xf32>
    %39 = vector.broadcast %38 : vector<1x32xf32> to vector<512x32xf32>
    %40 = arith.addf %37, %39 : vector<512x32xf32>
    %cst_20 = arith.constant 0.000000e+00 : f32
    %41 = vector.broadcast %cst_20 : f32 to vector<512x32xf32>
    %42 = arith.maximumf %40, %41 : vector<512x32xf32>
    %cst_21 = arith.constant 0.000000e+00 : f32
    %43 = vector.broadcast %cst_21 : f32 to vector<8x10x10x32xf32>
    %c0_22 = arith.constant 0 : index
    %c0_23 = arith.constant 0 : index
    %c0_24 = arith.constant 0 : index
    %c0_25 = arith.constant 0 : index
    %44 = vector.load %arg13[%c0_22, %c0_23, %c0_24, %c0_25] : memref<8x10x10x32xf32, #tpu.memory_space<vmem>>, vector<8x10x10x32xf32>
    tpu.vector_store %arg13[%c0_22, %c0_23, %c0_24, %c0_25], %43 {strides = array<i32>} : memref<8x10x10x32xf32, #tpu.memory_space<vmem>>, vector<8x10x10x32xf32>,
    %45 = vector.shape_cast %42 : vector<512x32xf32> to vector<8x8x8x32xf32>
    %c0_26 = arith.constant 0 : index
    %c1 = arith.constant 1 : index
    %c1_27 = arith.constant 1 : index
    %c0_28 = arith.constant 0 : index
    %46 = vector.load %arg13[%c0_26, %c1, %c1_27, %c0_28] : memref<8x10x10x32xf32, #tpu.memory_space<vmem>>, vector<8x8x8x32xf32>
    tpu.vector_store %arg13[%c0_26, %c1, %c1_27, %c0_28], %45 {strides = array<i32>} : memref<8x10x10x32xf32, #tpu.memory_space<vmem>>, vector<8x8x8x32xf32>,
    %c0_29 = arith.constant 0 : index
    %c0_30 = arith.constant 0 : index
    %c0_31 = arith.constant 0 : index
    %c0_32 = arith.constant 0 : index
    %47 = vector.load %arg13[%c0_29, %c0_30, %c0_31, %c0_32] : memref<8x10x10x32xf32, #tpu.memory_space<vmem>>, vector<8x10x10x32xf32>
    %48 = vector.extract_strided_slice %47 {offsets = [0, 0, 0, 0], sizes = [8, 8, 8, 32], strides = [1, 1, 1, 1]} : vector<8x10x10x32xf32> to vector<8x8x8x32xf32>
    %49 = vector.shape_cast %48 : vector<8x8x8x32xf32> to vector<512x32xf32>
    %50 = vector.extract_strided_slice %47 {offsets = [0, 0, 1, 0], sizes = [8, 8, 8, 32], strides = [1, 1, 1, 1]} : vector<8x10x10x32xf32> to vector<8x8x8x32xf32>
    %51 = vector.shape_cast %50 : vector<8x8x8x32xf32> to vector<512x32xf32>
    %52 = vector.extract_strided_slice %47 {offsets = [0, 0, 2, 0], sizes = [8, 8, 8, 32], strides = [1, 1, 1, 1]} : vector<8x10x10x32xf32> to vector<8x8x8x32xf32>
    %53 = vector.shape_cast %52 : vector<8x8x8x32xf32> to vector<512x32xf32>
    %54 = vector.extract_strided_slice %47 {offsets = [0, 1, 0, 0], sizes = [8, 8, 8, 32], strides = [1, 1, 1, 1]} : vector<8x10x10x32xf32> to vector<8x8x8x32xf32>
    %55 = vector.shape_cast %54 : vector<8x8x8x32xf32> to vector<512x32xf32>
    %56 = vector.extract_strided_slice %47 {offsets = [0, 1, 1, 0], sizes = [8, 8, 8, 32], strides = [1, 1, 1, 1]} : vector<8x10x10x32xf32> to vector<8x8x8x32xf32>
    %57 = vector.shape_cast %56 : vector<8x8x8x32xf32> to vector<512x32xf32>
    %58 = vector.extract_strided_slice %47 {offsets = [0, 1, 2, 0], sizes = [8, 8, 8, 32], strides = [1, 1, 1, 1]} : vector<8x10x10x32xf32> to vector<8x8x8x32xf32>
    %59 = vector.shape_cast %58 : vector<8x8x8x32xf32> to vector<512x32xf32>
    %60 = vector.extract_strided_slice %47 {offsets = [0, 2, 0, 0], sizes = [8, 8, 8, 32], strides = [1, 1, 1, 1]} : vector<8x10x10x32xf32> to vector<8x8x8x32xf32>
    %61 = vector.shape_cast %60 : vector<8x8x8x32xf32> to vector<512x32xf32>
    %62 = vector.extract_strided_slice %47 {offsets = [0, 2, 1, 0], sizes = [8, 8, 8, 32], strides = [1, 1, 1, 1]} : vector<8x10x10x32xf32> to vector<8x8x8x32xf32>
    %63 = vector.shape_cast %62 : vector<8x8x8x32xf32> to vector<512x32xf32>
    %64 = vector.extract_strided_slice %47 {offsets = [0, 2, 2, 0], sizes = [8, 8, 8, 32], strides = [1, 1, 1, 1]} : vector<8x10x10x32xf32> to vector<8x8x8x32xf32>
    %65 = vector.shape_cast %64 : vector<8x8x8x32xf32> to vector<512x32xf32>
    %66 = tpu.concatenate %49, %51, %53, %55, %57, %59, %61, %63, %65 in 1 : vector<512x32xf32>, vector<512x32xf32>, vector<512x32xf32>, vector<512x32xf32>, vector<512x32xf32>, vector<512x32xf32>, vector<512x32xf32>, vector<512x32xf32>, vector<512x32xf32> -> vector<512x288xf32>
    %c0_33 = arith.constant 0 : index
    %c0_34 = arith.constant 0 : index
    %67 = vector.load %arg8[%c0_33, %c0_34] : memref<288x32xbf16, #tpu.memory_space<vmem>>, vector<288x32xbf16>
    %68 = arith.truncf %66 : vector<512x288xf32> to vector<512x288xbf16>
    %cst_35 = arith.constant dense<0.000000e+00> : vector<512x32xf32>
    %69 = tpu.matmul %68, %67, %cst_35 {dimension_numbers = #tpu.dot_dimension_numbers<[1], [0], [0], [1], [0, 0, 1, 1], [], []>} : vector<512x288xbf16>, vector<288x32xbf16>, vector<512x32xf32> -> vector<512x32xf32>
    %c0_36 = arith.constant 0 : index
    %c0_37 = arith.constant 0 : index
    %70 = vector.load %arg9[%c0_36, %c0_37] : memref<1x32xf32, #tpu.memory_space<vmem>>, vector<1x32xf32>
    %71 = vector.broadcast %70 : vector<1x32xf32> to vector<512x32xf32>
    %72 = arith.addf %69, %71 : vector<512x32xf32>
    %cst_38 = arith.constant 0.000000e+00 : f32
    %73 = vector.broadcast %cst_38 : f32 to vector<512x32xf32>
    %74 = arith.maximumf %72, %73 : vector<512x32xf32>
    %75 = vector.shape_cast %74 : vector<512x32xf32> to vector<8x64x32xf32>
    %cst_39 = arith.constant dense<0.000000e+00> : vector<8x32xf32>
    %76 = vector.multi_reduction <add>, %75, %cst_39 [1] : vector<8x64x32xf32> to vector<8x32xf32>
    %cst_40 = arith.constant 6.400000e+01 : f32
    %77 = vector.broadcast %cst_40 : f32 to vector<8x32xf32>
    %78 = arith.divf %76, %77 : vector<8x32xf32>
    %c0_41 = arith.constant 0 : index
    %c0_42 = arith.constant 0 : index
    %79 = vector.load %arg10[%c0_41, %c0_42] : memref<32x32xbf16, #tpu.memory_space<vmem>>, vector<32x32xbf16>
    %80 = arith.truncf %78 : vector<8x32xf32> to vector<8x32xbf16>
    %cst_43 = arith.constant dense<0.000000e+00> : vector<8x32xf32>
    %81 = tpu.matmul %80, %79, %cst_43 {dimension_numbers = #tpu.dot_dimension_numbers<[1], [0], [0], [1], [0, 0, 1, 1], [], []>} : vector<8x32xbf16>, vector<32x32xbf16>, vector<8x32xf32> -> vector<8x32xf32>
    %c0_44 = arith.constant 0 : index
    %c0_45 = arith.constant 0 : index
    %82 = vector.load %arg11[%c0_44, %c0_45] : memref<1x32xf32, #tpu.memory_space<vmem>>, vector<1x32xf32>
    %83 = vector.broadcast %82 : vector<1x32xf32> to vector<8x32xf32>
    %84 = arith.addf %81, %83 : vector<8x32xf32>
    %85 = tpu.concatenate %14, %84 in 1 : vector<8x32xf32>, vector<8x32xf32> -> vector<8x64xf32>
    %c0_46 = arith.constant 0 : index
    %c0_47 = arith.constant 0 : index
    %86 = vector.load %arg12[%c0_46, %c0_47] : memref<8x64xf32, #tpu.memory_space<vmem>>, vector<8x64xf32>
    tpu.vector_store %arg12[%c0_46, %c0_47], %85 {strides = array<i32>} : memref<8x64xf32, #tpu.memory_space<vmem>>, vector<8x64xf32>,
    return
  }
}

module attributes {stable_mosaic.version = 11 : i64} {
  func.func @_edge_path_kernel(%arg0: memref<16x15xf32, #tpu.memory_space<vmem>>, %arg1: memref<16x10x12xf32, #tpu.memory_space<vmem>>, %arg2: memref<15x32xbf16, #tpu.memory_space<vmem>>, %arg3: memref<1x32xf32, #tpu.memory_space<vmem>>, %arg4: memref<32x32xbf16, #tpu.memory_space<vmem>>, %arg5: memref<1x32xf32, #tpu.memory_space<vmem>>, %arg6: memref<36x32xbf16, #tpu.memory_space<vmem>>, %arg7: memref<1x32xf32, #tpu.memory_space<vmem>>, %arg8: memref<96x32xbf16, #tpu.memory_space<vmem>>, %arg9: memref<1x32xf32, #tpu.memory_space<vmem>>, %arg10: memref<32x32xbf16, #tpu.memory_space<vmem>>, %arg11: memref<1x32xf32, #tpu.memory_space<vmem>>, %arg12: memref<16x64xf32, #tpu.memory_space<vmem>>, %arg13: memref<16x10x32xf32, #tpu.memory_space<vmem>>) attributes {dimension_semantics = [], scalar_prefetch = 0 : i64, scratch_operands = 1 : i64, tpu.core_type = #tpu.core_type<tc>} {
    %c0 = arith.constant 0 : index
    %c0_0 = arith.constant 0 : index
    %0 = vector.load %arg0[%c0, %c0_0] : memref<16x15xf32, #tpu.memory_space<vmem>>, vector<16x15xf32>
    %c0_1 = arith.constant 0 : index
    %c0_2 = arith.constant 0 : index
    %1 = vector.load %arg2[%c0_1, %c0_2] : memref<15x32xbf16, #tpu.memory_space<vmem>>, vector<15x32xbf16>
    %2 = arith.truncf %0 : vector<16x15xf32> to vector<16x15xbf16>
    %cst = arith.constant dense<0.000000e+00> : vector<16x32xf32>
    %3 = tpu.matmul %2, %1, %cst {dimension_numbers = #tpu.dot_dimension_numbers<[1], [0], [0], [1], [0, 0, 1, 1], [], []>} : vector<16x15xbf16>, vector<15x32xbf16>, vector<16x32xf32> -> vector<16x32xf32>
    %c0_3 = arith.constant 0 : index
    %c0_4 = arith.constant 0 : index
    %4 = vector.load %arg3[%c0_3, %c0_4] : memref<1x32xf32, #tpu.memory_space<vmem>>, vector<1x32xf32>
    %5 = vector.broadcast %4 : vector<1x32xf32> to vector<16x32xf32>
    %6 = arith.addf %3, %5 : vector<16x32xf32>
    %cst_5 = arith.constant 0.000000e+00 : f32
    %7 = vector.broadcast %cst_5 : f32 to vector<16x32xf32>
    %8 = arith.maximumf %6, %7 : vector<16x32xf32>
    %c0_6 = arith.constant 0 : index
    %c0_7 = arith.constant 0 : index
    %9 = vector.load %arg4[%c0_6, %c0_7] : memref<32x32xbf16, #tpu.memory_space<vmem>>, vector<32x32xbf16>
    %10 = arith.truncf %8 : vector<16x32xf32> to vector<16x32xbf16>
    %cst_8 = arith.constant dense<0.000000e+00> : vector<16x32xf32>
    %11 = tpu.matmul %10, %9, %cst_8 {dimension_numbers = #tpu.dot_dimension_numbers<[1], [0], [0], [1], [0, 0, 1, 1], [], []>} : vector<16x32xbf16>, vector<32x32xbf16>, vector<16x32xf32> -> vector<16x32xf32>
    %c0_9 = arith.constant 0 : index
    %c0_10 = arith.constant 0 : index
    %12 = vector.load %arg5[%c0_9, %c0_10] : memref<1x32xf32, #tpu.memory_space<vmem>>, vector<1x32xf32>
    %13 = vector.broadcast %12 : vector<1x32xf32> to vector<16x32xf32>
    %14 = arith.addf %11, %13 : vector<16x32xf32>
    %c0_11 = arith.constant 0 : index
    %c0_12 = arith.constant 0 : index
    %c0_13 = arith.constant 0 : index
    %15 = vector.load %arg1[%c0_11, %c0_12, %c0_13] : memref<16x10x12xf32, #tpu.memory_space<vmem>>, vector<16x10x12xf32>
    %16 = vector.extract_strided_slice %15 {offsets = [0, 0, 0], sizes = [16, 8, 12], strides = [1, 1, 1]} : vector<16x10x12xf32> to vector<16x8x12xf32>
    %17 = vector.shape_cast %16 : vector<16x8x12xf32> to vector<128x12xf32>
    %18 = vector.extract_strided_slice %15 {offsets = [0, 1, 0], sizes = [16, 8, 12], strides = [1, 1, 1]} : vector<16x10x12xf32> to vector<16x8x12xf32>
    %19 = vector.shape_cast %18 : vector<16x8x12xf32> to vector<128x12xf32>
    %20 = vector.extract_strided_slice %15 {offsets = [0, 2, 0], sizes = [16, 8, 12], strides = [1, 1, 1]} : vector<16x10x12xf32> to vector<16x8x12xf32>
    %21 = vector.shape_cast %20 : vector<16x8x12xf32> to vector<128x12xf32>
    %22 = tpu.concatenate %17, %19, %21 in 1 : vector<128x12xf32>, vector<128x12xf32>, vector<128x12xf32> -> vector<128x36xf32>
    %c0_14 = arith.constant 0 : index
    %c0_15 = arith.constant 0 : index
    %23 = vector.load %arg6[%c0_14, %c0_15] : memref<36x32xbf16, #tpu.memory_space<vmem>>, vector<36x32xbf16>
    %24 = arith.truncf %22 : vector<128x36xf32> to vector<128x36xbf16>
    %cst_16 = arith.constant dense<0.000000e+00> : vector<128x32xf32>
    %25 = tpu.matmul %24, %23, %cst_16 {dimension_numbers = #tpu.dot_dimension_numbers<[1], [0], [0], [1], [0, 0, 1, 1], [], []>} : vector<128x36xbf16>, vector<36x32xbf16>, vector<128x32xf32> -> vector<128x32xf32>
    %c0_17 = arith.constant 0 : index
    %c0_18 = arith.constant 0 : index
    %26 = vector.load %arg7[%c0_17, %c0_18] : memref<1x32xf32, #tpu.memory_space<vmem>>, vector<1x32xf32>
    %27 = vector.broadcast %26 : vector<1x32xf32> to vector<128x32xf32>
    %28 = arith.addf %25, %27 : vector<128x32xf32>
    %cst_19 = arith.constant 0.000000e+00 : f32
    %29 = vector.broadcast %cst_19 : f32 to vector<128x32xf32>
    %30 = arith.maximumf %28, %29 : vector<128x32xf32>
    %cst_20 = arith.constant 0.000000e+00 : f32
    %31 = vector.broadcast %cst_20 : f32 to vector<16x10x32xf32>
    %c0_21 = arith.constant 0 : index
    %c0_22 = arith.constant 0 : index
    %c0_23 = arith.constant 0 : index
    %32 = vector.load %arg13[%c0_21, %c0_22, %c0_23] : memref<16x10x32xf32, #tpu.memory_space<vmem>>, vector<16x10x32xf32>
    tpu.vector_store %arg13[%c0_21, %c0_22, %c0_23], %31 {strides = array<i32>} : memref<16x10x32xf32, #tpu.memory_space<vmem>>, vector<16x10x32xf32>,
    %33 = vector.shape_cast %30 : vector<128x32xf32> to vector<16x8x32xf32>
    %c0_24 = arith.constant 0 : index
    %c1 = arith.constant 1 : index
    %c0_25 = arith.constant 0 : index
    %34 = vector.load %arg13[%c0_24, %c1, %c0_25] : memref<16x10x32xf32, #tpu.memory_space<vmem>>, vector<16x8x32xf32>
    tpu.vector_store %arg13[%c0_24, %c1, %c0_25], %33 {strides = array<i32>} : memref<16x10x32xf32, #tpu.memory_space<vmem>>, vector<16x8x32xf32>,
    %c0_26 = arith.constant 0 : index
    %c0_27 = arith.constant 0 : index
    %c0_28 = arith.constant 0 : index
    %35 = vector.load %arg13[%c0_26, %c0_27, %c0_28] : memref<16x10x32xf32, #tpu.memory_space<vmem>>, vector<16x10x32xf32>
    %36 = vector.extract_strided_slice %35 {offsets = [0, 0, 0], sizes = [16, 8, 32], strides = [1, 1, 1]} : vector<16x10x32xf32> to vector<16x8x32xf32>
    %37 = vector.shape_cast %36 : vector<16x8x32xf32> to vector<128x32xf32>
    %38 = vector.extract_strided_slice %35 {offsets = [0, 1, 0], sizes = [16, 8, 32], strides = [1, 1, 1]} : vector<16x10x32xf32> to vector<16x8x32xf32>
    %39 = vector.shape_cast %38 : vector<16x8x32xf32> to vector<128x32xf32>
    %40 = vector.extract_strided_slice %35 {offsets = [0, 2, 0], sizes = [16, 8, 32], strides = [1, 1, 1]} : vector<16x10x32xf32> to vector<16x8x32xf32>
    %41 = vector.shape_cast %40 : vector<16x8x32xf32> to vector<128x32xf32>
    %42 = tpu.concatenate %37, %39, %41 in 1 : vector<128x32xf32>, vector<128x32xf32>, vector<128x32xf32> -> vector<128x96xf32>
    %c0_29 = arith.constant 0 : index
    %c0_30 = arith.constant 0 : index
    %43 = vector.load %arg8[%c0_29, %c0_30] : memref<96x32xbf16, #tpu.memory_space<vmem>>, vector<96x32xbf16>
    %44 = arith.truncf %42 : vector<128x96xf32> to vector<128x96xbf16>
    %cst_31 = arith.constant dense<0.000000e+00> : vector<128x32xf32>
    %45 = tpu.matmul %44, %43, %cst_31 {dimension_numbers = #tpu.dot_dimension_numbers<[1], [0], [0], [1], [0, 0, 1, 1], [], []>} : vector<128x96xbf16>, vector<96x32xbf16>, vector<128x32xf32> -> vector<128x32xf32>
    %c0_32 = arith.constant 0 : index
    %c0_33 = arith.constant 0 : index
    %46 = vector.load %arg9[%c0_32, %c0_33] : memref<1x32xf32, #tpu.memory_space<vmem>>, vector<1x32xf32>
    %47 = vector.broadcast %46 : vector<1x32xf32> to vector<128x32xf32>
    %48 = arith.addf %45, %47 : vector<128x32xf32>
    %cst_34 = arith.constant 0.000000e+00 : f32
    %49 = vector.broadcast %cst_34 : f32 to vector<128x32xf32>
    %50 = arith.maximumf %48, %49 : vector<128x32xf32>
    %51 = vector.shape_cast %50 : vector<128x32xf32> to vector<16x8x32xf32>
    %cst_35 = arith.constant dense<0.000000e+00> : vector<16x32xf32>
    %52 = vector.multi_reduction <add>, %51, %cst_35 [1] : vector<16x8x32xf32> to vector<16x32xf32>
    %cst_36 = arith.constant 8.000000e+00 : f32
    %53 = vector.broadcast %cst_36 : f32 to vector<16x32xf32>
    %54 = arith.divf %52, %53 : vector<16x32xf32>
    %c0_37 = arith.constant 0 : index
    %c0_38 = arith.constant 0 : index
    %55 = vector.load %arg10[%c0_37, %c0_38] : memref<32x32xbf16, #tpu.memory_space<vmem>>, vector<32x32xbf16>
    %56 = arith.truncf %54 : vector<16x32xf32> to vector<16x32xbf16>
    %cst_39 = arith.constant dense<0.000000e+00> : vector<16x32xf32>
    %57 = tpu.matmul %56, %55, %cst_39 {dimension_numbers = #tpu.dot_dimension_numbers<[1], [0], [0], [1], [0, 0, 1, 1], [], []>} : vector<16x32xbf16>, vector<32x32xbf16>, vector<16x32xf32> -> vector<16x32xf32>
    %c0_40 = arith.constant 0 : index
    %c0_41 = arith.constant 0 : index
    %58 = vector.load %arg11[%c0_40, %c0_41] : memref<1x32xf32, #tpu.memory_space<vmem>>, vector<1x32xf32>
    %59 = vector.broadcast %58 : vector<1x32xf32> to vector<16x32xf32>
    %60 = arith.addf %57, %59 : vector<16x32xf32>
    %61 = tpu.concatenate %14, %60 in 1 : vector<16x32xf32>, vector<16x32xf32> -> vector<16x64xf32>
    %c0_42 = arith.constant 0 : index
    %c0_43 = arith.constant 0 : index
    %62 = vector.load %arg12[%c0_42, %c0_43] : memref<16x64xf32, #tpu.memory_space<vmem>>, vector<16x64xf32>
    tpu.vector_store %arg12[%c0_42, %c0_43], %61 {strides = array<i32>} : memref<16x64xf32, #tpu.memory_space<vmem>>, vector<16x64xf32>,
    return
  }
}

module attributes {stable_mosaic.version = 11 : i64} {
  func.func @_graph_head_kernel(%arg0: memref<8x64xf32, #tpu.memory_space<vmem>>, %arg1: memref<16x64xf32, #tpu.memory_space<vmem>>, %arg2: memref<16x1xi32, #tpu.memory_space<vmem>>, %arg3: memref<1x16xi32, #tpu.memory_space<vmem>>, %arg4: memref<1x8xi32, #tpu.memory_space<vmem>>, %arg5: memref<2x21xf32, #tpu.memory_space<vmem>>, %arg6: memref<64x128xbf16, #tpu.memory_space<vmem>>, %arg7: memref<1x128xf32, #tpu.memory_space<vmem>>, %arg8: memref<128x64xbf16, #tpu.memory_space<vmem>>, %arg9: memref<1x64xf32, #tpu.memory_space<vmem>>, %arg10: memref<64x128xbf16, #tpu.memory_space<vmem>>, %arg11: memref<1x128xf32, #tpu.memory_space<vmem>>, %arg12: memref<128x64xbf16, #tpu.memory_space<vmem>>, %arg13: memref<1x64xf32, #tpu.memory_space<vmem>>, %arg14: memref<64x64xbf16, #tpu.memory_space<vmem>>, %arg15: memref<21x64xbf16, #tpu.memory_space<vmem>>, %arg16: memref<1x64xf32, #tpu.memory_space<vmem>>, %arg17: memref<64x32xbf16, #tpu.memory_space<vmem>>, %arg18: memref<1x32xf32, #tpu.memory_space<vmem>>, %arg19: memref<32x1xbf16, #tpu.memory_space<vmem>>, %arg20: memref<1x1xf32, #tpu.memory_space<vmem>>, %arg21: memref<2x1xf32, #tpu.memory_space<vmem>>) attributes {dimension_semantics = [], scalar_prefetch = 0 : i64, scratch_operands = 0 : i64, tpu.core_type = #tpu.core_type<tc>} {
    %c0 = arith.constant 0 : index
    %c0_0 = arith.constant 0 : index
    %0 = vector.load %arg0[%c0, %c0_0] : memref<8x64xf32, #tpu.memory_space<vmem>>, vector<8x64xf32>
    %c0_1 = arith.constant 0 : index
    %c0_2 = arith.constant 0 : index
    %1 = vector.load %arg1[%c0_1, %c0_2] : memref<16x64xf32, #tpu.memory_space<vmem>>, vector<16x64xf32>
    %2 = tpu.iota {dimensions = array<i32: 1>} : vector<16x8xi32>
    %c0_3 = arith.constant 0 : index
    %c0_4 = arith.constant 0 : index
    %3 = vector.load %arg2[%c0_3, %c0_4] : memref<16x1xi32, #tpu.memory_space<vmem>>, vector<16x1xi32>
    %4 = vector.broadcast %3 : vector<16x1xi32> to vector<16x8xi32>
    %5 = arith.cmpi eq, %2, %4 : vector<16x8xi32>
    %6 = arith.extui %5 : vector<16x8xi1> to vector<16x8xi32>
    %7 = arith.sitofp %6 : vector<16x8xi32> to vector<16x8xf32>
    %8 = arith.truncf %7 : vector<16x8xf32> to vector<16x8xbf16>
    %9 = tpu.iota {dimensions = array<i32: 0>} : vector<8x16xi32>
    %c0_5 = arith.constant 0 : index
    %c0_6 = arith.constant 0 : index
    %10 = vector.load %arg3[%c0_5, %c0_6] : memref<1x16xi32, #tpu.memory_space<vmem>>, vector<1x16xi32>
    %11 = vector.broadcast %10 : vector<1x16xi32> to vector<8x16xi32>
    %12 = arith.cmpi eq, %9, %11 : vector<8x16xi32>
    %13 = arith.extui %12 : vector<8x16xi1> to vector<8x16xi32>
    %14 = arith.sitofp %13 : vector<8x16xi32> to vector<8x16xf32>
    %cst = arith.constant dense<0.000000e+00> : vector<8xf32>
    %15 = vector.multi_reduction <add>, %14, %cst [1] : vector<8x16xf32> to vector<8xf32>
    %16 = vector.shape_cast %15 : vector<8xf32> to vector<8x1xf32>
    %cst_7 = arith.constant 1.000000e+00 : f32
    %17 = vector.broadcast %cst_7 : f32 to vector<8x1xf32>
    %18 = arith.maximumf %16, %17 : vector<8x1xf32>
    %cst_8 = arith.constant 1.000000e+00 : f32
    %19 = vector.broadcast %cst_8 : f32 to vector<8x1xf32>
    %20 = arith.divf %19, %18 : vector<8x1xf32>
    %21 = arith.truncf %14 : vector<8x16xf32> to vector<8x16xbf16>
    %c0_9 = arith.constant 0 : index
    %c0_10 = arith.constant 0 : index
    %22 = vector.load %arg6[%c0_9, %c0_10] : memref<64x128xbf16, #tpu.memory_space<vmem>>, vector<64x128xbf16>
    %c0_11 = arith.constant 0 : index
    %c0_12 = arith.constant 0 : index
    %23 = vector.load %arg7[%c0_11, %c0_12] : memref<1x128xf32, #tpu.memory_space<vmem>>, vector<1x128xf32>
    %c0_13 = arith.constant 0 : index
    %c0_14 = arith.constant 0 : index
    %24 = vector.load %arg8[%c0_13, %c0_14] : memref<128x64xbf16, #tpu.memory_space<vmem>>, vector<128x64xbf16>
    %c0_15 = arith.constant 0 : index
    %c0_16 = arith.constant 0 : index
    %25 = vector.load %arg9[%c0_15, %c0_16] : memref<1x64xf32, #tpu.memory_space<vmem>>, vector<1x64xf32>
    %26 = arith.truncf %0 : vector<8x64xf32> to vector<8x64xbf16>
    %cst_17 = arith.constant dense<0.000000e+00> : vector<16x64xf32>
    %27 = tpu.matmul %8, %26, %cst_17 {dimension_numbers = #tpu.dot_dimension_numbers<[1], [0], [0], [1], [0, 0, 1, 1], [], []>} : vector<16x8xbf16>, vector<8x64xbf16>, vector<16x64xf32> -> vector<16x64xf32>
    %28 = arith.addf %27, %1 : vector<16x64xf32>
    %cst_18 = arith.constant 0.000000e+00 : f32
    %29 = vector.broadcast %cst_18 : f32 to vector<16x64xf32>
    %30 = arith.maximumf %28, %29 : vector<16x64xf32>
    %cst_19 = arith.constant 1.000000e-07 : f32
    %31 = vector.broadcast %cst_19 : f32 to vector<16x64xf32>
    %32 = arith.addf %30, %31 : vector<16x64xf32>
    %33 = arith.truncf %32 : vector<16x64xf32> to vector<16x64xbf16>
    %cst_20 = arith.constant dense<0.000000e+00> : vector<8x64xf32>
    %34 = tpu.matmul %21, %33, %cst_20 {dimension_numbers = #tpu.dot_dimension_numbers<[1], [0], [0], [1], [0, 0, 1, 1], [], []>} : vector<8x16xbf16>, vector<16x64xbf16>, vector<8x64xf32> -> vector<8x64xf32>
    %35 = vector.broadcast %20 : vector<8x1xf32> to vector<8x64xf32>
    %36 = arith.mulf %34, %35 : vector<8x64xf32>
    %37 = arith.addf %0, %36 : vector<8x64xf32>
    %38 = arith.truncf %37 : vector<8x64xf32> to vector<8x64xbf16>
    %cst_21 = arith.constant dense<0.000000e+00> : vector<8x128xf32>
    %39 = tpu.matmul %38, %22, %cst_21 {dimension_numbers = #tpu.dot_dimension_numbers<[1], [0], [0], [1], [0, 0, 1, 1], [], []>} : vector<8x64xbf16>, vector<64x128xbf16>, vector<8x128xf32> -> vector<8x128xf32>
    %40 = vector.broadcast %23 : vector<1x128xf32> to vector<8x128xf32>
    %41 = arith.addf %39, %40 : vector<8x128xf32>
    %cst_22 = arith.constant 0.000000e+00 : f32
    %42 = vector.broadcast %cst_22 : f32 to vector<8x128xf32>
    %43 = arith.maximumf %41, %42 : vector<8x128xf32>
    %44 = arith.truncf %43 : vector<8x128xf32> to vector<8x128xbf16>
    %cst_23 = arith.constant dense<0.000000e+00> : vector<8x64xf32>
    %45 = tpu.matmul %44, %24, %cst_23 {dimension_numbers = #tpu.dot_dimension_numbers<[1], [0], [0], [1], [0, 0, 1, 1], [], []>} : vector<8x128xbf16>, vector<128x64xbf16>, vector<8x64xf32> -> vector<8x64xf32>
    %46 = vector.broadcast %25 : vector<1x64xf32> to vector<8x64xf32>
    %47 = arith.addf %45, %46 : vector<8x64xf32>
    %cst_24 = arith.constant 0.000000e+00 : f32
    %48 = vector.broadcast %cst_24 : f32 to vector<8x64xf32>
    %49 = arith.maximumf %47, %48 : vector<8x64xf32>
    %c0_25 = arith.constant 0 : index
    %c0_26 = arith.constant 0 : index
    %50 = vector.load %arg10[%c0_25, %c0_26] : memref<64x128xbf16, #tpu.memory_space<vmem>>, vector<64x128xbf16>
    %c0_27 = arith.constant 0 : index
    %c0_28 = arith.constant 0 : index
    %51 = vector.load %arg11[%c0_27, %c0_28] : memref<1x128xf32, #tpu.memory_space<vmem>>, vector<1x128xf32>
    %c0_29 = arith.constant 0 : index
    %c0_30 = arith.constant 0 : index
    %52 = vector.load %arg12[%c0_29, %c0_30] : memref<128x64xbf16, #tpu.memory_space<vmem>>, vector<128x64xbf16>
    %c0_31 = arith.constant 0 : index
    %c0_32 = arith.constant 0 : index
    %53 = vector.load %arg13[%c0_31, %c0_32] : memref<1x64xf32, #tpu.memory_space<vmem>>, vector<1x64xf32>
    %54 = arith.truncf %49 : vector<8x64xf32> to vector<8x64xbf16>
    %cst_33 = arith.constant dense<0.000000e+00> : vector<16x64xf32>
    %55 = tpu.matmul %8, %54, %cst_33 {dimension_numbers = #tpu.dot_dimension_numbers<[1], [0], [0], [1], [0, 0, 1, 1], [], []>} : vector<16x8xbf16>, vector<8x64xbf16>, vector<16x64xf32> -> vector<16x64xf32>
    %56 = arith.addf %55, %1 : vector<16x64xf32>
    %cst_34 = arith.constant 0.000000e+00 : f32
    %57 = vector.broadcast %cst_34 : f32 to vector<16x64xf32>
    %58 = arith.maximumf %56, %57 : vector<16x64xf32>
    %cst_35 = arith.constant 1.000000e-07 : f32
    %59 = vector.broadcast %cst_35 : f32 to vector<16x64xf32>
    %60 = arith.addf %58, %59 : vector<16x64xf32>
    %61 = arith.truncf %60 : vector<16x64xf32> to vector<16x64xbf16>
    %cst_36 = arith.constant dense<0.000000e+00> : vector<8x64xf32>
    %62 = tpu.matmul %21, %61, %cst_36 {dimension_numbers = #tpu.dot_dimension_numbers<[1], [0], [0], [1], [0, 0, 1, 1], [], []>} : vector<8x16xbf16>, vector<16x64xbf16>, vector<8x64xf32> -> vector<8x64xf32>
    %63 = vector.broadcast %20 : vector<8x1xf32> to vector<8x64xf32>
    %64 = arith.mulf %62, %63 : vector<8x64xf32>
    %65 = arith.addf %49, %64 : vector<8x64xf32>
    %66 = arith.truncf %65 : vector<8x64xf32> to vector<8x64xbf16>
    %cst_37 = arith.constant dense<0.000000e+00> : vector<8x128xf32>
    %67 = tpu.matmul %66, %50, %cst_37 {dimension_numbers = #tpu.dot_dimension_numbers<[1], [0], [0], [1], [0, 0, 1, 1], [], []>} : vector<8x64xbf16>, vector<64x128xbf16>, vector<8x128xf32> -> vector<8x128xf32>
    %68 = vector.broadcast %51 : vector<1x128xf32> to vector<8x128xf32>
    %69 = arith.addf %67, %68 : vector<8x128xf32>
    %cst_38 = arith.constant 0.000000e+00 : f32
    %70 = vector.broadcast %cst_38 : f32 to vector<8x128xf32>
    %71 = arith.maximumf %69, %70 : vector<8x128xf32>
    %72 = arith.truncf %71 : vector<8x128xf32> to vector<8x128xbf16>
    %cst_39 = arith.constant dense<0.000000e+00> : vector<8x64xf32>
    %73 = tpu.matmul %72, %52, %cst_39 {dimension_numbers = #tpu.dot_dimension_numbers<[1], [0], [0], [1], [0, 0, 1, 1], [], []>} : vector<8x128xbf16>, vector<128x64xbf16>, vector<8x64xf32> -> vector<8x64xf32>
    %74 = vector.broadcast %53 : vector<1x64xf32> to vector<8x64xf32>
    %75 = arith.addf %73, %74 : vector<8x64xf32>
    %76 = tpu.iota {dimensions = array<i32: 0>} : vector<2x8xi32>
    %c0_40 = arith.constant 0 : index
    %c0_41 = arith.constant 0 : index
    %77 = vector.load %arg4[%c0_40, %c0_41] : memref<1x8xi32, #tpu.memory_space<vmem>>, vector<1x8xi32>
    %78 = vector.broadcast %77 : vector<1x8xi32> to vector<2x8xi32>
    %79 = arith.cmpi eq, %76, %78 : vector<2x8xi32>
    %80 = arith.extui %79 : vector<2x8xi1> to vector<2x8xi32>
    %81 = arith.sitofp %80 : vector<2x8xi32> to vector<2x8xf32>
    %cst_42 = arith.constant dense<0.000000e+00> : vector<2xf32>
    %82 = vector.multi_reduction <add>, %81, %cst_42 [1] : vector<2x8xf32> to vector<2xf32>
    %83 = vector.shape_cast %82 : vector<2xf32> to vector<2x1xf32>
    %cst_43 = arith.constant 1.000000e+00 : f32
    %84 = vector.broadcast %cst_43 : f32 to vector<2x1xf32>
    %85 = arith.maximumf %83, %84 : vector<2x1xf32>
    %cst_44 = arith.constant 1.000000e+00 : f32
    %86 = vector.broadcast %cst_44 : f32 to vector<2x1xf32>
    %87 = arith.divf %86, %85 : vector<2x1xf32>
    %88 = arith.truncf %81 : vector<2x8xf32> to vector<2x8xbf16>
    %89 = arith.truncf %75 : vector<8x64xf32> to vector<8x64xbf16>
    %cst_45 = arith.constant dense<0.000000e+00> : vector<2x64xf32>
    %90 = tpu.matmul %88, %89, %cst_45 {dimension_numbers = #tpu.dot_dimension_numbers<[1], [0], [0], [1], [0, 0, 1, 1], [], []>} : vector<2x8xbf16>, vector<8x64xbf16>, vector<2x64xf32> -> vector<2x64xf32>
    %91 = vector.broadcast %87 : vector<2x1xf32> to vector<2x64xf32>
    %92 = arith.mulf %90, %91 : vector<2x64xf32>
    %c0_46 = arith.constant 0 : index
    %c0_47 = arith.constant 0 : index
    %93 = vector.load %arg14[%c0_46, %c0_47] : memref<64x64xbf16, #tpu.memory_space<vmem>>, vector<64x64xbf16>
    %94 = arith.truncf %92 : vector<2x64xf32> to vector<2x64xbf16>
    %cst_48 = arith.constant dense<0.000000e+00> : vector<2x64xf32>
    %95 = tpu.matmul %94, %93, %cst_48 {dimension_numbers = #tpu.dot_dimension_numbers<[1], [0], [0], [1], [0, 0, 1, 1], [], []>} : vector<2x64xbf16>, vector<64x64xbf16>, vector<2x64xf32> -> vector<2x64xf32>
    %c0_49 = arith.constant 0 : index
    %c0_50 = arith.constant 0 : index
    %96 = vector.load %arg5[%c0_49, %c0_50] : memref<2x21xf32, #tpu.memory_space<vmem>>, vector<2x21xf32>
    %c0_51 = arith.constant 0 : index
    %c0_52 = arith.constant 0 : index
    %97 = vector.load %arg15[%c0_51, %c0_52] : memref<21x64xbf16, #tpu.memory_space<vmem>>, vector<21x64xbf16>
    %98 = arith.truncf %96 : vector<2x21xf32> to vector<2x21xbf16>
    %cst_53 = arith.constant dense<0.000000e+00> : vector<2x64xf32>
    %99 = tpu.matmul %98, %97, %cst_53 {dimension_numbers = #tpu.dot_dimension_numbers<[1], [0], [0], [1], [0, 0, 1, 1], [], []>} : vector<2x21xbf16>, vector<21x64xbf16>, vector<2x64xf32> -> vector<2x64xf32>
    %100 = arith.addf %95, %99 : vector<2x64xf32>
    %c0_54 = arith.constant 0 : index
    %c0_55 = arith.constant 0 : index
    %101 = vector.load %arg16[%c0_54, %c0_55] : memref<1x64xf32, #tpu.memory_space<vmem>>, vector<1x64xf32>
    %102 = vector.broadcast %101 : vector<1x64xf32> to vector<2x64xf32>
    %103 = arith.addf %100, %102 : vector<2x64xf32>
    %cst_56 = arith.constant 0.000000e+00 : f32
    %104 = vector.broadcast %cst_56 : f32 to vector<2x64xf32>
    %105 = arith.maximumf %103, %104 : vector<2x64xf32>
    %c0_57 = arith.constant 0 : index
    %c0_58 = arith.constant 0 : index
    %106 = vector.load %arg17[%c0_57, %c0_58] : memref<64x32xbf16, #tpu.memory_space<vmem>>, vector<64x32xbf16>
    %107 = arith.truncf %105 : vector<2x64xf32> to vector<2x64xbf16>
    %cst_59 = arith.constant dense<0.000000e+00> : vector<2x32xf32>
    %108 = tpu.matmul %107, %106, %cst_59 {dimension_numbers = #tpu.dot_dimension_numbers<[1], [0], [0], [1], [0, 0, 1, 1], [], []>} : vector<2x64xbf16>, vector<64x32xbf16>, vector<2x32xf32> -> vector<2x32xf32>
    %c0_60 = arith.constant 0 : index
    %c0_61 = arith.constant 0 : index
    %109 = vector.load %arg18[%c0_60, %c0_61] : memref<1x32xf32, #tpu.memory_space<vmem>>, vector<1x32xf32>
    %110 = vector.broadcast %109 : vector<1x32xf32> to vector<2x32xf32>
    %111 = arith.addf %108, %110 : vector<2x32xf32>
    %cst_62 = arith.constant 0.000000e+00 : f32
    %112 = vector.broadcast %cst_62 : f32 to vector<2x32xf32>
    %113 = arith.maximumf %111, %112 : vector<2x32xf32>
    %c0_63 = arith.constant 0 : index
    %c0_64 = arith.constant 0 : index
    %114 = vector.load %arg19[%c0_63, %c0_64] : memref<32x1xbf16, #tpu.memory_space<vmem>>, vector<32x1xbf16>
    %115 = arith.truncf %113 : vector<2x32xf32> to vector<2x32xbf16>
    %cst_65 = arith.constant dense<0.000000e+00> : vector<2x1xf32>
    %116 = tpu.matmul %115, %114, %cst_65 {dimension_numbers = #tpu.dot_dimension_numbers<[1], [0], [0], [1], [0, 0, 1, 1], [], []>} : vector<2x32xbf16>, vector<32x1xbf16>, vector<2x1xf32> -> vector<2x1xf32>
    %c0_66 = arith.constant 0 : index
    %c0_67 = arith.constant 0 : index
    %117 = vector.load %arg20[%c0_66, %c0_67] : memref<1x1xf32, #tpu.memory_space<vmem>>, vector<1x1xf32>
    %118 = vector.broadcast %117 : vector<1x1xf32> to vector<2x1xf32>
    %119 = arith.addf %116, %118 : vector<2x1xf32>
    %c0_68 = arith.constant 0 : index
    %c0_69 = arith.constant 0 : index
    %120 = vector.load %arg21[%c0_68, %c0_69] : memref<2x1xf32, #tpu.memory_space<vmem>>, vector<2x1xf32>
    tpu.vector_store %arg21[%c0_68, %c0_69], %119 {strides = array<i32>} : memref<2x1xf32, #tpu.memory_space<vmem>>, vector<2x1xf32>,
    return
  }
}

</mosaic_0001>

<llo_original>
// kernel: forward.5
$region0: #{forward.5}
  #allocation0 [shape = 'u32[]', space=smem, size = 0x4, offset = 0x4, fixed_abs, tag = 'smem constant byte address 0x4 - core index']
  #allocation1 [shape = 'u32[144,128]{1,0:T(1,128)}', space=vmem, size = 0x12000, scoped, tag = 'internal scratch']
  #allocation2 [shape = 'f32[1,1]{1,0:T(1,128)S(1)}', space=vmem, size = 0x200, scoped, tag = 'scoped memory for forward.5']
  %s0 = inlined_call_operand.vmem [shape: f32[8,64], index: 0, kind: input, shape index: {}]
  %s1 = inlined_call_operand.vmem [shape: f32[16,64], index: 1, kind: input, shape index: {}]
  %s2 = inlined_call_operand.vmem [shape: s32[16,1], index: 2, kind: input, shape index: {}]
  %s3 = inlined_call_operand.vmem [shape: s32[1,16], index: 3, kind: input, shape index: {}]
  %s4 = inlined_call_operand.vmem [shape: s32[1,8], index: 4, kind: input, shape index: {}]
  %s5 = inlined_call_operand.vmem [shape: f32[2,21], index: 5, kind: input, shape index: {}]
  %s6 = inlined_call_operand.vmem [shape: bf16[64,128], index: 6, kind: input, shape index: {}]
  %s7 = inlined_call_operand.vmem [shape: f32[1,128], index: 7, kind: input, shape index: {}]
  %s8 = inlined_call_operand.vmem [shape: bf16[128,64], index: 8, kind: input, shape index: {}]
  %s9 = inlined_call_operand.vmem [shape: f32[1,64], index: 9, kind: input, shape index: {}]
  %s10 = inlined_call_operand.vmem [shape: bf16[64,128], index: 10, kind: input, shape index: {}]
  %s11 = inlined_call_operand.vmem [shape: f32[1,128], index: 11, kind: input, shape index: {}]
  %s12 = inlined_call_operand.vmem [shape: bf16[128,64], index: 12, kind: input, shape index: {}]
  %s13 = inlined_call_operand.vmem [shape: f32[1,64], index: 13, kind: input, shape index: {}]
  %s14 = inlined_call_operand.vmem [shape: bf16[64,64], index: 14, kind: input, shape index: {}]
  %s15 = inlined_call_operand.vmem [shape: bf16[21,64], index: 15, kind: input, shape index: {}]
  %s16 = inlined_call_operand.vmem [shape: f32[1,64], index: 16, kind: input, shape index: {}]
  %s17 = inlined_call_operand.vmem [shape: bf16[64,32], index: 17, kind: input, shape index: {}]
  %s18 = inlined_call_operand.vmem [shape: f32[1,32], index: 18, kind: input, shape index: {}]
  %s19 = inlined_call_operand.vmem [shape: bf16[32,1], index: 19, kind: input, shape index: {}]
  %s20 = inlined_call_operand.<no memory space> [shape: f32[1,1], index: 20, kind: input, shape index: {}]
  %s21 = inlined_call_operand.vmem [shape: f32[2,1], index: 21, kind: output, shape index: {}]
  %s22 = sld [smem:[#allocation0]]
  $region94: #{forward.5} parent=0
    _
  %s24 = ssub.s32 1, %s22
  %s25 = scalar_select 0, %s24, %s22
  %v26 = vstv %s20
  %27 = vst [vmem:[#allocation2] sm:$0x1] %v26
  // Predicated region
  $region2: #{forward.5} parent=0 // pred_check
    _
  $region3: #{forward.5} parent=0 // pred_check_branch
    %29 = sbr.rel (0) target = $region5
  $region4: #{forward.5} parent=0 // pred_region
    _
  $region5: #{forward.5} parent=0 // pred_fallthru
    _
  // Predicated region
  $region6: #{forward.5} parent=0 // pred_check
    _
  $region7: #{forward.5} parent=0 // pred_check_branch
    %31 = sbr.rel (0) target = $region9
  $region8: #{forward.5} parent=0 // pred_region
    _
  $region9: #{forward.5} parent=0 // pred_fallthru
    _
  // Predicated region
  $region10: #{forward.5} parent=0 // pred_check
    _
  $region11: #{forward.5} parent=0 // pred_check_branch
    %33 = sbr.rel (0) target = $region13
  $region12: #{forward.5} parent=0 // pred_region
    _
  $region13: #{forward.5} parent=0 // pred_fallthru
    _
  // Predicated region
  $region14: #{forward.5} parent=0 // pred_check
    _
  $region15: #{forward.5} parent=0 // pred_check_branch
    %35 = sbr.rel (0) target = $region17
  $region16: #{forward.5} parent=0 // pred_region
    _
  $region17: #{forward.5} parent=0 // pred_fallthru
    _
  // Predicated region
  $region18: #{forward.5} parent=0 // pred_check
    _
  $region19: #{forward.5} parent=0 // pred_check_branch
    %37 = sbr.rel (0) target = $region21
  $region20: #{forward.5} parent=0 // pred_region
    _
  $region21: #{forward.5} parent=0 // pred_fallthru
    _
  // Predicated region
  $region22: #{forward.5} parent=0 // pred_check
    _
  $region23: #{forward.5} parent=0 // pred_check_branch
    %39 = sbr.rel (0) target = $region25
  $region24: #{forward.5} parent=0 // pred_region
    _
  $region25: #{forward.5} parent=0 // pred_fallthru
    _
  // Predicated region
  $region26: #{forward.5} parent=0 // pred_check
    _
  $region27: #{forward.5} parent=0 // pred_check_branch
    %41 = sbr.rel (0) target = $region29
  $region28: #{forward.5} parent=0 // pred_region
    _
  $region29: #{forward.5} parent=0 // pred_fallthru
    _
  // Predicated region
  $region30: #{forward.5} parent=0 // pred_check
    _
  $region31: #{forward.5} parent=0 // pred_check_branch
    %43 = sbr.rel (0) target = $region33
  $region32: #{forward.5} parent=0 // pred_region
    _
  $region33: #{forward.5} parent=0 // pred_fallthru
    _
  // Predicated region
  $region34: #{forward.5} parent=0 // pred_check
    _
  $region35: #{forward.5} parent=0 // pred_check_branch
    %45 = sbr.rel (0) target = $region37
  $region36: #{forward.5} parent=0 // pred_region
    _
  $region37: #{forward.5} parent=0 // pred_fallthru
    _
  // Predicated region
  $region38: #{forward.5} parent=0 // pred_check
    _
  $region39: #{forward.5} parent=0 // pred_check_branch
    %47 = sbr.rel (0) target = $region41
  $region40: #{forward.5} parent=0 // pred_region
    _
  $region41: #{forward.5} parent=0 // pred_fallthru
    _
  // Predicated region
  $region42: #{forward.5} parent=0 // pred_check
    _
  $region43: #{forward.5} parent=0 // pred_check_branch
    %49 = sbr.rel (0) target = $region45
  $region44: #{forward.5} parent=0 // pred_region
    _
  $region45: #{forward.5} parent=0 // pred_fallthru
    _
  // Predicated region
  $region46: #{forward.5} parent=0 // pred_check
    _
  $region47: #{forward.5} parent=0 // pred_check_branch
    %51 = sbr.rel (0) target = $region49
  $region48: #{forward.5} parent=0 // pred_region
    _
  $region49: #{forward.5} parent=0 // pred_fallthru
    _
  // Predicated region
  $region50: #{forward.5} parent=0 // pred_check
    _
  $region51: #{forward.5} parent=0 // pred_check_branch
    %53 = sbr.rel (0) target = $region53
  $region52: #{forward.5} parent=0 // pred_region
    _
  $region53: #{forward.5} parent=0 // pred_fallthru
    _
  // Predicated region
  $region54: #{forward.5} parent=0 // pred_check
    _
  $region55: #{forward.5} parent=0 // pred_check_branch
    %55 = sbr.rel (0) target = $region57
  $region56: #{forward.5} parent=0 // pred_region
    _
  $region57: #{forward.5} parent=0 // pred_fallthru
    _
  // Predicated region
  $region58: #{forward.5} parent=0 // pred_check
    _
  $region59: #{forward.5} parent=0 // pred_check_branch
    %57 = sbr.rel (0) target = $region61
  $region60: #{forward.5} parent=0 // pred_region
    _
  $region61: #{forward.5} parent=0 // pred_fallthru
    _
  // Predicated region
  $region62: #{forward.5} parent=0 // pred_check
    _
  $region63: #{forward.5} parent=0 // pred_check_branch
    %59 = sbr.rel (0) target = $region65
  $region64: #{forward.5} parent=0 // pred_region
    _
  $region65: #{forward.5} parent=0 // pred_fallthru
    _
  // Predicated region
  $region66: #{forward.5} parent=0 // pred_check
    _
  $region67: #{forward.5} parent=0 // pred_check_branch
    %61 = sbr.rel (0) target = $region69
  $region68: #{forward.5} parent=0 // pred_region
    _
  $region69: #{forward.5} parent=0 // pred_fallthru
    _
  // Predicated region
  $region70: #{forward.5} parent=0 // pred_check
    _
  $region71: #{forward.5} parent=0 // pred_check_branch
    %63 = sbr.rel (0) target = $region73
  $region72: #{forward.5} parent=0 // pred_region
    _
  $region73: #{forward.5} parent=0 // pred_fallthru
    _
  // Predicated region
  $region74: #{forward.5} parent=0 // pred_check
    _
  $region75: #{forward.5} parent=0 // pred_check_branch
    %65 = sbr.rel (0) target = $region77
  $region76: #{forward.5} parent=0 // pred_region
    _
  $region77: #{forward.5} parent=0 // pred_fallthru
    _
  // Predicated region
  $region78: #{forward.5} parent=0 // pred_check
    _
  $region79: #{forward.5} parent=0 // pred_check_branch
    %67 = sbr.rel (0) target = $region81
  $region80: #{forward.5} parent=0 // pred_region
    _
  $region81: #{forward.5} parent=0 // pred_fallthru
    _
  // Predicated region
  $region82: #{forward.5} parent=0 // pred_check
    _
  $region83: #{forward.5} parent=0 // pred_check_branch
    %69 = sbr.rel (0) target = $region85
  $region84: #{forward.5} parent=0 // pred_region
    _
  $region85: #{forward.5} parent=0 // pred_fallthru
    _
  %v71 = vld [vmem:[%s0] sm:$0xff]
  %v72 = vld [vmem:[%s1] sm:$0xff]
  %v73 = vld [vmem:[%s1 + $0x8] sm:$0xff]
  %v74 = vlaneseq
  %v75 = vand.u32 %v74, 127
  %v76 = vld [vmem:[%s2] sm:$0xff]
  %v77 = vld [vmem:[%s2 + $0x8] sm:$0xff]
  %78 = vset.pattern.permute.xlu0 0
  %79 = vperm.xlu0 %78, %v76
  %v80 = vpop.permute.xlu0 %79
  %81 = vset.pattern.permute.xlu0 0
  %82 = vperm.xlu0 %81, %v77
  %v83 = vpop.permute.xlu0 %82
  %vm84 = vcmp.eq.s32.totalorder %v75, %v80
  %vm85 = vcmp.eq.s32.totalorder %v75, %v83
  %v86 = vsel %vm84, 1, 0
  %v87 = vsel %vm85, 1, 0
  %v88 = vcvt.s32.f32 %v86
  %v89 = vcvt.s32.f32 %v87
  %v90 = vpack.c.bf16 %v89, %v88
  %v91 = vlaneseq
  %v92 = vshrl.u32 %v91, 7
  %v93 = vld [vmem:[%s3] sm:$0x1]
  %v94 = vlaneseq
  %v95 = vshrl.u32 %v94, 7
  %v96 = vsub.s32 0, %v95
  %v97 = vrot.slane %v93, %v96
  %vm98 = vcmp.eq.s32.totalorder %v92, %v97
  %v99 = vsel %vm98, 1, 0
  %v100 = vcvt.s32.f32 %v99
  %vm101 = vcmask 130048
  %v102 = vsel %vm101, %v100, 0.0
  %103 = vadd.xlane.f32.xlu0 %v102
  %v104 = vpop.xlane.xlu0 %103
  %v105 = vmax.f32 %v104, 1.0
  %v106 = vrcp.pop %v105
  %v107 = vmul.f32 1.0, %v106
  %v108 = vpack.c.bf16 %v100, %v100
  %v109 = vld [vmem:[%s6] sm:$0xf]
  %v110 = vld [vmem:[%s6 + $0x4] sm:$0xf]
  %v111 = vld [vmem:[%s6 + $0x8] sm:$0xf]
  %v112 = vld [vmem:[%s6 + $0xc] sm:$0xf]
  %v113 = vld [vmem:[%s6 + $0x10] sm:$0xf]
  %v114 = vld [vmem:[%s6 + $0x14] sm:$0xf]
  %v115 = vld [vmem:[%s6 + $0x18] sm:$0xf]
  %v116 = vld [vmem:[%s6 + $0x1c] sm:$0xf]
  %v117 = vld [vmem:[%s7] sm:$0x1]
  %v118 = vld [vmem:[%s8] sm:$0xf]
  %v119 = vld [vmem:[%s8 + $0x4] sm:$0xf]
  %v120 = vld [vmem:[%s8 + $0x8] sm:$0xf]
  %v121 = vld [vmem:[%s8 + $0xc] sm:$0xf]
  %v122 = vld [vmem:[%s8 + $0x10] sm:$0xf]
  %v123 = vld [vmem:[%s8 + $0x14] sm:$0xf]
  %v124 = vld [vmem:[%s8 + $0x18] sm:$0xf]
  %v125 = vld [vmem:[%s8 + $0x1c] sm:$0xf]
  %v126 = vld [vmem:[%s8 + $0x20] sm:$0xf]
  %v127 = vld [vmem:[%s8 + $0x24] sm:$0xf]
  %v128 = vld [vmem:[%s8 + $0x28] sm:$0xf]
  %v129 = vld [vmem:[%s8 + $0x2c] sm:$0xf]
  %v130 = vld [vmem:[%s8 + $0x30] sm:$0xf]
  %v131 = vld [vmem:[%s8 + $0x34] sm:$0xf]
  %v132 = vld [vmem:[%s8 + $0x38] sm:$0xf]
  %v133 = vld [vmem:[%s8 + $0x3c] sm:$0xf]
  %v134 = vld [vmem:[%s9] sm:$0x1]
  %v135 = vpack.c.bf16 %v71, %v71
  %vm136 = vcmask 64512
  %v138 = vsel %vm136, %v90, 0
  %vm140 = vcmask 1043456
  %v142 = vsel %vm140, %v135, 0
  %144 = vmatprep.subr.bf16.mxu0 0
  %145 = vmatpush1.bf16.msra.mxu0 %v142
  %146 = vmatprep.subr.bf16.mxu0 0
  %147 = vmatpush1.bf16.msra.mxu0 0
  %148 = vmatprep.subr.bf16.mxu0 0
  %149 = vmatpush1.bf16.msra.mxu0 0
  %150 = vmatprep.subr.bf16.mxu0 0
  %151 = vmatpush1.bf16.msra.mxu0 0
  %152 = vmatprep.subr.bf16.mxu0 0
  %153 = vmatpush1.bf16.msra.mxu0 0
  %154 = vmatprep.subr.bf16.mxu0 0
  %155 = vmatpush1.bf16.msra.mxu0 0
  %156 = vmatprep.subr.bf16.mxu0 0
  %157 = vmatpush1.bf16.msra.mxu0 0
  %158 = vmatprep.subr.bf16.mxu0 0
  %159 = vmatpush1.bf16.msra.mxu0 0
  %160 = vmatprep.subr.bf16.mxu0 0
  %161 = vmatpush1.bf16.msra.mxu0 0
  %162 = vmatprep.subr.bf16.mxu0 0
  %163 = vmatpush1.bf16.msra.mxu0 0
  %164 = vmatprep.subr.bf16.mxu0 0
  %165 = vmatpush1.bf16.msra.mxu0 0
  %166 = vmatprep.subr.bf16.mxu0 0
  %167 = vmatpush1.bf16.msra.mxu0 0
  %168 = vmatprep.subr.bf16.mxu0 0
  %169 = vmatpush1.bf16.msra.mxu0 0
  %170 = vmatprep.subr.bf16.mxu0 0
  %171 = vmatpush1.bf16.msra.mxu0 0
  %172 = vmatprep.subr.bf16.mxu0 0
  %173 = vmatpush1.bf16.msra.mxu0 0
  %174 = vmatprep.subr.bf16.mxu0 0
  %175 = vmatpush1.bf16.msra.mxu0 0
  %176 = vmatprep.mubr.bf16.mxu0 0
  %177 = vmatmul.mubr.bf16.gmra.mrb[0].mxu0 %v138
  %v178 = vpop.f32.mrb[0].mxu0
  %v179 = vadd.f32 %v72, %v178
  %v180 = vpop.f32.mrb[0].mxu0
  %v181 = vpop.f32.mrb[0].mxu0
  %v182 = vadd.f32 %v73, %v181
  %v183 = vpop.f32.mrb[0].mxu0
  %184 = vdwg.mxu0
  %v185 = vmax.f32 %v179, 0.0
  %v186 = vmax.f32 %v182, 0.0
  %v187 = vadd.f32 %v185, 1e-07
  %v188 = vadd.f32 %v186, 1e-07
  %v189 = vpack.c.bf16 %v188, %v187
  %v191 = vsel %vm101, %v108, 0
  %193 = vmatprep.subr.bf16.mxu0 0
  %194 = vmatpush1.bf16.msra.mxu0 %v189
  %195 = vmatprep.subr.bf16.mxu0 0
  %196 = vmatpush1.bf16.msra.mxu0 0
  %197 = vmatprep.subr.bf16.mxu0 0
  %198 = vmatpush1.bf16.msra.mxu0 0
  %199 = vmatprep.subr.bf16.mxu0 0
  %200 = vmatpush1.bf16.msra.mxu0 0
  %201 = vmatprep.subr.bf16.mxu0 0
  %202 = vmatpush1.bf16.msra.mxu0 0
  %203 = vmatprep.subr.bf16.mxu0 0
  %204 = vmatpush1.bf16.msra.mxu0 0
  %205 = vmatprep.subr.bf16.mxu0 0
  %206 = vmatpush1.bf16.msra.mxu0 0
  %207 = vmatprep.subr.bf16.mxu0 0
  %208 = vmatpush1.bf16.msra.mxu0 0
  %209 = vmatprep.subr.bf16.mxu0 0
  %210 = vmatpush1.bf16.msra.mxu0 0
  %211 = vmatprep.subr.bf16.mxu0 0
  %212 = vmatpush1.bf16.msra.mxu0 0
  %213 = vmatprep.subr.bf16.mxu0 0
  %214 = vmatpush1.bf16.msra.mxu0 0
  %215 = vmatprep.subr.bf16.mxu0 0
  %216 = vmatpush1.bf16.msra.mxu0 0
  %217 = vmatprep.subr.bf16.mxu0 0
  %218 = vmatpush1.bf16.msra.mxu0 0
  %219 = vmatprep.subr.bf16.mxu0 0
  %220 = vmatpush1.bf16.msra.mxu0 0
  %221 = vmatprep.subr.bf16.mxu0 0
  %222 = vmatpush1.bf16.msra.mxu0 0
  %223 = vmatprep.subr.bf16.mxu0 0
  %224 = vmatpush1.bf16.msra.mxu0 0
  %225 = vmatprep.mubr.bf16.mxu0 0
  %226 = vmatmul.mubr.bf16.gmra.mrb[0].mxu0 %v191
  %v227 = vpop.f32.mrb[0].mxu0
  %v228 = vadd.f32 0.0, %v227
  %v229 = vpop.f32.mrb[0].mxu0
  %v230 = vpop.f32.mrb[0].mxu0
  %v231 = vpop.f32.mrb[0].mxu0
  %232 = vdwg.mxu0
  %v233 = vmul.f32 %v228, %v107
  %v234 = vadd.f32 %v71, %v233
  %v235 = vpack.c.bf16 %v234, %v234
  %v237 = vlaneseq
  %v238 = vshrl.u32 %v237, 7
  %v239 = vsub.s32 0, %v238
  %v240 = vrot.slane %v117, %v239
  %v250 = vunpack.c.l.b16 %v109
  %v251 = vunpack.c.l.b16 %v110
  %v252 = vunpack.c.l.b16 %v111
  %v253 = vunpack.c.l.b16 %v112
  %v254 = vunpack.c.l.b16 %v113
  %v255 = vunpack.c.l.b16 %v114
  %v256 = vunpack.c.l.b16 %v115
  %v257 = vunpack.c.l.b16 %v116
  %v258 = vpack.c.b16 %v251, %v250
  %v259 = vpack.c.b16 %v253, %v252
  %v260 = vpack.c.b16 %v255, %v254
  %v261 = vpack.c.b16 %v257, %v256
  %vm266 = vcmask 523264
  %v268 = vsel %vm266, %v235, 0
  %270 = vmatprep.subr.bf16.mxu0 0
  %271 = vmatpush1.bf16.msra.mxu0 %v258
  %272 = vmatprep.subr.bf16.mxu0 0
  %273 = vmatpush1.bf16.msra.mxu0 %v259
  %274 = vmatprep.subr.bf16.mxu0 0
  %275 = vmatpush1.bf16.msra.mxu0 %v260
  %276 = vmatprep.subr.bf16.mxu0 0
  %277 = vmatpush1.bf16.msra.mxu0 %v261
  %278 = vmatprep.subr.bf16.mxu0 0
  %279 = vmatpush1.bf16.msra.mxu0 0
  %280 = vmatprep.subr.bf16.mxu0 0
  %281 = vmatpush1.bf16.msra.mxu0 0
  %282 = vmatprep.subr.bf16.mxu0 0
  %283 = vmatpush1.bf16.msra.mxu0 0
  %284 = vmatprep.subr.bf16.mxu0 0
  %285 = vmatpush1.bf16.msra.mxu0 0
  %286 = vmatprep.subr.bf16.mxu0 0
  %287 = vmatpush1.bf16.msra.mxu0 0
  %288 = vmatprep.subr.bf16.mxu0 0
  %289 = vmatpush1.bf16.msra.mxu0 0
  %290 = vmatprep.subr.bf16.mxu0 0
  %291 = vmatpush1.bf16.msra.mxu0 0
  %292 = vmatprep.subr.bf16.mxu0 0
  %293 = vmatpush1.bf16.msra.mxu0 0
  %294 = vmatprep.subr.bf16.mxu0 0
  %295 = vmatpush1.bf16.msra.mxu0 0
  %296 = vmatprep.subr.bf16.mxu0 0
  %297 = vmatpush1.bf16.msra.mxu0 0
  %298 = vmatprep.subr.bf16.mxu0 0
  %299 = vmatpush1.bf16.msra.mxu0 0
  %300 = vmatprep.subr.bf16.mxu0 0
  %301 = vmatpush1.bf16.msra.mxu0 0
  %302 = vmatprep.mubr.bf16.mxu0 0
  %303 = vmatmul.mubr.bf16.gmra.mrb[0].mxu0 %v268
  %v304 = vpop.f32.mrb[0].mxu0
  %v305 = vadd.f32 %v240, %v304
  %v306 = vpop.f32.mrb[0].mxu0
  %v307 = vpop.f32.mrb[0].mxu0
  %v308 = vpop.f32.mrb[0].mxu0
  %309 = vdwg.mxu0
  %v310 = vmax.f32 %v305, 0.0
  %v311 = vpack.c.bf16 %v310, %v310
  %v313 = vlaneseq
  %v314 = vshrl.u32 %v313, 7
  %v315 = vsub.s32 0, %v314
  %v316 = vrot.slane %v134, %v315
  %v334 = vunpack.c.l.b16 %v118
  %v335 = vunpack.c.l.b16 %v119
  %v336 = vunpack.c.l.b16 %v120
  %v337 = vunpack.c.l.b16 %v121
  %v338 = vunpack.c.l.b16 %v122
  %v339 = vunpack.c.l.b16 %v123
  %v340 = vunpack.c.l.b16 %v124
  %v341 = vunpack.c.l.b16 %v125
  %v342 = vunpack.c.l.b16 %v126
  %v343 = vunpack.c.l.b16 %v127
  %v344 = vunpack.c.l.b16 %v128
  %v345 = vunpack.c.l.b16 %v129
  %v346 = vunpack.c.l.b16 %v130
  %v347 = vunpack.c.l.b16 %v131
  %v348 = vunpack.c.l.b16 %v132
  %v349 = vunpack.c.l.b16 %v133
  %v350 = vpack.c.b16 %v335, %v334
  %v351 = vpack.c.b16 %v337, %v336
  %v352 = vpack.c.b16 %v339, %v338
  %v353 = vpack.c.b16 %v341, %v340
  %v354 = vpack.c.b16 %v343, %v342
  %v355 = vpack.c.b16 %v345, %v344
  %v356 = vpack.c.b16 %v347, %v346
  %v357 = vpack.c.b16 %v349, %v348
  %366 = vmatprep.subr.bf16.mxu0 0
  %367 = vmatpush1.bf16.msra.mxu0 %v350
  %368 = vmatprep.subr.bf16.mxu0 0
  %369 = vmatpush1.bf16.msra.mxu0 %v351
  %370 = vmatprep.subr.bf16.mxu0 0
  %371 = vmatpush1.bf16.msra.mxu0 %v352
  %372 = vmatprep.subr.bf16.mxu0 0
  %373 = vmatpush1.bf16.msra.mxu0 %v353
  %374 = vmatprep.subr.bf16.mxu0 0
  %375 = vmatpush1.bf16.msra.mxu0 %v354
  %376 = vmatprep.subr.bf16.mxu0 0
  %377 = vmatpush1.bf16.msra.mxu0 %v355
  %378 = vmatprep.subr.bf16.mxu0 0
  %379 = vmatpush1.bf16.msra.mxu0 %v356
  %380 = vmatprep.subr.bf16.mxu0 0
  %381 = vmatpush1.bf16.msra.mxu0 %v357
  %382 = vmatprep.subr.bf16.mxu0 0
  %383 = vmatpush1.bf16.msra.mxu0 0
  %384 = vmatprep.subr.bf16.mxu0 0
  %385 = vmatpush1.bf16.msra.mxu0 0
  %386 = vmatprep.subr.bf16.mxu0 0
  %387 = vmatpush1.bf16.msra.mxu0 0
  %388 = vmatprep.subr.bf16.mxu0 0
  %389 = vmatpush1.bf16.msra.mxu0 0
  %390 = vmatprep.subr.bf16.mxu0 0
  %391 = vmatpush1.bf16.msra.mxu0 0
  %392 = vmatprep.subr.bf16.mxu0 0
  %393 = vmatpush1.bf16.msra.mxu0 0
  %394 = vmatprep.subr.bf16.mxu0 0
  %395 = vmatpush1.bf16.msra.mxu0 0
  %396 = vmatprep.subr.bf16.mxu0 0
  %397 = vmatpush1.bf16.msra.mxu0 0
  %398 = vmatprep.mubr.bf16.mxu0 0
  %399 = vmatmul.mubr.bf16.gmra.mrb[0].mxu0 %v311
  %v400 = vpop.f32.mrb[0].mxu0
  %v401 = vadd.f32 %v316, %v400
  %v402 = vpop.f32.mrb[0].mxu0
  %v403 = vpop.f32.mrb[0].mxu0
  %v404 = vpop.f32.mrb[0].mxu0
  %405 = vdwg.mxu0
  %v406 = vmax.f32 %v401, 0.0
  %v407 = vld [vmem:[%s10] sm:$0xf]
  %v408 = vld [vmem:[%s10 + $0x4] sm:$0xf]
  %v409 = vld [vmem:[%s10 + $0x8] sm:$0xf]
  %v410 = vld [vmem:[%s10 + $0xc] sm:$0xf]
  %v411 = vld [vmem:[%s10 + $0x10] sm:$0xf]
  %v412 = vld [vmem:[%s10 + $0x14] sm:$0xf]
  %v413 = vld [vmem:[%s10 + $0x18] sm:$0xf]
  %v414 = vld [vmem:[%s10 + $0x1c] sm:$0xf]
  %v415 = vld [vmem:[%s11] sm:$0x1]
  %v416 = vld [vmem:[%s12] sm:$0xf]
  %v417 = vld [vmem:[%s12 + $0x4] sm:$0xf]
  %v418 = vld [vmem:[%s12 + $0x8] sm:$0xf]
  %v419 = vld [vmem:[%s12 + $0xc] sm:$0xf]
  %v420 = vld [vmem:[%s12 + $0x10] sm:$0xf]
  %v421 = vld [vmem:[%s12 + $0x14] sm:$0xf]
  %v422 = vld [vmem:[%s12 + $0x18] sm:$0xf]
  %v423 = vld [vmem:[%s12 + $0x1c] sm:$0xf]
  %v424 = vld [vmem:[%s12 + $0x20] sm:$0xf]
  %v425 = vld [vmem:[%s12 + $0x24] sm:$0xf]
  %v426 = vld [vmem:[%s12 + $0x28] sm:$0xf]
  %v427 = vld [vmem:[%s12 + $0x2c] sm:$0xf]
  %v428 = vld [vmem:[%s12 + $0x30] sm:$0xf]
  %v429 = vld [vmem:[%s12 + $0x34] sm:$0xf]
  %v430 = vld [vmem:[%s12 + $0x38] sm:$0xf]
  %v431 = vld [vmem:[%s12 + $0x3c] sm:$0xf]
  %v432 = vld [vmem:[%s13] sm:$0x1]
  %v433 = vpack.c.bf16 %v406, %v406
  %v435 = vsel %vm140, %v433, 0
  %437 = vmatprep.subr.bf16.mxu0 0
  %438 = vmatpush1.bf16.msra.mxu0 %v435
  %439 = vmatprep.subr.bf16.mxu0 0
  %440 = vmatpush1.bf16.msra.mxu0 0
  %441 = vmatprep.subr.bf16.mxu0 0
  %442 = vmatpush1.bf16.msra.mxu0 0
  %443 = vmatprep.subr.bf16.mxu0 0
  %444 = vmatpush1.bf16.msra.mxu0 0
  %445 = vmatprep.subr.bf16.mxu0 0
  %446 = vmatpush1.bf16.msra.mxu0 0
  %447 = vmatprep.subr.bf16.mxu0 0
  %448 = vmatpush1.bf16.msra.mxu0 0
  %449 = vmatprep.subr.bf16.mxu0 0
  %450 = vmatpush1.bf16.msra.mxu0 0
  %451 = vmatprep.subr.bf16.mxu0 0
  %452 = vmatpush1.bf16.msra.mxu0 0
  %453 = vmatprep.subr.bf16.mxu0 0
  %454 = vmatpush1.bf16.msra.mxu0 0
  %455 = vmatprep.subr.bf16.mxu0 0
  %456 = vmatpush1.bf16.msra.mxu0 0
  %457 = vmatprep.subr.bf16.mxu0 0
  %458 = vmatpush1.bf16.msra.mxu0 0
  %459 = vmatprep.subr.bf16.mxu0 0
  %460 = vmatpush1.bf16.msra.mxu0 0
  %461 = vmatprep.subr.bf16.mxu0 0
  %462 = vmatpush1.bf16.msra.mxu0 0
  %463 = vmatprep.subr.bf16.mxu0 0
  %464 = vmatpush1.bf16.msra.mxu0 0
  %465 = vmatprep.subr.bf16.mxu0 0
  %466 = vmatpush1.bf16.msra.mxu0 0
  %467 = vmatprep.subr.bf16.mxu0 0
  %468 = vmatpush1.bf16.msra.mxu0 0
  %469 = vmatprep.mubr.bf16.mxu0 0
  %470 = vmatmul.mubr.bf16.gmra.mrb[0].mxu0 %v138
  %v471 = vpop.f32.mrb[0].mxu0
  %v472 = vadd.f32 %v72, %v471
  %v473 = vpop.f32.mrb[0].mxu0
  %v474 = vpop.f32.mrb[0].mxu0
  %v475 = vadd.f32 %v73, %v474
  %v476 = vpop.f32.mrb[0].mxu0
  %477 = vdwg.mxu0
  %v478 = vmax.f32 %v472, 0.0
  %v479 = vmax.f32 %v475, 0.0
  %v480 = vadd.f32 %v478, 1e-07
  %v481 = vadd.f32 %v479, 1e-07
  %v482 = vpack.c.bf16 %v481, %v480
  %483 = vmatprep.subr.bf16.mxu0 0
  %484 = vmatpush1.bf16.msra.mxu0 %v482
  %485 = vmatprep.subr.bf16.mxu0 0
  %486 = vmatpush1.bf16.msra.mxu0 0
  %487 = vmatprep.subr.bf16.mxu0 0
  %488 = vmatpush1.bf16.msra.mxu0 0
  %489 = vmatprep.subr.bf16.mxu0 0
  %490 = vmatpush1.bf16.msra.mxu0 0
  %491 = vmatprep.subr.bf16.mxu0 0
  %492 = vmatpush1.bf16.msra.mxu0 0
  %493 = vmatprep.subr.bf16.mxu0 0
  %494 = vmatpush1.bf16.msra.mxu0 0
  %495 = vmatprep.subr.bf16.mxu0 0
  %496 = vmatpush1.bf16.msra.mxu0 0
  %497 = vmatprep.subr.bf16.mxu0 0
  %498 = vmatpush1.bf16.msra.mxu0 0
  %499 = vmatprep.subr.bf16.mxu0 0
  %500 = vmatpush1.bf16.msra.mxu0 0
  %501 = vmatprep.subr.bf16.mxu0 0
  %502 = vmatpush1.bf16.msra.mxu0 0
  %503 = vmatprep.subr.bf16.mxu0 0
  %504 = vmatpush1.bf16.msra.mxu0 0
  %505 = vmatprep.subr.bf16.mxu0 0
  %506 = vmatpush1.bf16.msra.mxu0 0
  %507 = vmatprep.subr.bf16.mxu0 0
  %508 = vmatpush1.bf16.msra.mxu0 0
  %509 = vmatprep.subr.bf16.mxu0 0
  %510 = vmatpush1.bf16.msra.mxu0 0
  %511 = vmatprep.subr.bf16.mxu0 0
  %512 = vmatpush1.bf16.msra.mxu0 0
  %513 = vmatprep.subr.bf16.mxu0 0
  %514 = vmatpush1.bf16.msra.mxu0 0
  %515 = vmatprep.mubr.bf16.mxu0 0
  %516 = vmatmul.mubr.bf16.gmra.mrb[0].mxu0 %v191
  %v517 = vpop.f32.mrb[0].mxu0
  %v518 = vadd.f32 0.0, %v517
  %v519 = vpop.f32.mrb[0].mxu0
  %v520 = vpop.f32.mrb[0].mxu0
  %v521 = vpop.f32.mrb[0].mxu0
  %522 = vdwg.mxu0
  %v523 = vmul.f32 %v518, %v107
  %v524 = vadd.f32 %v406, %v523
  %v525 = vpack.c.bf16 %v524, %v524
  %v527 = vlaneseq
  %v528 = vshrl.u32 %v527, 7
  %v529 = vsub.s32 0, %v528
  %v530 = vrot.slane %v415, %v529
  %v540 = vunpack.c.l.b16 %v407
  %v541 = vunpack.c.l.b16 %v408
  %v542 = vunpack.c.l.b16 %v409
  %v543 = vunpack.c.l.b16 %v410
  %v544 = vunpack.c.l.b16 %v411
  %v545 = vunpack.c.l.b16 %v412
  %v546 = vunpack.c.l.b16 %v413
  %v547 = vunpack.c.l.b16 %v414
  %v548 = vpack.c.b16 %v541, %v540
  %v549 = vpack.c.b16 %v543, %v542
  %v550 = vpack.c.b16 %v545, %v544
  %v551 = vpack.c.b16 %v547, %v546
  %v557 = vsel %vm266, %v525, 0
  %559 = vmatprep.subr.bf16.mxu0 0
  %560 = vmatpush1.bf16.msra.mxu0 %v548
  %561 = vmatprep.subr.bf16.mxu0 0
  %562 = vmatpush1.bf16.msra.mxu0 %v549
  %563 = vmatprep.subr.bf16.mxu0 0
  %564 = vmatpush1.bf16.msra.mxu0 %v550
  %565 = vmatprep.subr.bf16.mxu0 0
  %566 = vmatpush1.bf16.msra.mxu0 %v551
  %567 = vmatprep.subr.bf16.mxu0 0
  %568 = vmatpush1.bf16.msra.mxu0 0
  %569 = vmatprep.subr.bf16.mxu0 0
  %570 = vmatpush1.bf16.msra.mxu0 0
  %571 = vmatprep.subr.bf16.mxu0 0
  %572 = vmatpush1.bf16.msra.mxu0 0
  %573 = vmatprep.subr.bf16.mxu0 0
  %574 = vmatpush1.bf16.msra.mxu0 0
  %575 = vmatprep.subr.bf16.mxu0 0
  %576 = vmatpush1.bf16.msra.mxu0 0
  %577 = vmatprep.subr.bf16.mxu0 0
  %578 = vmatpush1.bf16.msra.mxu0 0
  %579 = vmatprep.subr.bf16.mxu0 0
  %580 = vmatpush1.bf16.msra.mxu0 0
  %581 = vmatprep.subr.bf16.mxu0 0
  %582 = vmatpush1.bf16.msra.mxu0 0
  %583 = vmatprep.subr.bf16.mxu0 0
  %584 = vmatpush1.bf16.msra.mxu0 0
  %585 = vmatprep.subr.bf16.mxu0 0
  %586 = vmatpush1.bf16.msra.mxu0 0
  %587 = vmatprep.subr.bf16.mxu0 0
  %588 = vmatpush1.bf16.msra.mxu0 0
  %589 = vmatprep.subr.bf16.mxu0 0
  %590 = vmatpush1.bf16.msra.mxu0 0
  %591 = vmatprep.mubr.bf16.mxu0 0
  %592 = vmatmul.mubr.bf16.gmra.mrb[0].mxu0 %v557
  %v593 = vpop.f32.mrb[0].mxu0
  %v594 = vadd.f32 %v530, %v593
  %v595 = vpop.f32.mrb[0].mxu0
  %v596 = vpop.f32.mrb[0].mxu0
  %v597 = vpop.f32.mrb[0].mxu0
  %598 = vdwg.mxu0
  %v599 = vmax.f32 %v594, 0.0
  %v600 = vpack.c.bf16 %v599, %v599
  %v602 = vlaneseq
  %v603 = vshrl.u32 %v602, 7
  %v604 = vsub.s32 0, %v603
  %v605 = vrot.slane %v432, %v604
  %v623 = vunpack.c.l.b16 %v416
  %v624 = vunpack.c.l.b16 %v417
  %v625 = vunpack.c.l.b16 %v418
  %v626 = vunpack.c.l.b16 %v419
  %v627 = vunpack.c.l.b16 %v420
  %v628 = vunpack.c.l.b16 %v421
  %v629 = vunpack.c.l.b16 %v422
  %v630 = vunpack.c.l.b16 %v423
  %v631 = vunpack.c.l.b16 %v424
  %v632 = vunpack.c.l.b16 %v425
  %v633 = vunpack.c.l.b16 %v426
  %v634 = vunpack.c.l.b16 %v427
  %v635 = vunpack.c.l.b16 %v428
  %v636 = vunpack.c.l.b16 %v429
  %v637 = vunpack.c.l.b16 %v430
  %v638 = vunpack.c.l.b16 %v431
  %v639 = vpack.c.b16 %v624, %v623
  %v640 = vpack.c.b16 %v626, %v625
  %v641 = vpack.c.b16 %v628, %v627
  %v642 = vpack.c.b16 %v630, %v629
  %v643 = vpack.c.b16 %v632, %v631
  %v644 = vpack.c.b16 %v634, %v633
  %v645 = vpack.c.b16 %v636, %v635
  %v646 = vpack.c.b16 %v638, %v637
  %655 = vmatprep.subr.bf16.mxu0 0
  %656 = vmatpush1.bf16.msra.mxu0 %v639
  %657 = vmatprep.subr.bf16.mxu0 0
  %658 = vmatpush1.bf16.msra.mxu0 %v640
  %659 = vmatprep.subr.bf16.mxu0 0
  %660 = vmatpush1.bf16.msra.mxu0 %v641
  %661 = vmatprep.subr.bf16.mxu0 0
  %662 = vmatpush1.bf16.msra.mxu0 %v642
  %663 = vmatprep.subr.bf16.mxu0 0
  %664 = vmatpush1.bf16.msra.mxu0 %v643
  %665 = vmatprep.subr.bf16.mxu0 0
  %666 = vmatpush1.bf16.msra.mxu0 %v644
  %667 = vmatprep.subr.bf16.mxu0 0
  %668 = vmatpush1.bf16.msra.mxu0 %v645
  %669 = vmatprep.subr.bf16.mxu0 0
  %670 = vmatpush1.bf16.msra.mxu0 %v646
  %671 = vmatprep.subr.bf16.mxu0 0
  %672 = vmatpush1.bf16.msra.mxu0 0
  %673 = vmatprep.subr.bf16.mxu0 0
  %674 = vmatpush1.bf16.msra.mxu0 0
  %675 = vmatprep.subr.bf16.mxu0 0
  %676 = vmatpush1.bf16.msra.mxu0 0
  %677 = vmatprep.subr.bf16.mxu0 0
  %678 = vmatpush1.bf16.msra.mxu0 0
  %679 = vmatprep.subr.bf16.mxu0 0
  %680 = vmatpush1.bf16.msra.mxu0 0
  %681 = vmatprep.subr.bf16.mxu0 0
  %682 = vmatpush1.bf16.msra.mxu0 0
  %683 = vmatprep.subr.bf16.mxu0 0
  %684 = vmatpush1.bf16.msra.mxu0 0
  %685 = vmatprep.subr.bf16.mxu0 0
  %686 = vmatpush1.bf16.msra.mxu0 0
  %687 = vmatprep.mubr.bf16.mxu0 0
  %688 = vmatmul.mubr.bf16.gmra.mrb[0].mxu0 %v600
  %v689 = vpop.f32.mrb[0].mxu0
  %v690 = vadd.f32 %v605, %v689
  %v691 = vpop.f32.mrb[0].mxu0
  %v692 = vpop.f32.mrb[0].mxu0
  %v693 = vpop.f32.mrb[0].mxu0
  %694 = vdwg.mxu0
  %v695 = vld [vmem:[%s4] sm:$0x1]
  %v696 = vlaneseq
  %v697 = vshrl.u32 %v696, 7
  %v698 = vsub.s32 0, %v697
  %v699 = vrot.slane %v695, %v698
  %vm700 = vcmp.eq.s32.totalorder %v92, %v699
  %v701 = vsel %vm700, 1, 0
  %v702 = vcvt.s32.f32 %v701
  %vm703 = vcmask 58368
  %v704 = vsel %vm703, %v702, 0.0
  %705 = vadd.xlane.f32.xlu0 %v704
  %v706 = vpop.xlane.xlu0 %705
  %v707 = vmax.f32 %v706, 1.0
  %v708 = vrcp.pop %v707
  %v709 = vmul.f32 1.0, %v708
  %v710 = vpack.c.bf16 %v702, %v702
  %v711 = vpack.c.bf16 %v690, %v690
  %v713 = vsel %vm136, %v710, 0
  %v716 = vsel %vm140, %v711, 0
  %718 = vmatprep.subr.bf16.mxu0 0
  %719 = vmatpush1.bf16.msra.mxu0 %v716
  %720 = vmatprep.subr.bf16.mxu0 0
  %721 = vmatpush1.bf16.msra.mxu0 0
  %722 = vmatprep.subr.bf16.mxu0 0
  %723 = vmatpush1.bf16.msra.mxu0 0
  %724 = vmatprep.subr.bf16.mxu0 0
  %725 = vmatpush1.bf16.msra.mxu0 0
  %726 = vmatprep.subr.bf16.mxu0 0
  %727 = vmatpush1.bf16.msra.mxu0 0
  %728 = vmatprep.subr.bf16.mxu0 0
  %729 = vmatpush1.bf16.msra.mxu0 0
  %730 = vmatprep.subr.bf16.mxu0 0
  %731 = vmatpush1.bf16.msra.mxu0 0
  %732 = vmatprep.subr.bf16.mxu0 0
  %733 = vmatpush1.bf16.msra.mxu0 0
  %734 = vmatprep.subr.bf16.mxu0 0
  %735 = vmatpush1.bf16.msra.mxu0 0
  %736 = vmatprep.subr.bf16.mxu0 0
  %737 = vmatpush1.bf16.msra.mxu0 0
  %738 = vmatprep.subr.bf16.mxu0 0
  %739 = vmatpush1.bf16.msra.mxu0 0
  %740 = vmatprep.subr.bf16.mxu0 0
  %741 = vmatpush1.bf16.msra.mxu0 0
  %742 = vmatprep.subr.bf16.mxu0 0
  %743 = vmatpush1.bf16.msra.mxu0 0
  %744 = vmatprep.subr.bf16.mxu0 0
  %745 = vmatpush1.bf16.msra.mxu0 0
  %746 = vmatprep.subr.bf16.mxu0 0
  %747 = vmatpush1.bf16.msra.mxu0 0
  %748 = vmatprep.subr.bf16.mxu0 0
  %749 = vmatpush1.bf16.msra.mxu0 0
  %750 = vmatprep.mubr.bf16.mxu0 0
  %751 = vmatmul.mubr.bf16.gmra.mrb[0].mxu0 %v713
  %v752 = vpop.f32.mrb[0].mxu0
  %v753 = vadd.f32 0.0, %v752
  %v754 = vpop.f32.mrb[0].mxu0
  %v755 = vpop.f32.mrb[0].mxu0
  %v756 = vpop.f32.mrb[0].mxu0
  %757 = vdwg.mxu0
  %v758 = vmul.f32 %v753, %v709
  %v759 = vld [vmem:[%s14] sm:$0xf]
  %v760 = vld [vmem:[%s14 + $0x4] sm:$0xf]
  %v761 = vld [vmem:[%s14 + $0x8] sm:$0xf]
  %v762 = vld [vmem:[%s14 + $0xc] sm:$0xf]
  %v763 = vld [vmem:[%s14 + $0x10] sm:$0xf]
  %v764 = vld [vmem:[%s14 + $0x14] sm:$0xf]
  %v765 = vld [vmem:[%s14 + $0x18] sm:$0xf]
  %v766 = vld [vmem:[%s14 + $0x1c] sm:$0xf]
  %v767 = vpack.c.bf16 %v758, %v758
  %v768 = vld [vmem:[%s5] sm:$0x3]
  %v769 = vld [vmem:[%s15] sm:$0xf]
  %v770 = vld [vmem:[%s15 + $0x4] sm:$0xf]
  %v771 = vld [vmem:[%s15 + $0x8] sm:$0x7]
  %v772 = vpack.c.bf16 %v768, %v768
  %v776 = vunpack.c.l.b16 %v769
  %v777 = vunpack.c.l.b16 %v770
  %v778 = vunpack.c.l.b16 %v771
  %v779 = vpack.c.b16 %v777, %v776
  %v780 = vpack.c.b16 %v778, %v778
  %vm782 = vcmask 171008
  %v784 = vsel %vm782, %v772, 0
  %vm786 = vcmask 1041408
  %vm787 = vcmask 1042432
  %v788 = vsel %vm786, 4294967295, 65535
  %v789 = vsel %vm787, %v788, 0
  %v791 = vand.u32 %v780, %v789
  %793 = vmatprep.subr.bf16.mxu0 0
  %794 = vmatpush1.bf16.msra.mxu0 %v779
  %795 = vmatprep.subr.bf16.mxu0 0
  %796 = vmatpush1.bf16.msra.mxu0 %v791
  %797 = vmatprep.subr.bf16.mxu0 0
  %798 = vmatpush1.bf16.msra.mxu0 0
  %799 = vmatprep.subr.bf16.mxu0 0
  %800 = vmatpush1.bf16.msra.mxu0 0
  %801 = vmatprep.subr.bf16.mxu0 0
  %802 = vmatpush1.bf16.msra.mxu0 0
  %803 = vmatprep.subr.bf16.mxu0 0
  %804 = vmatpush1.bf16.msra.mxu0 0
  %805 = vmatprep.subr.bf16.mxu0 0
  %806 = vmatpush1.bf16.msra.mxu0 0
  %807 = vmatprep.subr.bf16.mxu0 0
  %808 = vmatpush1.bf16.msra.mxu0 0
  %809 = vmatprep.subr.bf16.mxu0 0
  %810 = vmatpush1.bf16.msra.mxu0 0
  %811 = vmatprep.subr.bf16.mxu0 0
  %812 = vmatpush1.bf16.msra.mxu0 0
  %813 = vmatprep.subr.bf16.mxu0 0
  %814 = vmatpush1.bf16.msra.mxu0 0
  %815 = vmatprep.subr.bf16.mxu0 0
  %816 = vmatpush1.bf16.msra.mxu0 0
  %817 = vmatprep.subr.bf16.mxu0 0
  %818 = vmatpush1.bf16.msra.mxu0 0
  %819 = vmatprep.subr.bf16.mxu0 0
  %820 = vmatpush1.bf16.msra.mxu0 0
  %821 = vmatprep.subr.bf16.mxu0 0
  %822 = vmatpush1.bf16.msra.mxu0 0
  %823 = vmatprep.subr.bf16.mxu0 0
  %824 = vmatpush1.bf16.msra.mxu0 0
  %825 = vmatprep.mubr.bf16.mxu0 0
  %826 = vmatmul.mubr.bf16.gmra.mrb[0].mxu0 %v784
  %v827 = vpop.f32.mrb[0].mxu0
  %v828 = vadd.f32 0.0, %v827
  %v829 = vpop.f32.mrb[0].mxu0
  %v830 = vpop.f32.mrb[0].mxu0
  %v831 = vpop.f32.mrb[0].mxu0
  %832 = vdwg.mxu0
  %v841 = vunpack.c.l.b16 %v759
  %v842 = vunpack.c.l.b16 %v760
  %v843 = vunpack.c.l.b16 %v761
  %v844 = vunpack.c.l.b16 %v762
  %v845 = vunpack.c.l.b16 %v763
  %v846 = vunpack.c.l.b16 %v764
  %v847 = vunpack.c.l.b16 %v765
  %v848 = vunpack.c.l.b16 %v766
  %v849 = vpack.c.b16 %v842, %v841
  %v850 = vpack.c.b16 %v844, %v843
  %v851 = vpack.c.b16 %v846, %v845
  %v852 = vpack.c.b16 %v848, %v847
  %v858 = vsel %vm266, %v767, 0
  %860 = vmatprep.subr.bf16.mxu0 0
  %861 = vmatpush1.bf16.msra.mxu0 %v849
  %862 = vmatprep.subr.bf16.mxu0 0
  %863 = vmatpush1.bf16.msra.mxu0 %v850
  %864 = vmatprep.subr.bf16.mxu0 0
  %865 = vmatpush1.bf16.msra.mxu0 %v851
  %866 = vmatprep.subr.bf16.mxu0 0
  %867 = vmatpush1.bf16.msra.mxu0 %v852
  %868 = vmatprep.subr.bf16.mxu0 0
  %869 = vmatpush1.bf16.msra.mxu0 0
  %870 = vmatprep.subr.bf16.mxu0 0
  %871 = vmatpush1.bf16.msra.mxu0 0
  %872 = vmatprep.subr.bf16.mxu0 0
  %873 = vmatpush1.bf16.msra.mxu0 0
  %874 = vmatprep.subr.bf16.mxu0 0
  %875 = vmatpush1.bf16.msra.mxu0 0
  %876 = vmatprep.subr.bf16.mxu0 0
  %877 = vmatpush1.bf16.msra.mxu0 0
  %878 = vmatprep.subr.bf16.mxu0 0
  %879 = vmatpush1.bf16.msra.mxu0 0
  %880 = vmatprep.subr.bf16.mxu0 0
  %881 = vmatpush1.bf16.msra.mxu0 0
  %882 = vmatprep.subr.bf16.mxu0 0
  %883 = vmatpush1.bf16.msra.mxu0 0
  %884 = vmatprep.subr.bf16.mxu0 0
  %885 = vmatpush1.bf16.msra.mxu0 0
  %886 = vmatprep.subr.bf16.mxu0 0
  %887 = vmatpush1.bf16.msra.mxu0 0
  %888 = vmatprep.subr.bf16.mxu0 0
  %889 = vmatpush1.bf16.msra.mxu0 0
  %890 = vmatprep.subr.bf16.mxu0 0
  %891 = vmatpush1.bf16.msra.mxu0 0
  %892 = vmatprep.mubr.bf16.mxu0 0
  %893 = vmatmul.mubr.bf16.gmra.mrb[0].mxu0 %v858
  %v894 = vpop.f32.mrb[0].mxu0
  %v895 = vadd.f32 %v828, %v894
  %v896 = vpop.f32.mrb[0].mxu0
  %v897 = vpop.f32.mrb[0].mxu0
  %v898 = vpop.f32.mrb[0].mxu0
  %899 = vdwg.mxu0
  %v900 = vld [vmem:[%s16] sm:$0x1]
  %v902 = vlaneseq
  %v903 = vshrl.u32 %v902, 7
  %v904 = vsub.s32 0, %v903
  %v905 = vrot.slane %v900, %v904
  %v907 = vadd.f32 %v895, %v905
  %v908 = vmax.f32 %v907, 0.0
  %v909 = vld [vmem:[%s17] sm:$0xf]
  %v910 = vld [vmem:[%s17 + $0x4] sm:$0xf]
  %v911 = vld [vmem:[%s17 + $0x8] sm:$0xf]
  %v912 = vld [vmem:[%s17 + $0xc] sm:$0xf]
  %v913 = vld [vmem:[%s17 + $0x10] sm:$0xf]
  %v914 = vld [vmem:[%s17 + $0x14] sm:$0xf]
  %v915 = vld [vmem:[%s17 + $0x18] sm:$0xf]
  %v916 = vld [vmem:[%s17 + $0x1c] sm:$0xf]
  %v917 = vpack.c.bf16 %v908, %v908
  %v918 = vld [vmem:[%s18] sm:$0x1]
  %v920 = vlaneseq
  %v921 = vshrl.u32 %v920, 7
  %v922 = vsub.s32 0, %v921
  %v923 = vrot.slane %v918, %v922
  %v933 = vunpack.c.l.b16 %v909
  %v934 = vunpack.c.l.b16 %v910
  %v935 = vunpack.c.l.b16 %v911
  %v936 = vunpack.c.l.b16 %v912
  %v937 = vunpack.c.l.b16 %v913
  %v938 = vunpack.c.l.b16 %v914
  %v939 = vunpack.c.l.b16 %v915
  %v940 = vunpack.c.l.b16 %v916
  %v941 = vpack.c.b16 %v934, %v933
  %v942 = vpack.c.b16 %v936, %v935
  %v943 = vpack.c.b16 %v938, %v937
  %v944 = vpack.c.b16 %v940, %v939
  %v950 = vsel %vm266, %v917, 0
  %952 = vmatprep.subr.bf16.mxu0 0
  %953 = vmatpush1.bf16.msra.mxu0 %v941
  %954 = vmatprep.subr.bf16.mxu0 0
  %955 = vmatpush1.bf16.msra.mxu0 %v942
  %956 = vmatprep.subr.bf16.mxu0 0
  %957 = vmatpush1.bf16.msra.mxu0 %v943
  %958 = vmatprep.subr.bf16.mxu0 0
  %959 = vmatpush1.bf16.msra.mxu0 %v944
  %960 = vmatprep.subr.bf16.mxu0 0
  %961 = vmatpush1.bf16.msra.mxu0 0
  %962 = vmatprep.subr.bf16.mxu0 0
  %963 = vmatpush1.bf16.msra.mxu0 0
  %964 = vmatprep.subr.bf16.mxu0 0
  %965 = vmatpush1.bf16.msra.mxu0 0
  %966 = vmatprep.subr.bf16.mxu0 0
  %967 = vmatpush1.bf16.msra.mxu0 0
  %968 = vmatprep.subr.bf16.mxu0 0
  %969 = vmatpush1.bf16.msra.mxu0 0
  %970 = vmatprep.subr.bf16.mxu0 0
  %971 = vmatpush1.bf16.msra.mxu0 0
  %972 = vmatprep.subr.bf16.mxu0 0
  %973 = vmatpush1.bf16.msra.mxu0 0
  %974 = vmatprep.subr.bf16.mxu0 0
  %975 = vmatpush1.bf16.msra.mxu0 0
  %976 = vmatprep.subr.bf16.mxu0 0
  %977 = vmatpush1.bf16.msra.mxu0 0
  %978 = vmatprep.subr.bf16.mxu0 0
  %979 = vmatpush1.bf16.msra.mxu0 0
  %980 = vmatprep.subr.bf16.mxu0 0
  %981 = vmatpush1.bf16.msra.mxu0 0
  %982 = vmatprep.subr.bf16.mxu0 0
  %983 = vmatpush1.bf16.msra.mxu0 0
  %984 = vmatprep.mubr.bf16.mxu0 0
  %985 = vmatmul.mubr.bf16.gmra.mrb[0].mxu0 %v950
  %v986 = vpop.f32.mrb[0].mxu0
  %v987 = vadd.f32 %v923, %v986
  %v988 = vpop.f32.mrb[0].mxu0
  %v989 = vpop.f32.mrb[0].mxu0
  %v990 = vpop.f32.mrb[0].mxu0
  %991 = vdwg.mxu0
  %v992 = vmax.f32 %v987, 0.0
  %v993 = vld [vmem:[%s19] sm:$0xf]
  %v994 = vld [vmem:[%s19 + $0x4] sm:$0xf]
  %v995 = vld [vmem:[%s19 + $0x8] sm:$0xf]
  %v996 = vld [vmem:[%s19 + $0xc] sm:$0xf]
  %v997 = vpack.c.bf16 %v992, %v992
  %v998 = vld [vmem:[#allocation2] sm:$0x1]
  %v1000 = vlaneseq
  %v1001 = vshrl.u32 %v1000, 7
  %v1002 = vsub.s32 0, %v1001
  %v1003 = vrot.slane %v998, %v1002
  %v1009 = vunpack.c.l.b16 %v993
  %v1010 = vunpack.c.l.b16 %v994
  %v1011 = vunpack.c.l.b16 %v995
  %v1012 = vunpack.c.l.b16 %v996
  %v1013 = vpack.c.b16 %v1010, %v1009
  %v1014 = vpack.c.b16 %v1012, %v1011
  %vm1017 = vcmask 261120
  %v1019 = vsel %vm1017, %v997, 0
  %1021 = vmatprep.subr.bf16.mxu0 0
  %1022 = vmatpush1.bf16.msra.mxu0 %v1013
  %1023 = vmatprep.subr.bf16.mxu0 0
  %1024 = vmatpush1.bf16.msra.mxu0 %v1014
  %1025 = vmatprep.subr.bf16.mxu0 0
  %1026 = vmatpush1.bf16.msra.mxu0 0
  %1027 = vmatprep.subr.bf16.mxu0 0
  %1028 = vmatpush1.bf16.msra.mxu0 0
  %1029 = vmatprep.subr.bf16.mxu0 0
  %1030 = vmatpush1.bf16.msra.mxu0 0
  %1031 = vmatprep.subr.bf16.mxu0 0
  %1032 = vmatpush1.bf16.msra.mxu0 0
  %1033 = vmatprep.subr.bf16.mxu0 0
  %1034 = vmatpush1.bf16.msra.mxu0 0
  %1035 = vmatprep.subr.bf16.mxu0 0
  %1036 = vmatpush1.bf16.msra.mxu0 0
  %1037 = vmatprep.subr.bf16.mxu0 0
  %1038 = vmatpush1.bf16.msra.mxu0 0
  %1039 = vmatprep.subr.bf16.mxu0 0
  %1040 = vmatpush1.bf16.msra.mxu0 0
  %1041 = vmatprep.subr.bf16.mxu0 0
  %1042 = vmatpush1.bf16.msra.mxu0 0
  %1043 = vmatprep.subr.bf16.mxu0 0
  %1044 = vmatpush1.bf16.msra.mxu0 0
  %1045 = vmatprep.subr.bf16.mxu0 0
  %1046 = vmatpush1.bf16.msra.mxu0 0
  %1047 = vmatprep.subr.bf16.mxu0 0
  %1048 = vmatpush1.bf16.msra.mxu0 0
  %1049 = vmatprep.subr.bf16.mxu0 0
  %1050 = vmatpush1.bf16.msra.mxu0 0
  %1051 = vmatprep.subr.bf16.mxu0 0
  %1052 = vmatpush1.bf16.msra.mxu0 0
  %1053 = vmatprep.mubr.bf16.mxu0 0
  %1054 = vmatmul.mubr.bf16.gmra.mrb[0].mxu0 %v1019
  %v1055 = vpop.f32.mrb[0].mxu0
  %v1056 = vadd.f32 %v1003, %v1055
  %v1057 = vpop.f32.mrb[0].mxu0
  %v1058 = vpop.f32.mrb[0].mxu0
  %v1059 = vpop.f32.mrb[0].mxu0
  %1060 = vdwg.mxu0
  %vm1061 = vcmask 1024
  %1062 = vst.msk [vmem:[%s21] sm:$0x3] %vm1061, %v1056
  // Predicated region
  $region86: #{forward.5} parent=0 // pred_check
    _
  $region87: #{forward.5} parent=0 // pred_check_branch
    %1064 = sbr.rel (0) target = $region89
  $region88: #{forward.5} parent=0 // pred_region
    _
  $region89: #{forward.5} parent=0 // pred_fallthru
    _
  // Predicated region
  $region90: #{forward.5} parent=0 // pred_check
    _
  $region91: #{forward.5} parent=0 // pred_check_branch
    %1066 = sbr.rel (0) target = $region93
  $region92: #{forward.5} parent=0 // pred_region
    _
  $region93: #{forward.5} parent=0 // pred_fallthru
    _

// kernel: forward.4
$region0: #{forward.4}
  #allocation0 [shape = 'u32[]', space=smem, size = 0x4, offset = 0x4, fixed_abs, tag = 'smem constant byte address 0x4 - core index']
  #allocation1 [shape = 'u32[144,128]{1,0:T(1,128)}', space=vmem, size = 0x12000, scoped, tag = 'internal scratch']
  #allocation2 [shape = 'f32[16,10,32]{2,1,0:T(8,128)}', space=vmem, size = 0x20000, scoped, tag = 'scratch operand']
  %s0 = inlined_call_operand.vmem [shape: f32[16,15], index: 0, kind: input, shape index: {}]
  %s1 = inlined_call_operand.vmem [shape: f32[16,10,12], index: 1, kind: input, shape index: {}]
  %s2 = inlined_call_operand.vmem [shape: bf16[15,32], index: 2, kind: input, shape index: {}]
  %s3 = inlined_call_operand.vmem [shape: f32[1,32], index: 3, kind: input, shape index: {}]
  %s4 = inlined_call_operand.vmem [shape: bf16[32,32], index: 4, kind: input, shape index: {}]
  %s5 = inlined_call_operand.vmem [shape: f32[1,32], index: 5, kind: input, shape index: {}]
  %s6 = inlined_call_operand.vmem [shape: bf16[36,32], index: 6, kind: input, shape index: {}]
  %s7 = inlined_call_operand.vmem [shape: f32[1,32], index: 7, kind: input, shape index: {}]
  %s8 = inlined_call_operand.vmem [shape: bf16[96,32], index: 8, kind: input, shape index: {}]
  %s9 = inlined_call_operand.vmem [shape: f32[1,32], index: 9, kind: input, shape index: {}]
  %s10 = inlined_call_operand.vmem [shape: bf16[32,32], index: 10, kind: input, shape index: {}]
  %s11 = inlined_call_operand.vmem [shape: f32[1,32], index: 11, kind: input, shape index: {}]
  %s12 = inlined_call_operand.vmem [shape: f32[16,64], index: 12, kind: output, shape index: {}]
  %s13 = sld [smem:[#allocation0]]
  $region58: #{forward.4} parent=0
    _
  %s15 = ssub.s32 1, %s13
  %s16 = scalar_select 0, %s15, %s13
  // Predicated region
  $region2: #{forward.4} parent=0 // pred_check
    _
  $region3: #{forward.4} parent=0 // pred_check_branch
    %18 = sbr.rel (0) target = $region5
  $region4: #{forward.4} parent=0 // pred_region
    _
  $region5: #{forward.4} parent=0 // pred_fallthru
    _
  // Predicated region
  $region6: #{forward.4} parent=0 // pred_check
    _
  $region7: #{forward.4} parent=0 // pred_check_branch
    %20 = sbr.rel (0) target = $region9
  $region8: #{forward.4} parent=0 // pred_region
    _
  $region9: #{forward.4} parent=0 // pred_fallthru
    _
  // Predicated region
  $region10: #{forward.4} parent=0 // pred_check
    _
  $region11: #{forward.4} parent=0 // pred_check_branch
    %22 = sbr.rel (0) target = $region13
  $region12: #{forward.4} parent=0 // pred_region
    _
  $region13: #{forward.4} parent=0 // pred_fallthru
    _
  // Predicated region
  $region14: #{forward.4} parent=0 // pred_check
    _
  $region15: #{forward.4} parent=0 // pred_check_branch
    %24 = sbr.rel (0) target = $region17
  $region16: #{forward.4} parent=0 // pred_region
    _
  $region17: #{forward.4} parent=0 // pred_fallthru
    _
  // Predicated region
  $region18: #{forward.4} parent=0 // pred_check
    _
  $region19: #{forward.4} parent=0 // pred_check_branch
    %26 = sbr.rel (0) target = $region21
  $region20: #{forward.4} parent=0 // pred_region
    _
  $region21: #{forward.4} parent=0 // pred_fallthru
    _
  // Predicated region
  $region22: #{forward.4} parent=0 // pred_check
    _
  $region23: #{forward.4} parent=0 // pred_check_branch
    %28 = sbr.rel (0) target = $region25
  $region24: #{forward.4} parent=0 // pred_region
    _
  $region25: #{forward.4} parent=0 // pred_fallthru
    _
  // Predicated region
  $region26: #{forward.4} parent=0 // pred_check
    _
  $region27: #{forward.4} parent=0 // pred_check_branch
    %30 = sbr.rel (0) target = $region29
  $region28: #{forward.4} parent=0 // pred_region
    _
  $region29: #{forward.4} parent=0 // pred_fallthru
    _
  // Predicated region
  $region30: #{forward.4} parent=0 // pred_check
    _
  $region31: #{forward.4} parent=0 // pred_check_branch
    %32 = sbr.rel (0) target = $region33
  $region32: #{forward.4} parent=0 // pred_region
    _
  $region33: #{forward.4} parent=0 // pred_fallthru
    _
  // Predicated region
  $region34: #{forward.4} parent=0 // pred_check
    _
  $region35: #{forward.4} parent=0 // pred_check_branch
    %34 = sbr.rel (0) target = $region37
  $region36: #{forward.4} parent=0 // pred_region
    _
  $region37: #{forward.4} parent=0 // pred_fallthru
    _
  // Predicated region
  $region38: #{forward.4} parent=0 // pred_check
    _
  $region39: #{forward.4} parent=0 // pred_check_branch
    %36 = sbr.rel (0) target = $region41
  $region40: #{forward.4} parent=0 // pred_region
    _
  $region41: #{forward.4} parent=0 // pred_fallthru
    _
  // Predicated region
  $region42: #{forward.4} parent=0 // pred_check
    _
  $region43: #{forward.4} parent=0 // pred_check_branch
    %38 = sbr.rel (0) target = $region45
  $region44: #{forward.4} parent=0 // pred_region
    _
  $region45: #{forward.4} parent=0 // pred_fallthru
    _
  // Predicated region
  $region46: #{forward.4} parent=0 // pred_check
    _
  $region47: #{forward.4} parent=0 // pred_check_branch
    %40 = sbr.rel (0) target = $region49
  $region48: #{forward.4} parent=0 // pred_region
    _
  $region49: #{forward.4} parent=0 // pred_fallthru
    _
  %v42 = vld [vmem:[%s0] sm:$0xff]
  %v43 = vld [vmem:[%s0 + $0x8] sm:$0xff]
  %v44 = vld [vmem:[%s2] sm:$0xf]
  %v45 = vld [vmem:[%s2 + $0x4] sm:$0xf]
  %v46 = vpack.c.bf16 %v43, %v42
  %v47 = vld [vmem:[%s3] sm:$0x1]
  %v49 = vlaneseq
  %v50 = vshrl.u32 %v49, 7
  %v51 = vsub.s32 0, %v50
  %v52 = vrot.slane %v47, %v51
  %v56 = vunpack.c.l.b16 %v44
  %v57 = vunpack.c.l.b16 %v45
  %v58 = vpack.c.b16 %v57, %v56
  %vm59 = vcmask 121856
  %v61 = vsel %vm59, %v46, 0
  %vm63 = vcmask 1046528
  %vm64 = vcmask 1047552
  %v65 = vsel %vm63, 4294967295, 65535
  %v66 = vsel %vm64, %v65, 0
  %v68 = vand.u32 %v58, %v66
  %70 = vmatprep.subr.bf16.mxu0 0
  %71 = vmatpush1.bf16.msra.mxu0 %v68
  %72 = vmatprep.subr.bf16.mxu0 0
  %73 = vmatpush1.bf16.msra.mxu0 0
  %74 = vmatprep.subr.bf16.mxu0 0
  %75 = vmatpush1.bf16.msra.mxu0 0
  %76 = vmatprep.subr.bf16.mxu0 0
  %77 = vmatpush1.bf16.msra.mxu0 0
  %78 = vmatprep.subr.bf16.mxu0 0
  %79 = vmatpush1.bf16.msra.mxu0 0
  %80 = vmatprep.subr.bf16.mxu0 0
  %81 = vmatpush1.bf16.msra.mxu0 0
  %82 = vmatprep.subr.bf16.mxu0 0
  %83 = vmatpush1.bf16.msra.mxu0 0
  %84 = vmatprep.subr.bf16.mxu0 0
  %85 = vmatpush1.bf16.msra.mxu0 0
  %86 = vmatprep.subr.bf16.mxu0 0
  %87 = vmatpush1.bf16.msra.mxu0 0
  %88 = vmatprep.subr.bf16.mxu0 0
  %89 = vmatpush1.bf16.msra.mxu0 0
  %90 = vmatprep.subr.bf16.mxu0 0
  %91 = vmatpush1.bf16.msra.mxu0 0
  %92 = vmatprep.subr.bf16.mxu0 0
  %93 = vmatpush1.bf16.msra.mxu0 0
  %94 = vmatprep.subr.bf16.mxu0 0
  %95 = vmatpush1.bf16.msra.mxu0 0
  %96 = vmatprep.subr.bf16.mxu0 0
  %97 = vmatpush1.bf16.msra.mxu0 0
  %98 = vmatprep.subr.bf16.mxu0 0
  %99 = vmatpush1.bf16.msra.mxu0 0
  %100 = vmatprep.subr.bf16.mxu0 0
  %101 = vmatpush1.bf16.msra.mxu0 0
  %102 = vmatprep.mubr.bf16.mxu0 0
  %103 = vmatmul.mubr.bf16.gmra.mrb[0].mxu0 %v61
  %v104 = vpop.f32.mrb[0].mxu0
  %v105 = vadd.f32 %v52, %v104
  %v106 = vpop.f32.mrb[0].mxu0
  %v107 = vpop.f32.mrb[0].mxu0
  %v108 = vadd.f32 %v52, %v107
  %v109 = vpop.f32.mrb[0].mxu0
  %110 = vdwg.mxu0
  %v111 = vmax.f32 %v105, 0.0
  %v112 = vmax.f32 %v108, 0.0
  %v113 = vld [vmem:[%s4] sm:$0xf]
  %v114 = vld [vmem:[%s4 + $0x4] sm:$0xf]
  %v115 = vld [vmem:[%s4 + $0x8] sm:$0xf]
  %v116 = vld [vmem:[%s4 + $0xc] sm:$0xf]
  %v117 = vpack.c.bf16 %v112, %v111
  %v118 = vld [vmem:[%s5] sm:$0x1]
  %v120 = vlaneseq
  %v121 = vshrl.u32 %v120, 7
  %v122 = vsub.s32 0, %v121
  %v123 = vrot.slane %v118, %v122
  %v129 = vunpack.c.l.b16 %v113
  %v130 = vunpack.c.l.b16 %v114
  %v131 = vunpack.c.l.b16 %v115
  %v132 = vunpack.c.l.b16 %v116
  %v133 = vpack.c.b16 %v130, %v129
  %v134 = vpack.c.b16 %v132, %v131
  %vm137 = vcmask 261120
  %v139 = vsel %vm137, %v117, 0
  %141 = vmatprep.subr.bf16.mxu0 0
  %142 = vmatpush1.bf16.msra.mxu0 %v133
  %143 = vmatprep.subr.bf16.mxu0 0
  %144 = vmatpush1.bf16.msra.mxu0 %v134
  %145 = vmatprep.subr.bf16.mxu0 0
  %146 = vmatpush1.bf16.msra.mxu0 0
  %147 = vmatprep.subr.bf16.mxu0 0
  %148 = vmatpush1.bf16.msra.mxu0 0
  %149 = vmatprep.subr.bf16.mxu0 0
  %150 = vmatpush1.bf16.msra.mxu0 0
  %151 = vmatprep.subr.bf16.mxu0 0
  %152 = vmatpush1.bf16.msra.mxu0 0
  %153 = vmatprep.subr.bf16.mxu0 0
  %154 = vmatpush1.bf16.msra.mxu0 0
  %155 = vmatprep.subr.bf16.mxu0 0
  %156 = vmatpush1.bf16.msra.mxu0 0
  %157 = vmatprep.subr.bf16.mxu0 0
  %158 = vmatpush1.bf16.msra.mxu0 0
  %159 = vmatprep.subr.bf16.mxu0 0
  %160 = vmatpush1.bf16.msra.mxu0 0
  %161 = vmatprep.subr.bf16.mxu0 0
  %162 = vmatpush1.bf16.msra.mxu0 0
  %163 = vmatprep.subr.bf16.mxu0 0
  %164 = vmatpush1.bf16.msra.mxu0 0
  %165 = vmatprep.subr.bf16.mxu0 0
  %166 = vmatpush1.bf16.msra.mxu0 0
  %167 = vmatprep.subr.bf16.mxu0 0
  %168 = vmatpush1.bf16.msra.mxu0 0
  %169 = vmatprep.subr.bf16.mxu0 0
  %170 = vmatpush1.bf16.msra.mxu0 0
  %171 = vmatprep.subr.bf16.mxu0 0
  %172 = vmatpush1.bf16.msra.mxu0 0
  %173 = vmatprep.mubr.bf16.mxu0 0
  %174 = vmatmul.mubr.bf16.gmra.mrb[0].mxu0 %v139
  %v175 = vpop.f32.mrb[0].mxu0
  %v176 = vadd.f32 %v123, %v175
  %v177 = vpop.f32.mrb[0].mxu0
  %v178 = vpop.f32.mrb[0].mxu0
  %v179 = vadd.f32 %v123, %v178
  %v180 = vpop.f32.mrb[0].mxu0
  %181 = vdwg.mxu0
  %v182 = vld [vmem:[%s1] sm:$0xff]
  %v183 = vld [vmem:[%s1 + $0x8] sm:$0x3]
  %v184 = vld [vmem:[%s1 + $0x10] sm:$0xff]
  %v185 = vld [vmem:[%s1 + $0x18] sm:$0x3]
  %v186 = vld [vmem:[%s1 + $0x20] sm:$0xff]
  %v187 = vld [vmem:[%s1 + $0x28] sm:$0x3]
  %v188 = vld [vmem:[%s1 + $0x30] sm:$0xff]
  %v189 = vld [vmem:[%s1 + $0x38] sm:$0x3]
  %v190 = vld [vmem:[%s1 + $0x40] sm:$0xff]
  %v191 = vld [vmem:[%s1 + $0x48] sm:$0x3]
  %v192 = vld [vmem:[%s1 + $0x50] sm:$0xff]
  %v193 = vld [vmem:[%s1 + $0x58] sm:$0x3]
  %v194 = vld [vmem:[%s1 + $0x60] sm:$0xff]
  %v195 = vld [vmem:[%s1 + $0x68] sm:$0x3]
  %v196 = vld [vmem:[%s1 + $0x70] sm:$0xff]
  %v197 = vld [vmem:[%s1 + $0x78] sm:$0x3]
  %v198 = vld [vmem:[%s1 + $0x80] sm:$0xff]
  %v199 = vld [vmem:[%s1 + $0x88] sm:$0x3]
  %v200 = vld [vmem:[%s1 + $0x90] sm:$0xff]
  %v201 = vld [vmem:[%s1 + $0x98] sm:$0x3]
  %v202 = vld [vmem:[%s1 + $0xa0] sm:$0xff]
  %v203 = vld [vmem:[%s1 + $0xa8] sm:$0x3]
  %v204 = vld [vmem:[%s1 + $0xb0] sm:$0xff]
  %v205 = vld [vmem:[%s1 + $0xb8] sm:$0x3]
  %v206 = vld [vmem:[%s1 + $0xc0] sm:$0xff]
  %v207 = vld [vmem:[%s1 + $0xc8] sm:$0x3]
  %v208 = vld [vmem:[%s1 + $0xd0] sm:$0xff]
  %v209 = vld [vmem:[%s1 + $0xd8] sm:$0x3]
  %v210 = vld [vmem:[%s1 + $0xe0] sm:$0xff]
  %v211 = vld [vmem:[%s1 + $0xe8] sm:$0x3]
  %v212 = vld [vmem:[%s1 + $0xf0] sm:$0xff]
  %v213 = vld [vmem:[%s1 + $0xf8] sm:$0x3]
  %v246 = vrot.slane %v182, 1
  %v247 = vrot.slane %v183, 1
  %v248 = vsel %vm63, %v246, %v247
  %v249 = vrot.slane %v184, 1
  %v250 = vrot.slane %v185, 1
  %v251 = vsel %vm63, %v249, %v250
  %v252 = vrot.slane %v186, 1
  %v253 = vrot.slane %v187, 1
  %v254 = vsel %vm63, %v252, %v253
  %v255 = vrot.slane %v188, 1
  %v256 = vrot.slane %v189, 1
  %v257 = vsel %vm63, %v255, %v256
  %v258 = vrot.slane %v190, 1
  %v259 = vrot.slane %v191, 1
  %v260 = vsel %vm63, %v258, %v259
  %v261 = vrot.slane %v192, 1
  %v262 = vrot.slane %v193, 1
  %v263 = vsel %vm63, %v261, %v262
  %v264 = vrot.slane %v194, 1
  %v265 = vrot.slane %v195, 1
  %v266 = vsel %vm63, %v264, %v265
  %v267 = vrot.slane %v196, 1
  %v268 = vrot.slane %v197, 1
  %v269 = vsel %vm63, %v267, %v268
  %v270 = vrot.slane %v198, 1
  %v271 = vrot.slane %v199, 1
  %v272 = vsel %vm63, %v270, %v271
  %v273 = vrot.slane %v200, 1
  %v274 = vrot.slane %v201, 1
  %v275 = vsel %vm63, %v273, %v274
  %v276 = vrot.slane %v202, 1
  %v277 = vrot.slane %v203, 1
  %v278 = vsel %vm63, %v276, %v277
  %v279 = vrot.slane %v204, 1
  %v280 = vrot.slane %v205, 1
  %v281 = vsel %vm63, %v279, %v280
  %v282 = vrot.slane %v206, 1
  %v283 = vrot.slane %v207, 1
  %v284 = vsel %vm63, %v282, %v283
  %v285 = vrot.slane %v208, 1
  %v286 = vrot.slane %v209, 1
  %v287 = vsel %vm63, %v285, %v286
  %v288 = vrot.slane %v210, 1
  %v289 = vrot.slane %v211, 1
  %v290 = vsel %vm63, %v288, %v289
  %v291 = vrot.slane %v212, 1
  %v292 = vrot.slane %v213, 1
  %v293 = vsel %vm63, %v291, %v292
  %vm294 = vcmask 1045504
  %v295 = vrot.slane %v182, 2
  %v296 = vrot.slane %v183, 2
  %v297 = vsel %vm294, %v295, %v296
  %v298 = vrot.slane %v184, 2
  %v299 = vrot.slane %v185, 2
  %v300 = vsel %vm294, %v298, %v299
  %v301 = vrot.slane %v186, 2
  %v302 = vrot.slane %v187, 2
  %v303 = vsel %vm294, %v301, %v302
  %v304 = vrot.slane %v188, 2
  %v305 = vrot.slane %v189, 2
  %v306 = vsel %vm294, %v304, %v305
  %v307 = vrot.slane %v190, 2
  %v308 = vrot.slane %v191, 2
  %v309 = vsel %vm294, %v307, %v308
  %v310 = vrot.slane %v192, 2
  %v311 = vrot.slane %v193, 2
  %v312 = vsel %vm294, %v310, %v311
  %v313 = vrot.slane %v194, 2
  %v314 = vrot.slane %v195, 2
  %v315 = vsel %vm294, %v313, %v314
  %v316 = vrot.slane %v196, 2
  %v317 = vrot.slane %v197, 2
  %v318 = vsel %vm294, %v316, %v317
  %v319 = vrot.slane %v198, 2
  %v320 = vrot.slane %v199, 2
  %v321 = vsel %vm294, %v319, %v320
  %v322 = vrot.slane %v200, 2
  %v323 = vrot.slane %v201, 2
  %v324 = vsel %vm294, %v322, %v323
  %v325 = vrot.slane %v202, 2
  %v326 = vrot.slane %v203, 2
  %v327 = vsel %vm294, %v325, %v326
  %v328 = vrot.slane %v204, 2
  %v329 = vrot.slane %v205, 2
  %v330 = vsel %vm294, %v328, %v329
  %v331 = vrot.slane %v206, 2
  %v332 = vrot.slane %v207, 2
  %v333 = vsel %vm294, %v331, %v332
  %v334 = vrot.slane %v208, 2
  %v335 = vrot.slane %v209, 2
  %v336 = vsel %vm294, %v334, %v335
  %v337 = vrot.slane %v210, 2
  %v338 = vrot.slane %v211, 2
  %v339 = vsel %vm294, %v337, %v338
  %v340 = vrot.slane %v212, 2
  %v341 = vrot.slane %v213, 2
  %v342 = vsel %vm294, %v340, %v341
  %343 = vrot.lane.b32.xlu0 %v248, 12
  %v344 = vpop.permute.xlu0 %343
  %345 = vrot.lane.b32.xlu0 %v251, 12
  %v346 = vpop.permute.xlu0 %345
  %347 = vrot.lane.b32.xlu0 %v254, 12
  %v348 = vpop.permute.xlu0 %347
  %349 = vrot.lane.b32.xlu0 %v257, 12
  %v350 = vpop.permute.xlu0 %349
  %351 = vrot.lane.b32.xlu0 %v260, 12
  %v352 = vpop.permute.xlu0 %351
  %353 = vrot.lane.b32.xlu0 %v263, 12
  %v354 = vpop.permute.xlu0 %353
  %355 = vrot.lane.b32.xlu0 %v266, 12
  %v356 = vpop.permute.xlu0 %355
  %357 = vrot.lane.b32.xlu0 %v269, 12
  %v358 = vpop.permute.xlu0 %357
  %359 = vrot.lane.b32.xlu0 %v272, 12
  %v360 = vpop.permute.xlu0 %359
  %361 = vrot.lane.b32.xlu0 %v275, 12
  %v362 = vpop.permute.xlu0 %361
  %363 = vrot.lane.b32.xlu0 %v278, 12
  %v364 = vpop.permute.xlu0 %363
  %365 = vrot.lane.b32.xlu0 %v281, 12
  %v366 = vpop.permute.xlu0 %365
  %367 = vrot.lane.b32.xlu0 %v284, 12
  %v368 = vpop.permute.xlu0 %367
  %369 = vrot.lane.b32.xlu0 %v287, 12
  %v370 = vpop.permute.xlu0 %369
  %371 = vrot.lane.b32.xlu0 %v290, 12
  %v372 = vpop.permute.xlu0 %371
  %373 = vrot.lane.b32.xlu0 %v293, 12
  %v374 = vpop.permute.xlu0 %373
  %391 = vrot.lane.b32.xlu0 %v297, 24
  %v392 = vpop.permute.xlu0 %391
  %393 = vrot.lane.b32.xlu0 %v300, 24
  %v394 = vpop.permute.xlu0 %393
  %395 = vrot.lane.b32.xlu0 %v303, 24
  %v396 = vpop.permute.xlu0 %395
  %397 = vrot.lane.b32.xlu0 %v306, 24
  %v398 = vpop.permute.xlu0 %397
  %399 = vrot.lane.b32.xlu0 %v309, 24
  %v400 = vpop.permute.xlu0 %399
  %401 = vrot.lane.b32.xlu0 %v312, 24
  %v402 = vpop.permute.xlu0 %401
  %403 = vrot.lane.b32.xlu0 %v315, 24
  %v404 = vpop.permute.xlu0 %403
  %405 = vrot.lane.b32.xlu0 %v318, 24
  %v406 = vpop.permute.xlu0 %405
  %407 = vrot.lane.b32.xlu0 %v321, 24
  %v408 = vpop.permute.xlu0 %407
  %409 = vrot.lane.b32.xlu0 %v324, 24
  %v410 = vpop.permute.xlu0 %409
  %411 = vrot.lane.b32.xlu0 %v327, 24
  %v412 = vpop.permute.xlu0 %411
  %413 = vrot.lane.b32.xlu0 %v330, 24
  %v414 = vpop.permute.xlu0 %413
  %415 = vrot.lane.b32.xlu0 %v333, 24
  %v416 = vpop.permute.xlu0 %415
  %417 = vrot.lane.b32.xlu0 %v336, 24
  %v418 = vpop.permute.xlu0 %417
  %419 = vrot.lane.b32.xlu0 %v339, 24
  %v420 = vpop.permute.xlu0 %419
  %421 = vrot.lane.b32.xlu0 %v342, 24
  %v422 = vpop.permute.xlu0 %421
  %vm439 = vcmask 97280
  %v440 = vsel %vm439, %v182, %v344
  %v441 = vsel %vm439, %v184, %v346
  %v442 = vsel %vm439, %v186, %v348
  %v443 = vsel %vm439, %v188, %v350
  %v444 = vsel %vm439, %v190, %v352
  %v445 = vsel %vm439, %v192, %v354
  %v446 = vsel %vm439, %v194, %v356
  %v447 = vsel %vm439, %v196, %v358
  %v448 = vsel %vm439, %v198, %v360
  %v449 = vsel %vm439, %v200, %v362
  %v450 = vsel %vm439, %v202, %v364
  %v451 = vsel %vm439, %v204, %v366
  %v452 = vsel %vm439, %v206, %v368
  %v453 = vsel %vm439, %v208, %v370
  %v454 = vsel %vm439, %v210, %v372
  %v455 = vsel %vm439, %v212, %v374
  %vm456 = vcmask 195584
  %v457 = vsel %vm456, %v440, %v392
  %v458 = vsel %vm456, %v441, %v394
  %v459 = vsel %vm456, %v442, %v396
  %v460 = vsel %vm456, %v443, %v398
  %v461 = vsel %vm456, %v444, %v400
  %v462 = vsel %vm456, %v445, %v402
  %v463 = vsel %vm456, %v446, %v404
  %v464 = vsel %vm456, %v447, %v406
  %v465 = vsel %vm456, %v448, %v408
  %v466 = vsel %vm456, %v449, %v410
  %v467 = vsel %vm456, %v450, %v412
  %v468 = vsel %vm456, %v451, %v414
  %v469 = vsel %vm456, %v452, %v416
  %v470 = vsel %vm456, %v453, %v418
  %v471 = vsel %vm456, %v454, %v420
  %v472 = vsel %vm456, %v455, %v422
  %v473 = vld [vmem:[%s6] sm:$0xf]
  %v474 = vld [vmem:[%s6 + $0x4] sm:$0xf]
  %v475 = vld [vmem:[%s6 + $0x8] sm:$0xf]
  %v476 = vld [vmem:[%s6 + $0xc] sm:$0xf]
  %v477 = vld [vmem:[%s6 + $0x10] sm:$0x3]
  %v478 = vpack.c.bf16 %v458, %v457
  %v479 = vpack.c.bf16 %v460, %v459
  %v480 = vpack.c.bf16 %v462, %v461
  %v481 = vpack.c.bf16 %v464, %v463
  %v482 = vpack.c.bf16 %v466, %v465
  %v483 = vpack.c.bf16 %v468, %v467
  %v484 = vpack.c.bf16 %v470, %v469
  %v485 = vpack.c.bf16 %v472, %v471
  %v486 = vld [vmem:[%s7] sm:$0x1]
  %v488 = vlaneseq
  %v489 = vshrl.u32 %v488, 7
  %v490 = vsub.s32 0, %v489
  %v491 = vrot.slane %v486, %v490
  %v498 = vunpack.c.l.b16 %v473
  %v499 = vunpack.c.l.b16 %v474
  %v500 = vunpack.c.l.b16 %v475
  %v501 = vunpack.c.l.b16 %v476
  %v502 = vunpack.c.l.b16 %v477
  %v503 = vpack.c.b16 %v499, %v498
  %v504 = vpack.c.b16 %v501, %v500
  %v505 = vpack.c.b16 %v502, %v502
  %vm508 = vcmask 293888
  %v510 = vsel %vm508, %v478, 0
  %v513 = vsel %vm508, %v479, 0
  %v516 = vsel %vm508, %v480, 0
  %v519 = vsel %vm508, %v481, 0
  %v522 = vsel %vm508, %v482, 0
  %v525 = vsel %vm508, %v483, 0
  %v528 = vsel %vm508, %v484, 0
  %v531 = vsel %vm508, %v485, 0
  %vm533 = vcmask 1041408
  %v535 = vsel %vm533, %v505, 0
  %537 = vmatprep.subr.bf16.mxu0 0
  %538 = vmatpush1.bf16.msra.mxu0 %v503
  %539 = vmatprep.subr.bf16.mxu0 0
  %540 = vmatpush1.bf16.msra.mxu0 %v504
  %541 = vmatprep.subr.bf16.mxu0 0
  %542 = vmatpush1.bf16.msra.mxu0 %v535
  %543 = vmatprep.subr.bf16.mxu0 0
  %544 = vmatpush1.bf16.msra.mxu0 0
  %545 = vmatprep.subr.bf16.mxu0 0
  %546 = vmatpush1.bf16.msra.mxu0 0
  %547 = vmatprep.subr.bf16.mxu0 0
  %548 = vmatpush1.bf16.msra.mxu0 0
  %549 = vmatprep.subr.bf16.mxu0 0
  %550 = vmatpush1.bf16.msra.mxu0 0
  %551 = vmatprep.subr.bf16.mxu0 0
  %552 = vmatpush1.bf16.msra.mxu0 0
  %553 = vmatprep.subr.bf16.mxu0 0
  %554 = vmatpush1.bf16.msra.mxu0 0
  %555 = vmatprep.subr.bf16.mxu0 0
  %556 = vmatpush1.bf16.msra.mxu0 0
  %557 = vmatprep.subr.bf16.mxu0 0
  %558 = vmatpush1.bf16.msra.mxu0 0
  %559 = vmatprep.subr.bf16.mxu0 0
  %560 = vmatpush1.bf16.msra.mxu0 0
  %561 = vmatprep.subr.bf16.mxu0 0
  %562 = vmatpush1.bf16.msra.mxu0 0
  %563 = vmatprep.subr.bf16.mxu0 0
  %564 = vmatpush1.bf16.msra.mxu0 0
  %565 = vmatprep.subr.bf16.mxu0 0
  %566 = vmatpush1.bf16.msra.mxu0 0
  %567 = vmatprep.subr.bf16.mxu0 0
  %568 = vmatpush1.bf16.msra.mxu0 0
  %569 = vmatprep.mubr.bf16.mxu0 0
  %570 = vmatmul.mubr.bf16.gmra.mrb[0].mxu0 %v510
  %v571 = vpop.f32.mrb[0].mxu0
  %v572 = vadd.f32 %v491, %v571
  %v573 = vpop.f32.mrb[0].mxu0
  %v574 = vpop.f32.mrb[0].mxu0
  %v575 = vadd.f32 %v491, %v574
  %v576 = vpop.f32.mrb[0].mxu0
  %577 = vmatprep.mubr.bf16.mxu0 0
  %578 = vmatmul.mubr.bf16.gmra.mrb[0].mxu0 %v513
  %v579 = vpop.f32.mrb[0].mxu0
  %v580 = vadd.f32 %v491, %v579
  %v581 = vpop.f32.mrb[0].mxu0
  %v582 = vpop.f32.mrb[0].mxu0
  %v583 = vadd.f32 %v491, %v582
  %v584 = vpop.f32.mrb[0].mxu0
  %585 = vmatprep.mubr.bf16.mxu0 0
  %586 = vmatmul.mubr.bf16.gmra.mrb[0].mxu0 %v516
  %v587 = vpop.f32.mrb[0].mxu0
  %v588 = vadd.f32 %v491, %v587
  %v589 = vpop.f32.mrb[0].mxu0
  %v590 = vpop.f32.mrb[0].mxu0
  %v591 = vadd.f32 %v491, %v590
  %v592 = vpop.f32.mrb[0].mxu0
  %593 = vmatprep.mubr.bf16.mxu0 0
  %594 = vmatmul.mubr.bf16.gmra.mrb[0].mxu0 %v519
  %v595 = vpop.f32.mrb[0].mxu0
  %v596 = vadd.f32 %v491, %v595
  %v597 = vpop.f32.mrb[0].mxu0
  %v598 = vpop.f32.mrb[0].mxu0
  %v599 = vadd.f32 %v491, %v598
  %v600 = vpop.f32.mrb[0].mxu0
  %601 = vmatprep.mubr.bf16.mxu0 0
  %602 = vmatmul.mubr.bf16.gmra.mrb[0].mxu0 %v522
  %v603 = vpop.f32.mrb[0].mxu0
  %v604 = vadd.f32 %v491, %v603
  %v605 = vpop.f32.mrb[0].mxu0
  %v606 = vpop.f32.mrb[0].mxu0
  %v607 = vadd.f32 %v491, %v606
  %v608 = vpop.f32.mrb[0].mxu0
  %609 = vmatprep.mubr.bf16.mxu0 0
  %610 = vmatmul.mubr.bf16.gmra.mrb[0].mxu0 %v525
  %v611 = vpop.f32.mrb[0].mxu0
  %v612 = vadd.f32 %v491, %v611
  %v613 = vpop.f32.mrb[0].mxu0
  %v614 = vpop.f32.mrb[0].mxu0
  %v615 = vadd.f32 %v491, %v614
  %v616 = vpop.f32.mrb[0].mxu0
  %617 = vmatprep.mubr.bf16.mxu0 0
  %618 = vmatmul.mubr.bf16.gmra.mrb[0].mxu0 %v528
  %v619 = vpop.f32.mrb[0].mxu0
  %v620 = vadd.f32 %v491, %v619
  %v621 = vpop.f32.mrb[0].mxu0
  %v622 = vpop.f32.mrb[0].mxu0
  %v623 = vadd.f32 %v491, %v622
  %v624 = vpop.f32.mrb[0].mxu0
  %625 = vmatprep.mubr.bf16.mxu0 0
  %626 = vmatmul.mubr.bf16.gmra.mrb[0].mxu0 %v531
  %v627 = vpop.f32.mrb[0].mxu0
  %v628 = vadd.f32 %v491, %v627
  %v629 = vpop.f32.mrb[0].mxu0
  %v630 = vpop.f32.mrb[0].mxu0
  %v631 = vadd.f32 %v491, %v630
  %v632 = vpop.f32.mrb[0].mxu0
  %633 = vdwg.mxu0
  %v634 = vmax.f32 %v572, 0.0
  %v635 = vmax.f32 %v575, 0.0
  %v636 = vmax.f32 %v580, 0.0
  %v637 = vmax.f32 %v583, 0.0
  %v638 = vmax.f32 %v588, 0.0
  %v639 = vmax.f32 %v591, 0.0
  %v640 = vmax.f32 %v596, 0.0
  %v641 = vmax.f32 %v599, 0.0
  %v642 = vmax.f32 %v604, 0.0
  %v643 = vmax.f32 %v607, 0.0
  %v644 = vmax.f32 %v612, 0.0
  %v645 = vmax.f32 %v615, 0.0
  %v646 = vmax.f32 %v620, 0.0
  %v647 = vmax.f32 %v623, 0.0
  %v648 = vmax.f32 %v628, 0.0
  %v649 = vmax.f32 %v631, 0.0
  %650 = vst.msk [vmem:[#allocation2] sm:$0xff] %vm137, 0.0
  %vm651 = vcmask 254976
  %652 = vst.msk [vmem:[#allocation2 + $0x8] sm:$0x3] %vm651, 0.0
  %653 = vst.msk [vmem:[#allocation2 + $0x10] sm:$0xff] %vm137, 0.0
  %654 = vst.msk [vmem:[#allocation2 + $0x18] sm:$0x3] %vm651, 0.0
  %655 = vst.msk [vmem:[#allocation2 + $0x20] sm:$0xff] %vm137, 0.0
  %656 = vst.msk [vmem:[#allocation2 + $0x28] sm:$0x3] %vm651, 0.0
  %657 = vst.msk [vmem:[#allocation2 + $0x30] sm:$0xff] %vm137, 0.0
  %658 = vst.msk [vmem:[#allocation2 + $0x38] sm:$0x3] %vm651, 0.0
  %659 = vst.msk [vmem:[#allocation2 + $0x40] sm:$0xff] %vm137, 0.0
  %660 = vst.msk [vmem:[#allocation2 + $0x48] sm:$0x3] %vm651, 0.0
  %661 = vst.msk [vmem:[#allocation2 + $0x50] sm:$0xff] %vm137, 0.0
  %662 = vst.msk [vmem:[#allocation2 + $0x58] sm:$0x3] %vm651, 0.0
  %663 = vst.msk [vmem:[#allocation2 + $0x60] sm:$0xff] %vm137, 0.0
  %664 = vst.msk [vmem:[#allocation2 + $0x68] sm:$0x3] %vm651, 0.0
  %665 = vst.msk [vmem:[#allocation2 + $0x70] sm:$0xff] %vm137, 0.0
  %666 = vst.msk [vmem:[#allocation2 + $0x78] sm:$0x3] %vm651, 0.0
  %667 = vst.msk [vmem:[#allocation2 + $0x80] sm:$0xff] %vm137, 0.0
  %668 = vst.msk [vmem:[#allocation2 + $0x88] sm:$0x3] %vm651, 0.0
  %669 = vst.msk [vmem:[#allocation2 + $0x90] sm:$0xff] %vm137, 0.0
  %670 = vst.msk [vmem:[#allocation2 + $0x98] sm:$0x3] %vm651, 0.0
  %671 = vst.msk [vmem:[#allocation2 + $0xa0] sm:$0xff] %vm137, 0.0
  %672 = vst.msk [vmem:[#allocation2 + $0xa8] sm:$0x3] %vm651, 0.0
  %673 = vst.msk [vmem:[#allocation2 + $0xb0] sm:$0xff] %vm137, 0.0
  %674 = vst.msk [vmem:[#allocation2 + $0xb8] sm:$0x3] %vm651, 0.0
  %675 = vst.msk [vmem:[#allocation2 + $0xc0] sm:$0xff] %vm137, 0.0
  %676 = vst.msk [vmem:[#allocation2 + $0xc8] sm:$0x3] %vm651, 0.0
  %677 = vst.msk [vmem:[#allocation2 + $0xd0] sm:$0xff] %vm137, 0.0
  %678 = vst.msk [vmem:[#allocation2 + $0xd8] sm:$0x3] %vm651, 0.0
  %679 = vst.msk [vmem:[#allocation2 + $0xe0] sm:$0xff] %vm137, 0.0
  %680 = vst.msk [vmem:[#allocation2 + $0xe8] sm:$0x3] %vm651, 0.0
  %681 = vst.msk [vmem:[#allocation2 + $0xf0] sm:$0xff] %vm137, 0.0
  %682 = vst.msk [vmem:[#allocation2 + $0xf8] sm:$0x3] %vm651, 0.0
  %683 = vst.msk [vmem:[#allocation2 + $0x1] sm:$0xff] %vm137, %v634
  %684 = vst.msk [vmem:[#allocation2 + $0x11] sm:$0xff] %vm137, %v635
  %685 = vst.msk [vmem:[#allocation2 + $0x21] sm:$0xff] %vm137, %v636
  %686 = vst.msk [vmem:[#allocation2 + $0x31] sm:$0xff] %vm137, %v637
  %687 = vst.msk [vmem:[#allocation2 + $0x41] sm:$0xff] %vm137, %v638
  %688 = vst.msk [vmem:[#allocation2 + $0x51] sm:$0xff] %vm137, %v639
  %689 = vst.msk [vmem:[#allocation2 + $0x61] sm:$0xff] %vm137, %v640
  %690 = vst.msk [vmem:[#allocation2 + $0x71] sm:$0xff] %vm137, %v641
  %691 = vst.msk [vmem:[#allocation2 + $0x81] sm:$0xff] %vm137, %v642
  %692 = vst.msk [vmem:[#allocation2 + $0x91] sm:$0xff] %vm137, %v643
  %693 = vst.msk [vmem:[#allocation2 + $0xa1] sm:$0xff] %vm137, %v644
  %694 = vst.msk [vmem:[#allocation2 + $0xb1] sm:$0xff] %vm137, %v645
  %695 = vst.msk [vmem:[#allocation2 + $0xc1] sm:$0xff] %vm137, %v646
  %696 = vst.msk [vmem:[#allocation2 + $0xd1] sm:$0xff] %vm137, %v647
  %697 = vst.msk [vmem:[#allocation2 + $0xe1] sm:$0xff] %vm137, %v648
  %698 = vst.msk [vmem:[#allocation2 + $0xf1] sm:$0xff] %vm137, %v649
  %v699 = vld [vmem:[#allocation2] sm:$0xff]
  %v700 = vld [vmem:[#allocation2 + $0x8] sm:$0x3]
  %v701 = vld [vmem:[#allocation2 + $0x10] sm:$0xff]
  %v702 = vld [vmem:[#allocation2 + $0x18] sm:$0x3]
  %v703 = vld [vmem:[#allocation2 + $0x20] sm:$0xff]
  %v704 = vld [vmem:[#allocation2 + $0x28] sm:$0x3]
  %v705 = vld [vmem:[#allocation2 + $0x30] sm:$0xff]
  %v706 = vld [vmem:[#allocation2 + $0x38] sm:$0x3]
  %v707 = vld [vmem:[#allocation2 + $0x40] sm:$0xff]
  %v708 = vld [vmem:[#allocation2 + $0x48] sm:$0x3]
  %v709 = vld [vmem:[#allocation2 + $0x50] sm:$0xff]
  %v710 = vld [vmem:[#allocation2 + $0x58] sm:$0x3]
  %v711 = vld [vmem:[#allocation2 + $0x60] sm:$0xff]
  %v712 = vld [vmem:[#allocation2 + $0x68] sm:$0x3]
  %v713 = vld [vmem:[#allocation2 + $0x70] sm:$0xff]
  %v714 = vld [vmem:[#allocation2 + $0x78] sm:$0x3]
  %v715 = vld [vmem:[#allocation2 + $0x80] sm:$0xff]
  %v716 = vld [vmem:[#allocation2 + $0x88] sm:$0x3]
  %v717 = vld [vmem:[#allocation2 + $0x90] sm:$0xff]
  %v718 = vld [vmem:[#allocation2 + $0x98] sm:$0x3]
  %v719 = vld [vmem:[#allocation2 + $0xa0] sm:$0xff]
  %v720 = vld [vmem:[#allocation2 + $0xa8] sm:$0x3]
  %v721 = vld [vmem:[#allocation2 + $0xb0] sm:$0xff]
  %v722 = vld [vmem:[#allocation2 + $0xb8] sm:$0x3]
  %v723 = vld [vmem:[#allocation2 + $0xc0] sm:$0xff]
  %v724 = vld [vmem:[#allocation2 + $0xc8] sm:$0x3]
  %v725 = vld [vmem:[#allocation2 + $0xd0] sm:$0xff]
  %v726 = vld [vmem:[#allocation2 + $0xd8] sm:$0x3]
  %v727 = vld [vmem:[#allocation2 + $0xe0] sm:$0xff]
  %v728 = vld [vmem:[#allocation2 + $0xe8] sm:$0x3]
  %v729 = vld [vmem:[#allocation2 + $0xf0] sm:$0xff]
  %v730 = vld [vmem:[#allocation2 + $0xf8] sm:$0x3]
  %v763 = vrot.slane %v699, 1
  %v764 = vrot.slane %v700, 1
  %v765 = vsel %vm63, %v763, %v764
  %v766 = vrot.slane %v701, 1
  %v767 = vrot.slane %v702, 1
  %v768 = vsel %vm63, %v766, %v767
  %v769 = vrot.slane %v703, 1
  %v770 = vrot.slane %v704, 1
  %v771 = vsel %vm63, %v769, %v770
  %v772 = vrot.slane %v705, 1
  %v773 = vrot.slane %v706, 1
  %v774 = vsel %vm63, %v772, %v773
  %v775 = vrot.slane %v707, 1
  %v776 = vrot.slane %v708, 1
  %v777 = vsel %vm63, %v775, %v776
  %v778 = vrot.slane %v709, 1
  %v779 = vrot.slane %v710, 1
  %v780 = vsel %vm63, %v778, %v779
  %v781 = vrot.slane %v711, 1
  %v782 = vrot.slane %v712, 1
  %v783 = vsel %vm63, %v781, %v782
  %v784 = vrot.slane %v713, 1
  %v785 = vrot.slane %v714, 1
  %v786 = vsel %vm63, %v784, %v785
  %v787 = vrot.slane %v715, 1
  %v788 = vrot.slane %v716, 1
  %v789 = vsel %vm63, %v787, %v788
  %v790 = vrot.slane %v717, 1
  %v791 = vrot.slane %v718, 1
  %v792 = vsel %vm63, %v790, %v791
  %v793 = vrot.slane %v719, 1
  %v794 = vrot.slane %v720, 1
  %v795 = vsel %vm63, %v793, %v794
  %v796 = vrot.slane %v721, 1
  %v797 = vrot.slane %v722, 1
  %v798 = vsel %vm63, %v796, %v797
  %v799 = vrot.slane %v723, 1
  %v800 = vrot.slane %v724, 1
  %v801 = vsel %vm63, %v799, %v800
  %v802 = vrot.slane %v725, 1
  %v803 = vrot.slane %v726, 1
  %v804 = vsel %vm63, %v802, %v803
  %v805 = vrot.slane %v727, 1
  %v806 = vrot.slane %v728, 1
  %v807 = vsel %vm63, %v805, %v806
  %v808 = vrot.slane %v729, 1
  %v809 = vrot.slane %v730, 1
  %v810 = vsel %vm63, %v808, %v809
  %v811 = vrot.slane %v699, 2
  %v812 = vrot.slane %v700, 2
  %v813 = vsel %vm294, %v811, %v812
  %v814 = vrot.slane %v701, 2
  %v815 = vrot.slane %v702, 2
  %v816 = vsel %vm294, %v814, %v815
  %v817 = vrot.slane %v703, 2
  %v818 = vrot.slane %v704, 2
  %v819 = vsel %vm294, %v817, %v818
  %v820 = vrot.slane %v705, 2
  %v821 = vrot.slane %v706, 2
  %v822 = vsel %vm294, %v820, %v821
  %v823 = vrot.slane %v707, 2
  %v824 = vrot.slane %v708, 2
  %v825 = vsel %vm294, %v823, %v824
  %v826 = vrot.slane %v709, 2
  %v827 = vrot.slane %v710, 2
  %v828 = vsel %vm294, %v826, %v827
  %v829 = vrot.slane %v711, 2
  %v830 = vrot.slane %v712, 2
  %v831 = vsel %vm294, %v829, %v830
  %v832 = vrot.slane %v713, 2
  %v833 = vrot.slane %v714, 2
  %v834 = vsel %vm294, %v832, %v833
  %v835 = vrot.slane %v715, 2
  %v836 = vrot.slane %v716, 2
  %v837 = vsel %vm294, %v835, %v836
  %v838 = vrot.slane %v717, 2
  %v839 = vrot.slane %v718, 2
  %v840 = vsel %vm294, %v838, %v839
  %v841 = vrot.slane %v719, 2
  %v842 = vrot.slane %v720, 2
  %v843 = vsel %vm294, %v841, %v842
  %v844 = vrot.slane %v721, 2
  %v845 = vrot.slane %v722, 2
  %v846 = vsel %vm294, %v844, %v845
  %v847 = vrot.slane %v723, 2
  %v848 = vrot.slane %v724, 2
  %v849 = vsel %vm294, %v847, %v848
  %v850 = vrot.slane %v725, 2
  %v851 = vrot.slane %v726, 2
  %v852 = vsel %vm294, %v850, %v851
  %v853 = vrot.slane %v727, 2
  %v854 = vrot.slane %v728, 2
  %v855 = vsel %vm294, %v853, %v854
  %v856 = vrot.slane %v729, 2
  %v857 = vrot.slane %v730, 2
  %v858 = vsel %vm294, %v856, %v857
  %859 = vrot.lane.b32.xlu0 %v765, 32
  %v860 = vpop.permute.xlu0 %859
  %861 = vrot.lane.b32.xlu0 %v768, 32
  %v862 = vpop.permute.xlu0 %861
  %863 = vrot.lane.b32.xlu0 %v771, 32
  %v864 = vpop.permute.xlu0 %863
  %865 = vrot.lane.b32.xlu0 %v774, 32
  %v866 = vpop.permute.xlu0 %865
  %867 = vrot.lane.b32.xlu0 %v777, 32
  %v868 = vpop.permute.xlu0 %867
  %869 = vrot.lane.b32.xlu0 %v780, 32
  %v870 = vpop.permute.xlu0 %869
  %871 = vrot.lane.b32.xlu0 %v783, 32
  %v872 = vpop.permute.xlu0 %871
  %873 = vrot.lane.b32.xlu0 %v786, 32
  %v874 = vpop.permute.xlu0 %873
  %875 = vrot.lane.b32.xlu0 %v789, 32
  %v876 = vpop.permute.xlu0 %875
  %877 = vrot.lane.b32.xlu0 %v792, 32
  %v878 = vpop.permute.xlu0 %877
  %879 = vrot.lane.b32.xlu0 %v795, 32
  %v880 = vpop.permute.xlu0 %879
  %881 = vrot.lane.b32.xlu0 %v798, 32
  %v882 = vpop.permute.xlu0 %881
  %883 = vrot.lane.b32.xlu0 %v801, 32
  %v884 = vpop.permute.xlu0 %883
  %885 = vrot.lane.b32.xlu0 %v804, 32
  %v886 = vpop.permute.xlu0 %885
  %887 = vrot.lane.b32.xlu0 %v807, 32
  %v888 = vpop.permute.xlu0 %887
  %889 = vrot.lane.b32.xlu0 %v810, 32
  %v890 = vpop.permute.xlu0 %889
  %907 = vrot.lane.b32.xlu0 %v813, 64
  %v908 = vpop.permute.xlu0 %907
  %909 = vrot.lane.b32.xlu0 %v816, 64
  %v910 = vpop.permute.xlu0 %909
  %911 = vrot.lane.b32.xlu0 %v819, 64
  %v912 = vpop.permute.xlu0 %911
  %913 = vrot.lane.b32.xlu0 %v822, 64
  %v914 = vpop.permute.xlu0 %913
  %915 = vrot.lane.b32.xlu0 %v825, 64
  %v916 = vpop.permute.xlu0 %915
  %917 = vrot.lane.b32.xlu0 %v828, 64
  %v918 = vpop.permute.xlu0 %917
  %919 = vrot.lane.b32.xlu0 %v831, 64
  %v920 = vpop.permute.xlu0 %919
  %921 = vrot.lane.b32.xlu0 %v834, 64
  %v922 = vpop.permute.xlu0 %921
  %923 = vrot.lane.b32.xlu0 %v837, 64
  %v924 = vpop.permute.xlu0 %923
  %925 = vrot.lane.b32.xlu0 %v840, 64
  %v926 = vpop.permute.xlu0 %925
  %927 = vrot.lane.b32.xlu0 %v843, 64
  %v928 = vpop.permute.xlu0 %927
  %929 = vrot.lane.b32.xlu0 %v846, 64
  %v930 = vpop.permute.xlu0 %929
  %931 = vrot.lane.b32.xlu0 %v849, 64
  %v932 = vpop.permute.xlu0 %931
  %933 = vrot.lane.b32.xlu0 %v852, 64
  %v934 = vpop.permute.xlu0 %933
  %935 = vrot.lane.b32.xlu0 %v855, 64
  %v936 = vpop.permute.xlu0 %935
  %937 = vrot.lane.b32.xlu0 %v858, 64
  %v938 = vpop.permute.xlu0 %937
  %v955 = vsel %vm137, %v699, %v860
  %v956 = vsel %vm137, %v701, %v862
  %v957 = vsel %vm137, %v703, %v864
  %v958 = vsel %vm137, %v705, %v866
  %v959 = vsel %vm137, %v707, %v868
  %v960 = vsel %vm137, %v709, %v870
  %v961 = vsel %vm137, %v711, %v872
  %v962 = vsel %vm137, %v713, %v874
  %v963 = vsel %vm137, %v715, %v876
  %v964 = vsel %vm137, %v717, %v878
  %v965 = vsel %vm137, %v719, %v880
  %v966 = vsel %vm137, %v721, %v882
  %v967 = vsel %vm137, %v723, %v884
  %v968 = vsel %vm137, %v725, %v886
  %v969 = vsel %vm137, %v727, %v888
  %v970 = vsel %vm137, %v729, %v890
  %vm971 = vcmask 523264
  %v972 = vsel %vm971, %v955, %v908
  %v973 = vsel %vm971, %v956, %v910
  %v974 = vsel %vm971, %v957, %v912
  %v975 = vsel %vm971, %v958, %v914
  %v976 = vsel %vm971, %v959, %v916
  %v977 = vsel %vm971, %v960, %v918
  %v978 = vsel %vm971, %v961, %v920
  %v979 = vsel %vm971, %v962, %v922
  %v980 = vsel %vm971, %v963, %v924
  %v981 = vsel %vm971, %v964, %v926
  %v982 = vsel %vm971, %v965, %v928
  %v983 = vsel %vm971, %v966, %v930
  %v984 = vsel %vm971, %v967, %v932
  %v985 = vsel %vm971, %v968, %v934
  %v986 = vsel %vm971, %v969, %v936
  %v987 = vsel %vm971, %v970, %v938
  %v988 = vld [vmem:[%s8] sm:$0xf]
  %v989 = vld [vmem:[%s8 + $0x4] sm:$0xf]
  %v990 = vld [vmem:[%s8 + $0x8] sm:$0xf]
  %v991 = vld [vmem:[%s8 + $0xc] sm:$0xf]
  %v992 = vld [vmem:[%s8 + $0x10] sm:$0xf]
  %v993 = vld [vmem:[%s8 + $0x14] sm:$0xf]
  %v994 = vld [vmem:[%s8 + $0x18] sm:$0xf]
  %v995 = vld [vmem:[%s8 + $0x1c] sm:$0xf]
  %v996 = vld [vmem:[%s8 + $0x20] sm:$0xf]
  %v997 = vld [vmem:[%s8 + $0x24] sm:$0xf]
  %v998 = vld [vmem:[%s8 + $0x28] sm:$0xf]
  %v999 = vld [vmem:[%s8 + $0x2c] sm:$0xf]
  %v1000 = vpack.c.bf16 %v973, %v972
  %v1001 = vpack.c.bf16 %v975, %v974
  %v1002 = vpack.c.bf16 %v977, %v976
  %v1003 = vpack.c.bf16 %v979, %v978
  %v1004 = vpack.c.bf16 %v981, %v980
  %v1005 = vpack.c.bf16 %v983, %v982
  %v1006 = vpack.c.bf16 %v985, %v984
  %v1007 = vpack.c.bf16 %v987, %v986
  %v1008 = vld [vmem:[%s9] sm:$0x1]
  %v1010 = vlaneseq
  %v1011 = vshrl.u32 %v1010, 7
  %v1012 = vsub.s32 0, %v1011
  %v1013 = vrot.slane %v1008, %v1012
  %v1027 = vunpack.c.l.b16 %v988
  %v1028 = vunpack.c.l.b16 %v989
  %v1029 = vunpack.c.l.b16 %v990
  %v1030 = vunpack.c.l.b16 %v991
  %v1031 = vunpack.c.l.b16 %v992
  %v1032 = vunpack.c.l.b16 %v993
  %v1033 = vunpack.c.l.b16 %v994
  %v1034 = vunpack.c.l.b16 %v995
  %v1035 = vunpack.c.l.b16 %v996
  %v1036 = vunpack.c.l.b16 %v997
  %v1037 = vunpack.c.l.b16 %v998
  %v1038 = vunpack.c.l.b16 %v999
  %v1039 = vpack.c.b16 %v1028, %v1027
  %v1040 = vpack.c.b16 %v1030, %v1029
  %v1041 = vpack.c.b16 %v1032, %v1031
  %v1042 = vpack.c.b16 %v1034, %v1033
  %v1043 = vpack.c.b16 %v1036, %v1035
  %v1044 = vpack.c.b16 %v1038, %v1037
  %vm1051 = vcmask 785408
  %v1053 = vsel %vm1051, %v1000, 0
  %v1056 = vsel %vm1051, %v1001, 0
  %v1059 = vsel %vm1051, %v1002, 0
  %v1062 = vsel %vm1051, %v1003, 0
  %v1065 = vsel %vm1051, %v1004, 0
  %v1068 = vsel %vm1051, %v1005, 0
  %v1071 = vsel %vm1051, %v1006, 0
  %v1074 = vsel %vm1051, %v1007, 0
  %1076 = vmatprep.subr.bf16.mxu0 0
  %1077 = vmatpush1.bf16.msra.mxu0 %v1039
  %1078 = vmatprep.subr.bf16.mxu0 0
  %1079 = vmatpush1.bf16.msra.mxu0 %v1040
  %1080 = vmatprep.subr.bf16.mxu0 0
  %1081 = vmatpush1.bf16.msra.mxu0 %v1041
  %1082 = vmatprep.subr.bf16.mxu0 0
  %1083 = vmatpush1.bf16.msra.mxu0 %v1042
  %1084 = vmatprep.subr.bf16.mxu0 0
  %1085 = vmatpush1.bf16.msra.mxu0 %v1043
  %1086 = vmatprep.subr.bf16.mxu0 0
  %1087 = vmatpush1.bf16.msra.mxu0 %v1044
  %1088 = vmatprep.subr.bf16.mxu0 0
  %1089 = vmatpush1.bf16.msra.mxu0 0
  %1090 = vmatprep.subr.bf16.mxu0 0
  %1091 = vmatpush1.bf16.msra.mxu0 0
  %1092 = vmatprep.subr.bf16.mxu0 0
  %1093 = vmatpush1.bf16.msra.mxu0 0
  %1094 = vmatprep.subr.bf16.mxu0 0
  %1095 = vmatpush1.bf16.msra.mxu0 0
  %1096 = vmatprep.subr.bf16.mxu0 0
  %1097 = vmatpush1.bf16.msra.mxu0 0
  %1098 = vmatprep.subr.bf16.mxu0 0
  %1099 = vmatpush1.bf16.msra.mxu0 0
  %1100 = vmatprep.subr.bf16.mxu0 0
  %1101 = vmatpush1.bf16.msra.mxu0 0
  %1102 = vmatprep.subr.bf16.mxu0 0
  %1103 = vmatpush1.bf16.msra.mxu0 0
  %1104 = vmatprep.subr.bf16.mxu0 0
  %1105 = vmatpush1.bf16.msra.mxu0 0
  %1106 = vmatprep.subr.bf16.mxu0 0
  %1107 = vmatpush1.bf16.msra.mxu0 0
  %1108 = vmatprep.mubr.bf16.mxu0 0
  %1109 = vmatmul.mubr.bf16.gmra.mrb[0].mxu0 %v1053
  %v1110 = vpop.f32.mrb[0].mxu0
  %v1111 = vadd.f32 %v1013, %v1110
  %v1112 = vpop.f32.mrb[0].mxu0
  %v1113 = vpop.f32.mrb[0].mxu0
  %v1114 = vadd.f32 %v1013, %v1113
  %v1115 = vpop.f32.mrb[0].mxu0
  %1116 = vmatprep.mubr.bf16.mxu0 0
  %1117 = vmatmul.mubr.bf16.gmra.mrb[0].mxu0 %v1056
  %v1118 = vpop.f32.mrb[0].mxu0
  %v1119 = vadd.f32 %v1013, %v1118
  %v1120 = vpop.f32.mrb[0].mxu0
  %v1121 = vpop.f32.mrb[0].mxu0
  %v1122 = vadd.f32 %v1013, %v1121
  %v1123 = vpop.f32.mrb[0].mxu0
  %1124 = vmatprep.mubr.bf16.mxu0 0
  %1125 = vmatmul.mubr.bf16.gmra.mrb[0].mxu0 %v1059
  %v1126 = vpop.f32.mrb[0].mxu0
  %v1127 = vadd.f32 %v1013, %v1126
  %v1128 = vpop.f32.mrb[0].mxu0
  %v1129 = vpop.f32.mrb[0].mxu0
  %v1130 = vadd.f32 %v1013, %v1129
  %v1131 = vpop.f32.mrb[0].mxu0
  %1132 = vmatprep.mubr.bf16.mxu0 0
  %1133 = vmatmul.mubr.bf16.gmra.mrb[0].mxu0 %v1062
  %v1134 = vpop.f32.mrb[0].mxu0
  %v1135 = vadd.f32 %v1013, %v1134
  %v1136 = vpop.f32.mrb[0].mxu0
  %v1137 = vpop.f32.mrb[0].mxu0
  %v1138 = vadd.f32 %v1013, %v1137
  %v1139 = vpop.f32.mrb[0].mxu0
  %1140 = vmatprep.mubr.bf16.mxu0 0
  %1141 = vmatmul.mubr.bf16.gmra.mrb[0].mxu0 %v1065
  %v1142 = vpop.f32.mrb[0].mxu0
  %v1143 = vadd.f32 %v1013, %v1142
  %v1144 = vpop.f32.mrb[0].mxu0
  %v1145 = vpop.f32.mrb[0].mxu0
  %v1146 = vadd.f32 %v1013, %v1145
  %v1147 = vpop.f32.mrb[0].mxu0
  %1148 = vmatprep.mubr.bf16.mxu0 0
  %1149 = vmatmul.mubr.bf16.gmra.mrb[0].mxu0 %v1068
  %v1150 = vpop.f32.mrb[0].mxu0
  %v1151 = vadd.f32 %v1013, %v1150
  %v1152 = vpop.f32.mrb[0].mxu0
  %v1153 = vpop.f32.mrb[0].mxu0
  %v1154 = vadd.f32 %v1013, %v1153
  %v1155 = vpop.f32.mrb[0].mxu0
  %1156 = vmatprep.mubr.bf16.mxu0 0
  %1157 = vmatmul.mubr.bf16.gmra.mrb[0].mxu0 %v1071
  %v1158 = vpop.f32.mrb[0].mxu0
  %v1159 = vadd.f32 %v1013, %v1158
  %v1160 = vpop.f32.mrb[0].mxu0
  %v1161 = vpop.f32.mrb[0].mxu0
  %v1162 = vadd.f32 %v1013, %v1161
  %v1163 = vpop.f32.mrb[0].mxu0
  %1164 = vmatprep.mubr.bf16.mxu0 0
  %1165 = vmatmul.mubr.bf16.gmra.mrb[0].mxu0 %v1074
  %v1166 = vpop.f32.mrb[0].mxu0
  %v1167 = vadd.f32 %v1013, %v1166
  %v1168 = vpop.f32.mrb[0].mxu0
  %v1169 = vpop.f32.mrb[0].mxu0
  %v1170 = vadd.f32 %v1013, %v1169
  %v1171 = vpop.f32.mrb[0].mxu0
  %1172 = vdwg.mxu0
  %v1173 = vmax.f32 %v1111, 0.0
  %v1174 = vmax.f32 %v1114, 0.0
  %v1175 = vmax.f32 %v1119, 0.0
  %v1176 = vmax.f32 %v1122, 0.0
  %v1177 = vmax.f32 %v1127, 0.0
  %v1178 = vmax.f32 %v1130, 0.0
  %v1179 = vmax.f32 %v1135, 0.0
  %v1180 = vmax.f32 %v1138, 0.0
  %v1181 = vmax.f32 %v1143, 0.0
  %v1182 = vmax.f32 %v1146, 0.0
  %v1183 = vmax.f32 %v1151, 0.0
  %v1184 = vmax.f32 %v1154, 0.0
  %v1185 = vmax.f32 %v1159, 0.0
  %v1186 = vmax.f32 %v1162, 0.0
  %v1187 = vmax.f32 %v1167, 0.0
  %v1188 = vmax.f32 %v1170, 0.0
  %v1189 = vsel %vm137, %v1173, 0.0
  %v1190 = vrot.slane %v1189, 4
  %v1191 = vadd.f32 %v1189, %v1190
  %v1192 = vrot.slane %v1191, 2
  %v1193 = vadd.f32 %v1191, %v1192
  %v1194 = vrot.slane %v1193, 1
  %v1195 = vadd.f32 %v1193, %v1194
  %v1196 = vsel %vm137, %v1174, 0.0
  %v1197 = vrot.slane %v1196, 4
  %v1198 = vadd.f32 %v1196, %v1197
  %v1199 = vrot.slane %v1198, 2
  %v1200 = vadd.f32 %v1198, %v1199
  %v1201 = vrot.slane %v1200, 1
  %v1202 = vadd.f32 %v1200, %v1201
  %v1203 = vsel %vm137, %v1175, 0.0
  %v1204 = vrot.slane %v1203, 4
  %v1205 = vadd.f32 %v1203, %v1204
  %v1206 = vrot.slane %v1205, 2
  %v1207 = vadd.f32 %v1205, %v1206
  %v1208 = vrot.slane %v1207, 1
  %v1209 = vadd.f32 %v1207, %v1208
  %v1210 = vsel %vm137, %v1176, 0.0
  %v1211 = vrot.slane %v1210, 4
  %v1212 = vadd.f32 %v1210, %v1211
  %v1213 = vrot.slane %v1212, 2
  %v1214 = vadd.f32 %v1212, %v1213
  %v1215 = vrot.slane %v1214, 1
  %v1216 = vadd.f32 %v1214, %v1215
  %v1217 = vsel %vm137, %v1177, 0.0
  %v1218 = vrot.slane %v1217, 4
  %v1219 = vadd.f32 %v1217, %v1218
  %v1220 = vrot.slane %v1219, 2
  %v1221 = vadd.f32 %v1219, %v1220
  %v1222 = vrot.slane %v1221, 1
  %v1223 = vadd.f32 %v1221, %v1222
  %v1224 = vsel %vm137, %v1178, 0.0
  %v1225 = vrot.slane %v1224, 4
  %v1226 = vadd.f32 %v1224, %v1225
  %v1227 = vrot.slane %v1226, 2
  %v1228 = vadd.f32 %v1226, %v1227
  %v1229 = vrot.slane %v1228, 1
  %v1230 = vadd.f32 %v1228, %v1229
  %v1231 = vsel %vm137, %v1179, 0.0
  %v1232 = vrot.slane %v1231, 4
  %v1233 = vadd.f32 %v1231, %v1232
  %v1234 = vrot.slane %v1233, 2
  %v1235 = vadd.f32 %v1233, %v1234
  %v1236 = vrot.slane %v1235, 1
  %v1237 = vadd.f32 %v1235, %v1236
  %v1238 = vsel %vm137, %v1180, 0.0
  %v1239 = vrot.slane %v1238, 4
  %v1240 = vadd.f32 %v1238, %v1239
  %v1241 = vrot.slane %v1240, 2
  %v1242 = vadd.f32 %v1240, %v1241
  %v1243 = vrot.slane %v1242, 1
  %v1244 = vadd.f32 %v1242, %v1243
  %v1245 = vsel %vm137, %v1181, 0.0
  %v1246 = vrot.slane %v1245, 4
  %v1247 = vadd.f32 %v1245, %v1246
  %v1248 = vrot.slane %v1247, 2
  %v1249 = vadd.f32 %v1247, %v1248
  %v1250 = vrot.slane %v1249, 1
  %v1251 = vadd.f32 %v1249, %v1250
  %v1252 = vsel %vm137, %v1182, 0.0
  %v1253 = vrot.slane %v1252, 4
  %v1254 = vadd.f32 %v1252, %v1253
  %v1255 = vrot.slane %v1254, 2
  %v1256 = vadd.f32 %v1254, %v1255
  %v1257 = vrot.slane %v1256, 1
  %v1258 = vadd.f32 %v1256, %v1257
  %v1259 = vsel %vm137, %v1183, 0.0
  %v1260 = vrot.slane %v1259, 4
  %v1261 = vadd.f32 %v1259, %v1260
  %v1262 = vrot.slane %v1261, 2
  %v1263 = vadd.f32 %v1261, %v1262
  %v1264 = vrot.slane %v1263, 1
  %v1265 = vadd.f32 %v1263, %v1264
  %v1266 = vsel %vm137, %v1184, 0.0
  %v1267 = vrot.slane %v1266, 4
  %v1268 = vadd.f32 %v1266, %v1267
  %v1269 = vrot.slane %v1268, 2
  %v1270 = vadd.f32 %v1268, %v1269
  %v1271 = vrot.slane %v1270, 1
  %v1272 = vadd.f32 %v1270, %v1271
  %v1273 = vsel %vm137, %v1185, 0.0
  %v1274 = vrot.slane %v1273, 4
  %v1275 = vadd.f32 %v1273, %v1274
  %v1276 = vrot.slane %v1275, 2
  %v1277 = vadd.f32 %v1275, %v1276
  %v1278 = vrot.slane %v1277, 1
  %v1279 = vadd.f32 %v1277, %v1278
  %v1280 = vsel %vm137, %v1186, 0.0
  %v1281 = vrot.slane %v1280, 4
  %v1282 = vadd.f32 %v1280, %v1281
  %v1283 = vrot.slane %v1282, 2
  %v1284 = vadd.f32 %v1282, %v1283
  %v1285 = vrot.slane %v1284, 1
  %v1286 = vadd.f32 %v1284, %v1285
  %v1287 = vsel %vm137, %v1187, 0.0
  %v1288 = vrot.slane %v1287, 4
  %v1289 = vadd.f32 %v1287, %v1288
  %v1290 = vrot.slane %v1289, 2
  %v1291 = vadd.f32 %v1289, %v1290
  %v1292 = vrot.slane %v1291, 1
  %v1293 = vadd.f32 %v1291, %v1292
  %v1294 = vsel %vm137, %v1188, 0.0
  %v1295 = vrot.slane %v1294, 4
  %v1296 = vadd.f32 %v1294, %v1295
  %v1297 = vrot.slane %v1296, 2
  %v1298 = vadd.f32 %v1296, %v1297
  %v1299 = vrot.slane %v1298, 1
  %v1300 = vadd.f32 %v1298, %v1299
  %v1301 = vrcp.pop 8.0
  %v1302 = vmul.f32 %v1195, %v1301
  %v1303 = vmul.f32 %v1202, %v1301
  %v1304 = vmul.f32 %v1209, %v1301
  %v1305 = vmul.f32 %v1216, %v1301
  %v1306 = vmul.f32 %v1223, %v1301
  %v1307 = vmul.f32 %v1230, %v1301
  %v1308 = vmul.f32 %v1237, %v1301
  %v1309 = vmul.f32 %v1244, %v1301
  %v1310 = vmul.f32 %v1251, %v1301
  %v1311 = vmul.f32 %v1258, %v1301
  %v1312 = vmul.f32 %v1265, %v1301
  %v1313 = vmul.f32 %v1272, %v1301
  %v1314 = vmul.f32 %v1279, %v1301
  %v1315 = vmul.f32 %v1286, %v1301
  %v1316 = vmul.f32 %v1293, %v1301
  %v1317 = vmul.f32 %v1300, %v1301
  %v1318 = vld [vmem:[%s10] sm:$0xf]
  %v1319 = vld [vmem:[%s10 + $0x4] sm:$0xf]
  %v1320 = vld [vmem:[%s10 + $0x8] sm:$0xf]
  %v1321 = vld [vmem:[%s10 + $0xc] sm:$0xf]
  %v1322 = vpack.c.bf16 %v1302, %v1302
  %v1323 = vpack.c.bf16 %v1303, %v1303
  %v1324 = vpack.c.bf16 %v1304, %v1304
  %v1325 = vpack.c.bf16 %v1305, %v1305
  %v1326 = vpack.c.bf16 %v1306, %v1306
  %v1327 = vpack.c.bf16 %v1307, %v1307
  %v1328 = vpack.c.bf16 %v1308, %v1308
  %v1329 = vpack.c.bf16 %v1309, %v1309
  %v1330 = vpack.c.bf16 %v1310, %v1310
  %v1331 = vpack.c.bf16 %v1311, %v1311
  %v1332 = vpack.c.bf16 %v1312, %v1312
  %v1333 = vpack.c.bf16 %v1313, %v1313
  %v1334 = vpack.c.bf16 %v1314, %v1314
  %v1335 = vpack.c.bf16 %v1315, %v1315
  %v1336 = vpack.c.bf16 %v1316, %v1316
  %v1337 = vpack.c.bf16 %v1317, %v1317
  %v1338 = vld [vmem:[%s11] sm:$0x1]
  %v1340 = vlaneseq
  %v1341 = vshrl.u32 %v1340, 7
  %v1342 = vsub.s32 0, %v1341
  %v1343 = vrot.slane %v1338, %v1342
  %v1361 = vunpack.c.l.b16 %v1322
  %v1362 = vunpack.c.l.b16 %v1323
  %v1363 = vunpack.c.l.b16 %v1324
  %v1364 = vunpack.c.l.b16 %v1325
  %v1365 = vunpack.c.l.b16 %v1326
  %v1366 = vunpack.c.l.b16 %v1327
  %v1367 = vunpack.c.l.b16 %v1328
  %v1368 = vunpack.c.l.b16 %v1329
  %v1369 = vunpack.c.l.b16 %v1330
  %v1370 = vunpack.c.l.b16 %v1331
  %v1371 = vunpack.c.l.b16 %v1332
  %v1372 = vunpack.c.l.b16 %v1333
  %v1373 = vunpack.c.l.b16 %v1334
  %v1374 = vunpack.c.l.b16 %v1335
  %v1375 = vunpack.c.l.b16 %v1336
  %v1376 = vunpack.c.l.b16 %v1337
  %vm1377 = vcmask 1041409
  %v1378 = vsel %vm1377, %v1362, %v1361
  %vm1379 = vcmask 1042434
  %v1380 = vsel %vm1379, %v1363, %v1378
  %vm1381 = vcmask 1043459
  %v1382 = vsel %vm1381, %v1364, %v1380
  %vm1383 = vcmask 1044484
  %v1384 = vsel %vm1383, %v1365, %v1382
  %vm1385 = vcmask 1045509
  %v1386 = vsel %vm1385, %v1366, %v1384
  %vm1387 = vcmask 1046534
  %v1388 = vsel %vm1387, %v1367, %v1386
  %vm1389 = vcmask 1047559
  %v1390 = vsel %vm1389, %v1368, %v1388
  %v1391 = vsel %vm1377, %v1370, %v1369
  %v1392 = vsel %vm1379, %v1371, %v1391
  %v1393 = vsel %vm1381, %v1372, %v1392
  %v1394 = vsel %vm1383, %v1373, %v1393
  %v1395 = vsel %vm1385, %v1374, %v1394
  %v1396 = vsel %vm1387, %v1375, %v1395
  %v1397 = vsel %vm1389, %v1376, %v1396
  %v1398 = vpack.c.b16 %v1397, %v1390
  %v1403 = vunpack.c.l.b16 %v1318
  %v1404 = vunpack.c.l.b16 %v1319
  %v1405 = vunpack.c.l.b16 %v1320
  %v1406 = vunpack.c.l.b16 %v1321
  %v1407 = vpack.c.b16 %v1404, %v1403
  %v1408 = vpack.c.b16 %v1406, %v1405
  %v1412 = vsel %vm137, %v1398, 0
  %1414 = vmatprep.subr.bf16.mxu0 0
  %1415 = vmatpush1.bf16.msra.mxu0 %v1407
  %1416 = vmatprep.subr.bf16.mxu0 0
  %1417 = vmatpush1.bf16.msra.mxu0 %v1408
  %1418 = vmatprep.subr.bf16.mxu0 0
  %1419 = vmatpush1.bf16.msra.mxu0 0
  %1420 = vmatprep.subr.bf16.mxu0 0
  %1421 = vmatpush1.bf16.msra.mxu0 0
  %1422 = vmatprep.subr.bf16.mxu0 0
  %1423 = vmatpush1.bf16.msra.mxu0 0
  %1424 = vmatprep.subr.bf16.mxu0 0
  %1425 = vmatpush1.bf16.msra.mxu0 0
  %1426 = vmatprep.subr.bf16.mxu0 0
  %1427 = vmatpush1.bf16.msra.mxu0 0
  %1428 = vmatprep.subr.bf16.mxu0 0
  %1429 = vmatpush1.bf16.msra.mxu0 0
  %1430 = vmatprep.subr.bf16.mxu0 0
  %1431 = vmatpush1.bf16.msra.mxu0 0
  %1432 = vmatprep.subr.bf16.mxu0 0
  %1433 = vmatpush1.bf16.msra.mxu0 0
  %1434 = vmatprep.subr.bf16.mxu0 0
  %1435 = vmatpush1.bf16.msra.mxu0 0
  %1436 = vmatprep.subr.bf16.mxu0 0
  %1437 = vmatpush1.bf16.msra.mxu0 0
  %1438 = vmatprep.subr.bf16.mxu0 0
  %1439 = vmatpush1.bf16.msra.mxu0 0
  %1440 = vmatprep.subr.bf16.mxu0 0
  %1441 = vmatpush1.bf16.msra.mxu0 0
  %1442 = vmatprep.subr.bf16.mxu0 0
  %1443 = vmatpush1.bf16.msra.mxu0 0
  %1444 = vmatprep.subr.bf16.mxu0 0
  %1445 = vmatpush1.bf16.msra.mxu0 0
  %1446 = vmatprep.mubr.bf16.mxu0 0
  %1447 = vmatmul.mubr.bf16.gmra.mrb[0].mxu0 %v1412
  %v1448 = vpop.f32.mrb[0].mxu0
  %v1449 = vadd.f32 %v1343, %v1448
  %v1450 = vpop.f32.mrb[0].mxu0
  %v1451 = vpop.f32.mrb[0].mxu0
  %v1452 = vadd.f32 %v1343, %v1451
  %v1453 = vpop.f32.mrb[0].mxu0
  %1454 = vdwg.mxu0
  %1457 = vrot.lane.b32.xlu0 %v1449, 32
  %v1458 = vpop.permute.xlu0 %1457
  %1459 = vrot.lane.b32.xlu0 %v1452, 32
  %v1460 = vpop.permute.xlu0 %1459
  %v1463 = vsel %vm137, %v176, %v1458
  %v1464 = vsel %vm137, %v179, %v1460
  %1465 = vst.msk [vmem:[%s12] sm:$0xff] %vm971, %v1463
  %1466 = vst.msk [vmem:[%s12 + $0x8] sm:$0xff] %vm971, %v1464
  // Predicated region
  $region50: #{forward.4} parent=0 // pred_check
    _
  $region51: #{forward.4} parent=0 // pred_check_branch
    %1468 = sbr.rel (0) target = $region53
  $region52: #{forward.4} parent=0 // pred_region
    _
  $region53: #{forward.4} parent=0 // pred_fallthru
    _
  // Predicated region
  $region54: #{forward.4} parent=0 // pred_check
    _
  $region55: #{forward.4} parent=0 // pred_check_branch
    %1470 = sbr.rel (0) target = $region57
  $region56: #{forward.4} parent=0 // pred_region
    _
  $region57: #{forward.4} parent=0 // pred_fallthru
    _

// kernel: forward.3
$region0: #{forward.3}
  #allocation0 [shape = 'u32[]', space=smem, size = 0x4, offset = 0x4, fixed_abs, tag = 'smem constant byte address 0x4 - core index']
  #allocation1 [shape = 'u32[144,128]{1,0:T(1,128)}', space=vmem, size = 0x12000, scoped, tag = 'internal scratch']
  #allocation2 [shape = 'f32[8,10,10,32]{3,2,1,0:T(8,128)}', space=vmem, size = 0xa0000, scoped, tag = 'scratch operand']
  %s0 = inlined_call_operand.vmem [shape: f32[8,14], index: 0, kind: input, shape index: {}]
  %s1 = inlined_call_operand.vmem [shape: f32[8,10,10,7], index: 1, kind: input, shape index: {}]
  %s2 = inlined_call_operand.vmem [shape: bf16[14,32], index: 2, kind: input, shape index: {}]
  %s3 = inlined_call_operand.vmem [shape: f32[1,32], index: 3, kind: input, shape index: {}]
  %s4 = inlined_call_operand.vmem [shape: bf16[32,32], index: 4, kind: input, shape index: {}]
  %s5 = inlined_call_operand.vmem [shape: f32[1,32], index: 5, kind: input, shape index: {}]
  %s6 = inlined_call_operand.vmem [shape: bf16[63,32], index: 6, kind: input, shape index: {}]
  %s7 = inlined_call_operand.vmem [shape: f32[1,32], index: 7, kind: input, shape index: {}]
  %s8 = inlined_call_operand.vmem [shape: bf16[288,32], index: 8, kind: input, shape index: {}]
  %s9 = inlined_call_operand.vmem [shape: f32[1,32], index: 9, kind: input, shape index: {}]
  %s10 = inlined_call_operand.vmem [shape: bf16[32,32], index: 10, kind: input, shape index: {}]
  %s11 = inlined_call_operand.vmem [shape: f32[1,32], index: 11, kind: input, shape index: {}]
  %s12 = inlined_call_operand.vmem [shape: f32[8,64], index: 12, kind: output, shape index: {}]
  %s13 = sld [smem:[#allocation0]]
  $region58: #{forward.3} parent=0
    _
  %s15 = ssub.s32 1, %s13
  %s16 = scalar_select 0, %s15, %s13
  // Predicated region
  $region2: #{forward.3} parent=0 // pred_check
    _
  $region3: #{forward.3} parent=0 // pred_check_branch
    %18 = sbr.rel (0) target = $region5
  $region4: #{forward.3} parent=0 // pred_region
    _
  $region5: #{forward.3} parent=0 // pred_fallthru
    _
  // Predicated region
  $region6: #{forward.3} parent=0 // pred_check
    _
  $region7: #{forward.3} parent=0 // pred_check_branch
    %20 = sbr.rel (0) target = $region9
  $region8: #{forward.3} parent=0 // pred_region
    _
  $region9: #{forward.3} parent=0 // pred_fallthru
    _
  // Predicated region
  $region10: #{forward.3} parent=0 // pred_check
    _
  $region11: #{forward.3} parent=0 // pred_check_branch
    %22 = sbr.rel (0) target = $region13
  $region12: #{forward.3} parent=0 // pred_region
    _
  $region13: #{forward.3} parent=0 // pred_fallthru
    _
  // Predicated region
  $region14: #{forward.3} parent=0 // pred_check
    _
  $region15: #{forward.3} parent=0 // pred_check_branch
    %24 = sbr.rel (0) target = $region17
  $region16: #{forward.3} parent=0 // pred_region
    _
  $region17: #{forward.3} parent=0 // pred_fallthru
    _
  // Predicated region
  $region18: #{forward.3} parent=0 // pred_check
    _
  $region19: #{forward.3} parent=0 // pred_check_branch
    %26 = sbr.rel (0) target = $region21
  $region20: #{forward.3} parent=0 // pred_region
    _
  $region21: #{forward.3} parent=0 // pred_fallthru
    _
  // Predicated region
  $region22: #{forward.3} parent=0 // pred_check
    _
  $region23: #{forward.3} parent=0 // pred_check_branch
    %28 = sbr.rel (0) target = $region25
  $region24: #{forward.3} parent=0 // pred_region
    _
  $region25: #{forward.3} parent=0 // pred_fallthru
    _
  // Predicated region
  $region26: #{forward.3} parent=0 // pred_check
    _
  $region27: #{forward.3} parent=0 // pred_check_branch
    %30 = sbr.rel (0) target = $region29
  $region28: #{forward.3} parent=0 // pred_region
    _
  $region29: #{forward.3} parent=0 // pred_fallthru
    _
  // Predicated region
  $region30: #{forward.3} parent=0 // pred_check
    _
  $region31: #{forward.3} parent=0 // pred_check_branch
    %32 = sbr.rel (0) target = $region33
  $region32: #{forward.3} parent=0 // pred_region
    _
  $region33: #{forward.3} parent=0 // pred_fallthru
    _
  // Predicated region
  $region34: #{forward.3} parent=0 // pred_check
    _
  $region35: #{forward.3} parent=0 // pred_check_branch
    %34 = sbr.rel (0) target = $region37
  $region36: #{forward.3} parent=0 // pred_region
    _
  $region37: #{forward.3} parent=0 // pred_fallthru
    _
  // Predicated region
  $region38: #{forward.3} parent=0 // pred_check
    _
  $region39: #{forward.3} parent=0 // pred_check_branch
    %36 = sbr.rel (0) target = $region41
  $region40: #{forward.3} parent=0 // pred_region
    _
  $region41: #{forward.3} parent=0 // pred_fallthru
    _
  // Predicated region
  $region42: #{forward.3} parent=0 // pred_check
    _
  $region43: #{forward.3} parent=0 // pred_check_branch
    %38 = sbr.rel (0) target = $region45
  $region44: #{forward.3} parent=0 // pred_region
    _
  $region45: #{forward.3} parent=0 // pred_fallthru
    _
  // Predicated region
  $region46: #{forward.3} parent=0 // pred_check
    _
  $region47: #{forward.3} parent=0 // pred_check_branch
    %40 = sbr.rel (0) target = $region49
  $region48: #{forward.3} parent=0 // pred_region
    _
  $region49: #{forward.3} parent=0 // pred_fallthru
    _
  %v42 = vld [vmem:[%s0] sm:$0xff]
  %v43 = vld [vmem:[%s2] sm:$0xf]
  %v44 = vld [vmem:[%s2 + $0x4] sm:$0x7]
  %v45 = vpack.c.bf16 %v42, %v42
  %v46 = vld [vmem:[%s3] sm:$0x1]
  %v48 = vlaneseq
  %v49 = vshrl.u32 %v48, 7
  %v50 = vsub.s32 0, %v49
  %v51 = vrot.slane %v46, %v50
  %v55 = vunpack.c.l.b16 %v43
  %v56 = vunpack.c.l.b16 %v44
  %v57 = vpack.c.b16 %v56, %v55
  %vm58 = vcmask 113664
  %v60 = vsel %vm58, %v45, 0
  %vm62 = vcmask 1046528
  %v64 = vsel %vm62, %v57, 0
  %66 = vmatprep.subr.bf16.mxu0 0
  %67 = vmatpush1.bf16.msra.mxu0 %v64
  %68 = vmatprep.subr.bf16.mxu0 0
  %69 = vmatpush1.bf16.msra.mxu0 0
  %70 = vmatprep.subr.bf16.mxu0 0
  %71 = vmatpush1.bf16.msra.mxu0 0
  %72 = vmatprep.subr.bf16.mxu0 0
  %73 = vmatpush1.bf16.msra.mxu0 0
  %74 = vmatprep.subr.bf16.mxu0 0
  %75 = vmatpush1.bf16.msra.mxu0 0
  %76 = vmatprep.subr.bf16.mxu0 0
  %77 = vmatpush1.bf16.msra.mxu0 0
  %78 = vmatprep.subr.bf16.mxu0 0
  %79 = vmatpush1.bf16.msra.mxu0 0
  %80 = vmatprep.subr.bf16.mxu0 0
  %81 = vmatpush1.bf16.msra.mxu0 0
  %82 = vmatprep.subr.bf16.mxu0 0
  %83 = vmatpush1.bf16.msra.mxu0 0
  %84 = vmatprep.subr.bf16.mxu0 0
  %85 = vmatpush1.bf16.msra.mxu0 0
  %86 = vmatprep.subr.bf16.mxu0 0
  %87 = vmatpush1.bf16.msra.mxu0 0
  %88 = vmatprep.subr.bf16.mxu0 0
  %89 = vmatpush1.bf16.msra.mxu0 0
  %90 = vmatprep.subr.bf16.mxu0 0
  %91 = vmatpush1.bf16.msra.mxu0 0
  %92 = vmatprep.subr.bf16.mxu0 0
  %93 = vmatpush1.bf16.msra.mxu0 0
  %94 = vmatprep.subr.bf16.mxu0 0
  %95 = vmatpush1.bf16.msra.mxu0 0
  %96 = vmatprep.subr.bf16.mxu0 0
  %97 = vmatpush1.bf16.msra.mxu0 0
  %98 = vmatprep.mubr.bf16.mxu0 0
  %99 = vmatmul.mubr.bf16.gmra.mrb[0].mxu0 %v60
  %v100 = vpop.f32.mrb[0].mxu0
  %v101 = vadd.f32 %v51, %v100
  %v102 = vpop.f32.mrb[0].mxu0
  %v103 = vpop.f32.mrb[0].mxu0
  %v104 = vpop.f32.mrb[0].mxu0
  %105 = vdwg.mxu0
  %v106 = vmax.f32 %v101, 0.0
  %v107 = vld [vmem:[%s4] sm:$0xf]
  %v108 = vld [vmem:[%s4 + $0x4] sm:$0xf]
  %v109 = vld [vmem:[%s4 + $0x8] sm:$0xf]
  %v110 = vld [vmem:[%s4 + $0xc] sm:$0xf]
  %v111 = vpack.c.bf16 %v106, %v106
  %v112 = vld [vmem:[%s5] sm:$0x1]
  %v114 = vlaneseq
  %v115 = vshrl.u32 %v114, 7
  %v116 = vsub.s32 0, %v115
  %v117 = vrot.slane %v112, %v116
  %v123 = vunpack.c.l.b16 %v107
  %v124 = vunpack.c.l.b16 %v108
  %v125 = vunpack.c.l.b16 %v109
  %v126 = vunpack.c.l.b16 %v110
  %v127 = vpack.c.b16 %v124, %v123
  %v128 = vpack.c.b16 %v126, %v125
  %vm131 = vcmask 261120
  %v133 = vsel %vm131, %v111, 0
  %135 = vmatprep.subr.bf16.mxu0 0
  %136 = vmatpush1.bf16.msra.mxu0 %v127
  %137 = vmatprep.subr.bf16.mxu0 0
  %138 = vmatpush1.bf16.msra.mxu0 %v128
  %139 = vmatprep.subr.bf16.mxu0 0
  %140 = vmatpush1.bf16.msra.mxu0 0
  %141 = vmatprep.subr.bf16.mxu0 0
  %142 = vmatpush1.bf16.msra.mxu0 0
  %143 = vmatprep.subr.bf16.mxu0 0
  %144 = vmatpush1.bf16.msra.mxu0 0
  %145 = vmatprep.subr.bf16.mxu0 0
  %146 = vmatpush1.bf16.msra.mxu0 0
  %147 = vmatprep.subr.bf16.mxu0 0
  %148 = vmatpush1.bf16.msra.mxu0 0
  %149 = vmatprep.subr.bf16.mxu0 0
  %150 = vmatpush1.bf16.msra.mxu0 0
  %151 = vmatprep.subr.bf16.mxu0 0
  %152 = vmatpush1.bf16.msra.mxu0 0
  %153 = vmatprep.subr.bf16.mxu0 0
  %154 = vmatpush1.bf16.msra.mxu0 0
  %155 = vmatprep.subr.bf16.mxu0 0
  %156 = vmatpush1.bf16.msra.mxu0 0
  %157 = vmatprep.subr.bf16.mxu0 0
  %158 = vmatpush1.bf16.msra.mxu0 0
  %159 = vmatprep.subr.bf16.mxu0 0
  %160 = vmatpush1.bf16.msra.mxu0 0
  %161 = vmatprep.subr.bf16.mxu0 0
  %162 = vmatpush1.bf16.msra.mxu0 0
  %163 = vmatprep.subr.bf16.mxu0 0
  %164 = vmatpush1.bf16.msra.mxu0 0
  %165 = vmatprep.subr.bf16.mxu0 0
  %166 = vmatpush1.bf16.msra.mxu0 0
  %167 = vmatprep.mubr.bf16.mxu0 0
  %168 = vmatmul.mubr.bf16.gmra.mrb[0].mxu0 %v133
  %v169 = vpop.f32.mrb[0].mxu0
  %v170 = vadd.f32 %v117, %v169
  %v171 = vpop.f32.mrb[0].mxu0
  %v172 = vpop.f32.mrb[0].mxu0
  %v173 = vpop.f32.mrb[0].mxu0
  %174 = vdwg.mxu0
  %v175 = vld [vmem:[%s1] sm:$0xff]
  %v176 = vld [vmem:[%s1 + $0x8] sm:$0x3]
  %v177 = vld [vmem:[%s1 + $0x10] sm:$0xff]
  %v178 = vld [vmem:[%s1 + $0x18] sm:$0x3]
  %v179 = vld [vmem:[%s1 + $0x20] sm:$0xff]
  %v180 = vld [vmem:[%s1 + $0x28] sm:$0x3]
  %v181 = vld [vmem:[%s1 + $0x30] sm:$0xff]
  %v182 = vld [vmem:[%s1 + $0x38] sm:$0x3]
  %v183 = vld [vmem:[%s1 + $0x40] sm:$0xff]
  %v184 = vld [vmem:[%s1 + $0x48] sm:$0x3]
  %v185 = vld [vmem:[%s1 + $0x50] sm:$0xff]
  %v186 = vld [vmem:[%s1 + $0x58] sm:$0x3]
  %v187 = vld [vmem:[%s1 + $0x60] sm:$0xff]
  %v188 = vld [vmem:[%s1 + $0x68] sm:$0x3]
  %v189 = vld [vmem:[%s1 + $0x70] sm:$0xff]
  %v190 = vld [vmem:[%s1 + $0x78] sm:$0x3]
  %v191 = vld [vmem:[%s1 + $0x80] sm:$0xff]
  %v192 = vld [vmem:[%s1 + $0x88] sm:$0x3]
  %v193 = vld [vmem:[%s1 + $0x90] sm:$0xff]
  %v194 = vld [vmem:[%s1 + $0x98] sm:$0x3]
  %v195 = vld [vmem:[%s1 + $0xa0] sm:$0xff]
  %v196 = vld [vmem:[%s1 + $0xa8] sm:$0x3]
  %v197 = vld [vmem:[%s1 + $0xb0] sm:$0xff]
  %v198 = vld [vmem:[%s1 + $0xb8] sm:$0x3]
  %v199 = vld [vmem:[%s1 + $0xc0] sm:$0xff]
  %v200 = vld [vmem:[%s1 + $0xc8] sm:$0x3]
  %v201 = vld [vmem:[%s1 + $0xd0] sm:$0xff]
  %v202 = vld [vmem:[%s1 + $0xd8] sm:$0x3]
  %v203 = vld [vmem:[%s1 + $0xe0] sm:$0xff]
  %v204 = vld [vmem:[%s1 + $0xe8] sm:$0x3]
  %v205 = vld [vmem:[%s1 + $0xf0] sm:$0xff]
  %v206 = vld [vmem:[%s1 + $0xf8] sm:$0x3]
  %v207 = vld [vmem:[%s1 + $0x100] sm:$0xff]
  %v208 = vld [vmem:[%s1 + $0x108] sm:$0x3]
  %v209 = vld [vmem:[%s1 + $0x110] sm:$0xff]
  %v210 = vld [vmem:[%s1 + $0x118] sm:$0x3]
  %v211 = vld [vmem:[%s1 + $0x120] sm:$0xff]
  %v212 = vld [vmem:[%s1 + $0x128] sm:$0x3]
  %v213 = vld [vmem:[%s1 + $0x130] sm:$0xff]
  %v214 = vld [vmem:[%s1 + $0x138] sm:$0x3]
  %v215 = vld [vmem:[%s1 + $0x140] sm:$0xff]
  %v216 = vld [vmem:[%s1 + $0x148] sm:$0x3]
  %v217 = vld [vmem:[%s1 + $0x150] sm:$0xff]
  %v218 = vld [vmem:[%s1 + $0x158] sm:$0x3]
  %v219 = vld [vmem:[%s1 + $0x160] sm:$0xff]
  %v220 = vld [vmem:[%s1 + $0x168] sm:$0x3]
  %v221 = vld [vmem:[%s1 + $0x170] sm:$0xff]
  %v222 = vld [vmem:[%s1 + $0x178] sm:$0x3]
  %v223 = vld [vmem:[%s1 + $0x180] sm:$0xff]
  %v224 = vld [vmem:[%s1 + $0x188] sm:$0x3]
  %v225 = vld [vmem:[%s1 + $0x190] sm:$0xff]
  %v226 = vld [vmem:[%s1 + $0x198] sm:$0x3]
  %v227 = vld [vmem:[%s1 + $0x1a0] sm:$0xff]
  %v228 = vld [vmem:[%s1 + $0x1a8] sm:$0x3]
  %v229 = vld [vmem:[%s1 + $0x1b0] sm:$0xff]
  %v230 = vld [vmem:[%s1 + $0x1b8] sm:$0x3]
  %v231 = vld [vmem:[%s1 + $0x1c0] sm:$0xff]
  %v232 = vld [vmem:[%s1 + $0x1c8] sm:$0x3]
  %v233 = vld [vmem:[%s1 + $0x1d0] sm:$0xff]
  %v234 = vld [vmem:[%s1 + $0x1d8] sm:$0x3]
  %v235 = vld [vmem:[%s1 + $0x1e0] sm:$0xff]
  %v236 = vld [vmem:[%s1 + $0x1e8] sm:$0x3]
  %v237 = vld [vmem:[%s1 + $0x1f0] sm:$0xff]
  %v238 = vld [vmem:[%s1 + $0x1f8] sm:$0x3]
  %v239 = vld [vmem:[%s1 + $0x200] sm:$0xff]
  %v240 = vld [vmem:[%s1 + $0x208] sm:$0x3]
  %v241 = vld [vmem:[%s1 + $0x210] sm:$0xff]
  %v242 = vld [vmem:[%s1 + $0x218] sm:$0x3]
  %v243 = vld [vmem:[%s1 + $0x220] sm:$0xff]
  %v244 = vld [vmem:[%s1 + $0x228] sm:$0x3]
  %v245 = vld [vmem:[%s1 + $0x230] sm:$0xff]
  %v246 = vld [vmem:[%s1 + $0x238] sm:$0x3]
  %v247 = vld [vmem:[%s1 + $0x240] sm:$0xff]
  %v248 = vld [vmem:[%s1 + $0x248] sm:$0x3]
  %v249 = vld [vmem:[%s1 + $0x250] sm:$0xff]
  %v250 = vld [vmem:[%s1 + $0x258] sm:$0x3]
  %v251 = vld [vmem:[%s1 + $0x260] sm:$0xff]
  %v252 = vld [vmem:[%s1 + $0x268] sm:$0x3]
  %v253 = vld [vmem:[%s1 + $0x270] sm:$0xff]
  %v254 = vld [vmem:[%s1 + $0x278] sm:$0x3]
  %v255 = vld [vmem:[%s1 + $0x280] sm:$0xff]
  %v256 = vld [vmem:[%s1 + $0x288] sm:$0x3]
  %v257 = vld [vmem:[%s1 + $0x290] sm:$0xff]
  %v258 = vld [vmem:[%s1 + $0x298] sm:$0x3]
  %v259 = vld [vmem:[%s1 + $0x2a0] sm:$0xff]
  %v260 = vld [vmem:[%s1 + $0x2a8] sm:$0x3]
  %v261 = vld [vmem:[%s1 + $0x2b0] sm:$0xff]
  %v262 = vld [vmem:[%s1 + $0x2b8] sm:$0x3]
  %v263 = vld [vmem:[%s1 + $0x2c0] sm:$0xff]
  %v264 = vld [vmem:[%s1 + $0x2c8] sm:$0x3]
  %v265 = vld [vmem:[%s1 + $0x2d0] sm:$0xff]
  %v266 = vld [vmem:[%s1 + $0x2d8] sm:$0x3]
  %v267 = vld [vmem:[%s1 + $0x2e0] sm:$0xff]
  %v268 = vld [vmem:[%s1 + $0x2e8] sm:$0x3]
  %v269 = vld [vmem:[%s1 + $0x2f0] sm:$0xff]
  %v270 = vld [vmem:[%s1 + $0x2f8] sm:$0x3]
  %v271 = vld [vmem:[%s1 + $0x300] sm:$0xff]
  %v272 = vld [vmem:[%s1 + $0x308] sm:$0x3]
  %v273 = vld [vmem:[%s1 + $0x310] sm:$0xff]
  %v274 = vld [vmem:[%s1 + $0x318] sm:$0x3]
  %v275 = vld [vmem:[%s1 + $0x320] sm:$0xff]
  %v276 = vld [vmem:[%s1 + $0x328] sm:$0x3]
  %v277 = vld [vmem:[%s1 + $0x330] sm:$0xff]
  %v278 = vld [vmem:[%s1 + $0x338] sm:$0x3]
  %v279 = vld [vmem:[%s1 + $0x340] sm:$0xff]
  %v280 = vld [vmem:[%s1 + $0x348] sm:$0x3]
  %v281 = vld [vmem:[%s1 + $0x350] sm:$0xff]
  %v282 = vld [vmem:[%s1 + $0x358] sm:$0x3]
  %v283 = vld [vmem:[%s1 + $0x360] sm:$0xff]
  %v284 = vld [vmem:[%s1 + $0x368] sm:$0x3]
  %v285 = vld [vmem:[%s1 + $0x370] sm:$0xff]
  %v286 = vld [vmem:[%s1 + $0x378] sm:$0x3]
  %v287 = vld [vmem:[%s1 + $0x380] sm:$0xff]
  %v288 = vld [vmem:[%s1 + $0x388] sm:$0x3]
  %v289 = vld [vmem:[%s1 + $0x390] sm:$0xff]
  %v290 = vld [vmem:[%s1 + $0x398] sm:$0x3]
  %v291 = vld [vmem:[%s1 + $0x3a0] sm:$0xff]
  %v292 = vld [vmem:[%s1 + $0x3a8] sm:$0x3]
  %v293 = vld [vmem:[%s1 + $0x3b0] sm:$0xff]
  %v294 = vld [vmem:[%s1 + $0x3b8] sm:$0x3]
  %v295 = vld [vmem:[%s1 + $0x3c0] sm:$0xff]
  %v296 = vld [vmem:[%s1 + $0x3c8] sm:$0x3]
  %v297 = vld [vmem:[%s1 + $0x3d0] sm:$0xff]
  %v298 = vld [vmem:[%s1 + $0x3d8] sm:$0x3]
  %v299 = vld [vmem:[%s1 + $0x3e0] sm:$0xff]
  %v300 = vld [vmem:[%s1 + $0x3e8] sm:$0x3]
  %v301 = vld [vmem:[%s1 + $0x3f0] sm:$0xff]
  %v302 = vld [vmem:[%s1 + $0x3f8] sm:$0x3]
  %v303 = vld [vmem:[%s1 + $0x400] sm:$0xff]
  %v304 = vld [vmem:[%s1 + $0x408] sm:$0x3]
  %v305 = vld [vmem:[%s1 + $0x410] sm:$0xff]
  %v306 = vld [vmem:[%s1 + $0x418] sm:$0x3]
  %v307 = vld [vmem:[%s1 + $0x420] sm:$0xff]
  %v308 = vld [vmem:[%s1 + $0x428] sm:$0x3]
  %v309 = vld [vmem:[%s1 + $0x430] sm:$0xff]
  %v310 = vld [vmem:[%s1 + $0x438] sm:$0x3]
  %v311 = vld [vmem:[%s1 + $0x440] sm:$0xff]
  %v312 = vld [vmem:[%s1 + $0x448] sm:$0x3]
  %v313 = vld [vmem:[%s1 + $0x450] sm:$0xff]
  %v314 = vld [vmem:[%s1 + $0x458] sm:$0x3]
  %v315 = vld [vmem:[%s1 + $0x460] sm:$0xff]
  %v316 = vld [vmem:[%s1 + $0x468] sm:$0x3]
  %v317 = vld [vmem:[%s1 + $0x470] sm:$0xff]
  %v318 = vld [vmem:[%s1 + $0x478] sm:$0x3]
  %v319 = vld [vmem:[%s1 + $0x480] sm:$0xff]
  %v320 = vld [vmem:[%s1 + $0x488] sm:$0x3]
  %v321 = vld [vmem:[%s1 + $0x490] sm:$0xff]
  %v322 = vld [vmem:[%s1 + $0x498] sm:$0x3]
  %v323 = vld [vmem:[%s1 + $0x4a0] sm:$0xff]
  %v324 = vld [vmem:[%s1 + $0x4a8] sm:$0x3]
  %v325 = vld [vmem:[%s1 + $0x4b0] sm:$0xff]
  %v326 = vld [vmem:[%s1 + $0x4b8] sm:$0x3]
  %v327 = vld [vmem:[%s1 + $0x4c0] sm:$0xff]
  %v328 = vld [vmem:[%s1 + $0x4c8] sm:$0x3]
  %v329 = vld [vmem:[%s1 + $0x4d0] sm:$0xff]
  %v330 = vld [vmem:[%s1 + $0x4d8] sm:$0x3]
  %v331 = vld [vmem:[%s1 + $0x4e0] sm:$0xff]
  %v332 = vld [vmem:[%s1 + $0x4e8] sm:$0x3]
  %v333 = vld [vmem:[%s1 + $0x4f0] sm:$0xff]
  %v334 = vld [vmem:[%s1 + $0x4f8] sm:$0x3]
  %v463 = vrot.slane %v175, 1
  %v464 = vrot.slane %v176, 1
  %v465 = vsel %vm62, %v463, %v464
  %v466 = vrot.slane %v177, 1
  %v467 = vrot.slane %v178, 1
  %v468 = vsel %vm62, %v466, %v467
  %v469 = vrot.slane %v179, 1
  %v470 = vrot.slane %v180, 1
  %v471 = vsel %vm62, %v469, %v470
  %v472 = vrot.slane %v181, 1
  %v473 = vrot.slane %v182, 1
  %v474 = vsel %vm62, %v472, %v473
  %v475 = vrot.slane %v183, 1
  %v476 = vrot.slane %v184, 1
  %v477 = vsel %vm62, %v475, %v476
  %v478 = vrot.slane %v185, 1
  %v479 = vrot.slane %v186, 1
  %v480 = vsel %vm62, %v478, %v479
  %v481 = vrot.slane %v187, 1
  %v482 = vrot.slane %v188, 1
  %v483 = vsel %vm62, %v481, %v482
  %v484 = vrot.slane %v189, 1
  %v485 = vrot.slane %v190, 1
  %v486 = vsel %vm62, %v484, %v485
  %v487 = vrot.slane %v195, 1
  %v488 = vrot.slane %v196, 1
  %v489 = vsel %vm62, %v487, %v488
  %v490 = vrot.slane %v197, 1
  %v491 = vrot.slane %v198, 1
  %v492 = vsel %vm62, %v490, %v491
  %v493 = vrot.slane %v199, 1
  %v494 = vrot.slane %v200, 1
  %v495 = vsel %vm62, %v493, %v494
  %v496 = vrot.slane %v201, 1
  %v497 = vrot.slane %v202, 1
  %v498 = vsel %vm62, %v496, %v497
  %v499 = vrot.slane %v203, 1
  %v500 = vrot.slane %v204, 1
  %v501 = vsel %vm62, %v499, %v500
  %v502 = vrot.slane %v205, 1
  %v503 = vrot.slane %v206, 1
  %v504 = vsel %vm62, %v502, %v503
  %v505 = vrot.slane %v207, 1
  %v506 = vrot.slane %v208, 1
  %v507 = vsel %vm62, %v505, %v506
  %v508 = vrot.slane %v209, 1
  %v509 = vrot.slane %v210, 1
  %v510 = vsel %vm62, %v508, %v509
  %v511 = vrot.slane %v215, 1
  %v512 = vrot.slane %v216, 1
  %v513 = vsel %vm62, %v511, %v512
  %v514 = vrot.slane %v217, 1
  %v515 = vrot.slane %v218, 1
  %v516 = vsel %vm62, %v514, %v515
  %v517 = vrot.slane %v219, 1
  %v518 = vrot.slane %v220, 1
  %v519 = vsel %vm62, %v517, %v518
  %v520 = vrot.slane %v221, 1
  %v521 = vrot.slane %v222, 1
  %v522 = vsel %vm62, %v520, %v521
  %v523 = vrot.slane %v223, 1
  %v524 = vrot.slane %v224, 1
  %v525 = vsel %vm62, %v523, %v524
  %v526 = vrot.slane %v225, 1
  %v527 = vrot.slane %v226, 1
  %v528 = vsel %vm62, %v526, %v527
  %v529 = vrot.slane %v227, 1
  %v530 = vrot.slane %v228, 1
  %v531 = vsel %vm62, %v529, %v530
  %v532 = vrot.slane %v229, 1
  %v533 = vrot.slane %v230, 1
  %v534 = vsel %vm62, %v532, %v533
  %v535 = vrot.slane %v235, 1
  %v536 = vrot.slane %v236, 1
  %v537 = vsel %vm62, %v535, %v536
  %v538 = vrot.slane %v237, 1
  %v539 = vrot.slane %v238, 1
  %v540 = vsel %vm62, %v538, %v539
  %v541 = vrot.slane %v239, 1
  %v542 = vrot.slane %v240, 1
  %v543 = vsel %vm62, %v541, %v542
  %v544 = vrot.slane %v241, 1
  %v545 = vrot.slane %v242, 1
  %v546 = vsel %vm62, %v544, %v545
  %v547 = vrot.slane %v243, 1
  %v548 = vrot.slane %v244, 1
  %v549 = vsel %vm62, %v547, %v548
  %v550 = vrot.slane %v245, 1
  %v551 = vrot.slane %v246, 1
  %v552 = vsel %vm62, %v550, %v551
  %v553 = vrot.slane %v247, 1
  %v554 = vrot.slane %v248, 1
  %v555 = vsel %vm62, %v553, %v554
  %v556 = vrot.slane %v249, 1
  %v557 = vrot.slane %v250, 1
  %v558 = vsel %vm62, %v556, %v557
  %v559 = vrot.slane %v255, 1
  %v560 = vrot.slane %v256, 1
  %v561 = vsel %vm62, %v559, %v560
  %v562 = vrot.slane %v257, 1
  %v563 = vrot.slane %v258, 1
  %v564 = vsel %vm62, %v562, %v563
  %v565 = vrot.slane %v259, 1
  %v566 = vrot.slane %v260, 1
  %v567 = vsel %vm62, %v565, %v566
  %v568 = vrot.slane %v261, 1
  %v569 = vrot.slane %v262, 1
  %v570 = vsel %vm62, %v568, %v569
  %v571 = vrot.slane %v263, 1
  %v572 = vrot.slane %v264, 1
  %v573 = vsel %vm62, %v571, %v572
  %v574 = vrot.slane %v265, 1
  %v575 = vrot.slane %v266, 1
  %v576 = vsel %vm62, %v574, %v575
  %v577 = vrot.slane %v267, 1
  %v578 = vrot.slane %v268, 1
  %v579 = vsel %vm62, %v577, %v578
  %v580 = vrot.slane %v269, 1
  %v581 = vrot.slane %v270, 1
  %v582 = vsel %vm62, %v580, %v581
  %v583 = vrot.slane %v275, 1
  %v584 = vrot.slane %v276, 1
  %v585 = vsel %vm62, %v583, %v584
  %v586 = vrot.slane %v277, 1
  %v587 = vrot.slane %v278, 1
  %v588 = vsel %vm62, %v586, %v587
  %v589 = vrot.slane %v279, 1
  %v590 = vrot.slane %v280, 1
  %v591 = vsel %vm62, %v589, %v590
  %v592 = vrot.slane %v281, 1
  %v593 = vrot.slane %v282, 1
  %v594 = vsel %vm62, %v592, %v593
  %v595 = vrot.slane %v283, 1
  %v596 = vrot.slane %v284, 1
  %v597 = vsel %vm62, %v595, %v596
  %v598 = vrot.slane %v285, 1
  %v599 = vrot.slane %v286, 1
  %v600 = vsel %vm62, %v598, %v599
  %v601 = vrot.slane %v287, 1
  %v602 = vrot.slane %v288, 1
  %v603 = vsel %vm62, %v601, %v602
  %v604 = vrot.slane %v289, 1
  %v605 = vrot.slane %v290, 1
  %v606 = vsel %vm62, %v604, %v605
  %v607 = vrot.slane %v295, 1
  %v608 = vrot.slane %v296, 1
  %v609 = vsel %vm62, %v607, %v608
  %v610 = vrot.slane %v297, 1
  %v611 = vrot.slane %v298, 1
  %v612 = vsel %vm62, %v610, %v611
  %v613 = vrot.slane %v299, 1
  %v614 = vrot.slane %v300, 1
  %v615 = vsel %vm62, %v613, %v614
  %v616 = vrot.slane %v301, 1
  %v617 = vrot.slane %v302, 1
  %v618 = vsel %vm62, %v616, %v617
  %v619 = vrot.slane %v303, 1
  %v620 = vrot.slane %v304, 1
  %v621 = vsel %vm62, %v619, %v620
  %v622 = vrot.slane %v305, 1
  %v623 = vrot.slane %v306, 1
  %v624 = vsel %vm62, %v622, %v623
  %v625 = vrot.slane %v307, 1
  %v626 = vrot.slane %v308, 1
  %v627 = vsel %vm62, %v625, %v626
  %v628 = vrot.slane %v309, 1
  %v629 = vrot.slane %v310, 1
  %v630 = vsel %vm62, %v628, %v629
  %v631 = vrot.slane %v315, 1
  %v632 = vrot.slane %v316, 1
  %v633 = vsel %vm62, %v631, %v632
  %v634 = vrot.slane %v317, 1
  %v635 = vrot.slane %v318, 1
  %v636 = vsel %vm62, %v634, %v635
  %v637 = vrot.slane %v319, 1
  %v638 = vrot.slane %v320, 1
  %v639 = vsel %vm62, %v637, %v638
  %v640 = vrot.slane %v321, 1
  %v641 = vrot.slane %v322, 1
  %v642 = vsel %vm62, %v640, %v641
  %v643 = vrot.slane %v323, 1
  %v644 = vrot.slane %v324, 1
  %v645 = vsel %vm62, %v643, %v644
  %v646 = vrot.slane %v325, 1
  %v647 = vrot.slane %v326, 1
  %v648 = vsel %vm62, %v646, %v647
  %v649 = vrot.slane %v327, 1
  %v650 = vrot.slane %v328, 1
  %v651 = vsel %vm62, %v649, %v650
  %v652 = vrot.slane %v329, 1
  %v653 = vrot.slane %v330, 1
  %v654 = vsel %vm62, %v652, %v653
  %vm655 = vcmask 1045504
  %v656 = vrot.slane %v175, 2
  %v657 = vrot.slane %v176, 2
  %v658 = vsel %vm655, %v656, %v657
  %v659 = vrot.slane %v177, 2
  %v660 = vrot.slane %v178, 2
  %v661 = vsel %vm655, %v659, %v660
  %v662 = vrot.slane %v179, 2
  %v663 = vrot.slane %v180, 2
  %v664 = vsel %vm655, %v662, %v663
  %v665 = vrot.slane %v181, 2
  %v666 = vrot.slane %v182, 2
  %v667 = vsel %vm655, %v665, %v666
  %v668 = vrot.slane %v183, 2
  %v669 = vrot.slane %v184, 2
  %v670 = vsel %vm655, %v668, %v669
  %v671 = vrot.slane %v185, 2
  %v672 = vrot.slane %v186, 2
  %v673 = vsel %vm655, %v671, %v672
  %v674 = vrot.slane %v187, 2
  %v675 = vrot.slane %v188, 2
  %v676 = vsel %vm655, %v674, %v675
  %v677 = vrot.slane %v189, 2
  %v678 = vrot.slane %v190, 2
  %v679 = vsel %vm655, %v677, %v678
  %v680 = vrot.slane %v195, 2
  %v681 = vrot.slane %v196, 2
  %v682 = vsel %vm655, %v680, %v681
  %v683 = vrot.slane %v197, 2
  %v684 = vrot.slane %v198, 2
  %v685 = vsel %vm655, %v683, %v684
  %v686 = vrot.slane %v199, 2
  %v687 = vrot.slane %v200, 2
  %v688 = vsel %vm655, %v686, %v687
  %v689 = vrot.slane %v201, 2
  %v690 = vrot.slane %v202, 2
  %v691 = vsel %vm655, %v689, %v690
  %v692 = vrot.slane %v203, 2
  %v693 = vrot.slane %v204, 2
  %v694 = vsel %vm655, %v692, %v693
  %v695 = vrot.slane %v205, 2
  %v696 = vrot.slane %v206, 2
  %v697 = vsel %vm655, %v695, %v696
  %v698 = vrot.slane %v207, 2
  %v699 = vrot.slane %v208, 2
  %v700 = vsel %vm655, %v698, %v699
  %v701 = vrot.slane %v209, 2
  %v702 = vrot.slane %v210, 2
  %v703 = vsel %vm655, %v701, %v702
  %v704 = vrot.slane %v215, 2
  %v705 = vrot.slane %v216, 2
  %v706 = vsel %vm655, %v704, %v705
  %v707 = vrot.slane %v217, 2
  %v708 = vrot.slane %v218, 2
  %v709 = vsel %vm655, %v707, %v708
  %v710 = vrot.slane %v219, 2
  %v711 = vrot.slane %v220, 2
  %v712 = vsel %vm655, %v710, %v711
  %v713 = vrot.slane %v221, 2
  %v714 = vrot.slane %v222, 2
  %v715 = vsel %vm655, %v713, %v714
  %v716 = vrot.slane %v223, 2
  %v717 = vrot.slane %v224, 2
  %v718 = vsel %vm655, %v716, %v717
  %v719 = vrot.slane %v225, 2
  %v720 = vrot.slane %v226, 2
  %v721 = vsel %vm655, %v719, %v720
  %v722 = vrot.slane %v227, 2
  %v723 = vrot.slane %v228, 2
  %v724 = vsel %vm655, %v722, %v723
  %v725 = vrot.slane %v229, 2
  %v726 = vrot.slane %v230, 2
  %v727 = vsel %vm655, %v725, %v726
  %v728 = vrot.slane %v235, 2
  %v729 = vrot.slane %v236, 2
  %v730 = vsel %vm655, %v728, %v729
  %v731 = vrot.slane %v237, 2
  %v732 = vrot.slane %v238, 2
  %v733 = vsel %vm655, %v731, %v732
  %v734 = vrot.slane %v239, 2
  %v735 = vrot.slane %v240, 2
  %v736 = vsel %vm655, %v734, %v735
  %v737 = vrot.slane %v241, 2
  %v738 = vrot.slane %v242, 2
  %v739 = vsel %vm655, %v737, %v738
  %v740 = vrot.slane %v243, 2
  %v741 = vrot.slane %v244, 2
  %v742 = vsel %vm655, %v740, %v741
  %v743 = vrot.slane %v245, 2
  %v744 = vrot.slane %v246, 2
  %v745 = vsel %vm655, %v743, %v744
  %v746 = vrot.slane %v247, 2
  %v747 = vrot.slane %v248, 2
  %v748 = vsel %vm655, %v746, %v747
  %v749 = vrot.slane %v249, 2
  %v750 = vrot.slane %v250, 2
  %v751 = vsel %vm655, %v749, %v750
  %v752 = vrot.slane %v255, 2
  %v753 = vrot.slane %v256, 2
  %v754 = vsel %vm655, %v752, %v753
  %v755 = vrot.slane %v257, 2
  %v756 = vrot.slane %v258, 2
  %v757 = vsel %vm655, %v755, %v756
  %v758 = vrot.slane %v259, 2
  %v759 = vrot.slane %v260, 2
  %v760 = vsel %vm655, %v758, %v759
  %v761 = vrot.slane %v261, 2
  %v762 = vrot.slane %v262, 2
  %v763 = vsel %vm655, %v761, %v762
  %v764 = vrot.slane %v263, 2
  %v765 = vrot.slane %v264, 2
  %v766 = vsel %vm655, %v764, %v765
  %v767 = vrot.slane %v265, 2
  %v768 = vrot.slane %v266, 2
  %v769 = vsel %vm655, %v767, %v768
  %v770 = vrot.slane %v267, 2
  %v771 = vrot.slane %v268, 2
  %v772 = vsel %vm655, %v770, %v771
  %v773 = vrot.slane %v269, 2
  %v774 = vrot.slane %v270, 2
  %v775 = vsel %vm655, %v773, %v774
  %v776 = vrot.slane %v275, 2
  %v777 = vrot.slane %v276, 2
  %v778 = vsel %vm655, %v776, %v777
  %v779 = vrot.slane %v277, 2
  %v780 = vrot.slane %v278, 2
  %v781 = vsel %vm655, %v779, %v780
  %v782 = vrot.slane %v279, 2
  %v783 = vrot.slane %v280, 2
  %v784 = vsel %vm655, %v782, %v783
  %v785 = vrot.slane %v281, 2
  %v786 = vrot.slane %v282, 2
  %v787 = vsel %vm655, %v785, %v786
  %v788 = vrot.slane %v283, 2
  %v789 = vrot.slane %v284, 2
  %v790 = vsel %vm655, %v788, %v789
  %v791 = vrot.slane %v285, 2
  %v792 = vrot.slane %v286, 2
  %v793 = vsel %vm655, %v791, %v792
  %v794 = vrot.slane %v287, 2
  %v795 = vrot.slane %v288, 2
  %v796 = vsel %vm655, %v794, %v795
  %v797 = vrot.slane %v289, 2
  %v798 = vrot.slane %v290, 2
  %v799 = vsel %vm655, %v797, %v798
  %v800 = vrot.slane %v295, 2
  %v801 = vrot.slane %v296, 2
  %v802 = vsel %vm655, %v800, %v801
  %v803 = vrot.slane %v297, 2
  %v804 = vrot.slane %v298, 2
  %v805 = vsel %vm655, %v803, %v804
  %v806 = vrot.slane %v299, 2
  %v807 = vrot.slane %v300, 2
  %v808 = vsel %vm655, %v806, %v807
  %v809 = vrot.slane %v301, 2
  %v810 = vrot.slane %v302, 2
  %v811 = vsel %vm655, %v809, %v810
  %v812 = vrot.slane %v303, 2
  %v813 = vrot.slane %v304, 2
  %v814 = vsel %vm655, %v812, %v813
  %v815 = vrot.slane %v305, 2
  %v816 = vrot.slane %v306, 2
  %v817 = vsel %vm655, %v815, %v816
  %v818 = vrot.slane %v307, 2
  %v819 = vrot.slane %v308, 2
  %v820 = vsel %vm655, %v818, %v819
  %v821 = vrot.slane %v309, 2
  %v822 = vrot.slane %v310, 2
  %v823 = vsel %vm655, %v821, %v822
  %v824 = vrot.slane %v315, 2
  %v825 = vrot.slane %v316, 2
  %v826 = vsel %vm655, %v824, %v825
  %v827 = vrot.slane %v317, 2
  %v828 = vrot.slane %v318, 2
  %v829 = vsel %vm655, %v827, %v828
  %v830 = vrot.slane %v319, 2
  %v831 = vrot.slane %v320, 2
  %v832 = vsel %vm655, %v830, %v831
  %v833 = vrot.slane %v321, 2
  %v834 = vrot.slane %v322, 2
  %v835 = vsel %vm655, %v833, %v834
  %v836 = vrot.slane %v323, 2
  %v837 = vrot.slane %v324, 2
  %v838 = vsel %vm655, %v836, %v837
  %v839 = vrot.slane %v325, 2
  %v840 = vrot.slane %v326, 2
  %v841 = vsel %vm655, %v839, %v840
  %v842 = vrot.slane %v327, 2
  %v843 = vrot.slane %v328, 2
  %v844 = vsel %vm655, %v842, %v843
  %v845 = vrot.slane %v329, 2
  %v846 = vrot.slane %v330, 2
  %v847 = vsel %vm655, %v845, %v846
  %v864 = vrot.slane %v191, 1
  %v865 = vrot.slane %v192, 1
  %v866 = vsel %vm62, %v864, %v865
  %v867 = vrot.slane %v211, 1
  %v868 = vrot.slane %v212, 1
  %v869 = vsel %vm62, %v867, %v868
  %v870 = vrot.slane %v231, 1
  %v871 = vrot.slane %v232, 1
  %v872 = vsel %vm62, %v870, %v871
  %v873 = vrot.slane %v251, 1
  %v874 = vrot.slane %v252, 1
  %v875 = vsel %vm62, %v873, %v874
  %v876 = vrot.slane %v271, 1
  %v877 = vrot.slane %v272, 1
  %v878 = vsel %vm62, %v876, %v877
  %v879 = vrot.slane %v291, 1
  %v880 = vrot.slane %v292, 1
  %v881 = vsel %vm62, %v879, %v880
  %v882 = vrot.slane %v311, 1
  %v883 = vrot.slane %v312, 1
  %v884 = vsel %vm62, %v882, %v883
  %v885 = vrot.slane %v331, 1
  %v886 = vrot.slane %v332, 1
  %v887 = vsel %vm62, %v885, %v886
  %v888 = vrot.slane %v191, 2
  %v889 = vrot.slane %v192, 2
  %v890 = vsel %vm655, %v888, %v889
  %v891 = vrot.slane %v211, 2
  %v892 = vrot.slane %v212, 2
  %v893 = vsel %vm655, %v891, %v892
  %v894 = vrot.slane %v231, 2
  %v895 = vrot.slane %v232, 2
  %v896 = vsel %vm655, %v894, %v895
  %v897 = vrot.slane %v251, 2
  %v898 = vrot.slane %v252, 2
  %v899 = vsel %vm655, %v897, %v898
  %v900 = vrot.slane %v271, 2
  %v901 = vrot.slane %v272, 2
  %v902 = vsel %vm655, %v900, %v901
  %v903 = vrot.slane %v291, 2
  %v904 = vrot.slane %v292, 2
  %v905 = vsel %vm655, %v903, %v904
  %v906 = vrot.slane %v311, 2
  %v907 = vrot.slane %v312, 2
  %v908 = vsel %vm655, %v906, %v907
  %v909 = vrot.slane %v331, 2
  %v910 = vrot.slane %v332, 2
  %v911 = vsel %vm655, %v909, %v910
  %v928 = vrot.slane %v193, 1
  %v929 = vrot.slane %v194, 1
  %v930 = vsel %vm62, %v928, %v929
  %v931 = vrot.slane %v213, 1
  %v932 = vrot.slane %v214, 1
  %v933 = vsel %vm62, %v931, %v932
  %v934 = vrot.slane %v233, 1
  %v935 = vrot.slane %v234, 1
  %v936 = vsel %vm62, %v934, %v935
  %v937 = vrot.slane %v253, 1
  %v938 = vrot.slane %v254, 1
  %v939 = vsel %vm62, %v937, %v938
  %v940 = vrot.slane %v273, 1
  %v941 = vrot.slane %v274, 1
  %v942 = vsel %vm62, %v940, %v941
  %v943 = vrot.slane %v293, 1
  %v944 = vrot.slane %v294, 1
  %v945 = vsel %vm62, %v943, %v944
  %v946 = vrot.slane %v313, 1
  %v947 = vrot.slane %v314, 1
  %v948 = vsel %vm62, %v946, %v947
  %v949 = vrot.slane %v333, 1
  %v950 = vrot.slane %v334, 1
  %v951 = vsel %vm62, %v949, %v950
  %v952 = vrot.slane %v193, 2
  %v953 = vrot.slane %v194, 2
  %v954 = vsel %vm655, %v952, %v953
  %v955 = vrot.slane %v213, 2
  %v956 = vrot.slane %v214, 2
  %v957 = vsel %vm655, %v955, %v956
  %v958 = vrot.slane %v233, 2
  %v959 = vrot.slane %v234, 2
  %v960 = vsel %vm655, %v958, %v959
  %v961 = vrot.slane %v253, 2
  %v962 = vrot.slane %v254, 2
  %v963 = vsel %vm655, %v961, %v962
  %v964 = vrot.slane %v273, 2
  %v965 = vrot.slane %v274, 2
  %v966 = vsel %vm655, %v964, %v965
  %v967 = vrot.slane %v293, 2
  %v968 = vrot.slane %v294, 2
  %v969 = vsel %vm655, %v967, %v968
  %v970 = vrot.slane %v313, 2
  %v971 = vrot.slane %v314, 2
  %v972 = vsel %vm655, %v970, %v971
  %v973 = vrot.slane %v333, 2
  %v974 = vrot.slane %v334, 2
  %v975 = vsel %vm655, %v973, %v974
  %976 = vrot.lane.b32.xlu0 %v465, 7
  %v977 = vpop.permute.xlu0 %976
  %978 = vrot.lane.b32.xlu0 %v468, 7
  %v979 = vpop.permute.xlu0 %978
  %980 = vrot.lane.b32.xlu0 %v471, 7
  %v981 = vpop.permute.xlu0 %980
  %982 = vrot.lane.b32.xlu0 %v474, 7
  %v983 = vpop.permute.xlu0 %982
  %984 = vrot.lane.b32.xlu0 %v477, 7
  %v985 = vpop.permute.xlu0 %984
  %986 = vrot.lane.b32.xlu0 %v480, 7
  %v987 = vpop.permute.xlu0 %986
  %988 = vrot.lane.b32.xlu0 %v483, 7
  %v989 = vpop.permute.xlu0 %988
  %990 = vrot.lane.b32.xlu0 %v486, 7
  %v991 = vpop.permute.xlu0 %990
  %992 = vrot.lane.b32.xlu0 %v489, 7
  %v993 = vpop.permute.xlu0 %992
  %994 = vrot.lane.b32.xlu0 %v492, 7
  %v995 = vpop.permute.xlu0 %994
  %996 = vrot.lane.b32.xlu0 %v495, 7
  %v997 = vpop.permute.xlu0 %996
  %998 = vrot.lane.b32.xlu0 %v498, 7
  %v999 = vpop.permute.xlu0 %998
  %1000 = vrot.lane.b32.xlu0 %v501, 7
  %v1001 = vpop.permute.xlu0 %1000
  %1002 = vrot.lane.b32.xlu0 %v504, 7
  %v1003 = vpop.permute.xlu0 %1002
  %1004 = vrot.lane.b32.xlu0 %v507, 7
  %v1005 = vpop.permute.xlu0 %1004
  %1006 = vrot.lane.b32.xlu0 %v510, 7
  %v1007 = vpop.permute.xlu0 %1006
  %1008 = vrot.lane.b32.xlu0 %v513, 7
  %v1009 = vpop.permute.xlu0 %1008
  %1010 = vrot.lane.b32.xlu0 %v516, 7
  %v1011 = vpop.permute.xlu0 %1010
  %1012 = vrot.lane.b32.xlu0 %v519, 7
  %v1013 = vpop.permute.xlu0 %1012
  %1014 = vrot.lane.b32.xlu0 %v522, 7
  %v1015 = vpop.permute.xlu0 %1014
  %1016 = vrot.lane.b32.xlu0 %v525, 7
  %v1017 = vpop.permute.xlu0 %1016
  %1018 = vrot.lane.b32.xlu0 %v528, 7
  %v1019 = vpop.permute.xlu0 %1018
  %1020 = vrot.lane.b32.xlu0 %v531, 7
  %v1021 = vpop.permute.xlu0 %1020
  %1022 = vrot.lane.b32.xlu0 %v534, 7
  %v1023 = vpop.permute.xlu0 %1022
  %1024 = vrot.lane.b32.xlu0 %v537, 7
  %v1025 = vpop.permute.xlu0 %1024
  %1026 = vrot.lane.b32.xlu0 %v540, 7
  %v1027 = vpop.permute.xlu0 %1026
  %1028 = vrot.lane.b32.xlu0 %v543, 7
  %v1029 = vpop.permute.xlu0 %1028
  %1030 = vrot.lane.b32.xlu0 %v546, 7
  %v1031 = vpop.permute.xlu0 %1030
  %1032 = vrot.lane.b32.xlu0 %v549, 7
  %v1033 = vpop.permute.xlu0 %1032
  %1034 = vrot.lane.b32.xlu0 %v552, 7
  %v1035 = vpop.permute.xlu0 %1034
  %1036 = vrot.lane.b32.xlu0 %v555, 7
  %v1037 = vpop.permute.xlu0 %1036
  %1038 = vrot.lane.b32.xlu0 %v558, 7
  %v1039 = vpop.permute.xlu0 %1038
  %1040 = vrot.lane.b32.xlu0 %v561, 7
  %v1041 = vpop.permute.xlu0 %1040
  %1042 = vrot.lane.b32.xlu0 %v564, 7
  %v1043 = vpop.permute.xlu0 %1042
  %1044 = vrot.lane.b32.xlu0 %v567, 7
  %v1045 = vpop.permute.xlu0 %1044
  %1046 = vrot.lane.b32.xlu0 %v570, 7
  %v1047 = vpop.permute.xlu0 %1046
  %1048 = vrot.lane.b32.xlu0 %v573, 7
  %v1049 = vpop.permute.xlu0 %1048
  %1050 = vrot.lane.b32.xlu0 %v576, 7
  %v1051 = vpop.permute.xlu0 %1050
  %1052 = vrot.lane.b32.xlu0 %v579, 7
  %v1053 = vpop.permute.xlu0 %1052
  %1054 = vrot.lane.b32.xlu0 %v582, 7
  %v1055 = vpop.permute.xlu0 %1054
  %1056 = vrot.lane.b32.xlu0 %v585, 7
  %v1057 = vpop.permute.xlu0 %1056
  %1058 = vrot.lane.b32.xlu0 %v588, 7
  %v1059 = vpop.permute.xlu0 %1058
  %1060 = vrot.lane.b32.xlu0 %v591, 7
  %v1061 = vpop.permute.xlu0 %1060
  %1062 = vrot.lane.b32.xlu0 %v594, 7
  %v1063 = vpop.permute.xlu0 %1062
  %1064 = vrot.lane.b32.xlu0 %v597, 7
  %v1065 = vpop.permute.xlu0 %1064
  %1066 = vrot.lane.b32.xlu0 %v600, 7
  %v1067 = vpop.permute.xlu0 %1066
  %1068 = vrot.lane.b32.xlu0 %v603, 7
  %v1069 = vpop.permute.xlu0 %1068
  %1070 = vrot.lane.b32.xlu0 %v606, 7
  %v1071 = vpop.permute.xlu0 %1070
  %1072 = vrot.lane.b32.xlu0 %v609, 7
  %v1073 = vpop.permute.xlu0 %1072
  %1074 = vrot.lane.b32.xlu0 %v612, 7
  %v1075 = vpop.permute.xlu0 %1074
  %1076 = vrot.lane.b32.xlu0 %v615, 7
  %v1077 = vpop.permute.xlu0 %1076
  %1078 = vrot.lane.b32.xlu0 %v618, 7
  %v1079 = vpop.permute.xlu0 %1078
  %1080 = vrot.lane.b32.xlu0 %v621, 7
  %v1081 = vpop.permute.xlu0 %1080
  %1082 = vrot.lane.b32.xlu0 %v624, 7
  %v1083 = vpop.permute.xlu0 %1082
  %1084 = vrot.lane.b32.xlu0 %v627, 7
  %v1085 = vpop.permute.xlu0 %1084
  %1086 = vrot.lane.b32.xlu0 %v630, 7
  %v1087 = vpop.permute.xlu0 %1086
  %1088 = vrot.lane.b32.xlu0 %v633, 7
  %v1089 = vpop.permute.xlu0 %1088
  %1090 = vrot.lane.b32.xlu0 %v636, 7
  %v1091 = vpop.permute.xlu0 %1090
  %1092 = vrot.lane.b32.xlu0 %v639, 7
  %v1093 = vpop.permute.xlu0 %1092
  %1094 = vrot.lane.b32.xlu0 %v642, 7
  %v1095 = vpop.permute.xlu0 %1094
  %1096 = vrot.lane.b32.xlu0 %v645, 7
  %v1097 = vpop.permute.xlu0 %1096
  %1098 = vrot.lane.b32.xlu0 %v648, 7
  %v1099 = vpop.permute.xlu0 %1098
  %1100 = vrot.lane.b32.xlu0 %v651, 7
  %v1101 = vpop.permute.xlu0 %1100
  %1102 = vrot.lane.b32.xlu0 %v654, 7
  %v1103 = vpop.permute.xlu0 %1102
  %1168 = vrot.lane.b32.xlu0 %v658, 14
  %v1169 = vpop.permute.xlu0 %1168
  %1170 = vrot.lane.b32.xlu0 %v661, 14
  %v1171 = vpop.permute.xlu0 %1170
  %1172 = vrot.lane.b32.xlu0 %v664, 14
  %v1173 = vpop.permute.xlu0 %1172
  %1174 = vrot.lane.b32.xlu0 %v667, 14
  %v1175 = vpop.permute.xlu0 %1174
  %1176 = vrot.lane.b32.xlu0 %v670, 14
  %v1177 = vpop.permute.xlu0 %1176
  %1178 = vrot.lane.b32.xlu0 %v673, 14
  %v1179 = vpop.permute.xlu0 %1178
  %1180 = vrot.lane.b32.xlu0 %v676, 14
  %v1181 = vpop.permute.xlu0 %1180
  %1182 = vrot.lane.b32.xlu0 %v679, 14
  %v1183 = vpop.permute.xlu0 %1182
  %1184 = vrot.lane.b32.xlu0 %v682, 14
  %v1185 = vpop.permute.xlu0 %1184
  %1186 = vrot.lane.b32.xlu0 %v685, 14
  %v1187 = vpop.permute.xlu0 %1186
  %1188 = vrot.lane.b32.xlu0 %v688, 14
  %v1189 = vpop.permute.xlu0 %1188
  %1190 = vrot.lane.b32.xlu0 %v691, 14
  %v1191 = vpop.permute.xlu0 %1190
  %1192 = vrot.lane.b32.xlu0 %v694, 14
  %v1193 = vpop.permute.xlu0 %1192
  %1194 = vrot.lane.b32.xlu0 %v697, 14
  %v1195 = vpop.permute.xlu0 %1194
  %1196 = vrot.lane.b32.xlu0 %v700, 14
  %v1197 = vpop.permute.xlu0 %1196
  %1198 = vrot.lane.b32.xlu0 %v703, 14
  %v1199 = vpop.permute.xlu0 %1198
  %1200 = vrot.lane.b32.xlu0 %v706, 14
  %v1201 = vpop.permute.xlu0 %1200
  %1202 = vrot.lane.b32.xlu0 %v709, 14
  %v1203 = vpop.permute.xlu0 %1202
  %1204 = vrot.lane.b32.xlu0 %v712, 14
  %v1205 = vpop.permute.xlu0 %1204
  %1206 = vrot.lane.b32.xlu0 %v715, 14
  %v1207 = vpop.permute.xlu0 %1206
  %1208 = vrot.lane.b32.xlu0 %v718, 14
  %v1209 = vpop.permute.xlu0 %1208
  %1210 = vrot.lane.b32.xlu0 %v721, 14
  %v1211 = vpop.permute.xlu0 %1210
  %1212 = vrot.lane.b32.xlu0 %v724, 14
  %v1213 = vpop.permute.xlu0 %1212
  %1214 = vrot.lane.b32.xlu0 %v727, 14
  %v1215 = vpop.permute.xlu0 %1214
  %1216 = vrot.lane.b32.xlu0 %v730, 14
  %v1217 = vpop.permute.xlu0 %1216
  %1218 = vrot.lane.b32.xlu0 %v733, 14
  %v1219 = vpop.permute.xlu0 %1218
  %1220 = vrot.lane.b32.xlu0 %v736, 14
  %v1221 = vpop.permute.xlu0 %1220
  %1222 = vrot.lane.b32.xlu0 %v739, 14
  %v1223 = vpop.permute.xlu0 %1222
  %1224 = vrot.lane.b32.xlu0 %v742, 14
  %v1225 = vpop.permute.xlu0 %1224
  %1226 = vrot.lane.b32.xlu0 %v745, 14
  %v1227 = vpop.permute.xlu0 %1226
  %1228 = vrot.lane.b32.xlu0 %v748, 14
  %v1229 = vpop.permute.xlu0 %1228
  %1230 = vrot.lane.b32.xlu0 %v751, 14
  %v1231 = vpop.permute.xlu0 %1230
  %1232 = vrot.lane.b32.xlu0 %v754, 14
  %v1233 = vpop.permute.xlu0 %1232
  %1234 = vrot.lane.b32.xlu0 %v757, 14
  %v1235 = vpop.permute.xlu0 %1234
  %1236 = vrot.lane.b32.xlu0 %v760, 14
  %v1237 = vpop.permute.xlu0 %1236
  %1238 = vrot.lane.b32.xlu0 %v763, 14
  %v1239 = vpop.permute.xlu0 %1238
  %1240 = vrot.lane.b32.xlu0 %v766, 14
  %v1241 = vpop.permute.xlu0 %1240
  %1242 = vrot.lane.b32.xlu0 %v769, 14
  %v1243 = vpop.permute.xlu0 %1242
  %1244 = vrot.lane.b32.xlu0 %v772, 14
  %v1245 = vpop.permute.xlu0 %1244
  %1246 = vrot.lane.b32.xlu0 %v775, 14
  %v1247 = vpop.permute.xlu0 %1246
  %1248 = vrot.lane.b32.xlu0 %v778, 14
  %v1249 = vpop.permute.xlu0 %1248
  %1250 = vrot.lane.b32.xlu0 %v781, 14
  %v1251 = vpop.permute.xlu0 %1250
  %1252 = vrot.lane.b32.xlu0 %v784, 14
  %v1253 = vpop.permute.xlu0 %1252
  %1254 = vrot.lane.b32.xlu0 %v787, 14
  %v1255 = vpop.permute.xlu0 %1254
  %1256 = vrot.lane.b32.xlu0 %v790, 14
  %v1257 = vpop.permute.xlu0 %1256
  %1258 = vrot.lane.b32.xlu0 %v793, 14
  %v1259 = vpop.permute.xlu0 %1258
  %1260 = vrot.lane.b32.xlu0 %v796, 14
  %v1261 = vpop.permute.xlu0 %1260
  %1262 = vrot.lane.b32.xlu0 %v799, 14
  %v1263 = vpop.permute.xlu0 %1262
  %1264 = vrot.lane.b32.xlu0 %v802, 14
  %v1265 = vpop.permute.xlu0 %1264
  %1266 = vrot.lane.b32.xlu0 %v805, 14
  %v1267 = vpop.permute.xlu0 %1266
  %1268 = vrot.lane.b32.xlu0 %v808, 14
  %v1269 = vpop.permute.xlu0 %1268
  %1270 = vrot.lane.b32.xlu0 %v811, 14
  %v1271 = vpop.permute.xlu0 %1270
  %1272 = vrot.lane.b32.xlu0 %v814, 14
  %v1273 = vpop.permute.xlu0 %1272
  %1274 = vrot.lane.b32.xlu0 %v817, 14
  %v1275 = vpop.permute.xlu0 %1274
  %1276 = vrot.lane.b32.xlu0 %v820, 14
  %v1277 = vpop.permute.xlu0 %1276
  %1278 = vrot.lane.b32.xlu0 %v823, 14
  %v1279 = vpop.permute.xlu0 %1278
  %1280 = vrot.lane.b32.xlu0 %v826, 14
  %v1281 = vpop.permute.xlu0 %1280
  %1282 = vrot.lane.b32.xlu0 %v829, 14
  %v1283 = vpop.permute.xlu0 %1282
  %1284 = vrot.lane.b32.xlu0 %v832, 14
  %v1285 = vpop.permute.xlu0 %1284
  %1286 = vrot.lane.b32.xlu0 %v835, 14
  %v1287 = vpop.permute.xlu0 %1286
  %1288 = vrot.lane.b32.xlu0 %v838, 14
  %v1289 = vpop.permute.xlu0 %1288
  %1290 = vrot.lane.b32.xlu0 %v841, 14
  %v1291 = vpop.permute.xlu0 %1290
  %1292 = vrot.lane.b32.xlu0 %v844, 14
  %v1293 = vpop.permute.xlu0 %1292
  %1294 = vrot.lane.b32.xlu0 %v847, 14
  %v1295 = vpop.permute.xlu0 %1294
  %1360 = vrot.lane.b32.xlu0 %v177, 21
  %v1361 = vpop.permute.xlu0 %1360
  %1362 = vrot.lane.b32.xlu0 %v179, 21
  %v1363 = vpop.permute.xlu0 %1362
  %1364 = vrot.lane.b32.xlu0 %v181, 21
  %v1365 = vpop.permute.xlu0 %1364
  %1366 = vrot.lane.b32.xlu0 %v183, 21
  %v1367 = vpop.permute.xlu0 %1366
  %1368 = vrot.lane.b32.xlu0 %v185, 21
  %v1369 = vpop.permute.xlu0 %1368
  %1370 = vrot.lane.b32.xlu0 %v187, 21
  %v1371 = vpop.permute.xlu0 %1370
  %1372 = vrot.lane.b32.xlu0 %v189, 21
  %v1373 = vpop.permute.xlu0 %1372
  %1374 = vrot.lane.b32.xlu0 %v191, 21
  %v1375 = vpop.permute.xlu0 %1374
  %1376 = vrot.lane.b32.xlu0 %v197, 21
  %v1377 = vpop.permute.xlu0 %1376
  %1378 = vrot.lane.b32.xlu0 %v199, 21
  %v1379 = vpop.permute.xlu0 %1378
  %1380 = vrot.lane.b32.xlu0 %v201, 21
  %v1381 = vpop.permute.xlu0 %1380
  %1382 = vrot.lane.b32.xlu0 %v203, 21
  %v1383 = vpop.permute.xlu0 %1382
  %1384 = vrot.lane.b32.xlu0 %v205, 21
  %v1385 = vpop.permute.xlu0 %1384
  %1386 = vrot.lane.b32.xlu0 %v207, 21
  %v1387 = vpop.permute.xlu0 %1386
  %1388 = vrot.lane.b32.xlu0 %v209, 21
  %v1389 = vpop.permute.xlu0 %1388
  %1390 = vrot.lane.b32.xlu0 %v211, 21
  %v1391 = vpop.permute.xlu0 %1390
  %1392 = vrot.lane.b32.xlu0 %v217, 21
  %v1393 = vpop.permute.xlu0 %1392
  %1394 = vrot.lane.b32.xlu0 %v219, 21
  %v1395 = vpop.permute.xlu0 %1394
  %1396 = vrot.lane.b32.xlu0 %v221, 21
  %v1397 = vpop.permute.xlu0 %1396
  %1398 = vrot.lane.b32.xlu0 %v223, 21
  %v1399 = vpop.permute.xlu0 %1398
  %1400 = vrot.lane.b32.xlu0 %v225, 21
  %v1401 = vpop.permute.xlu0 %1400
  %1402 = vrot.lane.b32.xlu0 %v227, 21
  %v1403 = vpop.permute.xlu0 %1402
  %1404 = vrot.lane.b32.xlu0 %v229, 21
  %v1405 = vpop.permute.xlu0 %1404
  %1406 = vrot.lane.b32.xlu0 %v231, 21
  %v1407 = vpop.permute.xlu0 %1406
  %1408 = vrot.lane.b32.xlu0 %v237, 21
  %v1409 = vpop.permute.xlu0 %1408
  %1410 = vrot.lane.b32.xlu0 %v239, 21
  %v1411 = vpop.permute.xlu0 %1410
  %1412 = vrot.lane.b32.xlu0 %v241, 21
  %v1413 = vpop.permute.xlu0 %1412
  %1414 = vrot.lane.b32.xlu0 %v243, 21
  %v1415 = vpop.permute.xlu0 %1414
  %1416 = vrot.lane.b32.xlu0 %v245, 21
  %v1417 = vpop.permute.xlu0 %1416
  %1418 = vrot.lane.b32.xlu0 %v247, 21
  %v1419 = vpop.permute.xlu0 %1418
  %1420 = vrot.lane.b32.xlu0 %v249, 21
  %v1421 = vpop.permute.xlu0 %1420
  %1422 = vrot.lane.b32.xlu0 %v251, 21
  %v1423 = vpop.permute.xlu0 %1422
  %1424 = vrot.lane.b32.xlu0 %v257, 21
  %v1425 = vpop.permute.xlu0 %1424
  %1426 = vrot.lane.b32.xlu0 %v259, 21
  %v1427 = vpop.permute.xlu0 %1426
  %1428 = vrot.lane.b32.xlu0 %v261, 21
  %v1429 = vpop.permute.xlu0 %1428
  %1430 = vrot.lane.b32.xlu0 %v263, 21
  %v1431 = vpop.permute.xlu0 %1430
  %1432 = vrot.lane.b32.xlu0 %v265, 21
  %v1433 = vpop.permute.xlu0 %1432
  %1434 = vrot.lane.b32.xlu0 %v267, 21
  %v1435 = vpop.permute.xlu0 %1434
  %1436 = vrot.lane.b32.xlu0 %v269, 21
  %v1437 = vpop.permute.xlu0 %1436
  %1438 = vrot.lane.b32.xlu0 %v271, 21
  %v1439 = vpop.permute.xlu0 %1438
  %1440 = vrot.lane.b32.xlu0 %v277, 21
  %v1441 = vpop.permute.xlu0 %1440
  %1442 = vrot.lane.b32.xlu0 %v279, 21
  %v1443 = vpop.permute.xlu0 %1442
  %1444 = vrot.lane.b32.xlu0 %v281, 21
  %v1445 = vpop.permute.xlu0 %1444
  %1446 = vrot.lane.b32.xlu0 %v283, 21
  %v1447 = vpop.permute.xlu0 %1446
  %1448 = vrot.lane.b32.xlu0 %v285, 21
  %v1449 = vpop.permute.xlu0 %1448
  %1450 = vrot.lane.b32.xlu0 %v287, 21
  %v1451 = vpop.permute.xlu0 %1450
  %1452 = vrot.lane.b32.xlu0 %v289, 21
  %v1453 = vpop.permute.xlu0 %1452
  %1454 = vrot.lane.b32.xlu0 %v291, 21
  %v1455 = vpop.permute.xlu0 %1454
  %1456 = vrot.lane.b32.xlu0 %v297, 21
  %v1457 = vpop.permute.xlu0 %1456
  %1458 = vrot.lane.b32.xlu0 %v299, 21
  %v1459 = vpop.permute.xlu0 %1458
  %1460 = vrot.lane.b32.xlu0 %v301, 21
  %v1461 = vpop.permute.xlu0 %1460
  %1462 = vrot.lane.b32.xlu0 %v303, 21
  %v1463 = vpop.permute.xlu0 %1462
  %1464 = vrot.lane.b32.xlu0 %v305, 21
  %v1465 = vpop.permute.xlu0 %1464
  %1466 = vrot.lane.b32.xlu0 %v307, 21
  %v1467 = vpop.permute.xlu0 %1466
  %1468 = vrot.lane.b32.xlu0 %v309, 21
  %v1469 = vpop.permute.xlu0 %1468
  %1470 = vrot.lane.b32.xlu0 %v311, 21
  %v1471 = vpop.permute.xlu0 %1470
  %1472 = vrot.lane.b32.xlu0 %v317, 21
  %v1473 = vpop.permute.xlu0 %1472
  %1474 = vrot.lane.b32.xlu0 %v319, 21
  %v1475 = vpop.permute.xlu0 %1474
  %1476 = vrot.lane.b32.xlu0 %v321, 21
  %v1477 = vpop.permute.xlu0 %1476
  %1478 = vrot.lane.b32.xlu0 %v323, 21
  %v1479 = vpop.permute.xlu0 %1478
  %1480 = vrot.lane.b32.xlu0 %v325, 21
  %v1481 = vpop.permute.xlu0 %1480
  %1482 = vrot.lane.b32.xlu0 %v327, 21
  %v1483 = vpop.permute.xlu0 %1482
  %1484 = vrot.lane.b32.xlu0 %v329, 21
  %v1485 = vpop.permute.xlu0 %1484
  %1486 = vrot.lane.b32.xlu0 %v331, 21
  %v1487 = vpop.permute.xlu0 %1486
  %1552 = vrot.lane.b32.xlu0 %v468, 28
  %v1553 = vpop.permute.xlu0 %1552
  %1554 = vrot.lane.b32.xlu0 %v471, 28
  %v1555 = vpop.permute.xlu0 %1554
  %1556 = vrot.lane.b32.xlu0 %v474, 28
  %v1557 = vpop.permute.xlu0 %1556
  %1558 = vrot.lane.b32.xlu0 %v477, 28
  %v1559 = vpop.permute.xlu0 %1558
  %1560 = vrot.lane.b32.xlu0 %v480, 28
  %v1561 = vpop.permute.xlu0 %1560
  %1562 = vrot.lane.b32.xlu0 %v483, 28
  %v1563 = vpop.permute.xlu0 %1562
  %1564 = vrot.lane.b32.xlu0 %v486, 28
  %v1565 = vpop.permute.xlu0 %1564
  %1566 = vrot.lane.b32.xlu0 %v866, 28
  %v1567 = vpop.permute.xlu0 %1566
  %1568 = vrot.lane.b32.xlu0 %v492, 28
  %v1569 = vpop.permute.xlu0 %1568
  %1570 = vrot.lane.b32.xlu0 %v495, 28
  %v1571 = vpop.permute.xlu0 %1570
  %1572 = vrot.lane.b32.xlu0 %v498, 28
  %v1573 = vpop.permute.xlu0 %1572
  %1574 = vrot.lane.b32.xlu0 %v501, 28
  %v1575 = vpop.permute.xlu0 %1574
  %1576 = vrot.lane.b32.xlu0 %v504, 28
  %v1577 = vpop.permute.xlu0 %1576
  %1578 = vrot.lane.b32.xlu0 %v507, 28
  %v1579 = vpop.permute.xlu0 %1578
  %1580 = vrot.lane.b32.xlu0 %v510, 28
  %v1581 = vpop.permute.xlu0 %1580
  %1582 = vrot.lane.b32.xlu0 %v869, 28
  %v1583 = vpop.permute.xlu0 %1582
  %1584 = vrot.lane.b32.xlu0 %v516, 28
  %v1585 = vpop.permute.xlu0 %1584
  %1586 = vrot.lane.b32.xlu0 %v519, 28
  %v1587 = vpop.permute.xlu0 %1586
  %1588 = vrot.lane.b32.xlu0 %v522, 28
  %v1589 = vpop.permute.xlu0 %1588
  %1590 = vrot.lane.b32.xlu0 %v525, 28
  %v1591 = vpop.permute.xlu0 %1590
  %1592 = vrot.lane.b32.xlu0 %v528, 28
  %v1593 = vpop.permute.xlu0 %1592
  %1594 = vrot.lane.b32.xlu0 %v531, 28
  %v1595 = vpop.permute.xlu0 %1594
  %1596 = vrot.lane.b32.xlu0 %v534, 28
  %v1597 = vpop.permute.xlu0 %1596
  %1598 = vrot.lane.b32.xlu0 %v872, 28
  %v1599 = vpop.permute.xlu0 %1598
  %1600 = vrot.lane.b32.xlu0 %v540, 28
  %v1601 = vpop.permute.xlu0 %1600
  %1602 = vrot.lane.b32.xlu0 %v543, 28
  %v1603 = vpop.permute.xlu0 %1602
  %1604 = vrot.lane.b32.xlu0 %v546, 28
  %v1605 = vpop.permute.xlu0 %1604
  %1606 = vrot.lane.b32.xlu0 %v549, 28
  %v1607 = vpop.permute.xlu0 %1606
  %1608 = vrot.lane.b32.xlu0 %v552, 28
  %v1609 = vpop.permute.xlu0 %1608
  %1610 = vrot.lane.b32.xlu0 %v555, 28
  %v1611 = vpop.permute.xlu0 %1610
  %1612 = vrot.lane.b32.xlu0 %v558, 28
  %v1613 = vpop.permute.xlu0 %1612
  %1614 = vrot.lane.b32.xlu0 %v875, 28
  %v1615 = vpop.permute.xlu0 %1614
  %1616 = vrot.lane.b32.xlu0 %v564, 28
  %v1617 = vpop.permute.xlu0 %1616
  %1618 = vrot.lane.b32.xlu0 %v567, 28
  %v1619 = vpop.permute.xlu0 %1618
  %1620 = vrot.lane.b32.xlu0 %v570, 28
  %v1621 = vpop.permute.xlu0 %1620
  %1622 = vrot.lane.b32.xlu0 %v573, 28
  %v1623 = vpop.permute.xlu0 %1622
  %1624 = vrot.lane.b32.xlu0 %v576, 28
  %v1625 = vpop.permute.xlu0 %1624
  %1626 = vrot.lane.b32.xlu0 %v579, 28
  %v1627 = vpop.permute.xlu0 %1626
  %1628 = vrot.lane.b32.xlu0 %v582, 28
  %v1629 = vpop.permute.xlu0 %1628
  %1630 = vrot.lane.b32.xlu0 %v878, 28
  %v1631 = vpop.permute.xlu0 %1630
  %1632 = vrot.lane.b32.xlu0 %v588, 28
  %v1633 = vpop.permute.xlu0 %1632
  %1634 = vrot.lane.b32.xlu0 %v591, 28
  %v1635 = vpop.permute.xlu0 %1634
  %1636 = vrot.lane.b32.xlu0 %v594, 28
  %v1637 = vpop.permute.xlu0 %1636
  %1638 = vrot.lane.b32.xlu0 %v597, 28
  %v1639 = vpop.permute.xlu0 %1638
  %1640 = vrot.lane.b32.xlu0 %v600, 28
  %v1641 = vpop.permute.xlu0 %1640
  %1642 = vrot.lane.b32.xlu0 %v603, 28
  %v1643 = vpop.permute.xlu0 %1642
  %1644 = vrot.lane.b32.xlu0 %v606, 28
  %v1645 = vpop.permute.xlu0 %1644
  %1646 = vrot.lane.b32.xlu0 %v881, 28
  %v1647 = vpop.permute.xlu0 %1646
  %1648 = vrot.lane.b32.xlu0 %v612, 28
  %v1649 = vpop.permute.xlu0 %1648
  %1650 = vrot.lane.b32.xlu0 %v615, 28
  %v1651 = vpop.permute.xlu0 %1650
  %1652 = vrot.lane.b32.xlu0 %v618, 28
  %v1653 = vpop.permute.xlu0 %1652
  %1654 = vrot.lane.b32.xlu0 %v621, 28
  %v1655 = vpop.permute.xlu0 %1654
  %1656 = vrot.lane.b32.xlu0 %v624, 28
  %v1657 = vpop.permute.xlu0 %1656
  %1658 = vrot.lane.b32.xlu0 %v627, 28
  %v1659 = vpop.permute.xlu0 %1658
  %1660 = vrot.lane.b32.xlu0 %v630, 28
  %v1661 = vpop.permute.xlu0 %1660
  %1662 = vrot.lane.b32.xlu0 %v884, 28
  %v1663 = vpop.permute.xlu0 %1662
  %1664 = vrot.lane.b32.xlu0 %v636, 28
  %v1665 = vpop.permute.xlu0 %1664
  %1666 = vrot.lane.b32.xlu0 %v639, 28
  %v1667 = vpop.permute.xlu0 %1666
  %1668 = vrot.lane.b32.xlu0 %v642, 28
  %v1669 = vpop.permute.xlu0 %1668
  %1670 = vrot.lane.b32.xlu0 %v645, 28
  %v1671 = vpop.permute.xlu0 %1670
  %1672 = vrot.lane.b32.xlu0 %v648, 28
  %v1673 = vpop.permute.xlu0 %1672
  %1674 = vrot.lane.b32.xlu0 %v651, 28
  %v1675 = vpop.permute.xlu0 %1674
  %1676 = vrot.lane.b32.xlu0 %v654, 28
  %v1677 = vpop.permute.xlu0 %1676
  %1678 = vrot.lane.b32.xlu0 %v887, 28
  %v1679 = vpop.permute.xlu0 %1678
  %1744 = vrot.lane.b32.xlu0 %v661, 35
  %v1745 = vpop.permute.xlu0 %1744
  %1746 = vrot.lane.b32.xlu0 %v664, 35
  %v1747 = vpop.permute.xlu0 %1746
  %1748 = vrot.lane.b32.xlu0 %v667, 35
  %v1749 = vpop.permute.xlu0 %1748
  %1750 = vrot.lane.b32.xlu0 %v670, 35
  %v1751 = vpop.permute.xlu0 %1750
  %1752 = vrot.lane.b32.xlu0 %v673, 35
  %v1753 = vpop.permute.xlu0 %1752
  %1754 = vrot.lane.b32.xlu0 %v676, 35
  %v1755 = vpop.permute.xlu0 %1754
  %1756 = vrot.lane.b32.xlu0 %v679, 35
  %v1757 = vpop.permute.xlu0 %1756
  %1758 = vrot.lane.b32.xlu0 %v890, 35
  %v1759 = vpop.permute.xlu0 %1758
  %1760 = vrot.lane.b32.xlu0 %v685, 35
  %v1761 = vpop.permute.xlu0 %1760
  %1762 = vrot.lane.b32.xlu0 %v688, 35
  %v1763 = vpop.permute.xlu0 %1762
  %1764 = vrot.lane.b32.xlu0 %v691, 35
  %v1765 = vpop.permute.xlu0 %1764
  %1766 = vrot.lane.b32.xlu0 %v694, 35
  %v1767 = vpop.permute.xlu0 %1766
  %1768 = vrot.lane.b32.xlu0 %v697, 35
  %v1769 = vpop.permute.xlu0 %1768
  %1770 = vrot.lane.b32.xlu0 %v700, 35
  %v1771 = vpop.permute.xlu0 %1770
  %1772 = vrot.lane.b32.xlu0 %v703, 35
  %v1773 = vpop.permute.xlu0 %1772
  %1774 = vrot.lane.b32.xlu0 %v893, 35
  %v1775 = vpop.permute.xlu0 %1774
  %1776 = vrot.lane.b32.xlu0 %v709, 35
  %v1777 = vpop.permute.xlu0 %1776
  %1778 = vrot.lane.b32.xlu0 %v712, 35
  %v1779 = vpop.permute.xlu0 %1778
  %1780 = vrot.lane.b32.xlu0 %v715, 35
  %v1781 = vpop.permute.xlu0 %1780
  %1782 = vrot.lane.b32.xlu0 %v718, 35
  %v1783 = vpop.permute.xlu0 %1782
  %1784 = vrot.lane.b32.xlu0 %v721, 35
  %v1785 = vpop.permute.xlu0 %1784
  %1786 = vrot.lane.b32.xlu0 %v724, 35
  %v1787 = vpop.permute.xlu0 %1786
  %1788 = vrot.lane.b32.xlu0 %v727, 35
  %v1789 = vpop.permute.xlu0 %1788
  %1790 = vrot.lane.b32.xlu0 %v896, 35
  %v1791 = vpop.permute.xlu0 %1790
  %1792 = vrot.lane.b32.xlu0 %v733, 35
  %v1793 = vpop.permute.xlu0 %1792
  %1794 = vrot.lane.b32.xlu0 %v736, 35
  %v1795 = vpop.permute.xlu0 %1794
  %1796 = vrot.lane.b32.xlu0 %v739, 35
  %v1797 = vpop.permute.xlu0 %1796
  %1798 = vrot.lane.b32.xlu0 %v742, 35
  %v1799 = vpop.permute.xlu0 %1798
  %1800 = vrot.lane.b32.xlu0 %v745, 35
  %v1801 = vpop.permute.xlu0 %1800
  %1802 = vrot.lane.b32.xlu0 %v748, 35
  %v1803 = vpop.permute.xlu0 %1802
  %1804 = vrot.lane.b32.xlu0 %v751, 35
  %v1805 = vpop.permute.xlu0 %1804
  %1806 = vrot.lane.b32.xlu0 %v899, 35
  %v1807 = vpop.permute.xlu0 %1806
  %1808 = vrot.lane.b32.xlu0 %v757, 35
  %v1809 = vpop.permute.xlu0 %1808
  %1810 = vrot.lane.b32.xlu0 %v760, 35
  %v1811 = vpop.permute.xlu0 %1810
  %1812 = vrot.lane.b32.xlu0 %v763, 35
  %v1813 = vpop.permute.xlu0 %1812
  %1814 = vrot.lane.b32.xlu0 %v766, 35
  %v1815 = vpop.permute.xlu0 %1814
  %1816 = vrot.lane.b32.xlu0 %v769, 35
  %v1817 = vpop.permute.xlu0 %1816
  %1818 = vrot.lane.b32.xlu0 %v772, 35
  %v1819 = vpop.permute.xlu0 %1818
  %1820 = vrot.lane.b32.xlu0 %v775, 35
  %v1821 = vpop.permute.xlu0 %1820
  %1822 = vrot.lane.b32.xlu0 %v902, 35
  %v1823 = vpop.permute.xlu0 %1822
  %1824 = vrot.lane.b32.xlu0 %v781, 35
  %v1825 = vpop.permute.xlu0 %1824
  %1826 = vrot.lane.b32.xlu0 %v784, 35
  %v1827 = vpop.permute.xlu0 %1826
  %1828 = vrot.lane.b32.xlu0 %v787, 35
  %v1829 = vpop.permute.xlu0 %1828
  %1830 = vrot.lane.b32.xlu0 %v790, 35
  %v1831 = vpop.permute.xlu0 %1830
  %1832 = vrot.lane.b32.xlu0 %v793, 35
  %v1833 = vpop.permute.xlu0 %1832
  %1834 = vrot.lane.b32.xlu0 %v796, 35
  %v1835 = vpop.permute.xlu0 %1834
  %1836 = vrot.lane.b32.xlu0 %v799, 35
  %v1837 = vpop.permute.xlu0 %1836
  %1838 = vrot.lane.b32.xlu0 %v905, 35
  %v1839 = vpop.permute.xlu0 %1838
  %1840 = vrot.lane.b32.xlu0 %v805, 35
  %v1841 = vpop.permute.xlu0 %1840
  %1842 = vrot.lane.b32.xlu0 %v808, 35
  %v1843 = vpop.permute.xlu0 %1842
  %1844 = vrot.lane.b32.xlu0 %v811, 35
  %v1845 = vpop.permute.xlu0 %1844
  %1846 = vrot.lane.b32.xlu0 %v814, 35
  %v1847 = vpop.permute.xlu0 %1846
  %1848 = vrot.lane.b32.xlu0 %v817, 35
  %v1849 = vpop.permute.xlu0 %1848
  %1850 = vrot.lane.b32.xlu0 %v820, 35
  %v1851 = vpop.permute.xlu0 %1850
  %1852 = vrot.lane.b32.xlu0 %v823, 35
  %v1853 = vpop.permute.xlu0 %1852
  %1854 = vrot.lane.b32.xlu0 %v908, 35
  %v1855 = vpop.permute.xlu0 %1854
  %1856 = vrot.lane.b32.xlu0 %v829, 35
  %v1857 = vpop.permute.xlu0 %1856
  %1858 = vrot.lane.b32.xlu0 %v832, 35
  %v1859 = vpop.permute.xlu0 %1858
  %1860 = vrot.lane.b32.xlu0 %v835, 35
  %v1861 = vpop.permute.xlu0 %1860
  %1862 = vrot.lane.b32.xlu0 %v838, 35
  %v1863 = vpop.permute.xlu0 %1862
  %1864 = vrot.lane.b32.xlu0 %v841, 35
  %v1865 = vpop.permute.xlu0 %1864
  %1866 = vrot.lane.b32.xlu0 %v844, 35
  %v1867 = vpop.permute.xlu0 %1866
  %1868 = vrot.lane.b32.xlu0 %v847, 35
  %v1869 = vpop.permute.xlu0 %1868
  %1870 = vrot.lane.b32.xlu0 %v911, 35
  %v1871 = vpop.permute.xlu0 %1870
  %1936 = vrot.lane.b32.xlu0 %v179, 42
  %v1937 = vpop.permute.xlu0 %1936
  %1938 = vrot.lane.b32.xlu0 %v181, 42
  %v1939 = vpop.permute.xlu0 %1938
  %1940 = vrot.lane.b32.xlu0 %v183, 42
  %v1941 = vpop.permute.xlu0 %1940
  %1942 = vrot.lane.b32.xlu0 %v185, 42
  %v1943 = vpop.permute.xlu0 %1942
  %1944 = vrot.lane.b32.xlu0 %v187, 42
  %v1945 = vpop.permute.xlu0 %1944
  %1946 = vrot.lane.b32.xlu0 %v189, 42
  %v1947 = vpop.permute.xlu0 %1946
  %1948 = vrot.lane.b32.xlu0 %v191, 42
  %v1949 = vpop.permute.xlu0 %1948
  %1950 = vrot.lane.b32.xlu0 %v193, 42
  %v1951 = vpop.permute.xlu0 %1950
  %1952 = vrot.lane.b32.xlu0 %v199, 42
  %v1953 = vpop.permute.xlu0 %1952
  %1954 = vrot.lane.b32.xlu0 %v201, 42
  %v1955 = vpop.permute.xlu0 %1954
  %1956 = vrot.lane.b32.xlu0 %v203, 42
  %v1957 = vpop.permute.xlu0 %1956
  %1958 = vrot.lane.b32.xlu0 %v205, 42
  %v1959 = vpop.permute.xlu0 %1958
  %1960 = vrot.lane.b32.xlu0 %v207, 42
  %v1961 = vpop.permute.xlu0 %1960
  %1962 = vrot.lane.b32.xlu0 %v209, 42
  %v1963 = vpop.permute.xlu0 %1962
  %1964 = vrot.lane.b32.xlu0 %v211, 42
  %v1965 = vpop.permute.xlu0 %1964
  %1966 = vrot.lane.b32.xlu0 %v213, 42
  %v1967 = vpop.permute.xlu0 %1966
  %1968 = vrot.lane.b32.xlu0 %v219, 42
  %v1969 = vpop.permute.xlu0 %1968
  %1970 = vrot.lane.b32.xlu0 %v221, 42
  %v1971 = vpop.permute.xlu0 %1970
  %1972 = vrot.lane.b32.xlu0 %v223, 42
  %v1973 = vpop.permute.xlu0 %1972
  %1974 = vrot.lane.b32.xlu0 %v225, 42
  %v1975 = vpop.permute.xlu0 %1974
  %1976 = vrot.lane.b32.xlu0 %v227, 42
  %v1977 = vpop.permute.xlu0 %1976
  %1978 = vrot.lane.b32.xlu0 %v229, 42
  %v1979 = vpop.permute.xlu0 %1978
  %1980 = vrot.lane.b32.xlu0 %v231, 42
  %v1981 = vpop.permute.xlu0 %1980
  %1982 = vrot.lane.b32.xlu0 %v233, 42
  %v1983 = vpop.permute.xlu0 %1982
  %1984 = vrot.lane.b32.xlu0 %v239, 42
  %v1985 = vpop.permute.xlu0 %1984
  %1986 = vrot.lane.b32.xlu0 %v241, 42
  %v1987 = vpop.permute.xlu0 %1986
  %1988 = vrot.lane.b32.xlu0 %v243, 42
  %v1989 = vpop.permute.xlu0 %1988
  %1990 = vrot.lane.b32.xlu0 %v245, 42
  %v1991 = vpop.permute.xlu0 %1990
  %1992 = vrot.lane.b32.xlu0 %v247, 42
  %v1993 = vpop.permute.xlu0 %1992
  %1994 = vrot.lane.b32.xlu0 %v249, 42
  %v1995 = vpop.permute.xlu0 %1994
  %1996 = vrot.lane.b32.xlu0 %v251, 42
  %v1997 = vpop.permute.xlu0 %1996
  %1998 = vrot.lane.b32.xlu0 %v253, 42
  %v1999 = vpop.permute.xlu0 %1998
  %2000 = vrot.lane.b32.xlu0 %v259, 42
  %v2001 = vpop.permute.xlu0 %2000
  %2002 = vrot.lane.b32.xlu0 %v261, 42
  %v2003 = vpop.permute.xlu0 %2002
  %2004 = vrot.lane.b32.xlu0 %v263, 42
  %v2005 = vpop.permute.xlu0 %2004
  %2006 = vrot.lane.b32.xlu0 %v265, 42
  %v2007 = vpop.permute.xlu0 %2006
  %2008 = vrot.lane.b32.xlu0 %v267, 42
  %v2009 = vpop.permute.xlu0 %2008
  %2010 = vrot.lane.b32.xlu0 %v269, 42
  %v2011 = vpop.permute.xlu0 %2010
  %2012 = vrot.lane.b32.xlu0 %v271, 42
  %v2013 = vpop.permute.xlu0 %2012
  %2014 = vrot.lane.b32.xlu0 %v273, 42
  %v2015 = vpop.permute.xlu0 %2014
  %2016 = vrot.lane.b32.xlu0 %v279, 42
  %v2017 = vpop.permute.xlu0 %2016
  %2018 = vrot.lane.b32.xlu0 %v281, 42
  %v2019 = vpop.permute.xlu0 %2018
  %2020 = vrot.lane.b32.xlu0 %v283, 42
  %v2021 = vpop.permute.xlu0 %2020
  %2022 = vrot.lane.b32.xlu0 %v285, 42
  %v2023 = vpop.permute.xlu0 %2022
  %2024 = vrot.lane.b32.xlu0 %v287, 42
  %v2025 = vpop.permute.xlu0 %2024
  %2026 = vrot.lane.b32.xlu0 %v289, 42
  %v2027 = vpop.permute.xlu0 %2026
  %2028 = vrot.lane.b32.xlu0 %v291, 42
  %v2029 = vpop.permute.xlu0 %2028
  %2030 = vrot.lane.b32.xlu0 %v293, 42
  %v2031 = vpop.permute.xlu0 %2030
  %2032 = vrot.lane.b32.xlu0 %v299, 42
  %v2033 = vpop.permute.xlu0 %2032
  %2034 = vrot.lane.b32.xlu0 %v301, 42
  %v2035 = vpop.permute.xlu0 %2034
  %2036 = vrot.lane.b32.xlu0 %v303, 42
  %v2037 = vpop.permute.xlu0 %2036
  %2038 = vrot.lane.b32.xlu0 %v305, 42
  %v2039 = vpop.permute.xlu0 %2038
  %2040 = vrot.lane.b32.xlu0 %v307, 42
  %v2041 = vpop.permute.xlu0 %2040
  %2042 = vrot.lane.b32.xlu0 %v309, 42
  %v2043 = vpop.permute.xlu0 %2042
  %2044 = vrot.lane.b32.xlu0 %v311, 42
  %v2045 = vpop.permute.xlu0 %2044
  %2046 = vrot.lane.b32.xlu0 %v313, 42
  %v2047 = vpop.permute.xlu0 %2046
  %2048 = vrot.lane.b32.xlu0 %v319, 42
  %v2049 = vpop.permute.xlu0 %2048
  %2050 = vrot.lane.b32.xlu0 %v321, 42
  %v2051 = vpop.permute.xlu0 %2050
  %2052 = vrot.lane.b32.xlu0 %v323, 42
  %v2053 = vpop.permute.xlu0 %2052
  %2054 = vrot.lane.b32.xlu0 %v325, 42
  %v2055 = vpop.permute.xlu0 %2054
  %2056 = vrot.lane.b32.xlu0 %v327, 42
  %v2057 = vpop.permute.xlu0 %2056
  %2058 = vrot.lane.b32.xlu0 %v329, 42
  %v2059 = vpop.permute.xlu0 %2058
  %2060 = vrot.lane.b32.xlu0 %v331, 42
  %v2061 = vpop.permute.xlu0 %2060
  %2062 = vrot.lane.b32.xlu0 %v333, 42
  %v2063 = vpop.permute.xlu0 %2062
  %2128 = vrot.lane.b32.xlu0 %v471, 49
  %v2129 = vpop.permute.xlu0 %2128
  %2130 = vrot.lane.b32.xlu0 %v474, 49
  %v2131 = vpop.permute.xlu0 %2130
  %2132 = vrot.lane.b32.xlu0 %v477, 49
  %v2133 = vpop.permute.xlu0 %2132
  %2134 = vrot.lane.b32.xlu0 %v480, 49
  %v2135 = vpop.permute.xlu0 %2134
  %2136 = vrot.lane.b32.xlu0 %v483, 49
  %v2137 = vpop.permute.xlu0 %2136
  %2138 = vrot.lane.b32.xlu0 %v486, 49
  %v2139 = vpop.permute.xlu0 %2138
  %2140 = vrot.lane.b32.xlu0 %v866, 49
  %v2141 = vpop.permute.xlu0 %2140
  %2142 = vrot.lane.b32.xlu0 %v930, 49
  %v2143 = vpop.permute.xlu0 %2142
  %2144 = vrot.lane.b32.xlu0 %v495, 49
  %v2145 = vpop.permute.xlu0 %2144
  %2146 = vrot.lane.b32.xlu0 %v498, 49
  %v2147 = vpop.permute.xlu0 %2146
  %2148 = vrot.lane.b32.xlu0 %v501, 49
  %v2149 = vpop.permute.xlu0 %2148
  %2150 = vrot.lane.b32.xlu0 %v504, 49
  %v2151 = vpop.permute.xlu0 %2150
  %2152 = vrot.lane.b32.xlu0 %v507, 49
  %v2153 = vpop.permute.xlu0 %2152
  %2154 = vrot.lane.b32.xlu0 %v510, 49
  %v2155 = vpop.permute.xlu0 %2154
  %2156 = vrot.lane.b32.xlu0 %v869, 49
  %v2157 = vpop.permute.xlu0 %2156
  %2158 = vrot.lane.b32.xlu0 %v933, 49
  %v2159 = vpop.permute.xlu0 %2158
  %2160 = vrot.lane.b32.xlu0 %v519, 49
  %v2161 = vpop.permute.xlu0 %2160
  %2162 = vrot.lane.b32.xlu0 %v522, 49
  %v2163 = vpop.permute.xlu0 %2162
  %2164 = vrot.lane.b32.xlu0 %v525, 49
  %v2165 = vpop.permute.xlu0 %2164
  %2166 = vrot.lane.b32.xlu0 %v528, 49
  %v2167 = vpop.permute.xlu0 %2166
  %2168 = vrot.lane.b32.xlu0 %v531, 49
  %v2169 = vpop.permute.xlu0 %2168
  %2170 = vrot.lane.b32.xlu0 %v534, 49
  %v2171 = vpop.permute.xlu0 %2170
  %2172 = vrot.lane.b32.xlu0 %v872, 49
  %v2173 = vpop.permute.xlu0 %2172
  %2174 = vrot.lane.b32.xlu0 %v936, 49
  %v2175 = vpop.permute.xlu0 %2174
  %2176 = vrot.lane.b32.xlu0 %v543, 49
  %v2177 = vpop.permute.xlu0 %2176
  %2178 = vrot.lane.b32.xlu0 %v546, 49
  %v2179 = vpop.permute.xlu0 %2178
  %2180 = vrot.lane.b32.xlu0 %v549, 49
  %v2181 = vpop.permute.xlu0 %2180
  %2182 = vrot.lane.b32.xlu0 %v552, 49
  %v2183 = vpop.permute.xlu0 %2182
  %2184 = vrot.lane.b32.xlu0 %v555, 49
  %v2185 = vpop.permute.xlu0 %2184
  %2186 = vrot.lane.b32.xlu0 %v558, 49
  %v2187 = vpop.permute.xlu0 %2186
  %2188 = vrot.lane.b32.xlu0 %v875, 49
  %v2189 = vpop.permute.xlu0 %2188
  %2190 = vrot.lane.b32.xlu0 %v939, 49
  %v2191 = vpop.permute.xlu0 %2190
  %2192 = vrot.lane.b32.xlu0 %v567, 49
  %v2193 = vpop.permute.xlu0 %2192
  %2194 = vrot.lane.b32.xlu0 %v570, 49
  %v2195 = vpop.permute.xlu0 %2194
  %2196 = vrot.lane.b32.xlu0 %v573, 49
  %v2197 = vpop.permute.xlu0 %2196
  %2198 = vrot.lane.b32.xlu0 %v576, 49
  %v2199 = vpop.permute.xlu0 %2198
  %2200 = vrot.lane.b32.xlu0 %v579, 49
  %v2201 = vpop.permute.xlu0 %2200
  %2202 = vrot.lane.b32.xlu0 %v582, 49
  %v2203 = vpop.permute.xlu0 %2202
  %2204 = vrot.lane.b32.xlu0 %v878, 49
  %v2205 = vpop.permute.xlu0 %2204
  %2206 = vrot.lane.b32.xlu0 %v942, 49
  %v2207 = vpop.permute.xlu0 %2206
  %2208 = vrot.lane.b32.xlu0 %v591, 49
  %v2209 = vpop.permute.xlu0 %2208
  %2210 = vrot.lane.b32.xlu0 %v594, 49
  %v2211 = vpop.permute.xlu0 %2210
  %2212 = vrot.lane.b32.xlu0 %v597, 49
  %v2213 = vpop.permute.xlu0 %2212
  %2214 = vrot.lane.b32.xlu0 %v600, 49
  %v2215 = vpop.permute.xlu0 %2214
  %2216 = vrot.lane.b32.xlu0 %v603, 49
  %v2217 = vpop.permute.xlu0 %2216
  %2218 = vrot.lane.b32.xlu0 %v606, 49
  %v2219 = vpop.permute.xlu0 %2218
  %2220 = vrot.lane.b32.xlu0 %v881, 49
  %v2221 = vpop.permute.xlu0 %2220
  %2222 = vrot.lane.b32.xlu0 %v945, 49
  %v2223 = vpop.permute.xlu0 %2222
  %2224 = vrot.lane.b32.xlu0 %v615, 49
  %v2225 = vpop.permute.xlu0 %2224
  %2226 = vrot.lane.b32.xlu0 %v618, 49
  %v2227 = vpop.permute.xlu0 %2226
  %2228 = vrot.lane.b32.xlu0 %v621, 49
  %v2229 = vpop.permute.xlu0 %2228
  %2230 = vrot.lane.b32.xlu0 %v624, 49
  %v2231 = vpop.permute.xlu0 %2230
  %2232 = vrot.lane.b32.xlu0 %v627, 49
  %v2233 = vpop.permute.xlu0 %2232
  %2234 = vrot.lane.b32.xlu0 %v630, 49
  %v2235 = vpop.permute.xlu0 %2234
  %2236 = vrot.lane.b32.xlu0 %v884, 49
  %v2237 = vpop.permute.xlu0 %2236
  %2238 = vrot.lane.b32.xlu0 %v948, 49
  %v2239 = vpop.permute.xlu0 %2238
  %2240 = vrot.lane.b32.xlu0 %v639, 49
  %v2241 = vpop.permute.xlu0 %2240
  %2242 = vrot.lane.b32.xlu0 %v642, 49
  %v2243 = vpop.permute.xlu0 %2242
  %2244 = vrot.lane.b32.xlu0 %v645, 49
  %v2245 = vpop.permute.xlu0 %2244
  %2246 = vrot.lane.b32.xlu0 %v648, 49
  %v2247 = vpop.permute.xlu0 %2246
  %2248 = vrot.lane.b32.xlu0 %v651, 49
  %v2249 = vpop.permute.xlu0 %2248
  %2250 = vrot.lane.b32.xlu0 %v654, 49
  %v2251 = vpop.permute.xlu0 %2250
  %2252 = vrot.lane.b32.xlu0 %v887, 49
  %v2253 = vpop.permute.xlu0 %2252
  %2254 = vrot.lane.b32.xlu0 %v951, 49
  %v2255 = vpop.permute.xlu0 %2254
  %2320 = vrot.lane.b32.xlu0 %v664, 56
  %v2321 = vpop.permute.xlu0 %2320
  %2322 = vrot.lane.b32.xlu0 %v667, 56
  %v2323 = vpop.permute.xlu0 %2322
  %2324 = vrot.lane.b32.xlu0 %v670, 56
  %v2325 = vpop.permute.xlu0 %2324
  %2326 = vrot.lane.b32.xlu0 %v673, 56
  %v2327 = vpop.permute.xlu0 %2326
  %2328 = vrot.lane.b32.xlu0 %v676, 56
  %v2329 = vpop.permute.xlu0 %2328
  %2330 = vrot.lane.b32.xlu0 %v679, 56
  %v2331 = vpop.permute.xlu0 %2330
  %2332 = vrot.lane.b32.xlu0 %v890, 56
  %v2333 = vpop.permute.xlu0 %2332
  %2334 = vrot.lane.b32.xlu0 %v954, 56
  %v2335 = vpop.permute.xlu0 %2334
  %2336 = vrot.lane.b32.xlu0 %v688, 56
  %v2337 = vpop.permute.xlu0 %2336
  %2338 = vrot.lane.b32.xlu0 %v691, 56
  %v2339 = vpop.permute.xlu0 %2338
  %2340 = vrot.lane.b32.xlu0 %v694, 56
  %v2341 = vpop.permute.xlu0 %2340
  %2342 = vrot.lane.b32.xlu0 %v697, 56
  %v2343 = vpop.permute.xlu0 %2342
  %2344 = vrot.lane.b32.xlu0 %v700, 56
  %v2345 = vpop.permute.xlu0 %2344
  %2346 = vrot.lane.b32.xlu0 %v703, 56
  %v2347 = vpop.permute.xlu0 %2346
  %2348 = vrot.lane.b32.xlu0 %v893, 56
  %v2349 = vpop.permute.xlu0 %2348
  %2350 = vrot.lane.b32.xlu0 %v957, 56
  %v2351 = vpop.permute.xlu0 %2350
  %2352 = vrot.lane.b32.xlu0 %v712, 56
  %v2353 = vpop.permute.xlu0 %2352
  %2354 = vrot.lane.b32.xlu0 %v715, 56
  %v2355 = vpop.permute.xlu0 %2354
  %2356 = vrot.lane.b32.xlu0 %v718, 56
  %v2357 = vpop.permute.xlu0 %2356
  %2358 = vrot.lane.b32.xlu0 %v721, 56
  %v2359 = vpop.permute.xlu0 %2358
  %2360 = vrot.lane.b32.xlu0 %v724, 56
  %v2361 = vpop.permute.xlu0 %2360
  %2362 = vrot.lane.b32.xlu0 %v727, 56
  %v2363 = vpop.permute.xlu0 %2362
  %2364 = vrot.lane.b32.xlu0 %v896, 56
  %v2365 = vpop.permute.xlu0 %2364
  %2366 = vrot.lane.b32.xlu0 %v960, 56
  %v2367 = vpop.permute.xlu0 %2366
  %2368 = vrot.lane.b32.xlu0 %v736, 56
  %v2369 = vpop.permute.xlu0 %2368
  %2370 = vrot.lane.b32.xlu0 %v739, 56
  %v2371 = vpop.permute.xlu0 %2370
  %2372 = vrot.lane.b32.xlu0 %v742, 56
  %v2373 = vpop.permute.xlu0 %2372
  %2374 = vrot.lane.b32.xlu0 %v745, 56
  %v2375 = vpop.permute.xlu0 %2374
  %2376 = vrot.lane.b32.xlu0 %v748, 56
  %v2377 = vpop.permute.xlu0 %2376
  %2378 = vrot.lane.b32.xlu0 %v751, 56
  %v2379 = vpop.permute.xlu0 %2378
  %2380 = vrot.lane.b32.xlu0 %v899, 56
  %v2381 = vpop.permute.xlu0 %2380
  %2382 = vrot.lane.b32.xlu0 %v963, 56
  %v2383 = vpop.permute.xlu0 %2382
  %2384 = vrot.lane.b32.xlu0 %v760, 56
  %v2385 = vpop.permute.xlu0 %2384
  %2386 = vrot.lane.b32.xlu0 %v763, 56
  %v2387 = vpop.permute.xlu0 %2386
  %2388 = vrot.lane.b32.xlu0 %v766, 56
  %v2389 = vpop.permute.xlu0 %2388
  %2390 = vrot.lane.b32.xlu0 %v769, 56
  %v2391 = vpop.permute.xlu0 %2390
  %2392 = vrot.lane.b32.xlu0 %v772, 56
  %v2393 = vpop.permute.xlu0 %2392
  %2394 = vrot.lane.b32.xlu0 %v775, 56
  %v2395 = vpop.permute.xlu0 %2394
  %2396 = vrot.lane.b32.xlu0 %v902, 56
  %v2397 = vpop.permute.xlu0 %2396
  %2398 = vrot.lane.b32.xlu0 %v966, 56
  %v2399 = vpop.permute.xlu0 %2398
  %2400 = vrot.lane.b32.xlu0 %v784, 56
  %v2401 = vpop.permute.xlu0 %2400
  %2402 = vrot.lane.b32.xlu0 %v787, 56
  %v2403 = vpop.permute.xlu0 %2402
  %2404 = vrot.lane.b32.xlu0 %v790, 56
  %v2405 = vpop.permute.xlu0 %2404
  %2406 = vrot.lane.b32.xlu0 %v793, 56
  %v2407 = vpop.permute.xlu0 %2406
  %2408 = vrot.lane.b32.xlu0 %v796, 56
  %v2409 = vpop.permute.xlu0 %2408
  %2410 = vrot.lane.b32.xlu0 %v799, 56
  %v2411 = vpop.permute.xlu0 %2410
  %2412 = vrot.lane.b32.xlu0 %v905, 56
  %v2413 = vpop.permute.xlu0 %2412
  %2414 = vrot.lane.b32.xlu0 %v969, 56
  %v2415 = vpop.permute.xlu0 %2414
  %2416 = vrot.lane.b32.xlu0 %v808, 56
  %v2417 = vpop.permute.xlu0 %2416
  %2418 = vrot.lane.b32.xlu0 %v811, 56
  %v2419 = vpop.permute.xlu0 %2418
  %2420 = vrot.lane.b32.xlu0 %v814, 56
  %v2421 = vpop.permute.xlu0 %2420
  %2422 = vrot.lane.b32.xlu0 %v817, 56
  %v2423 = vpop.permute.xlu0 %2422
  %2424 = vrot.lane.b32.xlu0 %v820, 56
  %v2425 = vpop.permute.xlu0 %2424
  %2426 = vrot.lane.b32.xlu0 %v823, 56
  %v2427 = vpop.permute.xlu0 %2426
  %2428 = vrot.lane.b32.xlu0 %v908, 56
  %v2429 = vpop.permute.xlu0 %2428
  %2430 = vrot.lane.b32.xlu0 %v972, 56
  %v2431 = vpop.permute.xlu0 %2430
  %2432 = vrot.lane.b32.xlu0 %v832, 56
  %v2433 = vpop.permute.xlu0 %2432
  %2434 = vrot.lane.b32.xlu0 %v835, 56
  %v2435 = vpop.permute.xlu0 %2434
  %2436 = vrot.lane.b32.xlu0 %v838, 56
  %v2437 = vpop.permute.xlu0 %2436
  %2438 = vrot.lane.b32.xlu0 %v841, 56
  %v2439 = vpop.permute.xlu0 %2438
  %2440 = vrot.lane.b32.xlu0 %v844, 56
  %v2441 = vpop.permute.xlu0 %2440
  %2442 = vrot.lane.b32.xlu0 %v847, 56
  %v2443 = vpop.permute.xlu0 %2442
  %2444 = vrot.lane.b32.xlu0 %v911, 56
  %v2445 = vpop.permute.xlu0 %2444
  %2446 = vrot.lane.b32.xlu0 %v975, 56
  %v2447 = vpop.permute.xlu0 %2446
  %vm2512 = vcmask 56320
  %v2513 = vsel %vm2512, %v175, %v977
  %v2514 = vsel %vm2512, %v177, %v979
  %v2515 = vsel %vm2512, %v179, %v981
  %v2516 = vsel %vm2512, %v181, %v983
  %v2517 = vsel %vm2512, %v183, %v985
  %v2518 = vsel %vm2512, %v185, %v987
  %v2519 = vsel %vm2512, %v187, %v989
  %v2520 = vsel %vm2512, %v189, %v991
  %v2521 = vsel %vm2512, %v195, %v993
  %v2522 = vsel %vm2512, %v197, %v995
  %v2523 = vsel %vm2512, %v199, %v997
  %v2524 = vsel %vm2512, %v201, %v999
  %v2525 = vsel %vm2512, %v203, %v1001
  %v2526 = vsel %vm2512, %v205, %v1003
  %v2527 = vsel %vm2512, %v207, %v1005
  %v2528 = vsel %vm2512, %v209, %v1007
  %v2529 = vsel %vm2512, %v215, %v1009
  %v2530 = vsel %vm2512, %v217, %v1011
  %v2531 = vsel %vm2512, %v219, %v1013
  %v2532 = vsel %vm2512, %v221, %v1015
  %v2533 = vsel %vm2512, %v223, %v1017
  %v2534 = vsel %vm2512, %v225, %v1019
  %v2535 = vsel %vm2512, %v227, %v1021
  %v2536 = vsel %vm2512, %v229, %v1023
  %v2537 = vsel %vm2512, %v235, %v1025
  %v2538 = vsel %vm2512, %v237, %v1027
  %v2539 = vsel %vm2512, %v239, %v1029
  %v2540 = vsel %vm2512, %v241, %v1031
  %v2541 = vsel %vm2512, %v243, %v1033
  %v2542 = vsel %vm2512, %v245, %v1035
  %v2543 = vsel %vm2512, %v247, %v1037
  %v2544 = vsel %vm2512, %v249, %v1039
  %v2545 = vsel %vm2512, %v255, %v1041
  %v2546 = vsel %vm2512, %v257, %v1043
  %v2547 = vsel %vm2512, %v259, %v1045
  %v2548 = vsel %vm2512, %v261, %v1047
  %v2549 = vsel %vm2512, %v263, %v1049
  %v2550 = vsel %vm2512, %v265, %v1051
  %v2551 = vsel %vm2512, %v267, %v1053
  %v2552 = vsel %vm2512, %v269, %v1055
  %v2553 = vsel %vm2512, %v275, %v1057
  %v2554 = vsel %vm2512, %v277, %v1059
  %v2555 = vsel %vm2512, %v279, %v1061
  %v2556 = vsel %vm2512, %v281, %v1063
  %v2557 = vsel %vm2512, %v283, %v1065
  %v2558 = vsel %vm2512, %v285, %v1067
  %v2559 = vsel %vm2512, %v287, %v1069
  %v2560 = vsel %vm2512, %v289, %v1071
  %v2561 = vsel %vm2512, %v295, %v1073
  %v2562 = vsel %vm2512, %v297, %v1075
  %v2563 = vsel %vm2512, %v299, %v1077
  %v2564 = vsel %vm2512, %v301, %v1079
  %v2565 = vsel %vm2512, %v303, %v1081
  %v2566 = vsel %vm2512, %v305, %v1083
  %v2567 = vsel %vm2512, %v307, %v1085
  %v2568 = vsel %vm2512, %v309, %v1087
  %v2569 = vsel %vm2512, %v315, %v1089
  %v2570 = vsel %vm2512, %v317, %v1091
  %v2571 = vsel %vm2512, %v319, %v1093
  %v2572 = vsel %vm2512, %v321, %v1095
  %v2573 = vsel %vm2512, %v323, %v1097
  %v2574 = vsel %vm2512, %v325, %v1099
  %v2575 = vsel %vm2512, %v327, %v1101
  %v2576 = vsel %vm2512, %v329, %v1103
  %v2577 = vsel %vm58, %v2513, %v1169
  %v2578 = vsel %vm58, %v2514, %v1171
  %v2579 = vsel %vm58, %v2515, %v1173
  %v2580 = vsel %vm58, %v2516, %v1175
  %v2581 = vsel %vm58, %v2517, %v1177
  %v2582 = vsel %vm58, %v2518, %v1179
  %v2583 = vsel %vm58, %v2519, %v1181
  %v2584 = vsel %vm58, %v2520, %v1183
  %v2585 = vsel %vm58, %v2521, %v1185
  %v2586 = vsel %vm58, %v2522, %v1187
  %v2587 = vsel %vm58, %v2523, %v1189
  %v2588 = vsel %vm58, %v2524, %v1191
  %v2589 = vsel %vm58, %v2525, %v1193
  %v2590 = vsel %vm58, %v2526, %v1195
  %v2591 = vsel %vm58, %v2527, %v1197
  %v2592 = vsel %vm58, %v2528, %v1199
  %v2593 = vsel %vm58, %v2529, %v1201
  %v2594 = vsel %vm58, %v2530, %v1203
  %v2595 = vsel %vm58, %v2531, %v1205
  %v2596 = vsel %vm58, %v2532, %v1207
  %v2597 = vsel %vm58, %v2533, %v1209
  %v2598 = vsel %vm58, %v2534, %v1211
  %v2599 = vsel %vm58, %v2535, %v1213
  %v2600 = vsel %vm58, %v2536, %v1215
  %v2601 = vsel %vm58, %v2537, %v1217
  %v2602 = vsel %vm58, %v2538, %v1219
  %v2603 = vsel %vm58, %v2539, %v1221
  %v2604 = vsel %vm58, %v2540, %v1223
  %v2605 = vsel %vm58, %v2541, %v1225
  %v2606 = vsel %vm58, %v2542, %v1227
  %v2607 = vsel %vm58, %v2543, %v1229
  %v2608 = vsel %vm58, %v2544, %v1231
  %v2609 = vsel %vm58, %v2545, %v1233
  %v2610 = vsel %vm58, %v2546, %v1235
  %v2611 = vsel %vm58, %v2547, %v1237
  %v2612 = vsel %vm58, %v2548, %v1239
  %v2613 = vsel %vm58, %v2549, %v1241
  %v2614 = vsel %vm58, %v2550, %v1243
  %v2615 = vsel %vm58, %v2551, %v1245
  %v2616 = vsel %vm58, %v2552, %v1247
  %v2617 = vsel %vm58, %v2553, %v1249
  %v2618 = vsel %vm58, %v2554, %v1251
  %v2619 = vsel %vm58, %v2555, %v1253
  %v2620 = vsel %vm58, %v2556, %v1255
  %v2621 = vsel %vm58, %v2557, %v1257
  %v2622 = vsel %vm58, %v2558, %v1259
  %v2623 = vsel %vm58, %v2559, %v1261
  %v2624 = vsel %vm58, %v2560, %v1263
  %v2625 = vsel %vm58, %v2561, %v1265
  %v2626 = vsel %vm58, %v2562, %v1267
  %v2627 = vsel %vm58, %v2563, %v1269
  %v2628 = vsel %vm58, %v2564, %v1271
  %v2629 = vsel %vm58, %v2565, %v1273
  %v2630 = vsel %vm58, %v2566, %v1275
  %v2631 = vsel %vm58, %v2567, %v1277
  %v2632 = vsel %vm58, %v2568, %v1279
  %v2633 = vsel %vm58, %v2569, %v1281
  %v2634 = vsel %vm58, %v2570, %v1283
  %v2635 = vsel %vm58, %v2571, %v1285
  %v2636 = vsel %vm58, %v2572, %v1287
  %v2637 = vsel %vm58, %v2573, %v1289
  %v2638 = vsel %vm58, %v2574, %v1291
  %v2639 = vsel %vm58, %v2575, %v1293
  %v2640 = vsel %vm58, %v2576, %v1295
  %vm2641 = vcmask 171008
  %v2642 = vsel %vm2641, %v2577, %v1361
  %v2643 = vsel %vm2641, %v2578, %v1363
  %v2644 = vsel %vm2641, %v2579, %v1365
  %v2645 = vsel %vm2641, %v2580, %v1367
  %v2646 = vsel %vm2641, %v2581, %v1369
  %v2647 = vsel %vm2641, %v2582, %v1371
  %v2648 = vsel %vm2641, %v2583, %v1373
  %v2649 = vsel %vm2641, %v2584, %v1375
  %v2650 = vsel %vm2641, %v2585, %v1377
  %v2651 = vsel %vm2641, %v2586, %v1379
  %v2652 = vsel %vm2641, %v2587, %v1381
  %v2653 = vsel %vm2641, %v2588, %v1383
  %v2654 = vsel %vm2641, %v2589, %v1385
  %v2655 = vsel %vm2641, %v2590, %v1387
  %v2656 = vsel %vm2641, %v2591, %v1389
  %v2657 = vsel %vm2641, %v2592, %v1391
  %v2658 = vsel %vm2641, %v2593, %v1393
  %v2659 = vsel %vm2641, %v2594, %v1395
  %v2660 = vsel %vm2641, %v2595, %v1397
  %v2661 = vsel %vm2641, %v2596, %v1399
  %v2662 = vsel %vm2641, %v2597, %v1401
  %v2663 = vsel %vm2641, %v2598, %v1403
  %v2664 = vsel %vm2641, %v2599, %v1405
  %v2665 = vsel %vm2641, %v2600, %v1407
  %v2666 = vsel %vm2641, %v2601, %v1409
  %v2667 = vsel %vm2641, %v2602, %v1411
  %v2668 = vsel %vm2641, %v2603, %v1413
  %v2669 = vsel %vm2641, %v2604, %v1415
  %v2670 = vsel %vm2641, %v2605, %v1417
  %v2671 = vsel %vm2641, %v2606, %v1419
  %v2672 = vsel %vm2641, %v2607, %v1421
  %v2673 = vsel %vm2641, %v2608, %v1423
  %v2674 = vsel %vm2641, %v2609, %v1425
  %v2675 = vsel %vm2641, %v2610, %v1427
  %v2676 = vsel %vm2641, %v2611, %v1429
  %v2677 = vsel %vm2641, %v2612, %v1431
  %v2678 = vsel %vm2641, %v2613, %v1433
  %v2679 = vsel %vm2641, %v2614, %v1435
  %v2680 = vsel %vm2641, %v2615, %v1437
  %v2681 = vsel %vm2641, %v2616, %v1439
  %v2682 = vsel %vm2641, %v2617, %v1441
  %v2683 = vsel %vm2641, %v2618, %v1443
  %v2684 = vsel %vm2641, %v2619, %v1445
  %v2685 = vsel %vm2641, %v2620, %v1447
  %v2686 = vsel %vm2641, %v2621, %v1449
  %v2687 = vsel %vm2641, %v2622, %v1451
  %v2688 = vsel %vm2641, %v2623, %v1453
  %v2689 = vsel %vm2641, %v2624, %v1455
  %v2690 = vsel %vm2641, %v2625, %v1457
  %v2691 = vsel %vm2641, %v2626, %v1459
  %v2692 = vsel %vm2641, %v2627, %v1461
  %v2693 = vsel %vm2641, %v2628, %v1463
  %v2694 = vsel %vm2641, %v2629, %v1465
  %v2695 = vsel %vm2641, %v2630, %v1467
  %v2696 = vsel %vm2641, %v2631, %v1469
  %v2697 = vsel %vm2641, %v2632, %v1471
  %v2698 = vsel %vm2641, %v2633, %v1473
  %v2699 = vsel %vm2641, %v2634, %v1475
  %v2700 = vsel %vm2641, %v2635, %v1477
  %v2701 = vsel %vm2641, %v2636, %v1479
  %v2702 = vsel %vm2641, %v2637, %v1481
  %v2703 = vsel %vm2641, %v2638, %v1483
  %v2704 = vsel %vm2641, %v2639, %v1485
  %v2705 = vsel %vm2641, %v2640, %v1487
  %vm2706 = vcmask 228352
  %v2707 = vsel %vm2706, %v2642, %v1553
  %v2708 = vsel %vm2706, %v2643, %v1555
  %v2709 = vsel %vm2706, %v2644, %v1557
  %v2710 = vsel %vm2706, %v2645, %v1559
  %v2711 = vsel %vm2706, %v2646, %v1561
  %v2712 = vsel %vm2706, %v2647, %v1563
  %v2713 = vsel %vm2706, %v2648, %v1565
  %v2714 = vsel %vm2706, %v2649, %v1567
  %v2715 = vsel %vm2706, %v2650, %v1569
  %v2716 = vsel %vm2706, %v2651, %v1571
  %v2717 = vsel %vm2706, %v2652, %v1573
  %v2718 = vsel %vm2706, %v2653, %v1575
  %v2719 = vsel %vm2706, %v2654, %v1577
  %v2720 = vsel %vm2706, %v2655, %v1579
  %v2721 = vsel %vm2706, %v2656, %v1581
  %v2722 = vsel %vm2706, %v2657, %v1583
  %v2723 = vsel %vm2706, %v2658, %v1585
  %v2724 = vsel %vm2706, %v2659, %v1587
  %v2725 = vsel %vm2706, %v2660, %v1589
  %v2726 = vsel %vm2706, %v2661, %v1591
  %v2727 = vsel %vm2706, %v2662, %v1593
  %v2728 = vsel %vm2706, %v2663, %v1595
  %v2729 = vsel %vm2706, %v2664, %v1597
  %v2730 = vsel %vm2706, %v2665, %v1599
  %v2731 = vsel %vm2706, %v2666, %v1601
  %v2732 = vsel %vm2706, %v2667, %v1603
  %v2733 = vsel %vm2706, %v2668, %v1605
  %v2734 = vsel %vm2706, %v2669, %v1607
  %v2735 = vsel %vm2706, %v2670, %v1609
  %v2736 = vsel %vm2706, %v2671, %v1611
  %v2737 = vsel %vm2706, %v2672, %v1613
  %v2738 = vsel %vm2706, %v2673, %v1615
  %v2739 = vsel %vm2706, %v2674, %v1617
  %v2740 = vsel %vm2706, %v2675, %v1619
  %v2741 = vsel %vm2706, %v2676, %v1621
  %v2742 = vsel %vm2706, %v2677, %v1623
  %v2743 = vsel %vm2706, %v2678, %v1625
  %v2744 = vsel %vm2706, %v2679, %v1627
  %v2745 = vsel %vm2706, %v2680, %v1629
  %v2746 = vsel %vm2706, %v2681, %v1631
  %v2747 = vsel %vm2706, %v2682, %v1633
  %v2748 = vsel %vm2706, %v2683, %v1635
  %v2749 = vsel %vm2706, %v2684, %v1637
  %v2750 = vsel %vm2706, %v2685, %v1639
  %v2751 = vsel %vm2706, %v2686, %v1641
  %v2752 = vsel %vm2706, %v2687, %v1643
  %v2753 = vsel %vm2706, %v2688, %v1645
  %v2754 = vsel %vm2706, %v2689, %v1647
  %v2755 = vsel %vm2706, %v2690, %v1649
  %v2756 = vsel %vm2706, %v2691, %v1651
  %v2757 = vsel %vm2706, %v2692, %v1653
  %v2758 = vsel %vm2706, %v2693, %v1655
  %v2759 = vsel %vm2706, %v2694, %v1657
  %v2760 = vsel %vm2706, %v2695, %v1659
  %v2761 = vsel %vm2706, %v2696, %v1661
  %v2762 = vsel %vm2706, %v2697, %v1663
  %v2763 = vsel %vm2706, %v2698, %v1665
  %v2764 = vsel %vm2706, %v2699, %v1667
  %v2765 = vsel %vm2706, %v2700, %v1669
  %v2766 = vsel %vm2706, %v2701, %v1671
  %v2767 = vsel %vm2706, %v2702, %v1673
  %v2768 = vsel %vm2706, %v2703, %v1675
  %v2769 = vsel %vm2706, %v2704, %v1677
  %v2770 = vsel %vm2706, %v2705, %v1679
  %vm2771 = vcmask 285696
  %v2772 = vsel %vm2771, %v2707, %v1745
  %v2773 = vsel %vm2771, %v2708, %v1747
  %v2774 = vsel %vm2771, %v2709, %v1749
  %v2775 = vsel %vm2771, %v2710, %v1751
  %v2776 = vsel %vm2771, %v2711, %v1753
  %v2777 = vsel %vm2771, %v2712, %v1755
  %v2778 = vsel %vm2771, %v2713, %v1757
  %v2779 = vsel %vm2771, %v2714, %v1759
  %v2780 = vsel %vm2771, %v2715, %v1761
  %v2781 = vsel %vm2771, %v2716, %v1763
  %v2782 = vsel %vm2771, %v2717, %v1765
  %v2783 = vsel %vm2771, %v2718, %v1767
  %v2784 = vsel %vm2771, %v2719, %v1769
  %v2785 = vsel %vm2771, %v2720, %v1771
  %v2786 = vsel %vm2771, %v2721, %v1773
  %v2787 = vsel %vm2771, %v2722, %v1775
  %v2788 = vsel %vm2771, %v2723, %v1777
  %v2789 = vsel %vm2771, %v2724, %v1779
  %v2790 = vsel %vm2771, %v2725, %v1781
  %v2791 = vsel %vm2771, %v2726, %v1783
  %v2792 = vsel %vm2771, %v2727, %v1785
  %v2793 = vsel %vm2771, %v2728, %v1787
  %v2794 = vsel %vm2771, %v2729, %v1789
  %v2795 = vsel %vm2771, %v2730, %v1791
  %v2796 = vsel %vm2771, %v2731, %v1793
  %v2797 = vsel %vm2771, %v2732, %v1795
  %v2798 = vsel %vm2771, %v2733, %v1797
  %v2799 = vsel %vm2771, %v2734, %v1799
  %v2800 = vsel %vm2771, %v2735, %v1801
  %v2801 = vsel %vm2771, %v2736, %v1803
  %v2802 = vsel %vm2771, %v2737, %v1805
  %v2803 = vsel %vm2771, %v2738, %v1807
  %v2804 = vsel %vm2771, %v2739, %v1809
  %v2805 = vsel %vm2771, %v2740, %v1811
  %v2806 = vsel %vm2771, %v2741, %v1813
  %v2807 = vsel %vm2771, %v2742, %v1815
  %v2808 = vsel %vm2771, %v2743, %v1817
  %v2809 = vsel %vm2771, %v2744, %v1819
  %v2810 = vsel %vm2771, %v2745, %v1821
  %v2811 = vsel %vm2771, %v2746, %v1823
  %v2812 = vsel %vm2771, %v2747, %v1825
  %v2813 = vsel %vm2771, %v2748, %v1827
  %v2814 = vsel %vm2771, %v2749, %v1829
  %v2815 = vsel %vm2771, %v2750, %v1831
  %v2816 = vsel %vm2771, %v2751, %v1833
  %v2817 = vsel %vm2771, %v2752, %v1835
  %v2818 = vsel %vm2771, %v2753, %v1837
  %v2819 = vsel %vm2771, %v2754, %v1839
  %v2820 = vsel %vm2771, %v2755, %v1841
  %v2821 = vsel %vm2771, %v2756, %v1843
  %v2822 = vsel %vm2771, %v2757, %v1845
  %v2823 = vsel %vm2771, %v2758, %v1847
  %v2824 = vsel %vm2771, %v2759, %v1849
  %v2825 = vsel %vm2771, %v2760, %v1851
  %v2826 = vsel %vm2771, %v2761, %v1853
  %v2827 = vsel %vm2771, %v2762, %v1855
  %v2828 = vsel %vm2771, %v2763, %v1857
  %v2829 = vsel %vm2771, %v2764, %v1859
  %v2830 = vsel %vm2771, %v2765, %v1861
  %v2831 = vsel %vm2771, %v2766, %v1863
  %v2832 = vsel %vm2771, %v2767, %v1865
  %v2833 = vsel %vm2771, %v2768, %v1867
  %v2834 = vsel %vm2771, %v2769, %v1869
  %v2835 = vsel %vm2771, %v2770, %v1871
  %vm2836 = vcmask 343040
  %v2837 = vsel %vm2836, %v2772, %v1937
  %v2838 = vsel %vm2836, %v2773, %v1939
  %v2839 = vsel %vm2836, %v2774, %v1941
  %v2840 = vsel %vm2836, %v2775, %v1943
  %v2841 = vsel %vm2836, %v2776, %v1945
  %v2842 = vsel %vm2836, %v2777, %v1947
  %v2843 = vsel %vm2836, %v2778, %v1949
  %v2844 = vsel %vm2836, %v2779, %v1951
  %v2845 = vsel %vm2836, %v2780, %v1953
  %v2846 = vsel %vm2836, %v2781, %v1955
  %v2847 = vsel %vm2836, %v2782, %v1957
  %v2848 = vsel %vm2836, %v2783, %v1959
  %v2849 = vsel %vm2836, %v2784, %v1961
  %v2850 = vsel %vm2836, %v2785, %v1963
  %v2851 = vsel %vm2836, %v2786, %v1965
  %v2852 = vsel %vm2836, %v2787, %v1967
  %v2853 = vsel %vm2836, %v2788, %v1969
  %v2854 = vsel %vm2836, %v2789, %v1971
  %v2855 = vsel %vm2836, %v2790, %v1973
  %v2856 = vsel %vm2836, %v2791, %v1975
  %v2857 = vsel %vm2836, %v2792, %v1977
  %v2858 = vsel %vm2836, %v2793, %v1979
  %v2859 = vsel %vm2836, %v2794, %v1981
  %v2860 = vsel %vm2836, %v2795, %v1983
  %v2861 = vsel %vm2836, %v2796, %v1985
  %v2862 = vsel %vm2836, %v2797, %v1987
  %v2863 = vsel %vm2836, %v2798, %v1989
  %v2864 = vsel %vm2836, %v2799, %v1991
  %v2865 = vsel %vm2836, %v2800, %v1993
  %v2866 = vsel %vm2836, %v2801, %v1995
  %v2867 = vsel %vm2836, %v2802, %v1997
  %v2868 = vsel %vm2836, %v2803, %v1999
  %v2869 = vsel %vm2836, %v2804, %v2001
  %v2870 = vsel %vm2836, %v2805, %v2003
  %v2871 = vsel %vm2836, %v2806, %v2005
  %v2872 = vsel %vm2836, %v2807, %v2007
  %v2873 = vsel %vm2836, %v2808, %v2009
  %v2874 = vsel %vm2836, %v2809, %v2011
  %v2875 = vsel %vm2836, %v2810, %v2013
  %v2876 = vsel %vm2836, %v2811, %v2015
  %v2877 = vsel %vm2836, %v2812, %v2017
  %v2878 = vsel %vm2836, %v2813, %v2019
  %v2879 = vsel %vm2836, %v2814, %v2021
  %v2880 = vsel %vm2836, %v2815, %v2023
  %v2881 = vsel %vm2836, %v2816, %v2025
  %v2882 = vsel %vm2836, %v2817, %v2027
  %v2883 = vsel %vm2836, %v2818, %v2029
  %v2884 = vsel %vm2836, %v2819, %v2031
  %v2885 = vsel %vm2836, %v2820, %v2033
  %v2886 = vsel %vm2836, %v2821, %v2035
  %v2887 = vsel %vm2836, %v2822, %v2037
  %v2888 = vsel %vm2836, %v2823, %v2039
  %v2889 = vsel %vm2836, %v2824, %v2041
  %v2890 = vsel %vm2836, %v2825, %v2043
  %v2891 = vsel %vm2836, %v2826, %v2045
  %v2892 = vsel %vm2836, %v2827, %v2047
  %v2893 = vsel %vm2836, %v2828, %v2049
  %v2894 = vsel %vm2836, %v2829, %v2051
  %v2895 = vsel %vm2836, %v2830, %v2053
  %v2896 = vsel %vm2836, %v2831, %v2055
  %v2897 = vsel %vm2836, %v2832, %v2057
  %v2898 = vsel %vm2836, %v2833, %v2059
  %v2899 = vsel %vm2836, %v2834, %v2061
  %v2900 = vsel %vm2836, %v2835, %v2063
  %vm2901 = vcmask 400384
  %v2902 = vsel %vm2901, %v2837, %v2129
  %v2903 = vsel %vm2901, %v2838, %v2131
  %v2904 = vsel %vm2901, %v2839, %v2133
  %v2905 = vsel %vm2901, %v2840, %v2135
  %v2906 = vsel %vm2901, %v2841, %v2137
  %v2907 = vsel %vm2901, %v2842, %v2139
  %v2908 = vsel %vm2901, %v2843, %v2141
  %v2909 = vsel %vm2901, %v2844, %v2143
  %v2910 = vsel %vm2901, %v2845, %v2145
  %v2911 = vsel %vm2901, %v2846, %v2147
  %v2912 = vsel %vm2901, %v2847, %v2149
  %v2913 = vsel %vm2901, %v2848, %v2151
  %v2914 = vsel %vm2901, %v2849, %v2153
  %v2915 = vsel %vm2901, %v2850, %v2155
  %v2916 = vsel %vm2901, %v2851, %v2157
  %v2917 = vsel %vm2901, %v2852, %v2159
  %v2918 = vsel %vm2901, %v2853, %v2161
  %v2919 = vsel %vm2901, %v2854, %v2163
  %v2920 = vsel %vm2901, %v2855, %v2165
  %v2921 = vsel %vm2901, %v2856, %v2167
  %v2922 = vsel %vm2901, %v2857, %v2169
  %v2923 = vsel %vm2901, %v2858, %v2171
  %v2924 = vsel %vm2901, %v2859, %v2173
  %v2925 = vsel %vm2901, %v2860, %v2175
  %v2926 = vsel %vm2901, %v2861, %v2177
  %v2927 = vsel %vm2901, %v2862, %v2179
  %v2928 = vsel %vm2901, %v2863, %v2181
  %v2929 = vsel %vm2901, %v2864, %v2183
  %v2930 = vsel %vm2901, %v2865, %v2185
  %v2931 = vsel %vm2901, %v2866, %v2187
  %v2932 = vsel %vm2901, %v2867, %v2189
  %v2933 = vsel %vm2901, %v2868, %v2191
  %v2934 = vsel %vm2901, %v2869, %v2193
  %v2935 = vsel %vm2901, %v2870, %v2195
  %v2936 = vsel %vm2901, %v2871, %v2197
  %v2937 = vsel %vm2901, %v2872, %v2199
  %v2938 = vsel %vm2901, %v2873, %v2201
  %v2939 = vsel %vm2901, %v2874, %v2203
  %v2940 = vsel %vm2901, %v2875, %v2205
  %v2941 = vsel %vm2901, %v2876, %v2207
  %v2942 = vsel %vm2901, %v2877, %v2209
  %v2943 = vsel %vm2901, %v2878, %v2211
  %v2944 = vsel %vm2901, %v2879, %v2213
  %v2945 = vsel %vm2901, %v2880, %v2215
  %v2946 = vsel %vm2901, %v2881, %v2217
  %v2947 = vsel %vm2901, %v2882, %v2219
  %v2948 = vsel %vm2901, %v2883, %v2221
  %v2949 = vsel %vm2901, %v2884, %v2223
  %v2950 = vsel %vm2901, %v2885, %v2225
  %v2951 = vsel %vm2901, %v2886, %v2227
  %v2952 = vsel %vm2901, %v2887, %v2229
  %v2953 = vsel %vm2901, %v2888, %v2231
  %v2954 = vsel %vm2901, %v2889, %v2233
  %v2955 = vsel %vm2901, %v2890, %v2235
  %v2956 = vsel %vm2901, %v2891, %v2237
  %v2957 = vsel %vm2901, %v2892, %v2239
  %v2958 = vsel %vm2901, %v2893, %v2241
  %v2959 = vsel %vm2901, %v2894, %v2243
  %v2960 = vsel %vm2901, %v2895, %v2245
  %v2961 = vsel %vm2901, %v2896, %v2247
  %v2962 = vsel %vm2901, %v2897, %v2249
  %v2963 = vsel %vm2901, %v2898, %v2251
  %v2964 = vsel %vm2901, %v2899, %v2253
  %v2965 = vsel %vm2901, %v2900, %v2255
  %vm2966 = vcmask 457728
  %v2967 = vsel %vm2966, %v2902, %v2321
  %v2968 = vsel %vm2966, %v2903, %v2323
  %v2969 = vsel %vm2966, %v2904, %v2325
  %v2970 = vsel %vm2966, %v2905, %v2327
  %v2971 = vsel %vm2966, %v2906, %v2329
  %v2972 = vsel %vm2966, %v2907, %v2331
  %v2973 = vsel %vm2966, %v2908, %v2333
  %v2974 = vsel %vm2966, %v2909, %v2335
  %v2975 = vsel %vm2966, %v2910, %v2337
  %v2976 = vsel %vm2966, %v2911, %v2339
  %v2977 = vsel %vm2966, %v2912, %v2341
  %v2978 = vsel %vm2966, %v2913, %v2343
  %v2979 = vsel %vm2966, %v2914, %v2345
  %v2980 = vsel %vm2966, %v2915, %v2347
  %v2981 = vsel %vm2966, %v2916, %v2349
  %v2982 = vsel %vm2966, %v2917, %v2351
  %v2983 = vsel %vm2966, %v2918, %v2353
  %v2984 = vsel %vm2966, %v2919, %v2355
  %v2985 = vsel %vm2966, %v2920, %v2357
  %v2986 = vsel %vm2966, %v2921, %v2359
  %v2987 = vsel %vm2966, %v2922, %v2361
  %v2988 = vsel %vm2966, %v2923, %v2363
  %v2989 = vsel %vm2966, %v2924, %v2365
  %v2990 = vsel %vm2966, %v2925, %v2367
  %v2991 = vsel %vm2966, %v2926, %v2369
  %v2992 = vsel %vm2966, %v2927, %v2371
  %v2993 = vsel %vm2966, %v2928, %v2373
  %v2994 = vsel %vm2966, %v2929, %v2375
  %v2995 = vsel %vm2966, %v2930, %v2377
  %v2996 = vsel %vm2966, %v2931, %v2379
  %v2997 = vsel %vm2966, %v2932, %v2381
  %v2998 = vsel %vm2966, %v2933, %v2383
  %v2999 = vsel %vm2966, %v2934, %v2385
  %v3000 = vsel %vm2966, %v2935, %v2387
  %v3001 = vsel %vm2966, %v2936, %v2389
  %v3002 = vsel %vm2966, %v2937, %v2391
  %v3003 = vsel %vm2966, %v2938, %v2393
  %v3004 = vsel %vm2966, %v2939, %v2395
  %v3005 = vsel %vm2966, %v2940, %v2397
  %v3006 = vsel %vm2966, %v2941, %v2399
  %v3007 = vsel %vm2966, %v2942, %v2401
  %v3008 = vsel %vm2966, %v2943, %v2403
  %v3009 = vsel %vm2966, %v2944, %v2405
  %v3010 = vsel %vm2966, %v2945, %v2407
  %v3011 = vsel %vm2966, %v2946, %v2409
  %v3012 = vsel %vm2966, %v2947, %v2411
  %v3013 = vsel %vm2966, %v2948, %v2413
  %v3014 = vsel %vm2966, %v2949, %v2415
  %v3015 = vsel %vm2966, %v2950, %v2417
  %v3016 = vsel %vm2966, %v2951, %v2419
  %v3017 = vsel %vm2966, %v2952, %v2421
  %v3018 = vsel %vm2966, %v2953, %v2423
  %v3019 = vsel %vm2966, %v2954, %v2425
  %v3020 = vsel %vm2966, %v2955, %v2427
  %v3021 = vsel %vm2966, %v2956, %v2429
  %v3022 = vsel %vm2966, %v2957, %v2431
  %v3023 = vsel %vm2966, %v2958, %v2433
  %v3024 = vsel %vm2966, %v2959, %v2435
  %v3025 = vsel %vm2966, %v2960, %v2437
  %v3026 = vsel %vm2966, %v2961, %v2439
  %v3027 = vsel %vm2966, %v2962, %v2441
  %v3028 = vsel %vm2966, %v2963, %v2443
  %v3029 = vsel %vm2966, %v2964, %v2445
  %v3030 = vsel %vm2966, %v2965, %v2447
  %v3031 = vld [vmem:[%s6] sm:$0xf]
  %v3032 = vld [vmem:[%s6 + $0x4] sm:$0xf]
  %v3033 = vld [vmem:[%s6 + $0x8] sm:$0xf]
  %v3034 = vld [vmem:[%s6 + $0xc] sm:$0xf]
  %v3035 = vld [vmem:[%s6 + $0x10] sm:$0xf]
  %v3036 = vld [vmem:[%s6 + $0x14] sm:$0xf]
  %v3037 = vld [vmem:[%s6 + $0x18] sm:$0xf]
  %v3038 = vld [vmem:[%s6 + $0x1c] sm:$0xf]
  %v3039 = vpack.c.bf16 %v2968, %v2967
  %v3040 = vpack.c.bf16 %v2970, %v2969
  %v3041 = vpack.c.bf16 %v2972, %v2971
  %v3042 = vpack.c.bf16 %v2974, %v2973
  %v3043 = vpack.c.bf16 %v2976, %v2975
  %v3044 = vpack.c.bf16 %v2978, %v2977
  %v3045 = vpack.c.bf16 %v2980, %v2979
  %v3046 = vpack.c.bf16 %v2982, %v2981
  %v3047 = vpack.c.bf16 %v2984, %v2983
  %v3048 = vpack.c.bf16 %v2986, %v2985
  %v3049 = vpack.c.bf16 %v2988, %v2987
  %v3050 = vpack.c.bf16 %v2990, %v2989
  %v3051 = vpack.c.bf16 %v2992, %v2991
  %v3052 = vpack.c.bf16 %v2994, %v2993
  %v3053 = vpack.c.bf16 %v2996, %v2995
  %v3054 = vpack.c.bf16 %v2998, %v2997
  %v3055 = vpack.c.bf16 %v3000, %v2999
  %v3056 = vpack.c.bf16 %v3002, %v3001
  %v3057 = vpack.c.bf16 %v3004, %v3003
  %v3058 = vpack.c.bf16 %v3006, %v3005
  %v3059 = vpack.c.bf16 %v3008, %v3007
  %v3060 = vpack.c.bf16 %v3010, %v3009
  %v3061 = vpack.c.bf16 %v3012, %v3011
  %v3062 = vpack.c.bf16 %v3014, %v3013
  %v3063 = vpack.c.bf16 %v3016, %v3015
  %v3064 = vpack.c.bf16 %v3018, %v3017
  %v3065 = vpack.c.bf16 %v3020, %v3019
  %v3066 = vpack.c.bf16 %v3022, %v3021
  %v3067 = vpack.c.bf16 %v3024, %v3023
  %v3068 = vpack.c.bf16 %v3026, %v3025
  %v3069 = vpack.c.bf16 %v3028, %v3027
  %v3070 = vpack.c.bf16 %v3030, %v3029
  %v3071 = vld [vmem:[%s7] sm:$0x1]
  %v3073 = vlaneseq
  %v3074 = vshrl.u32 %v3073, 7
  %v3075 = vsub.s32 0, %v3074
  %v3076 = vrot.slane %v3071, %v3075
  %v3086 = vunpack.c.l.b16 %v3031
  %v3087 = vunpack.c.l.b16 %v3032
  %v3088 = vunpack.c.l.b16 %v3033
  %v3089 = vunpack.c.l.b16 %v3034
  %v3090 = vunpack.c.l.b16 %v3035
  %v3091 = vunpack.c.l.b16 %v3036
  %v3092 = vunpack.c.l.b16 %v3037
  %v3093 = vunpack.c.l.b16 %v3038
  %v3094 = vpack.c.b16 %v3087, %v3086
  %v3095 = vpack.c.b16 %v3089, %v3088
  %v3096 = vpack.c.b16 %v3091, %v3090
  %v3097 = vpack.c.b16 %v3093, %v3092
  %vm3101 = vcmask 515072
  %v3103 = vsel %vm3101, %v3039, 0
  %v3106 = vsel %vm3101, %v3040, 0
  %v3109 = vsel %vm3101, %v3041, 0
  %v3112 = vsel %vm3101, %v3042, 0
  %v3115 = vsel %vm3101, %v3043, 0
  %v3118 = vsel %vm3101, %v3044, 0
  %v3121 = vsel %vm3101, %v3045, 0
  %v3124 = vsel %vm3101, %v3046, 0
  %v3127 = vsel %vm3101, %v3047, 0
  %v3130 = vsel %vm3101, %v3048, 0
  %v3133 = vsel %vm3101, %v3049, 0
  %v3136 = vsel %vm3101, %v3050, 0
  %v3139 = vsel %vm3101, %v3051, 0
  %v3142 = vsel %vm3101, %v3052, 0
  %v3145 = vsel %vm3101, %v3053, 0
  %v3148 = vsel %vm3101, %v3054, 0
  %v3151 = vsel %vm3101, %v3055, 0
  %v3154 = vsel %vm3101, %v3056, 0
  %v3157 = vsel %vm3101, %v3057, 0
  %v3160 = vsel %vm3101, %v3058, 0
  %v3163 = vsel %vm3101, %v3059, 0
  %v3166 = vsel %vm3101, %v3060, 0
  %v3169 = vsel %vm3101, %v3061, 0
  %v3172 = vsel %vm3101, %v3062, 0
  %v3175 = vsel %vm3101, %v3063, 0
  %v3178 = vsel %vm3101, %v3064, 0
  %v3181 = vsel %vm3101, %v3065, 0
  %v3184 = vsel %vm3101, %v3066, 0
  %v3187 = vsel %vm3101, %v3067, 0
  %v3190 = vsel %vm3101, %v3068, 0
  %v3193 = vsel %vm3101, %v3069, 0
  %v3196 = vsel %vm3101, %v3070, 0
  %vm3198 = vcmask 1047552
  %v3199 = vsel %vm62, 4294967295, 65535
  %v3200 = vsel %vm3198, %v3199, 0
  %v3202 = vand.u32 %v3097, %v3200
  %3204 = vmatprep.subr.bf16.mxu0 0
  %3205 = vmatpush1.bf16.msra.mxu0 %v3094
  %3206 = vmatprep.subr.bf16.mxu0 0
  %3207 = vmatpush1.bf16.msra.mxu0 %v3095
  %3208 = vmatprep.subr.bf16.mxu0 0
  %3209 = vmatpush1.bf16.msra.mxu0 %v3096
  %3210 = vmatprep.subr.bf16.mxu0 0
  %3211 = vmatpush1.bf16.msra.mxu0 %v3202
  %3212 = vmatprep.subr.bf16.mxu0 0
  %3213 = vmatpush1.bf16.msra.mxu0 0
  %3214 = vmatprep.subr.bf16.mxu0 0
  %3215 = vmatpush1.bf16.msra.mxu0 0
  %3216 = vmatprep.subr.bf16.mxu0 0
  %3217 = vmatpush1.bf16.msra.mxu0 0
  %3218 = vmatprep.subr.bf16.mxu0 0
  %3219 = vmatpush1.bf16.msra.mxu0 0
  %3220 = vmatprep.subr.bf16.mxu0 0
  %3221 = vmatpush1.bf16.msra.mxu0 0
  %3222 = vmatprep.subr.bf16.mxu0 0
  %3223 = vmatpush1.bf16.msra.mxu0 0
  %3224 = vmatprep.subr.bf16.mxu0 0
  %3225 = vmatpush1.bf16.msra.mxu0 0
  %3226 = vmatprep.subr.bf16.mxu0 0
  %3227 = vmatpush1.bf16.msra.mxu0 0
  %3228 = vmatprep.subr.bf16.mxu0 0
  %3229 = vmatpush1.bf16.msra.mxu0 0
  %3230 = vmatprep.subr.bf16.mxu0 0
  %3231 = vmatpush1.bf16.msra.mxu0 0
  %3232 = vmatprep.subr.bf16.mxu0 0
  %3233 = vmatpush1.bf16.msra.mxu0 0
  %3234 = vmatprep.subr.bf16.mxu0 0
  %3235 = vmatpush1.bf16.msra.mxu0 0
  %3236 = vmatprep.mubr.bf16.mxu0 0
  %3237 = vmatmul.mubr.bf16.gmra.mrb[0].mxu0 %v3103
  %v3238 = vpop.f32.mrb[0].mxu0
  %v3239 = vadd.f32 %v3076, %v3238
  %v3240 = vpop.f32.mrb[0].mxu0
  %v3241 = vpop.f32.mrb[0].mxu0
  %v3242 = vadd.f32 %v3076, %v3241
  %v3243 = vpop.f32.mrb[0].mxu0
  %3244 = vmatprep.mubr.bf16.mxu0 0
  %3245 = vmatmul.mubr.bf16.gmra.mrb[0].mxu0 %v3106
  %v3246 = vpop.f32.mrb[0].mxu0
  %v3247 = vadd.f32 %v3076, %v3246
  %v3248 = vpop.f32.mrb[0].mxu0
  %v3249 = vpop.f32.mrb[0].mxu0
  %v3250 = vadd.f32 %v3076, %v3249
  %v3251 = vpop.f32.mrb[0].mxu0
  %3252 = vmatprep.mubr.bf16.mxu0 0
  %3253 = vmatmul.mubr.bf16.gmra.mrb[0].mxu0 %v3109
  %v3254 = vpop.f32.mrb[0].mxu0
  %v3255 = vadd.f32 %v3076, %v3254
  %v3256 = vpop.f32.mrb[0].mxu0
  %v3257 = vpop.f32.mrb[0].mxu0
  %v3258 = vadd.f32 %v3076, %v3257
  %v3259 = vpop.f32.mrb[0].mxu0
  %3260 = vmatprep.mubr.bf16.mxu0 0
  %3261 = vmatmul.mubr.bf16.gmra.mrb[0].mxu0 %v3112
  %v3262 = vpop.f32.mrb[0].mxu0
  %v3263 = vadd.f32 %v3076, %v3262
  %v3264 = vpop.f32.mrb[0].mxu0
  %v3265 = vpop.f32.mrb[0].mxu0
  %v3266 = vadd.f32 %v3076, %v3265
  %v3267 = vpop.f32.mrb[0].mxu0
  %3268 = vmatprep.mubr.bf16.mxu0 0
  %3269 = vmatmul.mubr.bf16.gmra.mrb[0].mxu0 %v3115
  %v3270 = vpop.f32.mrb[0].mxu0
  %v3271 = vadd.f32 %v3076, %v3270
  %v3272 = vpop.f32.mrb[0].mxu0
  %v3273 = vpop.f32.mrb[0].mxu0
  %v3274 = vadd.f32 %v3076, %v3273
  %v3275 = vpop.f32.mrb[0].mxu0
  %3276 = vmatprep.mubr.bf16.mxu0 0
  %3277 = vmatmul.mubr.bf16.gmra.mrb[0].mxu0 %v3118
  %v3278 = vpop.f32.mrb[0].mxu0
  %v3279 = vadd.f32 %v3076, %v3278
  %v3280 = vpop.f32.mrb[0].mxu0
  %v3281 = vpop.f32.mrb[0].mxu0
  %v3282 = vadd.f32 %v3076, %v3281
  %v3283 = vpop.f32.mrb[0].mxu0
  %3284 = vmatprep.mubr.bf16.mxu0 0
  %3285 = vmatmul.mubr.bf16.gmra.mrb[0].mxu0 %v3121
  %v3286 = vpop.f32.mrb[0].mxu0
  %v3287 = vadd.f32 %v3076, %v3286
  %v3288 = vpop.f32.mrb[0].mxu0
  %v3289 = vpop.f32.mrb[0].mxu0
  %v3290 = vadd.f32 %v3076, %v3289
  %v3291 = vpop.f32.mrb[0].mxu0
  %3292 = vmatprep.mubr.bf16.mxu0 0
  %3293 = vmatmul.mubr.bf16.gmra.mrb[0].mxu0 %v3124
  %v3294 = vpop.f32.mrb[0].mxu0
  %v3295 = vadd.f32 %v3076, %v3294
  %v3296 = vpop.f32.mrb[0].mxu0
  %v3297 = vpop.f32.mrb[0].mxu0
  %v3298 = vadd.f32 %v3076, %v3297
  %v3299 = vpop.f32.mrb[0].mxu0
  %3300 = vmatprep.mubr.bf16.mxu0 0
  %3301 = vmatmul.mubr.bf16.gmra.mrb[0].mxu0 %v3127
  %v3302 = vpop.f32.mrb[0].mxu0
  %v3303 = vadd.f32 %v3076, %v3302
  %v3304 = vpop.f32.mrb[0].mxu0
  %v3305 = vpop.f32.mrb[0].mxu0
  %v3306 = vadd.f32 %v3076, %v3305
  %v3307 = vpop.f32.mrb[0].mxu0
  %3308 = vmatprep.mubr.bf16.mxu0 0
  %3309 = vmatmul.mubr.bf16.gmra.mrb[0].mxu0 %v3130
  %v3310 = vpop.f32.mrb[0].mxu0
  %v3311 = vadd.f32 %v3076, %v3310
  %v3312 = vpop.f32.mrb[0].mxu0
  %v3313 = vpop.f32.mrb[0].mxu0
  %v3314 = vadd.f32 %v3076, %v3313
  %v3315 = vpop.f32.mrb[0].mxu0
  %3316 = vmatprep.mubr.bf16.mxu0 0
  %3317 = vmatmul.mubr.bf16.gmra.mrb[0].mxu0 %v3133
  %v3318 = vpop.f32.mrb[0].mxu0
  %v3319 = vadd.f32 %v3076, %v3318
  %v3320 = vpop.f32.mrb[0].mxu0
  %v3321 = vpop.f32.mrb[0].mxu0
  %v3322 = vadd.f32 %v3076, %v3321
  %v3323 = vpop.f32.mrb[0].mxu0
  %3324 = vmatprep.mubr.bf16.mxu0 0
  %3325 = vmatmul.mubr.bf16.gmra.mrb[0].mxu0 %v3136
  %v3326 = vpop.f32.mrb[0].mxu0
  %v3327 = vadd.f32 %v3076, %v3326
  %v3328 = vpop.f32.mrb[0].mxu0
  %v3329 = vpop.f32.mrb[0].mxu0
  %v3330 = vadd.f32 %v3076, %v3329
  %v3331 = vpop.f32.mrb[0].mxu0
  %3332 = vmatprep.mubr.bf16.mxu0 0
  %3333 = vmatmul.mubr.bf16.gmra.mrb[0].mxu0 %v3139
  %v3334 = vpop.f32.mrb[0].mxu0
  %v3335 = vadd.f32 %v3076, %v3334
  %v3336 = vpop.f32.mrb[0].mxu0
  %v3337 = vpop.f32.mrb[0].mxu0
  %v3338 = vadd.f32 %v3076, %v3337
  %v3339 = vpop.f32.mrb[0].mxu0
  %3340 = vmatprep.mubr.bf16.mxu0 0
  %3341 = vmatmul.mubr.bf16.gmra.mrb[0].mxu0 %v3142
  %v3342 = vpop.f32.mrb[0].mxu0
  %v3343 = vadd.f32 %v3076, %v3342
  %v3344 = vpop.f32.mrb[0].mxu0
  %v3345 = vpop.f32.mrb[0].mxu0
  %v3346 = vadd.f32 %v3076, %v3345
  %v3347 = vpop.f32.mrb[0].mxu0
  %3348 = vmatprep.mubr.bf16.mxu0 0
  %3349 = vmatmul.mubr.bf16.gmra.mrb[0].mxu0 %v3145
  %v3350 = vpop.f32.mrb[0].mxu0
  %v3351 = vadd.f32 %v3076, %v3350
  %v3352 = vpop.f32.mrb[0].mxu0
  %v3353 = vpop.f32.mrb[0].mxu0
  %v3354 = vadd.f32 %v3076, %v3353
  %v3355 = vpop.f32.mrb[0].mxu0
  %3356 = vmatprep.mubr.bf16.mxu0 0
  %3357 = vmatmul.mubr.bf16.gmra.mrb[0].mxu0 %v3148
  %v3358 = vpop.f32.mrb[0].mxu0
  %v3359 = vadd.f32 %v3076, %v3358
  %v3360 = vpop.f32.mrb[0].mxu0
  %v3361 = vpop.f32.mrb[0].mxu0
  %v3362 = vadd.f32 %v3076, %v3361
  %v3363 = vpop.f32.mrb[0].mxu0
  %3364 = vmatprep.mubr.bf16.mxu0 0
  %3365 = vmatmul.mubr.bf16.gmra.mrb[0].mxu0 %v3151
  %v3366 = vpop.f32.mrb[0].mxu0
  %v3367 = vadd.f32 %v3076, %v3366
  %v3368 = vpop.f32.mrb[0].mxu0
  %v3369 = vpop.f32.mrb[0].mxu0
  %v3370 = vadd.f32 %v3076, %v3369
  %v3371 = vpop.f32.mrb[0].mxu0
  %3372 = vmatprep.mubr.bf16.mxu0 0
  %3373 = vmatmul.mubr.bf16.gmra.mrb[0].mxu0 %v3154
  %v3374 = vpop.f32.mrb[0].mxu0
  %v3375 = vadd.f32 %v3076, %v3374
  %v3376 = vpop.f32.mrb[0].mxu0
  %v3377 = vpop.f32.mrb[0].mxu0
  %v3378 = vadd.f32 %v3076, %v3377
  %v3379 = vpop.f32.mrb[0].mxu0
  %3380 = vmatprep.mubr.bf16.mxu0 0
  %3381 = vmatmul.mubr.bf16.gmra.mrb[0].mxu0 %v3157
  %v3382 = vpop.f32.mrb[0].mxu0
  %v3383 = vadd.f32 %v3076, %v3382
  %v3384 = vpop.f32.mrb[0].mxu0
  %v3385 = vpop.f32.mrb[0].mxu0
  %v3386 = vadd.f32 %v3076, %v3385
  %v3387 = vpop.f32.mrb[0].mxu0
  %3388 = vmatprep.mubr.bf16.mxu0 0
  %3389 = vmatmul.mubr.bf16.gmra.mrb[0].mxu0 %v3160
  %v3390 = vpop.f32.mrb[0].mxu0
  %v3391 = vadd.f32 %v3076, %v3390
  %v3392 = vpop.f32.mrb[0].mxu0
  %v3393 = vpop.f32.mrb[0].mxu0
  %v3394 = vadd.f32 %v3076, %v3393
  %v3395 = vpop.f32.mrb[0].mxu0
  %3396 = vmatprep.mubr.bf16.mxu0 0
  %3397 = vmatmul.mubr.bf16.gmra.mrb[0].mxu0 %v3163
  %v3398 = vpop.f32.mrb[0].mxu0
  %v3399 = vadd.f32 %v3076, %v3398
  %v3400 = vpop.f32.mrb[0].mxu0
  %v3401 = vpop.f32.mrb[0].mxu0
  %v3402 = vadd.f32 %v3076, %v3401
  %v3403 = vpop.f32.mrb[0].mxu0
  %3404 = vmatprep.mubr.bf16.mxu0 0
  %3405 = vmatmul.mubr.bf16.gmra.mrb[0].mxu0 %v3166
  %v3406 = vpop.f32.mrb[0].mxu0
  %v3407 = vadd.f32 %v3076, %v3406
  %v3408 = vpop.f32.mrb[0].mxu0
  %v3409 = vpop.f32.mrb[0].mxu0
  %v3410 = vadd.f32 %v3076, %v3409
  %v3411 = vpop.f32.mrb[0].mxu0
  %3412 = vmatprep.mubr.bf16.mxu0 0
  %3413 = vmatmul.mubr.bf16.gmra.mrb[0].mxu0 %v3169
  %v3414 = vpop.f32.mrb[0].mxu0
  %v3415 = vadd.f32 %v3076, %v3414
  %v3416 = vpop.f32.mrb[0].mxu0
  %v3417 = vpop.f32.mrb[0].mxu0
  %v3418 = vadd.f32 %v3076, %v3417
  %v3419 = vpop.f32.mrb[0].mxu0
  %3420 = vmatprep.mubr.bf16.mxu0 0
  %3421 = vmatmul.mubr.bf16.gmra.mrb[0].mxu0 %v3172
  %v3422 = vpop.f32.mrb[0].mxu0
  %v3423 = vadd.f32 %v3076, %v3422
  %v3424 = vpop.f32.mrb[0].mxu0
  %v3425 = vpop.f32.mrb[0].mxu0
  %v3426 = vadd.f32 %v3076, %v3425
  %v3427 = vpop.f32.mrb[0].mxu0
  %3428 = vmatprep.mubr.bf16.mxu0 0
  %3429 = vmatmul.mubr.bf16.gmra.mrb[0].mxu0 %v3175
  %v3430 = vpop.f32.mrb[0].mxu0
  %v3431 = vadd.f32 %v3076, %v3430
  %v3432 = vpop.f32.mrb[0].mxu0
  %v3433 = vpop.f32.mrb[0].mxu0
  %v3434 = vadd.f32 %v3076, %v3433
  %v3435 = vpop.f32.mrb[0].mxu0
  %3436 = vmatprep.mubr.bf16.mxu0 0
  %3437 = vmatmul.mubr.bf16.gmra.mrb[0].mxu0 %v3178
  %v3438 = vpop.f32.mrb[0].mxu0
  %v3439 = vadd.f32 %v3076, %v3438
  %v3440 = vpop.f32.mrb[0].mxu0
  %v3441 = vpop.f32.mrb[0].mxu0
  %v3442 = vadd.f32 %v3076, %v3441
  %v3443 = vpop.f32.mrb[0].mxu0
  %3444 = vmatprep.mubr.bf16.mxu0 0
  %3445 = vmatmul.mubr.bf16.gmra.mrb[0].mxu0 %v3181
  %v3446 = vpop.f32.mrb[0].mxu0
  %v3447 = vadd.f32 %v3076, %v3446
  %v3448 = vpop.f32.mrb[0].mxu0
  %v3449 = vpop.f32.mrb[0].mxu0
  %v3450 = vadd.f32 %v3076, %v3449
  %v3451 = vpop.f32.mrb[0].mxu0
  %3452 = vmatprep.mubr.bf16.mxu0 0
  %3453 = vmatmul.mubr.bf16.gmra.mrb[0].mxu0 %v3184
  %v3454 = vpop.f32.mrb[0].mxu0
  %v3455 = vadd.f32 %v3076, %v3454
  %v3456 = vpop.f32.mrb[0].mxu0
  %v3457 = vpop.f32.mrb[0].mxu0
  %v3458 = vadd.f32 %v3076, %v3457
  %v3459 = vpop.f32.mrb[0].mxu0
  %3460 = vmatprep.mubr.bf16.mxu0 0
  %3461 = vmatmul.mubr.bf16.gmra.mrb[0].mxu0 %v3187
  %v3462 = vpop.f32.mrb[0].mxu0
  %v3463 = vadd.f32 %v3076, %v3462
  %v3464 = vpop.f32.mrb[0].mxu0
  %v3465 = vpop.f32.mrb[0].mxu0
  %v3466 = vadd.f32 %v3076, %v3465
  %v3467 = vpop.f32.mrb[0].mxu0
  %3468 = vmatprep.mubr.bf16.mxu0 0
  %3469 = vmatmul.mubr.bf16.gmra.mrb[0].mxu0 %v3190
  %v3470 = vpop.f32.mrb[0].mxu0
  %v3471 = vadd.f32 %v3076, %v3470
  %v3472 = vpop.f32.mrb[0].mxu0
  %v3473 = vpop.f32.mrb[0].mxu0
  %v3474 = vadd.f32 %v3076, %v3473
  %v3475 = vpop.f32.mrb[0].mxu0
  %3476 = vmatprep.mubr.bf16.mxu0 0
  %3477 = vmatmul.mubr.bf16.gmra.mrb[0].mxu0 %v3193
  %v3478 = vpop.f32.mrb[0].mxu0
  %v3479 = vadd.f32 %v3076, %v3478
  %v3480 = vpop.f32.mrb[0].mxu0
  %v3481 = vpop.f32.mrb[0].mxu0
  %v3482 = vadd.f32 %v3076, %v3481
  %v3483 = vpop.f32.mrb[0].mxu0
  %3484 = vmatprep.mubr.bf16.mxu0 0
  %3485 = vmatmul.mubr.bf16.gmra.mrb[0].mxu0 %v3196
  %v3486 = vpop.f32.mrb[0].mxu0
  %v3487 = vadd.f32 %v3076, %v3486
  %v3488 = vpop.f32.mrb[0].mxu0
  %v3489 = vpop.f32.mrb[0].mxu0
  %v3490 = vadd.f32 %v3076, %v3489
  %v3491 = vpop.f32.mrb[0].mxu0
  %3492 = vdwg.mxu0
  %v3493 = vmax.f32 %v3239, 0.0
  %v3494 = vmax.f32 %v3242, 0.0
  %v3495 = vmax.f32 %v3247, 0.0
  %v3496 = vmax.f32 %v3250, 0.0
  %v3497 = vmax.f32 %v3255, 0.0
  %v3498 = vmax.f32 %v3258, 0.0
  %v3499 = vmax.f32 %v3263, 0.0
  %v3500 = vmax.f32 %v3266, 0.0
  %v3501 = vmax.f32 %v3271, 0.0
  %v3502 = vmax.f32 %v3274, 0.0
  %v3503 = vmax.f32 %v3279, 0.0
  %v3504 = vmax.f32 %v3282, 0.0
  %v3505 = vmax.f32 %v3287, 0.0
  %v3506 = vmax.f32 %v3290, 0.0
  %v3507 = vmax.f32 %v3295, 0.0
  %v3508 = vmax.f32 %v3298, 0.0
  %v3509 = vmax.f32 %v3303, 0.0
  %v3510 = vmax.f32 %v3306, 0.0
  %v3511 = vmax.f32 %v3311, 0.0
  %v3512 = vmax.f32 %v3314, 0.0
  %v3513 = vmax.f32 %v3319, 0.0
  %v3514 = vmax.f32 %v3322, 0.0
  %v3515 = vmax.f32 %v3327, 0.0
  %v3516 = vmax.f32 %v3330, 0.0
  %v3517 = vmax.f32 %v3335, 0.0
  %v3518 = vmax.f32 %v3338, 0.0
  %v3519 = vmax.f32 %v3343, 0.0
  %v3520 = vmax.f32 %v3346, 0.0
  %v3521 = vmax.f32 %v3351, 0.0
  %v3522 = vmax.f32 %v3354, 0.0
  %v3523 = vmax.f32 %v3359, 0.0
  %v3524 = vmax.f32 %v3362, 0.0
  %v3525 = vmax.f32 %v3367, 0.0
  %v3526 = vmax.f32 %v3370, 0.0
  %v3527 = vmax.f32 %v3375, 0.0
  %v3528 = vmax.f32 %v3378, 0.0
  %v3529 = vmax.f32 %v3383, 0.0
  %v3530 = vmax.f32 %v3386, 0.0
  %v3531 = vmax.f32 %v3391, 0.0
  %v3532 = vmax.f32 %v3394, 0.0
  %v3533 = vmax.f32 %v3399, 0.0
  %v3534 = vmax.f32 %v3402, 0.0
  %v3535 = vmax.f32 %v3407, 0.0
  %v3536 = vmax.f32 %v3410, 0.0
  %v3537 = vmax.f32 %v3415, 0.0
  %v3538 = vmax.f32 %v3418, 0.0
  %v3539 = vmax.f32 %v3423, 0.0
  %v3540 = vmax.f32 %v3426, 0.0
  %v3541 = vmax.f32 %v3431, 0.0
  %v3542 = vmax.f32 %v3434, 0.0
  %v3543 = vmax.f32 %v3439, 0.0
  %v3544 = vmax.f32 %v3442, 0.0
  %v3545 = vmax.f32 %v3447, 0.0
  %v3546 = vmax.f32 %v3450, 0.0
  %v3547 = vmax.f32 %v3455, 0.0
  %v3548 = vmax.f32 %v3458, 0.0
  %v3549 = vmax.f32 %v3463, 0.0
  %v3550 = vmax.f32 %v3466, 0.0
  %v3551 = vmax.f32 %v3471, 0.0
  %v3552 = vmax.f32 %v3474, 0.0
  %v3553 = vmax.f32 %v3479, 0.0
  %v3554 = vmax.f32 %v3482, 0.0
  %v3555 = vmax.f32 %v3487, 0.0
  %v3556 = vmax.f32 %v3490, 0.0
  %3557 = vst.msk [vmem:[#allocation2] sm:$0xff] %vm131, 0.0
  %vm3558 = vcmask 254976
  %3559 = vst.msk [vmem:[#allocation2 + $0x8] sm:$0x3] %vm3558, 0.0
  %3560 = vst.msk [vmem:[#allocation2 + $0x10] sm:$0xff] %vm131, 0.0
  %3561 = vst.msk [vmem:[#allocation2 + $0x18] sm:$0x3] %vm3558, 0.0
  %3562 = vst.msk [vmem:[#allocation2 + $0x20] sm:$0xff] %vm131, 0.0
  %3563 = vst.msk [vmem:[#allocation2 + $0x28] sm:$0x3] %vm3558, 0.0
  %3564 = vst.msk [vmem:[#allocation2 + $0x30] sm:$0xff] %vm131, 0.0
  %3565 = vst.msk [vmem:[#allocation2 + $0x38] sm:$0x3] %vm3558, 0.0
  %3566 = vst.msk [vmem:[#allocation2 + $0x40] sm:$0xff] %vm131, 0.0
  %3567 = vst.msk [vmem:[#allocation2 + $0x48] sm:$0x3] %vm3558, 0.0
  %3568 = vst.msk [vmem:[#allocation2 + $0x50] sm:$0xff] %vm131, 0.0
  %3569 = vst.msk [vmem:[#allocation2 + $0x58] sm:$0x3] %vm3558, 0.0
  %3570 = vst.msk [vmem:[#allocation2 + $0x60] sm:$0xff] %vm131, 0.0
  %3571 = vst.msk [vmem:[#allocation2 + $0x68] sm:$0x3] %vm3558, 0.0
  %3572 = vst.msk [vmem:[#allocation2 + $0x70] sm:$0xff] %vm131, 0.0
  %3573 = vst.msk [vmem:[#allocation2 + $0x78] sm:$0x3] %vm3558, 0.0
  %3574 = vst.msk [vmem:[#allocation2 + $0x80] sm:$0xff] %vm131, 0.0
  %3575 = vst.msk [vmem:[#allocation2 + $0x88] sm:$0x3] %vm3558, 0.0
  %3576 = vst.msk [vmem:[#allocation2 + $0x90] sm:$0xff] %vm131, 0.0
  %3577 = vst.msk [vmem:[#allocation2 + $0x98] sm:$0x3] %vm3558, 0.0
  %3578 = vst.msk [vmem:[#allocation2 + $0xa0] sm:$0xff] %vm131, 0.0
  %3579 = vst.msk [vmem:[#allocation2 + $0xa8] sm:$0x3] %vm3558, 0.0
  %3580 = vst.msk [vmem:[#allocation2 + $0xb0] sm:$0xff] %vm131, 0.0
  %3581 = vst.msk [vmem:[#allocation2 + $0xb8] sm:$0x3] %vm3558, 0.0
  %3582 = vst.msk [vmem:[#allocation2 + $0xc0] sm:$0xff] %vm131, 0.0
  %3583 = vst.msk [vmem:[#allocation2 + $0xc8] sm:$0x3] %vm3558, 0.0
  %3584 = vst.msk [vmem:[#allocation2 + $0xd0] sm:$0xff] %vm131, 0.0
  %3585 = vst.msk [vmem:[#allocation2 + $0xd8] sm:$0x3] %vm3558, 0.0
  %3586 = vst.msk [vmem:[#allocation2 + $0xe0] sm:$0xff] %vm131, 0.0
  %3587 = vst.msk [vmem:[#allocation2 + $0xe8] sm:$0x3] %vm3558, 0.0
  %3588 = vst.msk [vmem:[#allocation2 + $0xf0] sm:$0xff] %vm131, 0.0
  %3589 = vst.msk [vmem:[#allocation2 + $0xf8] sm:$0x3] %vm3558, 0.0
  %3590 = vst.msk [vmem:[#allocation2 + $0x100] sm:$0xff] %vm131, 0.0
  %3591 = vst.msk [vmem:[#allocation2 + $0x108] sm:$0x3] %vm3558, 0.0
  %3592 = vst.msk [vmem:[#allocation2 + $0x110] sm:$0xff] %vm131, 0.0
  %3593 = vst.msk [vmem:[#allocation2 + $0x118] sm:$0x3] %vm3558, 0.0
  %3594 = vst.msk [vmem:[#allocation2 + $0x120] sm:$0xff] %vm131, 0.0
  %3595 = vst.msk [vmem:[#allocation2 + $0x128] sm:$0x3] %vm3558, 0.0
  %3596 = vst.msk [vmem:[#allocation2 + $0x130] sm:$0xff] %vm131, 0.0
  %3597 = vst.msk [vmem:[#allocation2 + $0x138] sm:$0x3] %vm3558, 0.0
  %3598 = vst.msk [vmem:[#allocation2 + $0x140] sm:$0xff] %vm131, 0.0
  %3599 = vst.msk [vmem:[#allocation2 + $0x148] sm:$0x3] %vm3558, 0.0
  %3600 = vst.msk [vmem:[#allocation2 + $0x150] sm:$0xff] %vm131, 0.0
  %3601 = vst.msk [vmem:[#allocation2 + $0x158] sm:$0x3] %vm3558, 0.0
  %3602 = vst.msk [vmem:[#allocation2 + $0x160] sm:$0xff] %vm131, 0.0
  %3603 = vst.msk [vmem:[#allocation2 + $0x168] sm:$0x3] %vm3558, 0.0
  %3604 = vst.msk [vmem:[#allocation2 + $0x170] sm:$0xff] %vm131, 0.0
  %3605 = vst.msk [vmem:[#allocation2 + $0x178] sm:$0x3] %vm3558, 0.0
  %3606 = vst.msk [vmem:[#allocation2 + $0x180] sm:$0xff] %vm131, 0.0
  %3607 = vst.msk [vmem:[#allocation2 + $0x188] sm:$0x3] %vm3558, 0.0
  %3608 = vst.msk [vmem:[#allocation2 + $0x190] sm:$0xff] %vm131, 0.0
  %3609 = vst.msk [vmem:[#allocation2 + $0x198] sm:$0x3] %vm3558, 0.0
  %3610 = vst.msk [vmem:[#allocation2 + $0x1a0] sm:$0xff] %vm131, 0.0
  %3611 = vst.msk [vmem:[#allocation2 + $0x1a8] sm:$0x3] %vm3558, 0.0
  %3612 = vst.msk [vmem:[#allocation2 + $0x1b0] sm:$0xff] %vm131, 0.0
  %3613 = vst.msk [vmem:[#allocation2 + $0x1b8] sm:$0x3] %vm3558, 0.0
  %3614 = vst.msk [vmem:[#allocation2 + $0x1c0] sm:$0xff] %vm131, 0.0
  %3615 = vst.msk [vmem:[#allocation2 + $0x1c8] sm:$0x3] %vm3558, 0.0
  %3616 = vst.msk [vmem:[#allocation2 + $0x1d0] sm:$0xff] %vm131, 0.0
  %3617 = vst.msk [vmem:[#allocation2 + $0x1d8] sm:$0x3] %vm3558, 0.0
  %3618 = vst.msk [vmem:[#allocation2 + $0x1e0] sm:$0xff] %vm131, 0.0
  %3619 = vst.msk [vmem:[#allocation2 + $0x1e8] sm:$0x3] %vm3558, 0.0
  %3620 = vst.msk [vmem:[#allocation2 + $0x1f0] sm:$0xff] %vm131, 0.0
  %3621 = vst.msk [vmem:[#allocation2 + $0x1f8] sm:$0x3] %vm3558, 0.0
  %3622 = vst.msk [vmem:[#allocation2 + $0x200] sm:$0xff] %vm131, 0.0
  %3623 = vst.msk [vmem:[#allocation2 + $0x208] sm:$0x3] %vm3558, 0.0
  %3624 = vst.msk [vmem:[#allocation2 + $0x210] sm:$0xff] %vm131, 0.0
  %3625 = vst.msk [vmem:[#allocation2 + $0x218] sm:$0x3] %vm3558, 0.0
  %3626 = vst.msk [vmem:[#allocation2 + $0x220] sm:$0xff] %vm131, 0.0
  %3627 = vst.msk [vmem:[#allocation2 + $0x228] sm:$0x3] %vm3558, 0.0
  %3628 = vst.msk [vmem:[#allocation2 + $0x230] sm:$0xff] %vm131, 0.0
  %3629 = vst.msk [vmem:[#allocation2 + $0x238] sm:$0x3] %vm3558, 0.0
  %3630 = vst.msk [vmem:[#allocation2 + $0x240] sm:$0xff] %vm131, 0.0
  %3631 = vst.msk [vmem:[#allocation2 + $0x248] sm:$0x3] %vm3558, 0.0
  %3632 = vst.msk [vmem:[#allocation2 + $0x250] sm:$0xff] %vm131, 0.0
  %3633 = vst.msk [vmem:[#allocation2 + $0x258] sm:$0x3] %vm3558, 0.0
  %3634 = vst.msk [vmem:[#allocation2 + $0x260] sm:$0xff] %vm131, 0.0
  %3635 = vst.msk [vmem:[#allocation2 + $0x268] sm:$0x3] %vm3558, 0.0
  %3636 = vst.msk [vmem:[#allocation2 + $0x270] sm:$0xff] %vm131, 0.0
  %3637 = vst.msk [vmem:[#allocation2 + $0x278] sm:$0x3] %vm3558, 0.0
  %3638 = vst.msk [vmem:[#allocation2 + $0x280] sm:$0xff] %vm131, 0.0
  %3639 = vst.msk [vmem:[#allocation2 + $0x288] sm:$0x3] %vm3558, 0.0
  %3640 = vst.msk [vmem:[#allocation2 + $0x290] sm:$0xff] %vm131, 0.0
  %3641 = vst.msk [vmem:[#allocation2 + $0x298] sm:$0x3] %vm3558, 0.0
  %3642 = vst.msk [vmem:[#allocation2 + $0x2a0] sm:$0xff] %vm131, 0.0
  %3643 = vst.msk [vmem:[#allocation2 + $0x2a8] sm:$0x3] %vm3558, 0.0
  %3644 = vst.msk [vmem:[#allocation2 + $0x2b0] sm:$0xff] %vm131, 0.0
  %3645 = vst.msk [vmem:[#allocation2 + $0x2b8] sm:$0x3] %vm3558, 0.0
  %3646 = vst.msk [vmem:[#allocation2 + $0x2c0] sm:$0xff] %vm131, 0.0
  %3647 = vst.msk [vmem:[#allocation2 + $0x2c8] sm:$0x3] %vm3558, 0.0
  %3648 = vst.msk [vmem:[#allocation2 + $0x2d0] sm:$0xff] %vm131, 0.0
  %3649 = vst.msk [vmem:[#allocation2 + $0x2d8] sm:$0x3] %vm3558, 0.0
  %3650 = vst.msk [vmem:[#allocation2 + $0x2e0] sm:$0xff] %vm131, 0.0
  %3651 = vst.msk [vmem:[#allocation2 + $0x2e8] sm:$0x3] %vm3558, 0.0
  %3652 = vst.msk [vmem:[#allocation2 + $0x2f0] sm:$0xff] %vm131, 0.0
  %3653 = vst.msk [vmem:[#allocation2 + $0x2f8] sm:$0x3] %vm3558, 0.0
  %3654 = vst.msk [vmem:[#allocation2 + $0x300] sm:$0xff] %vm131, 0.0
  %3655 = vst.msk [vmem:[#allocation2 + $0x308] sm:$0x3] %vm3558, 0.0
  %3656 = vst.msk [vmem:[#allocation2 + $0x310] sm:$0xff] %vm131, 0.0
  %3657 = vst.msk [vmem:[#allocation2 + $0x318] sm:$0x3] %vm3558, 0.0
  %3658 = vst.msk [vmem:[#allocation2 + $0x320] sm:$0xff] %vm131, 0.0
  %3659 = vst.msk [vmem:[#allocation2 + $0x328] sm:$0x3] %vm3558, 0.0
  %3660 = vst.msk [vmem:[#allocation2 + $0x330] sm:$0xff] %vm131, 0.0
  %3661 = vst.msk [vmem:[#allocation2 + $0x338] sm:$0x3] %vm3558, 0.0
  %3662 = vst.msk [vmem:[#allocation2 + $0x340] sm:$0xff] %vm131, 0.0
  %3663 = vst.msk [vmem:[#allocation2 + $0x348] sm:$0x3] %vm3558, 0.0
  %3664 = vst.msk [vmem:[#allocation2 + $0x350] sm:$0xff] %vm131, 0.0
  %3665 = vst.msk [vmem:[#allocation2 + $0x358] sm:$0x3] %vm3558, 0.0
  %3666 = vst.msk [vmem:[#allocation2 + $0x360] sm:$0xff] %vm131, 0.0
  %3667 = vst.msk [vmem:[#allocation2 + $0x368] sm:$0x3] %vm3558, 0.0
  %3668 = vst.msk [vmem:[#allocation2 + $0x370] sm:$0xff] %vm131, 0.0
  %3669 = vst.msk [vmem:[#allocation2 + $0x378] sm:$0x3] %vm3558, 0.0
  %3670 = vst.msk [vmem:[#allocation2 + $0x380] sm:$0xff] %vm131, 0.0
  %3671 = vst.msk [vmem:[#allocation2 + $0x388] sm:$0x3] %vm3558, 0.0
  %3672 = vst.msk [vmem:[#allocation2 + $0x390] sm:$0xff] %vm131, 0.0
  %3673 = vst.msk [vmem:[#allocation2 + $0x398] sm:$0x3] %vm3558, 0.0
  %3674 = vst.msk [vmem:[#allocation2 + $0x3a0] sm:$0xff] %vm131, 0.0
  %3675 = vst.msk [vmem:[#allocation2 + $0x3a8] sm:$0x3] %vm3558, 0.0
  %3676 = vst.msk [vmem:[#allocation2 + $0x3b0] sm:$0xff] %vm131, 0.0
  %3677 = vst.msk [vmem:[#allocation2 + $0x3b8] sm:$0x3] %vm3558, 0.0
  %3678 = vst.msk [vmem:[#allocation2 + $0x3c0] sm:$0xff] %vm131, 0.0
  %3679 = vst.msk [vmem:[#allocation2 + $0x3c8] sm:$0x3] %vm3558, 0.0
  %3680 = vst.msk [vmem:[#allocation2 + $0x3d0] sm:$0xff] %vm131, 0.0
  %3681 = vst.msk [vmem:[#allocation2 + $0x3d8] sm:$0x3] %vm3558, 0.0
  %3682 = vst.msk [vmem:[#allocation2 + $0x3e0] sm:$0xff] %vm131, 0.0
  %3683 = vst.msk [vmem:[#allocation2 + $0x3e8] sm:$0x3] %vm3558, 0.0
  %3684 = vst.msk [vmem:[#allocation2 + $0x3f0] sm:$0xff] %vm131, 0.0
  %3685 = vst.msk [vmem:[#allocation2 + $0x3f8] sm:$0x3] %vm3558, 0.0
  %3686 = vst.msk [vmem:[#allocation2 + $0x400] sm:$0xff] %vm131, 0.0
  %3687 = vst.msk [vmem:[#allocation2 + $0x408] sm:$0x3] %vm3558, 0.0
  %3688 = vst.msk [vmem:[#allocation2 + $0x410] sm:$0xff] %vm131, 0.0
  %3689 = vst.msk [vmem:[#allocation2 + $0x418] sm:$0x3] %vm3558, 0.0
  %3690 = vst.msk [vmem:[#allocation2 + $0x420] sm:$0xff] %vm131, 0.0
  %3691 = vst.msk [vmem:[#allocation2 + $0x428] sm:$0x3] %vm3558, 0.0
  %3692 = vst.msk [vmem:[#allocation2 + $0x430] sm:$0xff] %vm131, 0.0
  %3693 = vst.msk [vmem:[#allocation2 + $0x438] sm:$0x3] %vm3558, 0.0
  %3694 = vst.msk [vmem:[#allocation2 + $0x440] sm:$0xff] %vm131, 0.0
  %3695 = vst.msk [vmem:[#allocation2 + $0x448] sm:$0x3] %vm3558, 0.0
  %3696 = vst.msk [vmem:[#allocation2 + $0x450] sm:$0xff] %vm131, 0.0
  %3697 = vst.msk [vmem:[#allocation2 + $0x458] sm:$0x3] %vm3558, 0.0
  %3698 = vst.msk [vmem:[#allocation2 + $0x460] sm:$0xff] %vm131, 0.0
  %3699 = vst.msk [vmem:[#allocation2 + $0x468] sm:$0x3] %vm3558, 0.0
  %3700 = vst.msk [vmem:[#allocation2 + $0x470] sm:$0xff] %vm131, 0.0
  %3701 = vst.msk [vmem:[#allocation2 + $0x478] sm:$0x3] %vm3558, 0.0
  %3702 = vst.msk [vmem:[#allocation2 + $0x480] sm:$0xff] %vm131, 0.0
  %3703 = vst.msk [vmem:[#allocation2 + $0x488] sm:$0x3] %vm3558, 0.0
  %3704 = vst.msk [vmem:[#allocation2 + $0x490] sm:$0xff] %vm131, 0.0
  %3705 = vst.msk [vmem:[#allocation2 + $0x498] sm:$0x3] %vm3558, 0.0
  %3706 = vst.msk [vmem:[#allocation2 + $0x4a0] sm:$0xff] %vm131, 0.0
  %3707 = vst.msk [vmem:[#allocation2 + $0x4a8] sm:$0x3] %vm3558, 0.0
  %3708 = vst.msk [vmem:[#allocation2 + $0x4b0] sm:$0xff] %vm131, 0.0
  %3709 = vst.msk [vmem:[#allocation2 + $0x4b8] sm:$0x3] %vm3558, 0.0
  %3710 = vst.msk [vmem:[#allocation2 + $0x4c0] sm:$0xff] %vm131, 0.0
  %3711 = vst.msk [vmem:[#allocation2 + $0x4c8] sm:$0x3] %vm3558, 0.0
  %3712 = vst.msk [vmem:[#allocation2 + $0x4d0] sm:$0xff] %vm131, 0.0
  %3713 = vst.msk [vmem:[#allocation2 + $0x4d8] sm:$0x3] %vm3558, 0.0
  %3714 = vst.msk [vmem:[#allocation2 + $0x4e0] sm:$0xff] %vm131, 0.0
  %3715 = vst.msk [vmem:[#allocation2 + $0x4e8] sm:$0x3] %vm3558, 0.0
  %3716 = vst.msk [vmem:[#allocation2 + $0x4f0] sm:$0xff] %vm131, 0.0
  %3717 = vst.msk [vmem:[#allocation2 + $0x4f8] sm:$0x3] %vm3558, 0.0
  %s3718 = scalar_lea.vmem [#allocation2], 16
  %3719 = vst.msk [vmem:[%s3718 + $0x1] sm:$0xff] %vm131, %v3493
  %3720 = vst.msk [vmem:[%s3718 + $0x11] sm:$0xff] %vm131, %v3494
  %3721 = vst.msk [vmem:[%s3718 + $0x21] sm:$0xff] %vm131, %v3495
  %3722 = vst.msk [vmem:[%s3718 + $0x31] sm:$0xff] %vm131, %v3496
  %3723 = vst.msk [vmem:[%s3718 + $0x41] sm:$0xff] %vm131, %v3497
  %3724 = vst.msk [vmem:[%s3718 + $0x51] sm:$0xff] %vm131, %v3498
  %3725 = vst.msk [vmem:[%s3718 + $0x61] sm:$0xff] %vm131, %v3499
  %3726 = vst.msk [vmem:[%s3718 + $0x71] sm:$0xff] %vm131, %v3500
  %3727 = vst.msk [vmem:[%s3718 + $0xa1] sm:$0xff] %vm131, %v3501
  %3728 = vst.msk [vmem:[%s3718 + $0xb1] sm:$0xff] %vm131, %v3502
  %3729 = vst.msk [vmem:[%s3718 + $0xc1] sm:$0xff] %vm131, %v3503
  %3730 = vst.msk [vmem:[%s3718 + $0xd1] sm:$0xff] %vm131, %v3504
  %3731 = vst.msk [vmem:[%s3718 + $0xe1] sm:$0xff] %vm131, %v3505
  %3732 = vst.msk [vmem:[%s3718 + $0xf1] sm:$0xff] %vm131, %v3506
  %3733 = vst.msk [vmem:[%s3718 + $0x101] sm:$0xff] %vm131, %v3507
  %3734 = vst.msk [vmem:[%s3718 + $0x111] sm:$0xff] %vm131, %v3508
  %3735 = vst.msk [vmem:[%s3718 + $0x141] sm:$0xff] %vm131, %v3509
  %3736 = vst.msk [vmem:[%s3718 + $0x151] sm:$0xff] %vm131, %v3510
  %3737 = vst.msk [vmem:[%s3718 + $0x161] sm:$0xff] %vm131, %v3511
  %3738 = vst.msk [vmem:[%s3718 + $0x171] sm:$0xff] %vm131, %v3512
  %3739 = vst.msk [vmem:[%s3718 + $0x181] sm:$0xff] %vm131, %v3513
  %3740 = vst.msk [vmem:[%s3718 + $0x191] sm:$0xff] %vm131, %v3514
  %3741 = vst.msk [vmem:[%s3718 + $0x1a1] sm:$0xff] %vm131, %v3515
  %3742 = vst.msk [vmem:[%s3718 + $0x1b1] sm:$0xff] %vm131, %v3516
  %3743 = vst.msk [vmem:[%s3718 + $0x1e1] sm:$0xff] %vm131, %v3517
  %3744 = vst.msk [vmem:[%s3718 + $0x1f1] sm:$0xff] %vm131, %v3518
  %3745 = vst.msk [vmem:[%s3718 + $0x201] sm:$0xff] %vm131, %v3519
  %3746 = vst.msk [vmem:[%s3718 + $0x211] sm:$0xff] %vm131, %v3520
  %3747 = vst.msk [vmem:[%s3718 + $0x221] sm:$0xff] %vm131, %v3521
  %3748 = vst.msk [vmem:[%s3718 + $0x231] sm:$0xff] %vm131, %v3522
  %3749 = vst.msk [vmem:[%s3718 + $0x241] sm:$0xff] %vm131, %v3523
  %3750 = vst.msk [vmem:[%s3718 + $0x251] sm:$0xff] %vm131, %v3524
  %3751 = vst.msk [vmem:[%s3718 + $0x281] sm:$0xff] %vm131, %v3525
  %3752 = vst.msk [vmem:[%s3718 + $0x291] sm:$0xff] %vm131, %v3526
  %3753 = vst.msk [vmem:[%s3718 + $0x2a1] sm:$0xff] %vm131, %v3527
  %3754 = vst.msk [vmem:[%s3718 + $0x2b1] sm:$0xff] %vm131, %v3528
  %3755 = vst.msk [vmem:[%s3718 + $0x2c1] sm:$0xff] %vm131, %v3529
  %3756 = vst.msk [vmem:[%s3718 + $0x2d1] sm:$0xff] %vm131, %v3530
  %3757 = vst.msk [vmem:[%s3718 + $0x2e1] sm:$0xff] %vm131, %v3531
  %3758 = vst.msk [vmem:[%s3718 + $0x2f1] sm:$0xff] %vm131, %v3532
  %3759 = vst.msk [vmem:[%s3718 + $0x321] sm:$0xff] %vm131, %v3533
  %3760 = vst.msk [vmem:[%s3718 + $0x331] sm:$0xff] %vm131, %v3534
  %3761 = vst.msk [vmem:[%s3718 + $0x341] sm:$0xff] %vm131, %v3535
  %3762 = vst.msk [vmem:[%s3718 + $0x351] sm:$0xff] %vm131, %v3536
  %3763 = vst.msk [vmem:[%s3718 + $0x361] sm:$0xff] %vm131, %v3537
  %3764 = vst.msk [vmem:[%s3718 + $0x371] sm:$0xff] %vm131, %v3538
  %3765 = vst.msk [vmem:[%s3718 + $0x381] sm:$0xff] %vm131, %v3539
  %3766 = vst.msk [vmem:[%s3718 + $0x391] sm:$0xff] %vm131, %v3540
  %3767 = vst.msk [vmem:[%s3718 + $0x3c1] sm:$0xff] %vm131, %v3541
  %3768 = vst.msk [vmem:[%s3718 + $0x3d1] sm:$0xff] %vm131, %v3542
  %3769 = vst.msk [vmem:[%s3718 + $0x3e1] sm:$0xff] %vm131, %v3543
  %3770 = vst.msk [vmem:[%s3718 + $0x3f1] sm:$0xff] %vm131, %v3544
  %3771 = vst.msk [vmem:[%s3718 + $0x401] sm:$0xff] %vm131, %v3545
  %3772 = vst.msk [vmem:[%s3718 + $0x411] sm:$0xff] %vm131, %v3546
  %3773 = vst.msk [vmem:[%s3718 + $0x421] sm:$0xff] %vm131, %v3547
  %3774 = vst.msk [vmem:[%s3718 + $0x431] sm:$0xff] %vm131, %v3548
  %3775 = vst.msk [vmem:[%s3718 + $0x461] sm:$0xff] %vm131, %v3549
  %3776 = vst.msk [vmem:[%s3718 + $0x471] sm:$0xff] %vm131, %v3550
  %3777 = vst.msk [vmem:[%s3718 + $0x481] sm:$0xff] %vm131, %v3551
  %3778 = vst.msk [vmem:[%s3718 + $0x491] sm:$0xff] %vm131, %v3552
  %3779 = vst.msk [vmem:[%s3718 + $0x4a1] sm:$0xff] %vm131, %v3553
  %3780 = vst.msk [vmem:[%s3718 + $0x4b1] sm:$0xff] %vm131, %v3554
  %3781 = vst.msk [vmem:[%s3718 + $0x4c1] sm:$0xff] %vm131, %v3555
  %3782 = vst.msk [vmem:[%s3718 + $0x4d1] sm:$0xff] %vm131, %v3556
  %v3783 = vld [vmem:[#allocation2] sm:$0xff]
  %v3784 = vld [vmem:[#allocation2 + $0x8] sm:$0x3]
  %v3785 = vld [vmem:[#allocation2 + $0x10] sm:$0xff]
  %v3786 = vld [vmem:[#allocation2 + $0x18] sm:$0x3]
  %v3787 = vld [vmem:[#allocation2 + $0x20] sm:$0xff]
  %v3788 = vld [vmem:[#allocation2 + $0x28] sm:$0x3]
  %v3789 = vld [vmem:[#allocation2 + $0x30] sm:$0xff]
  %v3790 = vld [vmem:[#allocation2 + $0x38] sm:$0x3]
  %v3791 = vld [vmem:[#allocation2 + $0x40] sm:$0xff]
  %v3792 = vld [vmem:[#allocation2 + $0x48] sm:$0x3]
  %v3793 = vld [vmem:[#allocation2 + $0x50] sm:$0xff]
  %v3794 = vld [vmem:[#allocation2 + $0x58] sm:$0x3]
  %v3795 = vld [vmem:[#allocation2 + $0x60] sm:$0xff]
  %v3796 = vld [vmem:[#allocation2 + $0x68] sm:$0x3]
  %v3797 = vld [vmem:[#allocation2 + $0x70] sm:$0xff]
  %v3798 = vld [vmem:[#allocation2 + $0x78] sm:$0x3]
  %v3799 = vld [vmem:[#allocation2 + $0x80] sm:$0xff]
  %v3800 = vld [vmem:[#allocation2 + $0x88] sm:$0x3]
  %v3801 = vld [vmem:[#allocation2 + $0x90] sm:$0xff]
  %v3802 = vld [vmem:[#allocation2 + $0x98] sm:$0x3]
  %v3803 = vld [vmem:[#allocation2 + $0xa0] sm:$0xff]
  %v3804 = vld [vmem:[#allocation2 + $0xa8] sm:$0x3]
  %v3805 = vld [vmem:[#allocation2 + $0xb0] sm:$0xff]
  %v3806 = vld [vmem:[#allocation2 + $0xb8] sm:$0x3]
  %v3807 = vld [vmem:[#allocation2 + $0xc0] sm:$0xff]
  %v3808 = vld [vmem:[#allocation2 + $0xc8] sm:$0x3]
  %v3809 = vld [vmem:[#allocation2 + $0xd0] sm:$0xff]
  %v3810 = vld [vmem:[#allocation2 + $0xd8] sm:$0x3]
  %v3811 = vld [vmem:[#allocation2 + $0xe0] sm:$0xff]
  %v3812 = vld [vmem:[#allocation2 + $0xe8] sm:$0x3]
  %v3813 = vld [vmem:[#allocation2 + $0xf0] sm:$0xff]
  %v3814 = vld [vmem:[#allocation2 + $0xf8] sm:$0x3]
  %v3815 = vld [vmem:[#allocation2 + $0x100] sm:$0xff]
  %v3816 = vld [vmem:[#allocation2 + $0x108] sm:$0x3]
  %v3817 = vld [vmem:[#allocation2 + $0x110] sm:$0xff]
  %v3818 = vld [vmem:[#allocation2 + $0x118] sm:$0x3]
  %v3819 = vld [vmem:[#allocation2 + $0x120] sm:$0xff]
  %v3820 = vld [vmem:[#allocation2 + $0x128] sm:$0x3]
  %v3821 = vld [vmem:[#allocation2 + $0x130] sm:$0xff]
  %v3822 = vld [vmem:[#allocation2 + $0x138] sm:$0x3]
  %v3823 = vld [vmem:[#allocation2 + $0x140] sm:$0xff]
  %v3824 = vld [vmem:[#allocation2 + $0x148] sm:$0x3]
  %v3825 = vld [vmem:[#allocation2 + $0x150] sm:$0xff]
  %v3826 = vld [vmem:[#allocation2 + $0x158] sm:$0x3]
  %v3827 = vld [vmem:[#allocation2 + $0x160] sm:$0xff]
  %v3828 = vld [vmem:[#allocation2 + $0x168] sm:$0x3]
  %v3829 = vld [vmem:[#allocation2 + $0x170] sm:$0xff]
  %v3830 = vld [vmem:[#allocation2 + $0x178] sm:$0x3]
  %v3831 = vld [vmem:[#allocation2 + $0x180] sm:$0xff]
  %v3832 = vld [vmem:[#allocation2 + $0x188] sm:$0x3]
  %v3833 = vld [vmem:[#allocation2 + $0x190] sm:$0xff]
  %v3834 = vld [vmem:[#allocation2 + $0x198] sm:$0x3]
  %v3835 = vld [vmem:[#allocation2 + $0x1a0] sm:$0xff]
  %v3836 = vld [vmem:[#allocation2 + $0x1a8] sm:$0x3]
  %v3837 = vld [vmem:[#allocation2 + $0x1b0] sm:$0xff]
  %v3838 = vld [vmem:[#allocation2 + $0x1b8] sm:$0x3]
  %v3839 = vld [vmem:[#allocation2 + $0x1c0] sm:$0xff]
  %v3840 = vld [vmem:[#allocation2 + $0x1c8] sm:$0x3]
  %v3841 = vld [vmem:[#allocation2 + $0x1d0] sm:$0xff]
  %v3842 = vld [vmem:[#allocation2 + $0x1d8] sm:$0x3]
  %v3843 = vld [vmem:[#allocation2 + $0x1e0] sm:$0xff]
  %v3844 = vld [vmem:[#allocation2 + $0x1e8] sm:$0x3]
  %v3845 = vld [vmem:[#allocation2 + $0x1f0] sm:$0xff]
  %v3846 = vld [vmem:[#allocation2 + $0x1f8] sm:$0x3]
  %v3847 = vld [vmem:[#allocation2 + $0x200] sm:$0xff]
  %v3848 = vld [vmem:[#allocation2 + $0x208] sm:$0x3]
  %v3849 = vld [vmem:[#allocation2 + $0x210] sm:$0xff]
  %v3850 = vld [vmem:[#allocation2 + $0x218] sm:$0x3]
  %v3851 = vld [vmem:[#allocation2 + $0x220] sm:$0xff]
  %v3852 = vld [vmem:[#allocation2 + $0x228] sm:$0x3]
  %v3853 = vld [vmem:[#allocation2 + $0x230] sm:$0xff]
  %v3854 = vld [vmem:[#allocation2 + $0x238] sm:$0x3]
  %v3855 = vld [vmem:[#allocation2 + $0x240] sm:$0xff]
  %v3856 = vld [vmem:[#allocation2 + $0x248] sm:$0x3]
  %v3857 = vld [vmem:[#allocation2 + $0x250] sm:$0xff]
  %v3858 = vld [vmem:[#allocation2 + $0x258] sm:$0x3]
  %v3859 = vld [vmem:[#allocation2 + $0x260] sm:$0xff]
  %v3860 = vld [vmem:[#allocation2 + $0x268] sm:$0x3]
  %v3861 = vld [vmem:[#allocation2 + $0x270] sm:$0xff]
  %v3862 = vld [vmem:[#allocation2 + $0x278] sm:$0x3]
  %v3863 = vld [vmem:[#allocation2 + $0x280] sm:$0xff]
  %v3864 = vld [vmem:[#allocation2 + $0x288] sm:$0x3]
  %v3865 = vld [vmem:[#allocation2 + $0x290] sm:$0xff]
  %v3866 = vld [vmem:[#allocation2 + $0x298] sm:$0x3]
  %v3867 = vld [vmem:[#allocation2 + $0x2a0] sm:$0xff]
  %v3868 = vld [vmem:[#allocation2 + $0x2a8] sm:$0x3]
  %v3869 = vld [vmem:[#allocation2 + $0x2b0] sm:$0xff]
  %v3870 = vld [vmem:[#allocation2 + $0x2b8] sm:$0x3]
  %v3871 = vld [vmem:[#allocation2 + $0x2c0] sm:$0xff]
  %v3872 = vld [vmem:[#allocation2 + $0x2c8] sm:$0x3]
  %v3873 = vld [vmem:[#allocation2 + $0x2d0] sm:$0xff]
  %v3874 = vld [vmem:[#allocation2 + $0x2d8] sm:$0x3]
  %v3875 = vld [vmem:[#allocation2 + $0x2e0] sm:$0xff]
  %v3876 = vld [vmem:[#allocation2 + $0x2e8] sm:$0x3]
  %v3877 = vld [vmem:[#allocation2 + $0x2f0] sm:$0xff]
  %v3878 = vld [vmem:[#allocation2 + $0x2f8] sm:$0x3]
  %v3879 = vld [vmem:[#allocation2 + $0x300] sm:$0xff]
  %v3880 = vld [vmem:[#allocation2 + $0x308] sm:$0x3]
  %v3881 = vld [vmem:[#allocation2 + $0x310] sm:$0xff]
  %v3882 = vld [vmem:[#allocation2 + $0x318] sm:$0x3]
  %v3883 = vld [vmem:[#allocation2 + $0x320] sm:$0xff]
  %v3884 = vld [vmem:[#allocation2 + $0x328] sm:$0x3]
  %v3885 = vld [vmem:[#allocation2 + $0x330] sm:$0xff]
  %v3886 = vld [vmem:[#allocation2 + $0x338] sm:$0x3]
  %v3887 = vld [vmem:[#allocation2 + $0x340] sm:$0xff]
  %v3888 = vld [vmem:[#allocation2 + $0x348] sm:$0x3]
  %v3889 = vld [vmem:[#allocation2 + $0x350] sm:$0xff]
  %v3890 = vld [vmem:[#allocation2 + $0x358] sm:$0x3]
  %v3891 = vld [vmem:[#allocation2 + $0x360] sm:$0xff]
  %v3892 = vld [vmem:[#allocation2 + $0x368] sm:$0x3]
  %v3893 = vld [vmem:[#allocation2 + $0x370] sm:$0xff]
  %v3894 = vld [vmem:[#allocation2 + $0x378] sm:$0x3]
  %v3895 = vld [vmem:[#allocation2 + $0x380] sm:$0xff]
  %v3896 = vld [vmem:[#allocation2 + $0x388] sm:$0x3]
  %v3897 = vld [vmem:[#allocation2 + $0x390] sm:$0xff]
  %v3898 = vld [vmem:[#allocation2 + $0x398] sm:$0x3]
  %v3899 = vld [vmem:[#allocation2 + $0x3a0] sm:$0xff]
  %v3900 = vld [vmem:[#allocation2 + $0x3a8] sm:$0x3]
  %v3901 = vld [vmem:[#allocation2 + $0x3b0] sm:$0xff]
  %v3902 = vld [vmem:[#allocation2 + $0x3b8] sm:$0x3]
  %v3903 = vld [vmem:[#allocation2 + $0x3c0] sm:$0xff]
  %v3904 = vld [vmem:[#allocation2 + $0x3c8] sm:$0x3]
  %v3905 = vld [vmem:[#allocation2 + $0x3d0] sm:$0xff]
  %v3906 = vld [vmem:[#allocation2 + $0x3d8] sm:$0x3]
  %v3907 = vld [vmem:[#allocation2 + $0x3e0] sm:$0xff]
  %v3908 = vld [vmem:[#allocation2 + $0x3e8] sm:$0x3]
  %v3909 = vld [vmem:[#allocation2 + $0x3f0] sm:$0xff]
  %v3910 = vld [vmem:[#allocation2 + $0x3f8] sm:$0x3]
  %v3911 = vld [vmem:[#allocation2 + $0x400] sm:$0xff]
  %v3912 = vld [vmem:[#allocation2 + $0x408] sm:$0x3]
  %v3913 = vld [vmem:[#allocation2 + $0x410] sm:$0xff]
  %v3914 = vld [vmem:[#allocation2 + $0x418] sm:$0x3]
  %v3915 = vld [vmem:[#allocation2 + $0x420] sm:$0xff]
  %v3916 = vld [vmem:[#allocation2 + $0x428] sm:$0x3]
  %v3917 = vld [vmem:[#allocation2 + $0x430] sm:$0xff]
  %v3918 = vld [vmem:[#allocation2 + $0x438] sm:$0x3]
  %v3919 = vld [vmem:[#allocation2 + $0x440] sm:$0xff]
  %v3920 = vld [vmem:[#allocation2 + $0x448] sm:$0x3]
  %v3921 = vld [vmem:[#allocation2 + $0x450] sm:$0xff]
  %v3922 = vld [vmem:[#allocation2 + $0x458] sm:$0x3]
  %v3923 = vld [vmem:[#allocation2 + $0x460] sm:$0xff]
  %v3924 = vld [vmem:[#allocation2 + $0x468] sm:$0x3]
  %v3925 = vld [vmem:[#allocation2 + $0x470] sm:$0xff]
  %v3926 = vld [vmem:[#allocation2 + $0x478] sm:$0x3]
  %v3927 = vld [vmem:[#allocation2 + $0x480] sm:$0xff]
  %v3928 = vld [vmem:[#allocation2 + $0x488] sm:$0x3]
  %v3929 = vld [vmem:[#allocation2 + $0x490] sm:$0xff]
  %v3930 = vld [vmem:[#allocation2 + $0x498] sm:$0x3]
  %v3931 = vld [vmem:[#allocation2 + $0x4a0] sm:$0xff]
  %v3932 = vld [vmem:[#allocation2 + $0x4a8] sm:$0x3]
  %v3933 = vld [vmem:[#allocation2 + $0x4b0] sm:$0xff]
  %v3934 = vld [vmem:[#allocation2 + $0x4b8] sm:$0x3]
  %v3935 = vld [vmem:[#allocation2 + $0x4c0] sm:$0xff]
  %v3936 = vld [vmem:[#allocation2 + $0x4c8] sm:$0x3]
  %v3937 = vld [vmem:[#allocation2 + $0x4d0] sm:$0xff]
  %v3938 = vld [vmem:[#allocation2 + $0x4d8] sm:$0x3]
  %v3939 = vld [vmem:[#allocation2 + $0x4e0] sm:$0xff]
  %v3940 = vld [vmem:[#allocation2 + $0x4e8] sm:$0x3]
  %v3941 = vld [vmem:[#allocation2 + $0x4f0] sm:$0xff]
  %v3942 = vld [vmem:[#allocation2 + $0x4f8] sm:$0x3]
  %v4071 = vrot.slane %v3783, 1
  %v4072 = vrot.slane %v3784, 1
  %v4073 = vsel %vm62, %v4071, %v4072
  %v4074 = vrot.slane %v3785, 1
  %v4075 = vrot.slane %v3786, 1
  %v4076 = vsel %vm62, %v4074, %v4075
  %v4077 = vrot.slane %v3787, 1
  %v4078 = vrot.slane %v3788, 1
  %v4079 = vsel %vm62, %v4077, %v4078
  %v4080 = vrot.slane %v3789, 1
  %v4081 = vrot.slane %v3790, 1
  %v4082 = vsel %vm62, %v4080, %v4081
  %v4083 = vrot.slane %v3791, 1
  %v4084 = vrot.slane %v3792, 1
  %v4085 = vsel %vm62, %v4083, %v4084
  %v4086 = vrot.slane %v3793, 1
  %v4087 = vrot.slane %v3794, 1
  %v4088 = vsel %vm62, %v4086, %v4087
  %v4089 = vrot.slane %v3795, 1
  %v4090 = vrot.slane %v3796, 1
  %v4091 = vsel %vm62, %v4089, %v4090
  %v4092 = vrot.slane %v3797, 1
  %v4093 = vrot.slane %v3798, 1
  %v4094 = vsel %vm62, %v4092, %v4093
  %v4095 = vrot.slane %v3803, 1
  %v4096 = vrot.slane %v3804, 1
  %v4097 = vsel %vm62, %v4095, %v4096
  %v4098 = vrot.slane %v3805, 1
  %v4099 = vrot.slane %v3806, 1
  %v4100 = vsel %vm62, %v4098, %v4099
  %v4101 = vrot.slane %v3807, 1
  %v4102 = vrot.slane %v3808, 1
  %v4103 = vsel %vm62, %v4101, %v4102
  %v4104 = vrot.slane %v3809, 1
  %v4105 = vrot.slane %v3810, 1
  %v4106 = vsel %vm62, %v4104, %v4105
  %v4107 = vrot.slane %v3811, 1
  %v4108 = vrot.slane %v3812, 1
  %v4109 = vsel %vm62, %v4107, %v4108
  %v4110 = vrot.slane %v3813, 1
  %v4111 = vrot.slane %v3814, 1
  %v4112 = vsel %vm62, %v4110, %v4111
  %v4113 = vrot.slane %v3815, 1
  %v4114 = vrot.slane %v3816, 1
  %v4115 = vsel %vm62, %v4113, %v4114
  %v4116 = vrot.slane %v3817, 1
  %v4117 = vrot.slane %v3818, 1
  %v4118 = vsel %vm62, %v4116, %v4117
  %v4119 = vrot.slane %v3823, 1
  %v4120 = vrot.slane %v3824, 1
  %v4121 = vsel %vm62, %v4119, %v4120
  %v4122 = vrot.slane %v3825, 1
  %v4123 = vrot.slane %v3826, 1
  %v4124 = vsel %vm62, %v4122, %v4123
  %v4125 = vrot.slane %v3827, 1
  %v4126 = vrot.slane %v3828, 1
  %v4127 = vsel %vm62, %v4125, %v4126
  %v4128 = vrot.slane %v3829, 1
  %v4129 = vrot.slane %v3830, 1
  %v4130 = vsel %vm62, %v4128, %v4129
  %v4131 = vrot.slane %v3831, 1
  %v4132 = vrot.slane %v3832, 1
  %v4133 = vsel %vm62, %v4131, %v4132
  %v4134 = vrot.slane %v3833, 1
  %v4135 = vrot.slane %v3834, 1
  %v4136 = vsel %vm62, %v4134, %v4135
  %v4137 = vrot.slane %v3835, 1
  %v4138 = vrot.slane %v3836, 1
  %v4139 = vsel %vm62, %v4137, %v4138
  %v4140 = vrot.slane %v3837, 1
  %v4141 = vrot.slane %v3838, 1
  %v4142 = vsel %vm62, %v4140, %v4141
  %v4143 = vrot.slane %v3843, 1
  %v4144 = vrot.slane %v3844, 1
  %v4145 = vsel %vm62, %v4143, %v4144
  %v4146 = vrot.slane %v3845, 1
  %v4147 = vrot.slane %v3846, 1
  %v4148 = vsel %vm62, %v4146, %v4147
  %v4149 = vrot.slane %v3847, 1
  %v4150 = vrot.slane %v3848, 1
  %v4151 = vsel %vm62, %v4149, %v4150
  %v4152 = vrot.slane %v3849, 1
  %v4153 = vrot.slane %v3850, 1
  %v4154 = vsel %vm62, %v4152, %v4153
  %v4155 = vrot.slane %v3851, 1
  %v4156 = vrot.slane %v3852, 1
  %v4157 = vsel %vm62, %v4155, %v4156
  %v4158 = vrot.slane %v3853, 1
  %v4159 = vrot.slane %v3854, 1
  %v4160 = vsel %vm62, %v4158, %v4159
  %v4161 = vrot.slane %v3855, 1
  %v4162 = vrot.slane %v3856, 1
  %v4163 = vsel %vm62, %v4161, %v4162
  %v4164 = vrot.slane %v3857, 1
  %v4165 = vrot.slane %v3858, 1
  %v4166 = vsel %vm62, %v4164, %v4165
  %v4167 = vrot.slane %v3863, 1
  %v4168 = vrot.slane %v3864, 1
  %v4169 = vsel %vm62, %v4167, %v4168
  %v4170 = vrot.slane %v3865, 1
  %v4171 = vrot.slane %v3866, 1
  %v4172 = vsel %vm62, %v4170, %v4171
  %v4173 = vrot.slane %v3867, 1
  %v4174 = vrot.slane %v3868, 1
  %v4175 = vsel %vm62, %v4173, %v4174
  %v4176 = vrot.slane %v3869, 1
  %v4177 = vrot.slane %v3870, 1
  %v4178 = vsel %vm62, %v4176, %v4177
  %v4179 = vrot.slane %v3871, 1
  %v4180 = vrot.slane %v3872, 1
  %v4181 = vsel %vm62, %v4179, %v4180
  %v4182 = vrot.slane %v3873, 1
  %v4183 = vrot.slane %v3874, 1
  %v4184 = vsel %vm62, %v4182, %v4183
  %v4185 = vrot.slane %v3875, 1
  %v4186 = vrot.slane %v3876, 1
  %v4187 = vsel %vm62, %v4185, %v4186
  %v4188 = vrot.slane %v3877, 1
  %v4189 = vrot.slane %v3878, 1
  %v4190 = vsel %vm62, %v4188, %v4189
  %v4191 = vrot.slane %v3883, 1
  %v4192 = vrot.slane %v3884, 1
  %v4193 = vsel %vm62, %v4191, %v4192
  %v4194 = vrot.slane %v3885, 1
  %v4195 = vrot.slane %v3886, 1
  %v4196 = vsel %vm62, %v4194, %v4195
  %v4197 = vrot.slane %v3887, 1
  %v4198 = vrot.slane %v3888, 1
  %v4199 = vsel %vm62, %v4197, %v4198
  %v4200 = vrot.slane %v3889, 1
  %v4201 = vrot.slane %v3890, 1
  %v4202 = vsel %vm62, %v4200, %v4201
  %v4203 = vrot.slane %v3891, 1
  %v4204 = vrot.slane %v3892, 1
  %v4205 = vsel %vm62, %v4203, %v4204
  %v4206 = vrot.slane %v3893, 1
  %v4207 = vrot.slane %v3894, 1
  %v4208 = vsel %vm62, %v4206, %v4207
  %v4209 = vrot.slane %v3895, 1
  %v4210 = vrot.slane %v3896, 1
  %v4211 = vsel %vm62, %v4209, %v4210
  %v4212 = vrot.slane %v3897, 1
  %v4213 = vrot.slane %v3898, 1
  %v4214 = vsel %vm62, %v4212, %v4213
  %v4215 = vrot.slane %v3903, 1
  %v4216 = vrot.slane %v3904, 1
  %v4217 = vsel %vm62, %v4215, %v4216
  %v4218 = vrot.slane %v3905, 1
  %v4219 = vrot.slane %v3906, 1
  %v4220 = vsel %vm62, %v4218, %v4219
  %v4221 = vrot.slane %v3907, 1
  %v4222 = vrot.slane %v3908, 1
  %v4223 = vsel %vm62, %v4221, %v4222
  %v4224 = vrot.slane %v3909, 1
  %v4225 = vrot.slane %v3910, 1
  %v4226 = vsel %vm62, %v4224, %v4225
  %v4227 = vrot.slane %v3911, 1
  %v4228 = vrot.slane %v3912, 1
  %v4229 = vsel %vm62, %v4227, %v4228
  %v4230 = vrot.slane %v3913, 1
  %v4231 = vrot.slane %v3914, 1
  %v4232 = vsel %vm62, %v4230, %v4231
  %v4233 = vrot.slane %v3915, 1
  %v4234 = vrot.slane %v3916, 1
  %v4235 = vsel %vm62, %v4233, %v4234
  %v4236 = vrot.slane %v3917, 1
  %v4237 = vrot.slane %v3918, 1
  %v4238 = vsel %vm62, %v4236, %v4237
  %v4239 = vrot.slane %v3923, 1
  %v4240 = vrot.slane %v3924, 1
  %v4241 = vsel %vm62, %v4239, %v4240
  %v4242 = vrot.slane %v3925, 1
  %v4243 = vrot.slane %v3926, 1
  %v4244 = vsel %vm62, %v4242, %v4243
  %v4245 = vrot.slane %v3927, 1
  %v4246 = vrot.slane %v3928, 1
  %v4247 = vsel %vm62, %v4245, %v4246
  %v4248 = vrot.slane %v3929, 1
  %v4249 = vrot.slane %v3930, 1
  %v4250 = vsel %vm62, %v4248, %v4249
  %v4251 = vrot.slane %v3931, 1
  %v4252 = vrot.slane %v3932, 1
  %v4253 = vsel %vm62, %v4251, %v4252
  %v4254 = vrot.slane %v3933, 1
  %v4255 = vrot.slane %v3934, 1
  %v4256 = vsel %vm62, %v4254, %v4255
  %v4257 = vrot.slane %v3935, 1
  %v4258 = vrot.slane %v3936, 1
  %v4259 = vsel %vm62, %v4257, %v4258
  %v4260 = vrot.slane %v3937, 1
  %v4261 = vrot.slane %v3938, 1
  %v4262 = vsel %vm62, %v4260, %v4261
  %v4263 = vrot.slane %v3783, 2
  %v4264 = vrot.slane %v3784, 2
  %v4265 = vsel %vm655, %v4263, %v4264
  %v4266 = vrot.slane %v3785, 2
  %v4267 = vrot.slane %v3786, 2
  %v4268 = vsel %vm655, %v4266, %v4267
  %v4269 = vrot.slane %v3787, 2
  %v4270 = vrot.slane %v3788, 2
  %v4271 = vsel %vm655, %v4269, %v4270
  %v4272 = vrot.slane %v3789, 2
  %v4273 = vrot.slane %v3790, 2
  %v4274 = vsel %vm655, %v4272, %v4273
  %v4275 = vrot.slane %v3791, 2
  %v4276 = vrot.slane %v3792, 2
  %v4277 = vsel %vm655, %v4275, %v4276
  %v4278 = vrot.slane %v3793, 2
  %v4279 = vrot.slane %v3794, 2
  %v4280 = vsel %vm655, %v4278, %v4279
  %v4281 = vrot.slane %v3795, 2
  %v4282 = vrot.slane %v3796, 2
  %v4283 = vsel %vm655, %v4281, %v4282
  %v4284 = vrot.slane %v3797, 2
  %v4285 = vrot.slane %v3798, 2
  %v4286 = vsel %vm655, %v4284, %v4285
  %v4287 = vrot.slane %v3803, 2
  %v4288 = vrot.slane %v3804, 2
  %v4289 = vsel %vm655, %v4287, %v4288
  %v4290 = vrot.slane %v3805, 2
  %v4291 = vrot.slane %v3806, 2
  %v4292 = vsel %vm655, %v4290, %v4291
  %v4293 = vrot.slane %v3807, 2
  %v4294 = vrot.slane %v3808, 2
  %v4295 = vsel %vm655, %v4293, %v4294
  %v4296 = vrot.slane %v3809, 2
  %v4297 = vrot.slane %v3810, 2
  %v4298 = vsel %vm655, %v4296, %v4297
  %v4299 = vrot.slane %v3811, 2
  %v4300 = vrot.slane %v3812, 2
  %v4301 = vsel %vm655, %v4299, %v4300
  %v4302 = vrot.slane %v3813, 2
  %v4303 = vrot.slane %v3814, 2
  %v4304 = vsel %vm655, %v4302, %v4303
  %v4305 = vrot.slane %v3815, 2
  %v4306 = vrot.slane %v3816, 2
  %v4307 = vsel %vm655, %v4305, %v4306
  %v4308 = vrot.slane %v3817, 2
  %v4309 = vrot.slane %v3818, 2
  %v4310 = vsel %vm655, %v4308, %v4309
  %v4311 = vrot.slane %v3823, 2
  %v4312 = vrot.slane %v3824, 2
  %v4313 = vsel %vm655, %v4311, %v4312
  %v4314 = vrot.slane %v3825, 2
  %v4315 = vrot.slane %v3826, 2
  %v4316 = vsel %vm655, %v4314, %v4315
  %v4317 = vrot.slane %v3827, 2
  %v4318 = vrot.slane %v3828, 2
  %v4319 = vsel %vm655, %v4317, %v4318
  %v4320 = vrot.slane %v3829, 2
  %v4321 = vrot.slane %v3830, 2
  %v4322 = vsel %vm655, %v4320, %v4321
  %v4323 = vrot.slane %v3831, 2
  %v4324 = vrot.slane %v3832, 2
  %v4325 = vsel %vm655, %v4323, %v4324
  %v4326 = vrot.slane %v3833, 2
  %v4327 = vrot.slane %v3834, 2
  %v4328 = vsel %vm655, %v4326, %v4327
  %v4329 = vrot.slane %v3835, 2
  %v4330 = vrot.slane %v3836, 2
  %v4331 = vsel %vm655, %v4329, %v4330
  %v4332 = vrot.slane %v3837, 2
  %v4333 = vrot.slane %v3838, 2
  %v4334 = vsel %vm655, %v4332, %v4333
  %v4335 = vrot.slane %v3843, 2
  %v4336 = vrot.slane %v3844, 2
  %v4337 = vsel %vm655, %v4335, %v4336
  %v4338 = vrot.slane %v3845, 2
  %v4339 = vrot.slane %v3846, 2
  %v4340 = vsel %vm655, %v4338, %v4339
  %v4341 = vrot.slane %v3847, 2
  %v4342 = vrot.slane %v3848, 2
  %v4343 = vsel %vm655, %v4341, %v4342
  %v4344 = vrot.slane %v3849, 2
  %v4345 = vrot.slane %v3850, 2
  %v4346 = vsel %vm655, %v4344, %v4345
  %v4347 = vrot.slane %v3851, 2
  %v4348 = vrot.slane %v3852, 2
  %v4349 = vsel %vm655, %v4347, %v4348
  %v4350 = vrot.slane %v3853, 2
  %v4351 = vrot.slane %v3854, 2
  %v4352 = vsel %vm655, %v4350, %v4351
  %v4353 = vrot.slane %v3855, 2
  %v4354 = vrot.slane %v3856, 2
  %v4355 = vsel %vm655, %v4353, %v4354
  %v4356 = vrot.slane %v3857, 2
  %v4357 = vrot.slane %v3858, 2
  %v4358 = vsel %vm655, %v4356, %v4357
  %v4359 = vrot.slane %v3863, 2
  %v4360 = vrot.slane %v3864, 2
  %v4361 = vsel %vm655, %v4359, %v4360
  %v4362 = vrot.slane %v3865, 2
  %v4363 = vrot.slane %v3866, 2
  %v4364 = vsel %vm655, %v4362, %v4363
  %v4365 = vrot.slane %v3867, 2
  %v4366 = vrot.slane %v3868, 2
  %v4367 = vsel %vm655, %v4365, %v4366
  %v4368 = vrot.slane %v3869, 2
  %v4369 = vrot.slane %v3870, 2
  %v4370 = vsel %vm655, %v4368, %v4369
  %v4371 = vrot.slane %v3871, 2
  %v4372 = vrot.slane %v3872, 2
  %v4373 = vsel %vm655, %v4371, %v4372
  %v4374 = vrot.slane %v3873, 2
  %v4375 = vrot.slane %v3874, 2
  %v4376 = vsel %vm655, %v4374, %v4375
  %v4377 = vrot.slane %v3875, 2
  %v4378 = vrot.slane %v3876, 2
  %v4379 = vsel %vm655, %v4377, %v4378
  %v4380 = vrot.slane %v3877, 2
  %v4381 = vrot.slane %v3878, 2
  %v4382 = vsel %vm655, %v4380, %v4381
  %v4383 = vrot.slane %v3883, 2
  %v4384 = vrot.slane %v3884, 2
  %v4385 = vsel %vm655, %v4383, %v4384
  %v4386 = vrot.slane %v3885, 2
  %v4387 = vrot.slane %v3886, 2
  %v4388 = vsel %vm655, %v4386, %v4387
  %v4389 = vrot.slane %v3887, 2
  %v4390 = vrot.slane %v3888, 2
  %v4391 = vsel %vm655, %v4389, %v4390
  %v4392 = vrot.slane %v3889, 2
  %v4393 = vrot.slane %v3890, 2
  %v4394 = vsel %vm655, %v4392, %v4393
  %v4395 = vrot.slane %v3891, 2
  %v4396 = vrot.slane %v3892, 2
  %v4397 = vsel %vm655, %v4395, %v4396
  %v4398 = vrot.slane %v3893, 2
  %v4399 = vrot.slane %v3894, 2
  %v4400 = vsel %vm655, %v4398, %v4399
  %v4401 = vrot.slane %v3895, 2
  %v4402 = vrot.slane %v3896, 2
  %v4403 = vsel %vm655, %v4401, %v4402
  %v4404 = vrot.slane %v3897, 2
  %v4405 = vrot.slane %v3898, 2
  %v4406 = vsel %vm655, %v4404, %v4405
  %v4407 = vrot.slane %v3903, 2
  %v4408 = vrot.slane %v3904, 2
  %v4409 = vsel %vm655, %v4407, %v4408
  %v4410 = vrot.slane %v3905, 2
  %v4411 = vrot.slane %v3906, 2
  %v4412 = vsel %vm655, %v4410, %v4411
  %v4413 = vrot.slane %v3907, 2
  %v4414 = vrot.slane %v3908, 2
  %v4415 = vsel %vm655, %v4413, %v4414
  %v4416 = vrot.slane %v3909, 2
  %v4417 = vrot.slane %v3910, 2
  %v4418 = vsel %vm655, %v4416, %v4417
  %v4419 = vrot.slane %v3911, 2
  %v4420 = vrot.slane %v3912, 2
  %v4421 = vsel %vm655, %v4419, %v4420
  %v4422 = vrot.slane %v3913, 2
  %v4423 = vrot.slane %v3914, 2
  %v4424 = vsel %vm655, %v4422, %v4423
  %v4425 = vrot.slane %v3915, 2
  %v4426 = vrot.slane %v3916, 2
  %v4427 = vsel %vm655, %v4425, %v4426
  %v4428 = vrot.slane %v3917, 2
  %v4429 = vrot.slane %v3918, 2
  %v4430 = vsel %vm655, %v4428, %v4429
  %v4431 = vrot.slane %v3923, 2
  %v4432 = vrot.slane %v3924, 2
  %v4433 = vsel %vm655, %v4431, %v4432
  %v4434 = vrot.slane %v3925, 2
  %v4435 = vrot.slane %v3926, 2
  %v4436 = vsel %vm655, %v4434, %v4435
  %v4437 = vrot.slane %v3927, 2
  %v4438 = vrot.slane %v3928, 2
  %v4439 = vsel %vm655, %v4437, %v4438
  %v4440 = vrot.slane %v3929, 2
  %v4441 = vrot.slane %v3930, 2
  %v4442 = vsel %vm655, %v4440, %v4441
  %v4443 = vrot.slane %v3931, 2
  %v4444 = vrot.slane %v3932, 2
  %v4445 = vsel %vm655, %v4443, %v4444
  %v4446 = vrot.slane %v3933, 2
  %v4447 = vrot.slane %v3934, 2
  %v4448 = vsel %vm655, %v4446, %v4447
  %v4449 = vrot.slane %v3935, 2
  %v4450 = vrot.slane %v3936, 2
  %v4451 = vsel %vm655, %v4449, %v4450
  %v4452 = vrot.slane %v3937, 2
  %v4453 = vrot.slane %v3938, 2
  %v4454 = vsel %vm655, %v4452, %v4453
  %v4471 = vrot.slane %v3799, 1
  %v4472 = vrot.slane %v3800, 1
  %v4473 = vsel %vm62, %v4471, %v4472
  %v4474 = vrot.slane %v3819, 1
  %v4475 = vrot.slane %v3820, 1
  %v4476 = vsel %vm62, %v4474, %v4475
  %v4477 = vrot.slane %v3839, 1
  %v4478 = vrot.slane %v3840, 1
  %v4479 = vsel %vm62, %v4477, %v4478
  %v4480 = vrot.slane %v3859, 1
  %v4481 = vrot.slane %v3860, 1
  %v4482 = vsel %vm62, %v4480, %v4481
  %v4483 = vrot.slane %v3879, 1
  %v4484 = vrot.slane %v3880, 1
  %v4485 = vsel %vm62, %v4483, %v4484
  %v4486 = vrot.slane %v3899, 1
  %v4487 = vrot.slane %v3900, 1
  %v4488 = vsel %vm62, %v4486, %v4487
  %v4489 = vrot.slane %v3919, 1
  %v4490 = vrot.slane %v3920, 1
  %v4491 = vsel %vm62, %v4489, %v4490
  %v4492 = vrot.slane %v3939, 1
  %v4493 = vrot.slane %v3940, 1
  %v4494 = vsel %vm62, %v4492, %v4493
  %v4559 = vrot.slane %v3799, 2
  %v4560 = vrot.slane %v3800, 2
  %v4561 = vsel %vm655, %v4559, %v4560
  %v4562 = vrot.slane %v3819, 2
  %v4563 = vrot.slane %v3820, 2
  %v4564 = vsel %vm655, %v4562, %v4563
  %v4565 = vrot.slane %v3839, 2
  %v4566 = vrot.slane %v3840, 2
  %v4567 = vsel %vm655, %v4565, %v4566
  %v4568 = vrot.slane %v3859, 2
  %v4569 = vrot.slane %v3860, 2
  %v4570 = vsel %vm655, %v4568, %v4569
  %v4571 = vrot.slane %v3879, 2
  %v4572 = vrot.slane %v3880, 2
  %v4573 = vsel %vm655, %v4571, %v4572
  %v4574 = vrot.slane %v3899, 2
  %v4575 = vrot.slane %v3900, 2
  %v4576 = vsel %vm655, %v4574, %v4575
  %v4577 = vrot.slane %v3919, 2
  %v4578 = vrot.slane %v3920, 2
  %v4579 = vsel %vm655, %v4577, %v4578
  %v4580 = vrot.slane %v3939, 2
  %v4581 = vrot.slane %v3940, 2
  %v4582 = vsel %vm655, %v4580, %v4581
  %v4599 = vrot.slane %v3801, 1
  %v4600 = vrot.slane %v3802, 1
  %v4601 = vsel %vm62, %v4599, %v4600
  %v4602 = vrot.slane %v3821, 1
  %v4603 = vrot.slane %v3822, 1
  %v4604 = vsel %vm62, %v4602, %v4603
  %v4605 = vrot.slane %v3841, 1
  %v4606 = vrot.slane %v3842, 1
  %v4607 = vsel %vm62, %v4605, %v4606
  %v4608 = vrot.slane %v3861, 1
  %v4609 = vrot.slane %v3862, 1
  %v4610 = vsel %vm62, %v4608, %v4609
  %v4611 = vrot.slane %v3881, 1
  %v4612 = vrot.slane %v3882, 1
  %v4613 = vsel %vm62, %v4611, %v4612
  %v4614 = vrot.slane %v3901, 1
  %v4615 = vrot.slane %v3902, 1
  %v4616 = vsel %vm62, %v4614, %v4615
  %v4617 = vrot.slane %v3921, 1
  %v4618 = vrot.slane %v3922, 1
  %v4619 = vsel %vm62, %v4617, %v4618
  %v4620 = vrot.slane %v3941, 1
  %v4621 = vrot.slane %v3942, 1
  %v4622 = vsel %vm62, %v4620, %v4621
  %v4623 = vrot.slane %v3801, 2
  %v4624 = vrot.slane %v3802, 2
  %v4625 = vsel %vm655, %v4623, %v4624
  %v4626 = vrot.slane %v3821, 2
  %v4627 = vrot.slane %v3822, 2
  %v4628 = vsel %vm655, %v4626, %v4627
  %v4629 = vrot.slane %v3841, 2
  %v4630 = vrot.slane %v3842, 2
  %v4631 = vsel %vm655, %v4629, %v4630
  %v4632 = vrot.slane %v3861, 2
  %v4633 = vrot.slane %v3862, 2
  %v4634 = vsel %vm655, %v4632, %v4633
  %v4635 = vrot.slane %v3881, 2
  %v4636 = vrot.slane %v3882, 2
  %v4637 = vsel %vm655, %v4635, %v4636
  %v4638 = vrot.slane %v3901, 2
  %v4639 = vrot.slane %v3902, 2
  %v4640 = vsel %vm655, %v4638, %v4639
  %v4641 = vrot.slane %v3921, 2
  %v4642 = vrot.slane %v3922, 2
  %v4643 = vsel %vm655, %v4641, %v4642
  %v4644 = vrot.slane %v3941, 2
  %v4645 = vrot.slane %v3942, 2
  %v4646 = vsel %vm655, %v4644, %v4645
  %4711 = vrot.lane.b32.xlu0 %v4073, 32
  %v4712 = vpop.permute.xlu0 %4711
  %4713 = vrot.lane.b32.xlu0 %v4076, 32
  %v4714 = vpop.permute.xlu0 %4713
  %4715 = vrot.lane.b32.xlu0 %v4079, 32
  %v4716 = vpop.permute.xlu0 %4715
  %4717 = vrot.lane.b32.xlu0 %v4082, 32
  %v4718 = vpop.permute.xlu0 %4717
  %4719 = vrot.lane.b32.xlu0 %v4085, 32
  %v4720 = vpop.permute.xlu0 %4719
  %4721 = vrot.lane.b32.xlu0 %v4088, 32
  %v4722 = vpop.permute.xlu0 %4721
  %4723 = vrot.lane.b32.xlu0 %v4091, 32
  %v4724 = vpop.permute.xlu0 %4723
  %4725 = vrot.lane.b32.xlu0 %v4094, 32
  %v4726 = vpop.permute.xlu0 %4725
  %4727 = vrot.lane.b32.xlu0 %v4097, 32
  %v4728 = vpop.permute.xlu0 %4727
  %4729 = vrot.lane.b32.xlu0 %v4100, 32
  %v4730 = vpop.permute.xlu0 %4729
  %4731 = vrot.lane.b32.xlu0 %v4103, 32
  %v4732 = vpop.permute.xlu0 %4731
  %4733 = vrot.lane.b32.xlu0 %v4106, 32
  %v4734 = vpop.permute.xlu0 %4733
  %4735 = vrot.lane.b32.xlu0 %v4109, 32
  %v4736 = vpop.permute.xlu0 %4735
  %4737 = vrot.lane.b32.xlu0 %v4112, 32
  %v4738 = vpop.permute.xlu0 %4737
  %4739 = vrot.lane.b32.xlu0 %v4115, 32
  %v4740 = vpop.permute.xlu0 %4739
  %4741 = vrot.lane.b32.xlu0 %v4118, 32
  %v4742 = vpop.permute.xlu0 %4741
  %4743 = vrot.lane.b32.xlu0 %v4121, 32
  %v4744 = vpop.permute.xlu0 %4743
  %4745 = vrot.lane.b32.xlu0 %v4124, 32
  %v4746 = vpop.permute.xlu0 %4745
  %4747 = vrot.lane.b32.xlu0 %v4127, 32
  %v4748 = vpop.permute.xlu0 %4747
  %4749 = vrot.lane.b32.xlu0 %v4130, 32
  %v4750 = vpop.permute.xlu0 %4749
  %4751 = vrot.lane.b32.xlu0 %v4133, 32
  %v4752 = vpop.permute.xlu0 %4751
  %4753 = vrot.lane.b32.xlu0 %v4136, 32
  %v4754 = vpop.permute.xlu0 %4753
  %4755 = vrot.lane.b32.xlu0 %v4139, 32
  %v4756 = vpop.permute.xlu0 %4755
  %4757 = vrot.lane.b32.xlu0 %v4142, 32
  %v4758 = vpop.permute.xlu0 %4757
  %4759 = vrot.lane.b32.xlu0 %v4145, 32
  %v4760 = vpop.permute.xlu0 %4759
  %4761 = vrot.lane.b32.xlu0 %v4148, 32
  %v4762 = vpop.permute.xlu0 %4761
  %4763 = vrot.lane.b32.xlu0 %v4151, 32
  %v4764 = vpop.permute.xlu0 %4763
  %4765 = vrot.lane.b32.xlu0 %v4154, 32
  %v4766 = vpop.permute.xlu0 %4765
  %4767 = vrot.lane.b32.xlu0 %v4157, 32
  %v4768 = vpop.permute.xlu0 %4767
  %4769 = vrot.lane.b32.xlu0 %v4160, 32
  %v4770 = vpop.permute.xlu0 %4769
  %4771 = vrot.lane.b32.xlu0 %v4163, 32
  %v4772 = vpop.permute.xlu0 %4771
  %4773 = vrot.lane.b32.xlu0 %v4166, 32
  %v4774 = vpop.permute.xlu0 %4773
  %4775 = vrot.lane.b32.xlu0 %v4169, 32
  %v4776 = vpop.permute.xlu0 %4775
  %4777 = vrot.lane.b32.xlu0 %v4172, 32
  %v4778 = vpop.permute.xlu0 %4777
  %4779 = vrot.lane.b32.xlu0 %v4175, 32
  %v4780 = vpop.permute.xlu0 %4779
  %4781 = vrot.lane.b32.xlu0 %v4178, 32
  %v4782 = vpop.permute.xlu0 %4781
  %4783 = vrot.lane.b32.xlu0 %v4181, 32
  %v4784 = vpop.permute.xlu0 %4783
  %4785 = vrot.lane.b32.xlu0 %v4184, 32
  %v4786 = vpop.permute.xlu0 %4785
  %4787 = vrot.lane.b32.xlu0 %v4187, 32
  %v4788 = vpop.permute.xlu0 %4787
  %4789 = vrot.lane.b32.xlu0 %v4190, 32
  %v4790 = vpop.permute.xlu0 %4789
  %4791 = vrot.lane.b32.xlu0 %v4193, 32
  %v4792 = vpop.permute.xlu0 %4791
  %4793 = vrot.lane.b32.xlu0 %v4196, 32
  %v4794 = vpop.permute.xlu0 %4793
  %4795 = vrot.lane.b32.xlu0 %v4199, 32
  %v4796 = vpop.permute.xlu0 %4795
  %4797 = vrot.lane.b32.xlu0 %v4202, 32
  %v4798 = vpop.permute.xlu0 %4797
  %4799 = vrot.lane.b32.xlu0 %v4205, 32
  %v4800 = vpop.permute.xlu0 %4799
  %4801 = vrot.lane.b32.xlu0 %v4208, 32
  %v4802 = vpop.permute.xlu0 %4801
  %4803 = vrot.lane.b32.xlu0 %v4211, 32
  %v4804 = vpop.permute.xlu0 %4803
  %4805 = vrot.lane.b32.xlu0 %v4214, 32
  %v4806 = vpop.permute.xlu0 %4805
  %4807 = vrot.lane.b32.xlu0 %v4217, 32
  %v4808 = vpop.permute.xlu0 %4807
  %4809 = vrot.lane.b32.xlu0 %v4220, 32
  %v4810 = vpop.permute.xlu0 %4809
  %4811 = vrot.lane.b32.xlu0 %v4223, 32
  %v4812 = vpop.permute.xlu0 %4811
  %4813 = vrot.lane.b32.xlu0 %v4226, 32
  %v4814 = vpop.permute.xlu0 %4813
  %4815 = vrot.lane.b32.xlu0 %v4229, 32
  %v4816 = vpop.permute.xlu0 %4815
  %4817 = vrot.lane.b32.xlu0 %v4232, 32
  %v4818 = vpop.permute.xlu0 %4817
  %4819 = vrot.lane.b32.xlu0 %v4235, 32
  %v4820 = vpop.permute.xlu0 %4819
  %4821 = vrot.lane.b32.xlu0 %v4238, 32
  %v4822 = vpop.permute.xlu0 %4821
  %4823 = vrot.lane.b32.xlu0 %v4241, 32
  %v4824 = vpop.permute.xlu0 %4823
  %4825 = vrot.lane.b32.xlu0 %v4244, 32
  %v4826 = vpop.permute.xlu0 %4825
  %4827 = vrot.lane.b32.xlu0 %v4247, 32
  %v4828 = vpop.permute.xlu0 %4827
  %4829 = vrot.lane.b32.xlu0 %v4250, 32
  %v4830 = vpop.permute.xlu0 %4829
  %4831 = vrot.lane.b32.xlu0 %v4253, 32
  %v4832 = vpop.permute.xlu0 %4831
  %4833 = vrot.lane.b32.xlu0 %v4256, 32
  %v4834 = vpop.permute.xlu0 %4833
  %4835 = vrot.lane.b32.xlu0 %v4259, 32
  %v4836 = vpop.permute.xlu0 %4835
  %4837 = vrot.lane.b32.xlu0 %v4262, 32
  %v4838 = vpop.permute.xlu0 %4837
  %4903 = vrot.lane.b32.xlu0 %v4265, 64
  %v4904 = vpop.permute.xlu0 %4903
  %4905 = vrot.lane.b32.xlu0 %v4268, 64
  %v4906 = vpop.permute.xlu0 %4905
  %4907 = vrot.lane.b32.xlu0 %v4271, 64
  %v4908 = vpop.permute.xlu0 %4907
  %4909 = vrot.lane.b32.xlu0 %v4274, 64
  %v4910 = vpop.permute.xlu0 %4909
  %4911 = vrot.lane.b32.xlu0 %v4277, 64
  %v4912 = vpop.permute.xlu0 %4911
  %4913 = vrot.lane.b32.xlu0 %v4280, 64
  %v4914 = vpop.permute.xlu0 %4913
  %4915 = vrot.lane.b32.xlu0 %v4283, 64
  %v4916 = vpop.permute.xlu0 %4915
  %4917 = vrot.lane.b32.xlu0 %v4286, 64
  %v4918 = vpop.permute.xlu0 %4917
  %4919 = vrot.lane.b32.xlu0 %v4289, 64
  %v4920 = vpop.permute.xlu0 %4919
  %4921 = vrot.lane.b32.xlu0 %v4292, 64
  %v4922 = vpop.permute.xlu0 %4921
  %4923 = vrot.lane.b32.xlu0 %v4295, 64
  %v4924 = vpop.permute.xlu0 %4923
  %4925 = vrot.lane.b32.xlu0 %v4298, 64
  %v4926 = vpop.permute.xlu0 %4925
  %4927 = vrot.lane.b32.xlu0 %v4301, 64
  %v4928 = vpop.permute.xlu0 %4927
  %4929 = vrot.lane.b32.xlu0 %v4304, 64
  %v4930 = vpop.permute.xlu0 %4929
  %4931 = vrot.lane.b32.xlu0 %v4307, 64
  %v4932 = vpop.permute.xlu0 %4931
  %4933 = vrot.lane.b32.xlu0 %v4310, 64
  %v4934 = vpop.permute.xlu0 %4933
  %4935 = vrot.lane.b32.xlu0 %v4313, 64
  %v4936 = vpop.permute.xlu0 %4935
  %4937 = vrot.lane.b32.xlu0 %v4316, 64
  %v4938 = vpop.permute.xlu0 %4937
  %4939 = vrot.lane.b32.xlu0 %v4319, 64
  %v4940 = vpop.permute.xlu0 %4939
  %4941 = vrot.lane.b32.xlu0 %v4322, 64
  %v4942 = vpop.permute.xlu0 %4941
  %4943 = vrot.lane.b32.xlu0 %v4325, 64
  %v4944 = vpop.permute.xlu0 %4943
  %4945 = vrot.lane.b32.xlu0 %v4328, 64
  %v4946 = vpop.permute.xlu0 %4945
  %4947 = vrot.lane.b32.xlu0 %v4331, 64
  %v4948 = vpop.permute.xlu0 %4947
  %4949 = vrot.lane.b32.xlu0 %v4334, 64
  %v4950 = vpop.permute.xlu0 %4949
  %4951 = vrot.lane.b32.xlu0 %v4337, 64
  %v4952 = vpop.permute.xlu0 %4951
  %4953 = vrot.lane.b32.xlu0 %v4340, 64
  %v4954 = vpop.permute.xlu0 %4953
  %4955 = vrot.lane.b32.xlu0 %v4343, 64
  %v4956 = vpop.permute.xlu0 %4955
  %4957 = vrot.lane.b32.xlu0 %v4346, 64
  %v4958 = vpop.permute.xlu0 %4957
  %4959 = vrot.lane.b32.xlu0 %v4349, 64
  %v4960 = vpop.permute.xlu0 %4959
  %4961 = vrot.lane.b32.xlu0 %v4352, 64
  %v4962 = vpop.permute.xlu0 %4961
  %4963 = vrot.lane.b32.xlu0 %v4355, 64
  %v4964 = vpop.permute.xlu0 %4963
  %4965 = vrot.lane.b32.xlu0 %v4358, 64
  %v4966 = vpop.permute.xlu0 %4965
  %4967 = vrot.lane.b32.xlu0 %v4361, 64
  %v4968 = vpop.permute.xlu0 %4967
  %4969 = vrot.lane.b32.xlu0 %v4364, 64
  %v4970 = vpop.permute.xlu0 %4969
  %4971 = vrot.lane.b32.xlu0 %v4367, 64
  %v4972 = vpop.permute.xlu0 %4971
  %4973 = vrot.lane.b32.xlu0 %v4370, 64
  %v4974 = vpop.permute.xlu0 %4973
  %4975 = vrot.lane.b32.xlu0 %v4373, 64
  %v4976 = vpop.permute.xlu0 %4975
  %4977 = vrot.lane.b32.xlu0 %v4376, 64
  %v4978 = vpop.permute.xlu0 %4977
  %4979 = vrot.lane.b32.xlu0 %v4379, 64
  %v4980 = vpop.permute.xlu0 %4979
  %4981 = vrot.lane.b32.xlu0 %v4382, 64
  %v4982 = vpop.permute.xlu0 %4981
  %4983 = vrot.lane.b32.xlu0 %v4385, 64
  %v4984 = vpop.permute.xlu0 %4983
  %4985 = vrot.lane.b32.xlu0 %v4388, 64
  %v4986 = vpop.permute.xlu0 %4985
  %4987 = vrot.lane.b32.xlu0 %v4391, 64
  %v4988 = vpop.permute.xlu0 %4987
  %4989 = vrot.lane.b32.xlu0 %v4394, 64
  %v4990 = vpop.permute.xlu0 %4989
  %4991 = vrot.lane.b32.xlu0 %v4397, 64
  %v4992 = vpop.permute.xlu0 %4991
  %4993 = vrot.lane.b32.xlu0 %v4400, 64
  %v4994 = vpop.permute.xlu0 %4993
  %4995 = vrot.lane.b32.xlu0 %v4403, 64
  %v4996 = vpop.permute.xlu0 %4995
  %4997 = vrot.lane.b32.xlu0 %v4406, 64
  %v4998 = vpop.permute.xlu0 %4997
  %4999 = vrot.lane.b32.xlu0 %v4409, 64
  %v5000 = vpop.permute.xlu0 %4999
  %5001 = vrot.lane.b32.xlu0 %v4412, 64
  %v5002 = vpop.permute.xlu0 %5001
  %5003 = vrot.lane.b32.xlu0 %v4415, 64
  %v5004 = vpop.permute.xlu0 %5003
  %5005 = vrot.lane.b32.xlu0 %v4418, 64
  %v5006 = vpop.permute.xlu0 %5005
  %5007 = vrot.lane.b32.xlu0 %v4421, 64
  %v5008 = vpop.permute.xlu0 %5007
  %5009 = vrot.lane.b32.xlu0 %v4424, 64
  %v5010 = vpop.permute.xlu0 %5009
  %5011 = vrot.lane.b32.xlu0 %v4427, 64
  %v5012 = vpop.permute.xlu0 %5011
  %5013 = vrot.lane.b32.xlu0 %v4430, 64
  %v5014 = vpop.permute.xlu0 %5013
  %5015 = vrot.lane.b32.xlu0 %v4433, 64
  %v5016 = vpop.permute.xlu0 %5015
  %5017 = vrot.lane.b32.xlu0 %v4436, 64
  %v5018 = vpop.permute.xlu0 %5017
  %5019 = vrot.lane.b32.xlu0 %v4439, 64
  %v5020 = vpop.permute.xlu0 %5019
  %5021 = vrot.lane.b32.xlu0 %v4442, 64
  %v5022 = vpop.permute.xlu0 %5021
  %5023 = vrot.lane.b32.xlu0 %v4445, 64
  %v5024 = vpop.permute.xlu0 %5023
  %5025 = vrot.lane.b32.xlu0 %v4448, 64
  %v5026 = vpop.permute.xlu0 %5025
  %5027 = vrot.lane.b32.xlu0 %v4451, 64
  %v5028 = vpop.permute.xlu0 %5027
  %5029 = vrot.lane.b32.xlu0 %v4454, 64
  %v5030 = vpop.permute.xlu0 %5029
  %5095 = vrot.lane.b32.xlu0 %v3785, 96
  %v5096 = vpop.permute.xlu0 %5095
  %5097 = vrot.lane.b32.xlu0 %v3787, 96
  %v5098 = vpop.permute.xlu0 %5097
  %5099 = vrot.lane.b32.xlu0 %v3789, 96
  %v5100 = vpop.permute.xlu0 %5099
  %5101 = vrot.lane.b32.xlu0 %v3791, 96
  %v5102 = vpop.permute.xlu0 %5101
  %5103 = vrot.lane.b32.xlu0 %v3793, 96
  %v5104 = vpop.permute.xlu0 %5103
  %5105 = vrot.lane.b32.xlu0 %v3795, 96
  %v5106 = vpop.permute.xlu0 %5105
  %5107 = vrot.lane.b32.xlu0 %v3797, 96
  %v5108 = vpop.permute.xlu0 %5107
  %5109 = vrot.lane.b32.xlu0 %v3799, 96
  %v5110 = vpop.permute.xlu0 %5109
  %5111 = vrot.lane.b32.xlu0 %v3805, 96
  %v5112 = vpop.permute.xlu0 %5111
  %5113 = vrot.lane.b32.xlu0 %v3807, 96
  %v5114 = vpop.permute.xlu0 %5113
  %5115 = vrot.lane.b32.xlu0 %v3809, 96
  %v5116 = vpop.permute.xlu0 %5115
  %5117 = vrot.lane.b32.xlu0 %v3811, 96
  %v5118 = vpop.permute.xlu0 %5117
  %5119 = vrot.lane.b32.xlu0 %v3813, 96
  %v5120 = vpop.permute.xlu0 %5119
  %5121 = vrot.lane.b32.xlu0 %v3815, 96
  %v5122 = vpop.permute.xlu0 %5121
  %5123 = vrot.lane.b32.xlu0 %v3817, 96
  %v5124 = vpop.permute.xlu0 %5123
  %5125 = vrot.lane.b32.xlu0 %v3819, 96
  %v5126 = vpop.permute.xlu0 %5125
  %5127 = vrot.lane.b32.xlu0 %v3825, 96
  %v5128 = vpop.permute.xlu0 %5127
  %5129 = vrot.lane.b32.xlu0 %v3827, 96
  %v5130 = vpop.permute.xlu0 %5129
  %5131 = vrot.lane.b32.xlu0 %v3829, 96
  %v5132 = vpop.permute.xlu0 %5131
  %5133 = vrot.lane.b32.xlu0 %v3831, 96
  %v5134 = vpop.permute.xlu0 %5133
  %5135 = vrot.lane.b32.xlu0 %v3833, 96
  %v5136 = vpop.permute.xlu0 %5135
  %5137 = vrot.lane.b32.xlu0 %v3835, 96
  %v5138 = vpop.permute.xlu0 %5137
  %5139 = vrot.lane.b32.xlu0 %v3837, 96
  %v5140 = vpop.permute.xlu0 %5139
  %5141 = vrot.lane.b32.xlu0 %v3839, 96
  %v5142 = vpop.permute.xlu0 %5141
  %5143 = vrot.lane.b32.xlu0 %v3845, 96
  %v5144 = vpop.permute.xlu0 %5143
  %5145 = vrot.lane.b32.xlu0 %v3847, 96
  %v5146 = vpop.permute.xlu0 %5145
  %5147 = vrot.lane.b32.xlu0 %v3849, 96
  %v5148 = vpop.permute.xlu0 %5147
  %5149 = vrot.lane.b32.xlu0 %v3851, 96
  %v5150 = vpop.permute.xlu0 %5149
  %5151 = vrot.lane.b32.xlu0 %v3853, 96
  %v5152 = vpop.permute.xlu0 %5151
  %5153 = vrot.lane.b32.xlu0 %v3855, 96
  %v5154 = vpop.permute.xlu0 %5153
  %5155 = vrot.lane.b32.xlu0 %v3857, 96
  %v5156 = vpop.permute.xlu0 %5155
  %5157 = vrot.lane.b32.xlu0 %v3859, 96
  %v5158 = vpop.permute.xlu0 %5157
  %5159 = vrot.lane.b32.xlu0 %v3865, 96
  %v5160 = vpop.permute.xlu0 %5159
  %5161 = vrot.lane.b32.xlu0 %v3867, 96
  %v5162 = vpop.permute.xlu0 %5161
  %5163 = vrot.lane.b32.xlu0 %v3869, 96
  %v5164 = vpop.permute.xlu0 %5163
  %5165 = vrot.lane.b32.xlu0 %v3871, 96
  %v5166 = vpop.permute.xlu0 %5165
  %5167 = vrot.lane.b32.xlu0 %v3873, 96
  %v5168 = vpop.permute.xlu0 %5167
  %5169 = vrot.lane.b32.xlu0 %v3875, 96
  %v5170 = vpop.permute.xlu0 %5169
  %5171 = vrot.lane.b32.xlu0 %v3877, 96
  %v5172 = vpop.permute.xlu0 %5171
  %5173 = vrot.lane.b32.xlu0 %v3879, 96
  %v5174 = vpop.permute.xlu0 %5173
  %5175 = vrot.lane.b32.xlu0 %v3885, 96
  %v5176 = vpop.permute.xlu0 %5175
  %5177 = vrot.lane.b32.xlu0 %v3887, 96
  %v5178 = vpop.permute.xlu0 %5177
  %5179 = vrot.lane.b32.xlu0 %v3889, 96
  %v5180 = vpop.permute.xlu0 %5179
  %5181 = vrot.lane.b32.xlu0 %v3891, 96
  %v5182 = vpop.permute.xlu0 %5181
  %5183 = vrot.lane.b32.xlu0 %v3893, 96
  %v5184 = vpop.permute.xlu0 %5183
  %5185 = vrot.lane.b32.xlu0 %v3895, 96
  %v5186 = vpop.permute.xlu0 %5185
  %5187 = vrot.lane.b32.xlu0 %v3897, 96
  %v5188 = vpop.permute.xlu0 %5187
  %5189 = vrot.lane.b32.xlu0 %v3899, 96
  %v5190 = vpop.permute.xlu0 %5189
  %5191 = vrot.lane.b32.xlu0 %v3905, 96
  %v5192 = vpop.permute.xlu0 %5191
  %5193 = vrot.lane.b32.xlu0 %v3907, 96
  %v5194 = vpop.permute.xlu0 %5193
  %5195 = vrot.lane.b32.xlu0 %v3909, 96
  %v5196 = vpop.permute.xlu0 %5195
  %5197 = vrot.lane.b32.xlu0 %v3911, 96
  %v5198 = vpop.permute.xlu0 %5197
  %5199 = vrot.lane.b32.xlu0 %v3913, 96
  %v5200 = vpop.permute.xlu0 %5199
  %5201 = vrot.lane.b32.xlu0 %v3915, 96
  %v5202 = vpop.permute.xlu0 %5201
  %5203 = vrot.lane.b32.xlu0 %v3917, 96
  %v5204 = vpop.permute.xlu0 %5203
  %5205 = vrot.lane.b32.xlu0 %v3919, 96
  %v5206 = vpop.permute.xlu0 %5205
  %5207 = vrot.lane.b32.xlu0 %v3925, 96
  %v5208 = vpop.permute.xlu0 %5207
  %5209 = vrot.lane.b32.xlu0 %v3927, 96
  %v5210 = vpop.permute.xlu0 %5209
  %5211 = vrot.lane.b32.xlu0 %v3929, 96
  %v5212 = vpop.permute.xlu0 %5211
  %5213 = vrot.lane.b32.xlu0 %v3931, 96
  %v5214 = vpop.permute.xlu0 %5213
  %5215 = vrot.lane.b32.xlu0 %v3933, 96
  %v5216 = vpop.permute.xlu0 %5215
  %5217 = vrot.lane.b32.xlu0 %v3935, 96
  %v5218 = vpop.permute.xlu0 %5217
  %5219 = vrot.lane.b32.xlu0 %v3937, 96
  %v5220 = vpop.permute.xlu0 %5219
  %5221 = vrot.lane.b32.xlu0 %v3939, 96
  %v5222 = vpop.permute.xlu0 %5221
  %5287 = vrot.lane.b32.xlu0 %v4268, 32
  %v5288 = vpop.permute.xlu0 %5287
  %5289 = vrot.lane.b32.xlu0 %v4271, 32
  %v5290 = vpop.permute.xlu0 %5289
  %5291 = vrot.lane.b32.xlu0 %v4274, 32
  %v5292 = vpop.permute.xlu0 %5291
  %5293 = vrot.lane.b32.xlu0 %v4277, 32
  %v5294 = vpop.permute.xlu0 %5293
  %5295 = vrot.lane.b32.xlu0 %v4280, 32
  %v5296 = vpop.permute.xlu0 %5295
  %5297 = vrot.lane.b32.xlu0 %v4283, 32
  %v5298 = vpop.permute.xlu0 %5297
  %5299 = vrot.lane.b32.xlu0 %v4286, 32
  %v5300 = vpop.permute.xlu0 %5299
  %5301 = vrot.lane.b32.xlu0 %v4561, 32
  %v5302 = vpop.permute.xlu0 %5301
  %5303 = vrot.lane.b32.xlu0 %v4292, 32
  %v5304 = vpop.permute.xlu0 %5303
  %5305 = vrot.lane.b32.xlu0 %v4295, 32
  %v5306 = vpop.permute.xlu0 %5305
  %5307 = vrot.lane.b32.xlu0 %v4298, 32
  %v5308 = vpop.permute.xlu0 %5307
  %5309 = vrot.lane.b32.xlu0 %v4301, 32
  %v5310 = vpop.permute.xlu0 %5309
  %5311 = vrot.lane.b32.xlu0 %v4304, 32
  %v5312 = vpop.permute.xlu0 %5311
  %5313 = vrot.lane.b32.xlu0 %v4307, 32
  %v5314 = vpop.permute.xlu0 %5313
  %5315 = vrot.lane.b32.xlu0 %v4310, 32
  %v5316 = vpop.permute.xlu0 %5315
  %5317 = vrot.lane.b32.xlu0 %v4564, 32
  %v5318 = vpop.permute.xlu0 %5317
  %5319 = vrot.lane.b32.xlu0 %v4316, 32
  %v5320 = vpop.permute.xlu0 %5319
  %5321 = vrot.lane.b32.xlu0 %v4319, 32
  %v5322 = vpop.permute.xlu0 %5321
  %5323 = vrot.lane.b32.xlu0 %v4322, 32
  %v5324 = vpop.permute.xlu0 %5323
  %5325 = vrot.lane.b32.xlu0 %v4325, 32
  %v5326 = vpop.permute.xlu0 %5325
  %5327 = vrot.lane.b32.xlu0 %v4328, 32
  %v5328 = vpop.permute.xlu0 %5327
  %5329 = vrot.lane.b32.xlu0 %v4331, 32
  %v5330 = vpop.permute.xlu0 %5329
  %5331 = vrot.lane.b32.xlu0 %v4334, 32
  %v5332 = vpop.permute.xlu0 %5331
  %5333 = vrot.lane.b32.xlu0 %v4567, 32
  %v5334 = vpop.permute.xlu0 %5333
  %5335 = vrot.lane.b32.xlu0 %v4340, 32
  %v5336 = vpop.permute.xlu0 %5335
  %5337 = vrot.lane.b32.xlu0 %v4343, 32
  %v5338 = vpop.permute.xlu0 %5337
  %5339 = vrot.lane.b32.xlu0 %v4346, 32
  %v5340 = vpop.permute.xlu0 %5339
  %5341 = vrot.lane.b32.xlu0 %v4349, 32
  %v5342 = vpop.permute.xlu0 %5341
  %5343 = vrot.lane.b32.xlu0 %v4352, 32
  %v5344 = vpop.permute.xlu0 %5343
  %5345 = vrot.lane.b32.xlu0 %v4355, 32
  %v5346 = vpop.permute.xlu0 %5345
  %5347 = vrot.lane.b32.xlu0 %v4358, 32
  %v5348 = vpop.permute.xlu0 %5347
  %5349 = vrot.lane.b32.xlu0 %v4570, 32
  %v5350 = vpop.permute.xlu0 %5349
  %5351 = vrot.lane.b32.xlu0 %v4364, 32
  %v5352 = vpop.permute.xlu0 %5351
  %5353 = vrot.lane.b32.xlu0 %v4367, 32
  %v5354 = vpop.permute.xlu0 %5353
  %5355 = vrot.lane.b32.xlu0 %v4370, 32
  %v5356 = vpop.permute.xlu0 %5355
  %5357 = vrot.lane.b32.xlu0 %v4373, 32
  %v5358 = vpop.permute.xlu0 %5357
  %5359 = vrot.lane.b32.xlu0 %v4376, 32
  %v5360 = vpop.permute.xlu0 %5359
  %5361 = vrot.lane.b32.xlu0 %v4379, 32
  %v5362 = vpop.permute.xlu0 %5361
  %5363 = vrot.lane.b32.xlu0 %v4382, 32
  %v5364 = vpop.permute.xlu0 %5363
  %5365 = vrot.lane.b32.xlu0 %v4573, 32
  %v5366 = vpop.permute.xlu0 %5365
  %5367 = vrot.lane.b32.xlu0 %v4388, 32
  %v5368 = vpop.permute.xlu0 %5367
  %5369 = vrot.lane.b32.xlu0 %v4391, 32
  %v5370 = vpop.permute.xlu0 %5369
  %5371 = vrot.lane.b32.xlu0 %v4394, 32
  %v5372 = vpop.permute.xlu0 %5371
  %5373 = vrot.lane.b32.xlu0 %v4397, 32
  %v5374 = vpop.permute.xlu0 %5373
  %5375 = vrot.lane.b32.xlu0 %v4400, 32
  %v5376 = vpop.permute.xlu0 %5375
  %5377 = vrot.lane.b32.xlu0 %v4403, 32
  %v5378 = vpop.permute.xlu0 %5377
  %5379 = vrot.lane.b32.xlu0 %v4406, 32
  %v5380 = vpop.permute.xlu0 %5379
  %5381 = vrot.lane.b32.xlu0 %v4576, 32
  %v5382 = vpop.permute.xlu0 %5381
  %5383 = vrot.lane.b32.xlu0 %v4412, 32
  %v5384 = vpop.permute.xlu0 %5383
  %5385 = vrot.lane.b32.xlu0 %v4415, 32
  %v5386 = vpop.permute.xlu0 %5385
  %5387 = vrot.lane.b32.xlu0 %v4418, 32
  %v5388 = vpop.permute.xlu0 %5387
  %5389 = vrot.lane.b32.xlu0 %v4421, 32
  %v5390 = vpop.permute.xlu0 %5389
  %5391 = vrot.lane.b32.xlu0 %v4424, 32
  %v5392 = vpop.permute.xlu0 %5391
  %5393 = vrot.lane.b32.xlu0 %v4427, 32
  %v5394 = vpop.permute.xlu0 %5393
  %5395 = vrot.lane.b32.xlu0 %v4430, 32
  %v5396 = vpop.permute.xlu0 %5395
  %5397 = vrot.lane.b32.xlu0 %v4579, 32
  %v5398 = vpop.permute.xlu0 %5397
  %5399 = vrot.lane.b32.xlu0 %v4436, 32
  %v5400 = vpop.permute.xlu0 %5399
  %5401 = vrot.lane.b32.xlu0 %v4439, 32
  %v5402 = vpop.permute.xlu0 %5401
  %5403 = vrot.lane.b32.xlu0 %v4442, 32
  %v5404 = vpop.permute.xlu0 %5403
  %5405 = vrot.lane.b32.xlu0 %v4445, 32
  %v5406 = vpop.permute.xlu0 %5405
  %5407 = vrot.lane.b32.xlu0 %v4448, 32
  %v5408 = vpop.permute.xlu0 %5407
  %5409 = vrot.lane.b32.xlu0 %v4451, 32
  %v5410 = vpop.permute.xlu0 %5409
  %5411 = vrot.lane.b32.xlu0 %v4454, 32
  %v5412 = vpop.permute.xlu0 %5411
  %5413 = vrot.lane.b32.xlu0 %v4582, 32
  %v5414 = vpop.permute.xlu0 %5413
  %5479 = vrot.lane.b32.xlu0 %v3787, 64
  %v5480 = vpop.permute.xlu0 %5479
  %5481 = vrot.lane.b32.xlu0 %v3789, 64
  %v5482 = vpop.permute.xlu0 %5481
  %5483 = vrot.lane.b32.xlu0 %v3791, 64
  %v5484 = vpop.permute.xlu0 %5483
  %5485 = vrot.lane.b32.xlu0 %v3793, 64
  %v5486 = vpop.permute.xlu0 %5485
  %5487 = vrot.lane.b32.xlu0 %v3795, 64
  %v5488 = vpop.permute.xlu0 %5487
  %5489 = vrot.lane.b32.xlu0 %v3797, 64
  %v5490 = vpop.permute.xlu0 %5489
  %5491 = vrot.lane.b32.xlu0 %v3799, 64
  %v5492 = vpop.permute.xlu0 %5491
  %5493 = vrot.lane.b32.xlu0 %v3801, 64
  %v5494 = vpop.permute.xlu0 %5493
  %5495 = vrot.lane.b32.xlu0 %v3807, 64
  %v5496 = vpop.permute.xlu0 %5495
  %5497 = vrot.lane.b32.xlu0 %v3809, 64
  %v5498 = vpop.permute.xlu0 %5497
  %5499 = vrot.lane.b32.xlu0 %v3811, 64
  %v5500 = vpop.permute.xlu0 %5499
  %5501 = vrot.lane.b32.xlu0 %v3813, 64
  %v5502 = vpop.permute.xlu0 %5501
  %5503 = vrot.lane.b32.xlu0 %v3815, 64
  %v5504 = vpop.permute.xlu0 %5503
  %5505 = vrot.lane.b32.xlu0 %v3817, 64
  %v5506 = vpop.permute.xlu0 %5505
  %5507 = vrot.lane.b32.xlu0 %v3819, 64
  %v5508 = vpop.permute.xlu0 %5507
  %5509 = vrot.lane.b32.xlu0 %v3821, 64
  %v5510 = vpop.permute.xlu0 %5509
  %5511 = vrot.lane.b32.xlu0 %v3827, 64
  %v5512 = vpop.permute.xlu0 %5511
  %5513 = vrot.lane.b32.xlu0 %v3829, 64
  %v5514 = vpop.permute.xlu0 %5513
  %5515 = vrot.lane.b32.xlu0 %v3831, 64
  %v5516 = vpop.permute.xlu0 %5515
  %5517 = vrot.lane.b32.xlu0 %v3833, 64
  %v5518 = vpop.permute.xlu0 %5517
  %5519 = vrot.lane.b32.xlu0 %v3835, 64
  %v5520 = vpop.permute.xlu0 %5519
  %5521 = vrot.lane.b32.xlu0 %v3837, 64
  %v5522 = vpop.permute.xlu0 %5521
  %5523 = vrot.lane.b32.xlu0 %v3839, 64
  %v5524 = vpop.permute.xlu0 %5523
  %5525 = vrot.lane.b32.xlu0 %v3841, 64
  %v5526 = vpop.permute.xlu0 %5525
  %5527 = vrot.lane.b32.xlu0 %v3847, 64
  %v5528 = vpop.permute.xlu0 %5527
  %5529 = vrot.lane.b32.xlu0 %v3849, 64
  %v5530 = vpop.permute.xlu0 %5529
  %5531 = vrot.lane.b32.xlu0 %v3851, 64
  %v5532 = vpop.permute.xlu0 %5531
  %5533 = vrot.lane.b32.xlu0 %v3853, 64
  %v5534 = vpop.permute.xlu0 %5533
  %5535 = vrot.lane.b32.xlu0 %v3855, 64
  %v5536 = vpop.permute.xlu0 %5535
  %5537 = vrot.lane.b32.xlu0 %v3857, 64
  %v5538 = vpop.permute.xlu0 %5537
  %5539 = vrot.lane.b32.xlu0 %v3859, 64
  %v5540 = vpop.permute.xlu0 %5539
  %5541 = vrot.lane.b32.xlu0 %v3861, 64
  %v5542 = vpop.permute.xlu0 %5541
  %5543 = vrot.lane.b32.xlu0 %v3867, 64
  %v5544 = vpop.permute.xlu0 %5543
  %5545 = vrot.lane.b32.xlu0 %v3869, 64
  %v5546 = vpop.permute.xlu0 %5545
  %5547 = vrot.lane.b32.xlu0 %v3871, 64
  %v5548 = vpop.permute.xlu0 %5547
  %5549 = vrot.lane.b32.xlu0 %v3873, 64
  %v5550 = vpop.permute.xlu0 %5549
  %5551 = vrot.lane.b32.xlu0 %v3875, 64
  %v5552 = vpop.permute.xlu0 %5551
  %5553 = vrot.lane.b32.xlu0 %v3877, 64
  %v5554 = vpop.permute.xlu0 %5553
  %5555 = vrot.lane.b32.xlu0 %v3879, 64
  %v5556 = vpop.permute.xlu0 %5555
  %5557 = vrot.lane.b32.xlu0 %v3881, 64
  %v5558 = vpop.permute.xlu0 %5557
  %5559 = vrot.lane.b32.xlu0 %v3887, 64
  %v5560 = vpop.permute.xlu0 %5559
  %5561 = vrot.lane.b32.xlu0 %v3889, 64
  %v5562 = vpop.permute.xlu0 %5561
  %5563 = vrot.lane.b32.xlu0 %v3891, 64
  %v5564 = vpop.permute.xlu0 %5563
  %5565 = vrot.lane.b32.xlu0 %v3893, 64
  %v5566 = vpop.permute.xlu0 %5565
  %5567 = vrot.lane.b32.xlu0 %v3895, 64
  %v5568 = vpop.permute.xlu0 %5567
  %5569 = vrot.lane.b32.xlu0 %v3897, 64
  %v5570 = vpop.permute.xlu0 %5569
  %5571 = vrot.lane.b32.xlu0 %v3899, 64
  %v5572 = vpop.permute.xlu0 %5571
  %5573 = vrot.lane.b32.xlu0 %v3901, 64
  %v5574 = vpop.permute.xlu0 %5573
  %5575 = vrot.lane.b32.xlu0 %v3907, 64
  %v5576 = vpop.permute.xlu0 %5575
  %5577 = vrot.lane.b32.xlu0 %v3909, 64
  %v5578 = vpop.permute.xlu0 %5577
  %5579 = vrot.lane.b32.xlu0 %v3911, 64
  %v5580 = vpop.permute.xlu0 %5579
  %5581 = vrot.lane.b32.xlu0 %v3913, 64
  %v5582 = vpop.permute.xlu0 %5581
  %5583 = vrot.lane.b32.xlu0 %v3915, 64
  %v5584 = vpop.permute.xlu0 %5583
  %5585 = vrot.lane.b32.xlu0 %v3917, 64
  %v5586 = vpop.permute.xlu0 %5585
  %5587 = vrot.lane.b32.xlu0 %v3919, 64
  %v5588 = vpop.permute.xlu0 %5587
  %5589 = vrot.lane.b32.xlu0 %v3921, 64
  %v5590 = vpop.permute.xlu0 %5589
  %5591 = vrot.lane.b32.xlu0 %v3927, 64
  %v5592 = vpop.permute.xlu0 %5591
  %5593 = vrot.lane.b32.xlu0 %v3929, 64
  %v5594 = vpop.permute.xlu0 %5593
  %5595 = vrot.lane.b32.xlu0 %v3931, 64
  %v5596 = vpop.permute.xlu0 %5595
  %5597 = vrot.lane.b32.xlu0 %v3933, 64
  %v5598 = vpop.permute.xlu0 %5597
  %5599 = vrot.lane.b32.xlu0 %v3935, 64
  %v5600 = vpop.permute.xlu0 %5599
  %5601 = vrot.lane.b32.xlu0 %v3937, 64
  %v5602 = vpop.permute.xlu0 %5601
  %5603 = vrot.lane.b32.xlu0 %v3939, 64
  %v5604 = vpop.permute.xlu0 %5603
  %5605 = vrot.lane.b32.xlu0 %v3941, 64
  %v5606 = vpop.permute.xlu0 %5605
  %5671 = vrot.lane.b32.xlu0 %v4079, 96
  %v5672 = vpop.permute.xlu0 %5671
  %5673 = vrot.lane.b32.xlu0 %v4082, 96
  %v5674 = vpop.permute.xlu0 %5673
  %5675 = vrot.lane.b32.xlu0 %v4085, 96
  %v5676 = vpop.permute.xlu0 %5675
  %5677 = vrot.lane.b32.xlu0 %v4088, 96
  %v5678 = vpop.permute.xlu0 %5677
  %5679 = vrot.lane.b32.xlu0 %v4091, 96
  %v5680 = vpop.permute.xlu0 %5679
  %5681 = vrot.lane.b32.xlu0 %v4094, 96
  %v5682 = vpop.permute.xlu0 %5681
  %5683 = vrot.lane.b32.xlu0 %v4473, 96
  %v5684 = vpop.permute.xlu0 %5683
  %5685 = vrot.lane.b32.xlu0 %v4601, 96
  %v5686 = vpop.permute.xlu0 %5685
  %5687 = vrot.lane.b32.xlu0 %v4103, 96
  %v5688 = vpop.permute.xlu0 %5687
  %5689 = vrot.lane.b32.xlu0 %v4106, 96
  %v5690 = vpop.permute.xlu0 %5689
  %5691 = vrot.lane.b32.xlu0 %v4109, 96
  %v5692 = vpop.permute.xlu0 %5691
  %5693 = vrot.lane.b32.xlu0 %v4112, 96
  %v5694 = vpop.permute.xlu0 %5693
  %5695 = vrot.lane.b32.xlu0 %v4115, 96
  %v5696 = vpop.permute.xlu0 %5695
  %5697 = vrot.lane.b32.xlu0 %v4118, 96
  %v5698 = vpop.permute.xlu0 %5697
  %5699 = vrot.lane.b32.xlu0 %v4476, 96
  %v5700 = vpop.permute.xlu0 %5699
  %5701 = vrot.lane.b32.xlu0 %v4604, 96
  %v5702 = vpop.permute.xlu0 %5701
  %5703 = vrot.lane.b32.xlu0 %v4127, 96
  %v5704 = vpop.permute.xlu0 %5703
  %5705 = vrot.lane.b32.xlu0 %v4130, 96
  %v5706 = vpop.permute.xlu0 %5705
  %5707 = vrot.lane.b32.xlu0 %v4133, 96
  %v5708 = vpop.permute.xlu0 %5707
  %5709 = vrot.lane.b32.xlu0 %v4136, 96
  %v5710 = vpop.permute.xlu0 %5709
  %5711 = vrot.lane.b32.xlu0 %v4139, 96
  %v5712 = vpop.permute.xlu0 %5711
  %5713 = vrot.lane.b32.xlu0 %v4142, 96
  %v5714 = vpop.permute.xlu0 %5713
  %5715 = vrot.lane.b32.xlu0 %v4479, 96
  %v5716 = vpop.permute.xlu0 %5715
  %5717 = vrot.lane.b32.xlu0 %v4607, 96
  %v5718 = vpop.permute.xlu0 %5717
  %5719 = vrot.lane.b32.xlu0 %v4151, 96
  %v5720 = vpop.permute.xlu0 %5719
  %5721 = vrot.lane.b32.xlu0 %v4154, 96
  %v5722 = vpop.permute.xlu0 %5721
  %5723 = vrot.lane.b32.xlu0 %v4157, 96
  %v5724 = vpop.permute.xlu0 %5723
  %5725 = vrot.lane.b32.xlu0 %v4160, 96
  %v5726 = vpop.permute.xlu0 %5725
  %5727 = vrot.lane.b32.xlu0 %v4163, 96
  %v5728 = vpop.permute.xlu0 %5727
  %5729 = vrot.lane.b32.xlu0 %v4166, 96
  %v5730 = vpop.permute.xlu0 %5729
  %5731 = vrot.lane.b32.xlu0 %v4482, 96
  %v5732 = vpop.permute.xlu0 %5731
  %5733 = vrot.lane.b32.xlu0 %v4610, 96
  %v5734 = vpop.permute.xlu0 %5733
  %5735 = vrot.lane.b32.xlu0 %v4175, 96
  %v5736 = vpop.permute.xlu0 %5735
  %5737 = vrot.lane.b32.xlu0 %v4178, 96
  %v5738 = vpop.permute.xlu0 %5737
  %5739 = vrot.lane.b32.xlu0 %v4181, 96
  %v5740 = vpop.permute.xlu0 %5739
  %5741 = vrot.lane.b32.xlu0 %v4184, 96
  %v5742 = vpop.permute.xlu0 %5741
  %5743 = vrot.lane.b32.xlu0 %v4187, 96
  %v5744 = vpop.permute.xlu0 %5743
  %5745 = vrot.lane.b32.xlu0 %v4190, 96
  %v5746 = vpop.permute.xlu0 %5745
  %5747 = vrot.lane.b32.xlu0 %v4485, 96
  %v5748 = vpop.permute.xlu0 %5747
  %5749 = vrot.lane.b32.xlu0 %v4613, 96
  %v5750 = vpop.permute.xlu0 %5749
  %5751 = vrot.lane.b32.xlu0 %v4199, 96
  %v5752 = vpop.permute.xlu0 %5751
  %5753 = vrot.lane.b32.xlu0 %v4202, 96
  %v5754 = vpop.permute.xlu0 %5753
  %5755 = vrot.lane.b32.xlu0 %v4205, 96
  %v5756 = vpop.permute.xlu0 %5755
  %5757 = vrot.lane.b32.xlu0 %v4208, 96
  %v5758 = vpop.permute.xlu0 %5757
  %5759 = vrot.lane.b32.xlu0 %v4211, 96
  %v5760 = vpop.permute.xlu0 %5759
  %5761 = vrot.lane.b32.xlu0 %v4214, 96
  %v5762 = vpop.permute.xlu0 %5761
  %5763 = vrot.lane.b32.xlu0 %v4488, 96
  %v5764 = vpop.permute.xlu0 %5763
  %5765 = vrot.lane.b32.xlu0 %v4616, 96
  %v5766 = vpop.permute.xlu0 %5765
  %5767 = vrot.lane.b32.xlu0 %v4223, 96
  %v5768 = vpop.permute.xlu0 %5767
  %5769 = vrot.lane.b32.xlu0 %v4226, 96
  %v5770 = vpop.permute.xlu0 %5769
  %5771 = vrot.lane.b32.xlu0 %v4229, 96
  %v5772 = vpop.permute.xlu0 %5771
  %5773 = vrot.lane.b32.xlu0 %v4232, 96
  %v5774 = vpop.permute.xlu0 %5773
  %5775 = vrot.lane.b32.xlu0 %v4235, 96
  %v5776 = vpop.permute.xlu0 %5775
  %5777 = vrot.lane.b32.xlu0 %v4238, 96
  %v5778 = vpop.permute.xlu0 %5777
  %5779 = vrot.lane.b32.xlu0 %v4491, 96
  %v5780 = vpop.permute.xlu0 %5779
  %5781 = vrot.lane.b32.xlu0 %v4619, 96
  %v5782 = vpop.permute.xlu0 %5781
  %5783 = vrot.lane.b32.xlu0 %v4247, 96
  %v5784 = vpop.permute.xlu0 %5783
  %5785 = vrot.lane.b32.xlu0 %v4250, 96
  %v5786 = vpop.permute.xlu0 %5785
  %5787 = vrot.lane.b32.xlu0 %v4253, 96
  %v5788 = vpop.permute.xlu0 %5787
  %5789 = vrot.lane.b32.xlu0 %v4256, 96
  %v5790 = vpop.permute.xlu0 %5789
  %5791 = vrot.lane.b32.xlu0 %v4259, 96
  %v5792 = vpop.permute.xlu0 %5791
  %5793 = vrot.lane.b32.xlu0 %v4262, 96
  %v5794 = vpop.permute.xlu0 %5793
  %5795 = vrot.lane.b32.xlu0 %v4494, 96
  %v5796 = vpop.permute.xlu0 %5795
  %5797 = vrot.lane.b32.xlu0 %v4622, 96
  %v5798 = vpop.permute.xlu0 %5797
  %v5863 = vsel %vm131, %v3783, %v4712
  %v5864 = vsel %vm131, %v3785, %v4714
  %v5865 = vsel %vm131, %v3787, %v4716
  %v5866 = vsel %vm131, %v3789, %v4718
  %v5867 = vsel %vm131, %v3791, %v4720
  %v5868 = vsel %vm131, %v3793, %v4722
  %v5869 = vsel %vm131, %v3795, %v4724
  %v5870 = vsel %vm131, %v3797, %v4726
  %v5871 = vsel %vm131, %v3803, %v4728
  %v5872 = vsel %vm131, %v3805, %v4730
  %v5873 = vsel %vm131, %v3807, %v4732
  %v5874 = vsel %vm131, %v3809, %v4734
  %v5875 = vsel %vm131, %v3811, %v4736
  %v5876 = vsel %vm131, %v3813, %v4738
  %v5877 = vsel %vm131, %v3815, %v4740
  %v5878 = vsel %vm131, %v3817, %v4742
  %v5879 = vsel %vm131, %v3823, %v4744
  %v5880 = vsel %vm131, %v3825, %v4746
  %v5881 = vsel %vm131, %v3827, %v4748
  %v5882 = vsel %vm131, %v3829, %v4750
  %v5883 = vsel %vm131, %v3831, %v4752
  %v5884 = vsel %vm131, %v3833, %v4754
  %v5885 = vsel %vm131, %v3835, %v4756
  %v5886 = vsel %vm131, %v3837, %v4758
  %v5887 = vsel %vm131, %v3843, %v4760
  %v5888 = vsel %vm131, %v3845, %v4762
  %v5889 = vsel %vm131, %v3847, %v4764
  %v5890 = vsel %vm131, %v3849, %v4766
  %v5891 = vsel %vm131, %v3851, %v4768
  %v5892 = vsel %vm131, %v3853, %v4770
  %v5893 = vsel %vm131, %v3855, %v4772
  %v5894 = vsel %vm131, %v3857, %v4774
  %v5895 = vsel %vm131, %v3863, %v4776
  %v5896 = vsel %vm131, %v3865, %v4778
  %v5897 = vsel %vm131, %v3867, %v4780
  %v5898 = vsel %vm131, %v3869, %v4782
  %v5899 = vsel %vm131, %v3871, %v4784
  %v5900 = vsel %vm131, %v3873, %v4786
  %v5901 = vsel %vm131, %v3875, %v4788
  %v5902 = vsel %vm131, %v3877, %v4790
  %v5903 = vsel %vm131, %v3883, %v4792
  %v5904 = vsel %vm131, %v3885, %v4794
  %v5905 = vsel %vm131, %v3887, %v4796
  %v5906 = vsel %vm131, %v3889, %v4798
  %v5907 = vsel %vm131, %v3891, %v4800
  %v5908 = vsel %vm131, %v3893, %v4802
  %v5909 = vsel %vm131, %v3895, %v4804
  %v5910 = vsel %vm131, %v3897, %v4806
  %v5911 = vsel %vm131, %v3903, %v4808
  %v5912 = vsel %vm131, %v3905, %v4810
  %v5913 = vsel %vm131, %v3907, %v4812
  %v5914 = vsel %vm131, %v3909, %v4814
  %v5915 = vsel %vm131, %v3911, %v4816
  %v5916 = vsel %vm131, %v3913, %v4818
  %v5917 = vsel %vm131, %v3915, %v4820
  %v5918 = vsel %vm131, %v3917, %v4822
  %v5919 = vsel %vm131, %v3923, %v4824
  %v5920 = vsel %vm131, %v3925, %v4826
  %v5921 = vsel %vm131, %v3927, %v4828
  %v5922 = vsel %vm131, %v3929, %v4830
  %v5923 = vsel %vm131, %v3931, %v4832
  %v5924 = vsel %vm131, %v3933, %v4834
  %v5925 = vsel %vm131, %v3935, %v4836
  %v5926 = vsel %vm131, %v3937, %v4838
  %vm5927 = vcmask 523264
  %v5928 = vsel %vm5927, %v5863, %v4904
  %v5929 = vsel %vm5927, %v5864, %v4906
  %v5930 = vsel %vm5927, %v5865, %v4908
  %v5931 = vsel %vm5927, %v5866, %v4910
  %v5932 = vsel %vm5927, %v5867, %v4912
  %v5933 = vsel %vm5927, %v5868, %v4914
  %v5934 = vsel %vm5927, %v5869, %v4916
  %v5935 = vsel %vm5927, %v5870, %v4918
  %v5936 = vsel %vm5927, %v5871, %v4920
  %v5937 = vsel %vm5927, %v5872, %v4922
  %v5938 = vsel %vm5927, %v5873, %v4924
  %v5939 = vsel %vm5927, %v5874, %v4926
  %v5940 = vsel %vm5927, %v5875, %v4928
  %v5941 = vsel %vm5927, %v5876, %v4930
  %v5942 = vsel %vm5927, %v5877, %v4932
  %v5943 = vsel %vm5927, %v5878, %v4934
  %v5944 = vsel %vm5927, %v5879, %v4936
  %v5945 = vsel %vm5927, %v5880, %v4938
  %v5946 = vsel %vm5927, %v5881, %v4940
  %v5947 = vsel %vm5927, %v5882, %v4942
  %v5948 = vsel %vm5927, %v5883, %v4944
  %v5949 = vsel %vm5927, %v5884, %v4946
  %v5950 = vsel %vm5927, %v5885, %v4948
  %v5951 = vsel %vm5927, %v5886, %v4950
  %v5952 = vsel %vm5927, %v5887, %v4952
  %v5953 = vsel %vm5927, %v5888, %v4954
  %v5954 = vsel %vm5927, %v5889, %v4956
  %v5955 = vsel %vm5927, %v5890, %v4958
  %v5956 = vsel %vm5927, %v5891, %v4960
  %v5957 = vsel %vm5927, %v5892, %v4962
  %v5958 = vsel %vm5927, %v5893, %v4964
  %v5959 = vsel %vm5927, %v5894, %v4966
  %v5960 = vsel %vm5927, %v5895, %v4968
  %v5961 = vsel %vm5927, %v5896, %v4970
  %v5962 = vsel %vm5927, %v5897, %v4972
  %v5963 = vsel %vm5927, %v5898, %v4974
  %v5964 = vsel %vm5927, %v5899, %v4976
  %v5965 = vsel %vm5927, %v5900, %v4978
  %v5966 = vsel %vm5927, %v5901, %v4980
  %v5967 = vsel %vm5927, %v5902, %v4982
  %v5968 = vsel %vm5927, %v5903, %v4984
  %v5969 = vsel %vm5927, %v5904, %v4986
  %v5970 = vsel %vm5927, %v5905, %v4988
  %v5971 = vsel %vm5927, %v5906, %v4990
  %v5972 = vsel %vm5927, %v5907, %v4992
  %v5973 = vsel %vm5927, %v5908, %v4994
  %v5974 = vsel %vm5927, %v5909, %v4996
  %v5975 = vsel %vm5927, %v5910, %v4998
  %v5976 = vsel %vm5927, %v5911, %v5000
  %v5977 = vsel %vm5927, %v5912, %v5002
  %v5978 = vsel %vm5927, %v5913, %v5004
  %v5979 = vsel %vm5927, %v5914, %v5006
  %v5980 = vsel %vm5927, %v5915, %v5008
  %v5981 = vsel %vm5927, %v5916, %v5010
  %v5982 = vsel %vm5927, %v5917, %v5012
  %v5983 = vsel %vm5927, %v5918, %v5014
  %v5984 = vsel %vm5927, %v5919, %v5016
  %v5985 = vsel %vm5927, %v5920, %v5018
  %v5986 = vsel %vm5927, %v5921, %v5020
  %v5987 = vsel %vm5927, %v5922, %v5022
  %v5988 = vsel %vm5927, %v5923, %v5024
  %v5989 = vsel %vm5927, %v5924, %v5026
  %v5990 = vsel %vm5927, %v5925, %v5028
  %v5991 = vsel %vm5927, %v5926, %v5030
  %vm5992 = vcmask 785408
  %v5993 = vsel %vm5992, %v5928, %v5096
  %v5994 = vsel %vm5992, %v5929, %v5098
  %v5995 = vsel %vm5992, %v5930, %v5100
  %v5996 = vsel %vm5992, %v5931, %v5102
  %v5997 = vsel %vm5992, %v5932, %v5104
  %v5998 = vsel %vm5992, %v5933, %v5106
  %v5999 = vsel %vm5992, %v5934, %v5108
  %v6000 = vsel %vm5992, %v5935, %v5110
  %v6001 = vsel %vm5992, %v5936, %v5112
  %v6002 = vsel %vm5992, %v5937, %v5114
  %v6003 = vsel %vm5992, %v5938, %v5116
  %v6004 = vsel %vm5992, %v5939, %v5118
  %v6005 = vsel %vm5992, %v5940, %v5120
  %v6006 = vsel %vm5992, %v5941, %v5122
  %v6007 = vsel %vm5992, %v5942, %v5124
  %v6008 = vsel %vm5992, %v5943, %v5126
  %v6009 = vsel %vm5992, %v5944, %v5128
  %v6010 = vsel %vm5992, %v5945, %v5130
  %v6011 = vsel %vm5992, %v5946, %v5132
  %v6012 = vsel %vm5992, %v5947, %v5134
  %v6013 = vsel %vm5992, %v5948, %v5136
  %v6014 = vsel %vm5992, %v5949, %v5138
  %v6015 = vsel %vm5992, %v5950, %v5140
  %v6016 = vsel %vm5992, %v5951, %v5142
  %v6017 = vsel %vm5992, %v5952, %v5144
  %v6018 = vsel %vm5992, %v5953, %v5146
  %v6019 = vsel %vm5992, %v5954, %v5148
  %v6020 = vsel %vm5992, %v5955, %v5150
  %v6021 = vsel %vm5992, %v5956, %v5152
  %v6022 = vsel %vm5992, %v5957, %v5154
  %v6023 = vsel %vm5992, %v5958, %v5156
  %v6024 = vsel %vm5992, %v5959, %v5158
  %v6025 = vsel %vm5992, %v5960, %v5160
  %v6026 = vsel %vm5992, %v5961, %v5162
  %v6027 = vsel %vm5992, %v5962, %v5164
  %v6028 = vsel %vm5992, %v5963, %v5166
  %v6029 = vsel %vm5992, %v5964, %v5168
  %v6030 = vsel %vm5992, %v5965, %v5170
  %v6031 = vsel %vm5992, %v5966, %v5172
  %v6032 = vsel %vm5992, %v5967, %v5174
  %v6033 = vsel %vm5992, %v5968, %v5176
  %v6034 = vsel %vm5992, %v5969, %v5178
  %v6035 = vsel %vm5992, %v5970, %v5180
  %v6036 = vsel %vm5992, %v5971, %v5182
  %v6037 = vsel %vm5992, %v5972, %v5184
  %v6038 = vsel %vm5992, %v5973, %v5186
  %v6039 = vsel %vm5992, %v5974, %v5188
  %v6040 = vsel %vm5992, %v5975, %v5190
  %v6041 = vsel %vm5992, %v5976, %v5192
  %v6042 = vsel %vm5992, %v5977, %v5194
  %v6043 = vsel %vm5992, %v5978, %v5196
  %v6044 = vsel %vm5992, %v5979, %v5198
  %v6045 = vsel %vm5992, %v5980, %v5200
  %v6046 = vsel %vm5992, %v5981, %v5202
  %v6047 = vsel %vm5992, %v5982, %v5204
  %v6048 = vsel %vm5992, %v5983, %v5206
  %v6049 = vsel %vm5992, %v5984, %v5208
  %v6050 = vsel %vm5992, %v5985, %v5210
  %v6051 = vsel %vm5992, %v5986, %v5212
  %v6052 = vsel %vm5992, %v5987, %v5214
  %v6053 = vsel %vm5992, %v5988, %v5216
  %v6054 = vsel %vm5992, %v5989, %v5218
  %v6055 = vsel %vm5992, %v5990, %v5220
  %v6056 = vsel %vm5992, %v5991, %v5222
  %v6057 = vsel %vm131, %v4076, %v5288
  %v6058 = vsel %vm131, %v4079, %v5290
  %v6059 = vsel %vm131, %v4082, %v5292
  %v6060 = vsel %vm131, %v4085, %v5294
  %v6061 = vsel %vm131, %v4088, %v5296
  %v6062 = vsel %vm131, %v4091, %v5298
  %v6063 = vsel %vm131, %v4094, %v5300
  %v6064 = vsel %vm131, %v4473, %v5302
  %v6065 = vsel %vm131, %v4100, %v5304
  %v6066 = vsel %vm131, %v4103, %v5306
  %v6067 = vsel %vm131, %v4106, %v5308
  %v6068 = vsel %vm131, %v4109, %v5310
  %v6069 = vsel %vm131, %v4112, %v5312
  %v6070 = vsel %vm131, %v4115, %v5314
  %v6071 = vsel %vm131, %v4118, %v5316
  %v6072 = vsel %vm131, %v4476, %v5318
  %v6073 = vsel %vm131, %v4124, %v5320
  %v6074 = vsel %vm131, %v4127, %v5322
  %v6075 = vsel %vm131, %v4130, %v5324
  %v6076 = vsel %vm131, %v4133, %v5326
  %v6077 = vsel %vm131, %v4136, %v5328
  %v6078 = vsel %vm131, %v4139, %v5330
  %v6079 = vsel %vm131, %v4142, %v5332
  %v6080 = vsel %vm131, %v4479, %v5334
  %v6081 = vsel %vm131, %v4148, %v5336
  %v6082 = vsel %vm131, %v4151, %v5338
  %v6083 = vsel %vm131, %v4154, %v5340
  %v6084 = vsel %vm131, %v4157, %v5342
  %v6085 = vsel %vm131, %v4160, %v5344
  %v6086 = vsel %vm131, %v4163, %v5346
  %v6087 = vsel %vm131, %v4166, %v5348
  %v6088 = vsel %vm131, %v4482, %v5350
  %v6089 = vsel %vm131, %v4172, %v5352
  %v6090 = vsel %vm131, %v4175, %v5354
  %v6091 = vsel %vm131, %v4178, %v5356
  %v6092 = vsel %vm131, %v4181, %v5358
  %v6093 = vsel %vm131, %v4184, %v5360
  %v6094 = vsel %vm131, %v4187, %v5362
  %v6095 = vsel %vm131, %v4190, %v5364
  %v6096 = vsel %vm131, %v4485, %v5366
  %v6097 = vsel %vm131, %v4196, %v5368
  %v6098 = vsel %vm131, %v4199, %v5370
  %v6099 = vsel %vm131, %v4202, %v5372
  %v6100 = vsel %vm131, %v4205, %v5374
  %v6101 = vsel %vm131, %v4208, %v5376
  %v6102 = vsel %vm131, %v4211, %v5378
  %v6103 = vsel %vm131, %v4214, %v5380
  %v6104 = vsel %vm131, %v4488, %v5382
  %v6105 = vsel %vm131, %v4220, %v5384
  %v6106 = vsel %vm131, %v4223, %v5386
  %v6107 = vsel %vm131, %v4226, %v5388
  %v6108 = vsel %vm131, %v4229, %v5390
  %v6109 = vsel %vm131, %v4232, %v5392
  %v6110 = vsel %vm131, %v4235, %v5394
  %v6111 = vsel %vm131, %v4238, %v5396
  %v6112 = vsel %vm131, %v4491, %v5398
  %v6113 = vsel %vm131, %v4244, %v5400
  %v6114 = vsel %vm131, %v4247, %v5402
  %v6115 = vsel %vm131, %v4250, %v5404
  %v6116 = vsel %vm131, %v4253, %v5406
  %v6117 = vsel %vm131, %v4256, %v5408
  %v6118 = vsel %vm131, %v4259, %v5410
  %v6119 = vsel %vm131, %v4262, %v5412
  %v6120 = vsel %vm131, %v4494, %v5414
  %v6121 = vsel %vm5927, %v6057, %v5480
  %v6122 = vsel %vm5927, %v6058, %v5482
  %v6123 = vsel %vm5927, %v6059, %v5484
  %v6124 = vsel %vm5927, %v6060, %v5486
  %v6125 = vsel %vm5927, %v6061, %v5488
  %v6126 = vsel %vm5927, %v6062, %v5490
  %v6127 = vsel %vm5927, %v6063, %v5492
  %v6128 = vsel %vm5927, %v6064, %v5494
  %v6129 = vsel %vm5927, %v6065, %v5496
  %v6130 = vsel %vm5927, %v6066, %v5498
  %v6131 = vsel %vm5927, %v6067, %v5500
  %v6132 = vsel %vm5927, %v6068, %v5502
  %v6133 = vsel %vm5927, %v6069, %v5504
  %v6134 = vsel %vm5927, %v6070, %v5506
  %v6135 = vsel %vm5927, %v6071, %v5508
  %v6136 = vsel %vm5927, %v6072, %v5510
  %v6137 = vsel %vm5927, %v6073, %v5512
  %v6138 = vsel %vm5927, %v6074, %v5514
  %v6139 = vsel %vm5927, %v6075, %v5516
  %v6140 = vsel %vm5927, %v6076, %v5518
  %v6141 = vsel %vm5927, %v6077, %v5520
  %v6142 = vsel %vm5927, %v6078, %v5522
  %v6143 = vsel %vm5927, %v6079, %v5524
  %v6144 = vsel %vm5927, %v6080, %v5526
  %v6145 = vsel %vm5927, %v6081, %v5528
  %v6146 = vsel %vm5927, %v6082, %v5530
  %v6147 = vsel %vm5927, %v6083, %v5532
  %v6148 = vsel %vm5927, %v6084, %v5534
  %v6149 = vsel %vm5927, %v6085, %v5536
  %v6150 = vsel %vm5927, %v6086, %v5538
  %v6151 = vsel %vm5927, %v6087, %v5540
  %v6152 = vsel %vm5927, %v6088, %v5542
  %v6153 = vsel %vm5927, %v6089, %v5544
  %v6154 = vsel %vm5927, %v6090, %v5546
  %v6155 = vsel %vm5927, %v6091, %v5548
  %v6156 = vsel %vm5927, %v6092, %v5550
  %v6157 = vsel %vm5927, %v6093, %v5552
  %v6158 = vsel %vm5927, %v6094, %v5554
  %v6159 = vsel %vm5927, %v6095, %v5556
  %v6160 = vsel %vm5927, %v6096, %v5558
  %v6161 = vsel %vm5927, %v6097, %v5560
  %v6162 = vsel %vm5927, %v6098, %v5562
  %v6163 = vsel %vm5927, %v6099, %v5564
  %v6164 = vsel %vm5927, %v6100, %v5566
  %v6165 = vsel %vm5927, %v6101, %v5568
  %v6166 = vsel %vm5927, %v6102, %v5570
  %v6167 = vsel %vm5927, %v6103, %v5572
  %v6168 = vsel %vm5927, %v6104, %v5574
  %v6169 = vsel %vm5927, %v6105, %v5576
  %v6170 = vsel %vm5927, %v6106, %v5578
  %v6171 = vsel %vm5927, %v6107, %v5580
  %v6172 = vsel %vm5927, %v6108, %v5582
  %v6173 = vsel %vm5927, %v6109, %v5584
  %v6174 = vsel %vm5927, %v6110, %v5586
  %v6175 = vsel %vm5927, %v6111, %v5588
  %v6176 = vsel %vm5927, %v6112, %v5590
  %v6177 = vsel %vm5927, %v6113, %v5592
  %v6178 = vsel %vm5927, %v6114, %v5594
  %v6179 = vsel %vm5927, %v6115, %v5596
  %v6180 = vsel %vm5927, %v6116, %v5598
  %v6181 = vsel %vm5927, %v6117, %v5600
  %v6182 = vsel %vm5927, %v6118, %v5602
  %v6183 = vsel %vm5927, %v6119, %v5604
  %v6184 = vsel %vm5927, %v6120, %v5606
  %v6185 = vsel %vm5992, %v6121, %v5672
  %v6186 = vsel %vm5992, %v6122, %v5674
  %v6187 = vsel %vm5992, %v6123, %v5676
  %v6188 = vsel %vm5992, %v6124, %v5678
  %v6189 = vsel %vm5992, %v6125, %v5680
  %v6190 = vsel %vm5992, %v6126, %v5682
  %v6191 = vsel %vm5992, %v6127, %v5684
  %v6192 = vsel %vm5992, %v6128, %v5686
  %v6193 = vsel %vm5992, %v6129, %v5688
  %v6194 = vsel %vm5992, %v6130, %v5690
  %v6195 = vsel %vm5992, %v6131, %v5692
  %v6196 = vsel %vm5992, %v6132, %v5694
  %v6197 = vsel %vm5992, %v6133, %v5696
  %v6198 = vsel %vm5992, %v6134, %v5698
  %v6199 = vsel %vm5992, %v6135, %v5700
  %v6200 = vsel %vm5992, %v6136, %v5702
  %v6201 = vsel %vm5992, %v6137, %v5704
  %v6202 = vsel %vm5992, %v6138, %v5706
  %v6203 = vsel %vm5992, %v6139, %v5708
  %v6204 = vsel %vm5992, %v6140, %v5710
  %v6205 = vsel %vm5992, %v6141, %v5712
  %v6206 = vsel %vm5992, %v6142, %v5714
  %v6207 = vsel %vm5992, %v6143, %v5716
  %v6208 = vsel %vm5992, %v6144, %v5718
  %v6209 = vsel %vm5992, %v6145, %v5720
  %v6210 = vsel %vm5992, %v6146, %v5722
  %v6211 = vsel %vm5992, %v6147, %v5724
  %v6212 = vsel %vm5992, %v6148, %v5726
  %v6213 = vsel %vm5992, %v6149, %v5728
  %v6214 = vsel %vm5992, %v6150, %v5730
  %v6215 = vsel %vm5992, %v6151, %v5732
  %v6216 = vsel %vm5992, %v6152, %v5734
  %v6217 = vsel %vm5992, %v6153, %v5736
  %v6218 = vsel %vm5992, %v6154, %v5738
  %v6219 = vsel %vm5992, %v6155, %v5740
  %v6220 = vsel %vm5992, %v6156, %v5742
  %v6221 = vsel %vm5992, %v6157, %v5744
  %v6222 = vsel %vm5992, %v6158, %v5746
  %v6223 = vsel %vm5992, %v6159, %v5748
  %v6224 = vsel %vm5992, %v6160, %v5750
  %v6225 = vsel %vm5992, %v6161, %v5752
  %v6226 = vsel %vm5992, %v6162, %v5754
  %v6227 = vsel %vm5992, %v6163, %v5756
  %v6228 = vsel %vm5992, %v6164, %v5758
  %v6229 = vsel %vm5992, %v6165, %v5760
  %v6230 = vsel %vm5992, %v6166, %v5762
  %v6231 = vsel %vm5992, %v6167, %v5764
  %v6232 = vsel %vm5992, %v6168, %v5766
  %v6233 = vsel %vm5992, %v6169, %v5768
  %v6234 = vsel %vm5992, %v6170, %v5770
  %v6235 = vsel %vm5992, %v6171, %v5772
  %v6236 = vsel %vm5992, %v6172, %v5774
  %v6237 = vsel %vm5992, %v6173, %v5776
  %v6238 = vsel %vm5992, %v6174, %v5778
  %v6239 = vsel %vm5992, %v6175, %v5780
  %v6240 = vsel %vm5992, %v6176, %v5782
  %v6241 = vsel %vm5992, %v6177, %v5784
  %v6242 = vsel %vm5992, %v6178, %v5786
  %v6243 = vsel %vm5992, %v6179, %v5788
  %v6244 = vsel %vm5992, %v6180, %v5790
  %v6245 = vsel %vm5992, %v6181, %v5792
  %v6246 = vsel %vm5992, %v6182, %v5794
  %v6247 = vsel %vm5992, %v6183, %v5796
  %v6248 = vsel %vm5992, %v6184, %v5798
  %v6249 = vld [vmem:[%s8] sm:$0xf]
  %v6250 = vld [vmem:[%s8 + $0x4] sm:$0xf]
  %v6251 = vld [vmem:[%s8 + $0x8] sm:$0xf]
  %v6252 = vld [vmem:[%s8 + $0xc] sm:$0xf]
  %v6253 = vld [vmem:[%s8 + $0x10] sm:$0xf]
  %v6254 = vld [vmem:[%s8 + $0x14] sm:$0xf]
  %v6255 = vld [vmem:[%s8 + $0x18] sm:$0xf]
  %v6256 = vld [vmem:[%s8 + $0x1c] sm:$0xf]
  %v6257 = vld [vmem:[%s8 + $0x20] sm:$0xf]
  %v6258 = vld [vmem:[%s8 + $0x24] sm:$0xf]
  %v6259 = vld [vmem:[%s8 + $0x28] sm:$0xf]
  %v6260 = vld [vmem:[%s8 + $0x2c] sm:$0xf]
  %v6261 = vld [vmem:[%s8 + $0x30] sm:$0xf]
  %v6262 = vld [vmem:[%s8 + $0x34] sm:$0xf]
  %v6263 = vld [vmem:[%s8 + $0x38] sm:$0xf]
  %v6264 = vld [vmem:[%s8 + $0x3c] sm:$0xf]
  %v6265 = vld [vmem:[%s8 + $0x40] sm:$0xf]
  %v6266 = vld [vmem:[%s8 + $0x44] sm:$0xf]
  %v6267 = vld [vmem:[%s8 + $0x48] sm:$0xf]
  %v6268 = vld [vmem:[%s8 + $0x4c] sm:$0xf]
  %v6269 = vld [vmem:[%s8 + $0x50] sm:$0xf]
  %v6270 = vld [vmem:[%s8 + $0x54] sm:$0xf]
  %v6271 = vld [vmem:[%s8 + $0x58] sm:$0xf]
  %v6272 = vld [vmem:[%s8 + $0x5c] sm:$0xf]
  %v6273 = vld [vmem:[%s8 + $0x60] sm:$0xf]
  %v6274 = vld [vmem:[%s8 + $0x64] sm:$0xf]
  %v6275 = vld [vmem:[%s8 + $0x68] sm:$0xf]
  %v6276 = vld [vmem:[%s8 + $0x6c] sm:$0xf]
  %v6277 = vld [vmem:[%s8 + $0x70] sm:$0xf]
  %v6278 = vld [vmem:[%s8 + $0x74] sm:$0xf]
  %v6279 = vld [vmem:[%s8 + $0x78] sm:$0xf]
  %v6280 = vld [vmem:[%s8 + $0x7c] sm:$0xf]
  %v6281 = vld [vmem:[%s8 + $0x80] sm:$0xf]
  %v6282 = vld [vmem:[%s8 + $0x84] sm:$0xf]
  %v6283 = vld [vmem:[%s8 + $0x88] sm:$0xf]
  %v6284 = vld [vmem:[%s8 + $0x8c] sm:$0xf]
  %v6285 = vpack.c.bf16 %v5994, %v5993
  %v6286 = vpack.c.bf16 %v6186, %v6185
  %v6287 = vpack.c.bf16 %v4274, %v4271
  %v6288 = vpack.c.bf16 %v5996, %v5995
  %v6289 = vpack.c.bf16 %v6188, %v6187
  %v6290 = vpack.c.bf16 %v4280, %v4277
  %v6291 = vpack.c.bf16 %v5998, %v5997
  %v6292 = vpack.c.bf16 %v6190, %v6189
  %v6293 = vpack.c.bf16 %v4286, %v4283
  %v6294 = vpack.c.bf16 %v6000, %v5999
  %v6295 = vpack.c.bf16 %v6192, %v6191
  %v6296 = vpack.c.bf16 %v4625, %v4561
  %v6297 = vpack.c.bf16 %v6002, %v6001
  %v6298 = vpack.c.bf16 %v6194, %v6193
  %v6299 = vpack.c.bf16 %v4298, %v4295
  %v6300 = vpack.c.bf16 %v6004, %v6003
  %v6301 = vpack.c.bf16 %v6196, %v6195
  %v6302 = vpack.c.bf16 %v4304, %v4301
  %v6303 = vpack.c.bf16 %v6006, %v6005
  %v6304 = vpack.c.bf16 %v6198, %v6197
  %v6305 = vpack.c.bf16 %v4310, %v4307
  %v6306 = vpack.c.bf16 %v6008, %v6007
  %v6307 = vpack.c.bf16 %v6200, %v6199
  %v6308 = vpack.c.bf16 %v4628, %v4564
  %v6309 = vpack.c.bf16 %v6010, %v6009
  %v6310 = vpack.c.bf16 %v6202, %v6201
  %v6311 = vpack.c.bf16 %v4322, %v4319
  %v6312 = vpack.c.bf16 %v6012, %v6011
  %v6313 = vpack.c.bf16 %v6204, %v6203
  %v6314 = vpack.c.bf16 %v4328, %v4325
  %v6315 = vpack.c.bf16 %v6014, %v6013
  %v6316 = vpack.c.bf16 %v6206, %v6205
  %v6317 = vpack.c.bf16 %v4334, %v4331
  %v6318 = vpack.c.bf16 %v6016, %v6015
  %v6319 = vpack.c.bf16 %v6208, %v6207
  %v6320 = vpack.c.bf16 %v4631, %v4567
  %v6321 = vpack.c.bf16 %v6018, %v6017
  %v6322 = vpack.c.bf16 %v6210, %v6209
  %v6323 = vpack.c.bf16 %v4346, %v4343
  %v6324 = vpack.c.bf16 %v6020, %v6019
  %v6325 = vpack.c.bf16 %v6212, %v6211
  %v6326 = vpack.c.bf16 %v4352, %v4349
  %v6327 = vpack.c.bf16 %v6022, %v6021
  %v6328 = vpack.c.bf16 %v6214, %v6213
  %v6329 = vpack.c.bf16 %v4358, %v4355
  %v6330 = vpack.c.bf16 %v6024, %v6023
  %v6331 = vpack.c.bf16 %v6216, %v6215
  %v6332 = vpack.c.bf16 %v4634, %v4570
  %v6333 = vpack.c.bf16 %v6026, %v6025
  %v6334 = vpack.c.bf16 %v6218, %v6217
  %v6335 = vpack.c.bf16 %v4370, %v4367
  %v6336 = vpack.c.bf16 %v6028, %v6027
  %v6337 = vpack.c.bf16 %v6220, %v6219
  %v6338 = vpack.c.bf16 %v4376, %v4373
  %v6339 = vpack.c.bf16 %v6030, %v6029
  %v6340 = vpack.c.bf16 %v6222, %v6221
  %v6341 = vpack.c.bf16 %v4382, %v4379
  %v6342 = vpack.c.bf16 %v6032, %v6031
  %v6343 = vpack.c.bf16 %v6224, %v6223
  %v6344 = vpack.c.bf16 %v4637, %v4573
  %v6345 = vpack.c.bf16 %v6034, %v6033
  %v6346 = vpack.c.bf16 %v6226, %v6225
  %v6347 = vpack.c.bf16 %v4394, %v4391
  %v6348 = vpack.c.bf16 %v6036, %v6035
  %v6349 = vpack.c.bf16 %v6228, %v6227
  %v6350 = vpack.c.bf16 %v4400, %v4397
  %v6351 = vpack.c.bf16 %v6038, %v6037
  %v6352 = vpack.c.bf16 %v6230, %v6229
  %v6353 = vpack.c.bf16 %v4406, %v4403
  %v6354 = vpack.c.bf16 %v6040, %v6039
  %v6355 = vpack.c.bf16 %v6232, %v6231
  %v6356 = vpack.c.bf16 %v4640, %v4576
  %v6357 = vpack.c.bf16 %v6042, %v6041
  %v6358 = vpack.c.bf16 %v6234, %v6233
  %v6359 = vpack.c.bf16 %v4418, %v4415
  %v6360 = vpack.c.bf16 %v6044, %v6043
  %v6361 = vpack.c.bf16 %v6236, %v6235
  %v6362 = vpack.c.bf16 %v4424, %v4421
  %v6363 = vpack.c.bf16 %v6046, %v6045
  %v6364 = vpack.c.bf16 %v6238, %v6237
  %v6365 = vpack.c.bf16 %v4430, %v4427
  %v6366 = vpack.c.bf16 %v6048, %v6047
  %v6367 = vpack.c.bf16 %v6240, %v6239
  %v6368 = vpack.c.bf16 %v4643, %v4579
  %v6369 = vpack.c.bf16 %v6050, %v6049
  %v6370 = vpack.c.bf16 %v6242, %v6241
  %v6371 = vpack.c.bf16 %v4442, %v4439
  %v6372 = vpack.c.bf16 %v6052, %v6051
  %v6373 = vpack.c.bf16 %v6244, %v6243
  %v6374 = vpack.c.bf16 %v4448, %v4445
  %v6375 = vpack.c.bf16 %v6054, %v6053
  %v6376 = vpack.c.bf16 %v6246, %v6245
  %v6377 = vpack.c.bf16 %v4454, %v4451
  %v6378 = vpack.c.bf16 %v6056, %v6055
  %v6379 = vpack.c.bf16 %v6248, %v6247
  %v6380 = vpack.c.bf16 %v4646, %v4582
  %v6381 = vld [vmem:[%s9] sm:$0x1]
  %v6383 = vlaneseq
  %v6384 = vshrl.u32 %v6383, 7
  %v6385 = vsub.s32 0, %v6384
  %v6386 = vrot.slane %v6381, %v6385
  %v6424 = vunpack.c.l.b16 %v6249
  %v6425 = vunpack.c.l.b16 %v6250
  %v6426 = vunpack.c.l.b16 %v6251
  %v6427 = vunpack.c.l.b16 %v6252
  %v6428 = vunpack.c.l.b16 %v6253
  %v6429 = vunpack.c.l.b16 %v6254
  %v6430 = vunpack.c.l.b16 %v6255
  %v6431 = vunpack.c.l.b16 %v6256
  %v6432 = vunpack.c.l.b16 %v6257
  %v6433 = vunpack.c.l.b16 %v6258
  %v6434 = vunpack.c.l.b16 %v6259
  %v6435 = vunpack.c.l.b16 %v6260
  %v6436 = vunpack.c.l.b16 %v6261
  %v6437 = vunpack.c.l.b16 %v6262
  %v6438 = vunpack.c.l.b16 %v6263
  %v6439 = vunpack.c.l.b16 %v6264
  %v6440 = vunpack.c.l.b16 %v6265
  %v6441 = vunpack.c.l.b16 %v6266
  %v6442 = vunpack.c.l.b16 %v6267
  %v6443 = vunpack.c.l.b16 %v6268
  %v6444 = vunpack.c.l.b16 %v6269
  %v6445 = vunpack.c.l.b16 %v6270
  %v6446 = vunpack.c.l.b16 %v6271
  %v6447 = vunpack.c.l.b16 %v6272
  %v6448 = vunpack.c.l.b16 %v6273
  %v6449 = vunpack.c.l.b16 %v6274
  %v6450 = vunpack.c.l.b16 %v6275
  %v6451 = vunpack.c.l.b16 %v6276
  %v6452 = vunpack.c.l.b16 %v6277
  %v6453 = vunpack.c.l.b16 %v6278
  %v6454 = vunpack.c.l.b16 %v6279
  %v6455 = vunpack.c.l.b16 %v6280
  %v6456 = vunpack.c.l.b16 %v6281
  %v6457 = vunpack.c.l.b16 %v6282
  %v6458 = vunpack.c.l.b16 %v6283
  %v6459 = vunpack.c.l.b16 %v6284
  %v6460 = vpack.c.b16 %v6425, %v6424
  %v6461 = vpack.c.b16 %v6427, %v6426
  %v6462 = vpack.c.b16 %v6429, %v6428
  %v6463 = vpack.c.b16 %v6431, %v6430
  %v6464 = vpack.c.b16 %v6433, %v6432
  %v6465 = vpack.c.b16 %v6435, %v6434
  %v6466 = vpack.c.b16 %v6437, %v6436
  %v6467 = vpack.c.b16 %v6439, %v6438
  %v6468 = vpack.c.b16 %v6441, %v6440
  %v6469 = vpack.c.b16 %v6443, %v6442
  %v6470 = vpack.c.b16 %v6445, %v6444
  %v6471 = vpack.c.b16 %v6447, %v6446
  %v6472 = vpack.c.b16 %v6449, %v6448
  %v6473 = vpack.c.b16 %v6451, %v6450
  %v6474 = vpack.c.b16 %v6453, %v6452
  %v6475 = vpack.c.b16 %v6455, %v6454
  %v6476 = vpack.c.b16 %v6457, %v6456
  %v6477 = vpack.c.b16 %v6459, %v6458
  %v6497 = vsel %vm131, %v6287, 0
  %v6500 = vsel %vm131, %v6290, 0
  %v6503 = vsel %vm131, %v6293, 0
  %v6506 = vsel %vm131, %v6296, 0
  %v6509 = vsel %vm131, %v6299, 0
  %v6512 = vsel %vm131, %v6302, 0
  %v6515 = vsel %vm131, %v6305, 0
  %v6518 = vsel %vm131, %v6308, 0
  %v6521 = vsel %vm131, %v6311, 0
  %v6524 = vsel %vm131, %v6314, 0
  %v6527 = vsel %vm131, %v6317, 0
  %v6530 = vsel %vm131, %v6320, 0
  %v6533 = vsel %vm131, %v6323, 0
  %v6536 = vsel %vm131, %v6326, 0
  %v6539 = vsel %vm131, %v6329, 0
  %v6542 = vsel %vm131, %v6332, 0
  %v6545 = vsel %vm131, %v6335, 0
  %v6548 = vsel %vm131, %v6338, 0
  %v6551 = vsel %vm131, %v6341, 0
  %v6554 = vsel %vm131, %v6344, 0
  %v6557 = vsel %vm131, %v6347, 0
  %v6560 = vsel %vm131, %v6350, 0
  %v6563 = vsel %vm131, %v6353, 0
  %v6566 = vsel %vm131, %v6356, 0
  %v6569 = vsel %vm131, %v6359, 0
  %v6572 = vsel %vm131, %v6362, 0
  %v6575 = vsel %vm131, %v6365, 0
  %v6578 = vsel %vm131, %v6368, 0
  %v6581 = vsel %vm131, %v6371, 0
  %v6584 = vsel %vm131, %v6374, 0
  %v6587 = vsel %vm131, %v6377, 0
  %v6590 = vsel %vm131, %v6380, 0
  %6592 = vmatprep.subr.bf16.mxu0 0
  %6593 = vmatpush1.bf16.msra.mxu0 %v6460
  %6594 = vmatprep.subr.bf16.mxu0 0
  %6595 = vmatpush1.bf16.msra.mxu0 %v6461
  %6596 = vmatprep.subr.bf16.mxu0 0
  %6597 = vmatpush1.bf16.msra.mxu0 %v6462
  %6598 = vmatprep.subr.bf16.mxu0 0
  %6599 = vmatpush1.bf16.msra.mxu0 %v6463
  %6600 = vmatprep.subr.bf16.mxu0 0
  %6601 = vmatpush1.bf16.msra.mxu0 %v6464
  %6602 = vmatprep.subr.bf16.mxu0 0
  %6603 = vmatpush1.bf16.msra.mxu0 %v6465
  %6604 = vmatprep.subr.bf16.mxu0 0
  %6605 = vmatpush1.bf16.msra.mxu0 %v6466
  %6606 = vmatprep.subr.bf16.mxu0 0
  %6607 = vmatpush1.bf16.msra.mxu0 %v6467
  %6608 = vmatprep.subr.bf16.mxu0 0
  %6609 = vmatpush1.bf16.msra.mxu0 %v6468
  %6610 = vmatprep.subr.bf16.mxu0 0
  %6611 = vmatpush1.bf16.msra.mxu0 %v6469
  %6612 = vmatprep.subr.bf16.mxu0 0
  %6613 = vmatpush1.bf16.msra.mxu0 %v6470
  %6614 = vmatprep.subr.bf16.mxu0 0
  %6615 = vmatpush1.bf16.msra.mxu0 %v6471
  %6616 = vmatprep.subr.bf16.mxu0 0
  %6617 = vmatpush1.bf16.msra.mxu0 %v6472
  %6618 = vmatprep.subr.bf16.mxu0 0
  %6619 = vmatpush1.bf16.msra.mxu0 %v6473
  %6620 = vmatprep.subr.bf16.mxu0 0
  %6621 = vmatpush1.bf16.msra.mxu0 %v6474
  %6622 = vmatprep.subr.bf16.mxu0 0
  %6623 = vmatpush1.bf16.msra.mxu0 %v6475
  %6624 = vmatprep.mubr.bf16.mxu0 %v6286
  %6625 = vmatmul.mubr.bf16.gmra.mrb[0].mxu0 %v6285
  %v6626 = vpop.f32.mrb[0].mxu0
  %v6627 = vadd.f32 %v6386, %v6626
  %v6628 = vpop.f32.mrb[0].mxu0
  %v6629 = vpop.f32.mrb[0].mxu0
  %v6630 = vadd.f32 %v6386, %v6629
  %v6631 = vpop.f32.mrb[0].mxu0
  %6632 = vmatprep.mubr.bf16.mxu0 %v6289
  %6633 = vmatmul.mubr.bf16.gmra.mrb[0].mxu0 %v6288
  %v6634 = vpop.f32.mrb[0].mxu0
  %v6635 = vadd.f32 %v6386, %v6634
  %v6636 = vpop.f32.mrb[0].mxu0
  %v6637 = vpop.f32.mrb[0].mxu0
  %v6638 = vadd.f32 %v6386, %v6637
  %v6639 = vpop.f32.mrb[0].mxu0
  %6640 = vmatprep.mubr.bf16.mxu0 %v6292
  %6641 = vmatmul.mubr.bf16.gmra.mrb[0].mxu0 %v6291
  %v6642 = vpop.f32.mrb[0].mxu0
  %v6643 = vadd.f32 %v6386, %v6642
  %v6644 = vpop.f32.mrb[0].mxu0
  %v6645 = vpop.f32.mrb[0].mxu0
  %v6646 = vadd.f32 %v6386, %v6645
  %v6647 = vpop.f32.mrb[0].mxu0
  %6648 = vmatprep.mubr.bf16.mxu0 %v6295
  %6649 = vmatmul.mubr.bf16.gmra.mrb[0].mxu0 %v6294
  %v6650 = vpop.f32.mrb[0].mxu0
  %v6651 = vadd.f32 %v6386, %v6650
  %v6652 = vpop.f32.mrb[0].mxu0
  %v6653 = vpop.f32.mrb[0].mxu0
  %v6654 = vadd.f32 %v6386, %v6653
  %v6655 = vpop.f32.mrb[0].mxu0
  %6656 = vmatprep.mubr.bf16.mxu0 %v6298
  %6657 = vmatmul.mubr.bf16.gmra.mrb[0].mxu0 %v6297
  %v6658 = vpop.f32.mrb[0].mxu0
  %v6659 = vadd.f32 %v6386, %v6658
  %v6660 = vpop.f32.mrb[0].mxu0
  %v6661 = vpop.f32.mrb[0].mxu0
  %v6662 = vadd.f32 %v6386, %v6661
  %v6663 = vpop.f32.mrb[0].mxu0
  %6664 = vmatprep.mubr.bf16.mxu0 %v6301
  %6665 = vmatmul.mubr.bf16.gmra.mrb[0].mxu0 %v6300
  %v6666 = vpop.f32.mrb[0].mxu0
  %v6667 = vadd.f32 %v6386, %v6666
  %v6668 = vpop.f32.mrb[0].mxu0
  %v6669 = vpop.f32.mrb[0].mxu0
  %v6670 = vadd.f32 %v6386, %v6669
  %v6671 = vpop.f32.mrb[0].mxu0
  %6672 = vmatprep.mubr.bf16.mxu0 %v6304
  %6673 = vmatmul.mubr.bf16.gmra.mrb[0].mxu0 %v6303
  %v6674 = vpop.f32.mrb[0].mxu0
  %v6675 = vadd.f32 %v6386, %v6674
  %v6676 = vpop.f32.mrb[0].mxu0
  %v6677 = vpop.f32.mrb[0].mxu0
  %v6678 = vadd.f32 %v6386, %v6677
  %v6679 = vpop.f32.mrb[0].mxu0
  %6680 = vmatprep.mubr.bf16.mxu0 %v6307
  %6681 = vmatmul.mubr.bf16.gmra.mrb[0].mxu0 %v6306
  %v6682 = vpop.f32.mrb[0].mxu0
  %v6683 = vadd.f32 %v6386, %v6682
  %v6684 = vpop.f32.mrb[0].mxu0
  %v6685 = vpop.f32.mrb[0].mxu0
  %v6686 = vadd.f32 %v6386, %v6685
  %v6687 = vpop.f32.mrb[0].mxu0
  %6688 = vmatprep.mubr.bf16.mxu0 %v6310
  %6689 = vmatmul.mubr.bf16.gmra.mrb[0].mxu0 %v6309
  %v6690 = vpop.f32.mrb[0].mxu0
  %v6691 = vadd.f32 %v6386, %v6690
  %v6692 = vpop.f32.mrb[0].mxu0
  %v6693 = vpop.f32.mrb[0].mxu0
  %v6694 = vadd.f32 %v6386, %v6693
  %v6695 = vpop.f32.mrb[0].mxu0
  %6696 = vmatprep.mubr.bf16.mxu0 %v6313
  %6697 = vmatmul.mubr.bf16.gmra.mrb[0].mxu0 %v6312
  %v6698 = vpop.f32.mrb[0].mxu0
  %v6699 = vadd.f32 %v6386, %v6698
  %v6700 = vpop.f32.mrb[0].mxu0
  %v6701 = vpop.f32.mrb[0].mxu0
  %v6702 = vadd.f32 %v6386, %v6701
  %v6703 = vpop.f32.mrb[0].mxu0
  %6704 = vmatprep.mubr.bf16.mxu0 %v6316
  %6705 = vmatmul.mubr.bf16.gmra.mrb[0].mxu0 %v6315
  %v6706 = vpop.f32.mrb[0].mxu0
  %v6707 = vadd.f32 %v6386, %v6706
  %v6708 = vpop.f32.mrb[0].mxu0
  %v6709 = vpop.f32.mrb[0].mxu0
  %v6710 = vadd.f32 %v6386, %v6709
  %v6711 = vpop.f32.mrb[0].mxu0
  %6712 = vmatprep.mubr.bf16.mxu0 %v6319
  %6713 = vmatmul.mubr.bf16.gmra.mrb[0].mxu0 %v6318
  %v6714 = vpop.f32.mrb[0].mxu0
  %v6715 = vadd.f32 %v6386, %v6714
  %v6716 = vpop.f32.mrb[0].mxu0
  %v6717 = vpop.f32.mrb[0].mxu0
  %v6718 = vadd.f32 %v6386, %v6717
  %v6719 = vpop.f32.mrb[0].mxu0
  %6720 = vmatprep.mubr.bf16.mxu0 %v6322
  %6721 = vmatmul.mubr.bf16.gmra.mrb[0].mxu0 %v6321
  %v6722 = vpop.f32.mrb[0].mxu0
  %v6723 = vadd.f32 %v6386, %v6722
  %v6724 = vpop.f32.mrb[0].mxu0
  %v6725 = vpop.f32.mrb[0].mxu0
  %v6726 = vadd.f32 %v6386, %v6725
  %v6727 = vpop.f32.mrb[0].mxu0
  %6728 = vmatprep.mubr.bf16.mxu0 %v6325
  %6729 = vmatmul.mubr.bf16.gmra.mrb[0].mxu0 %v6324
  %v6730 = vpop.f32.mrb[0].mxu0
  %v6731 = vadd.f32 %v6386, %v6730
  %v6732 = vpop.f32.mrb[0].mxu0
  %v6733 = vpop.f32.mrb[0].mxu0
  %v6734 = vadd.f32 %v6386, %v6733
  %v6735 = vpop.f32.mrb[0].mxu0
  %6736 = vmatprep.mubr.bf16.mxu0 %v6328
  %6737 = vmatmul.mubr.bf16.gmra.mrb[0].mxu0 %v6327
  %v6738 = vpop.f32.mrb[0].mxu0
  %v6739 = vadd.f32 %v6386, %v6738
  %v6740 = vpop.f32.mrb[0].mxu0
  %v6741 = vpop.f32.mrb[0].mxu0
  %v6742 = vadd.f32 %v6386, %v6741
  %v6743 = vpop.f32.mrb[0].mxu0
  %6744 = vmatprep.mubr.bf16.mxu0 %v6331
  %6745 = vmatmul.mubr.bf16.gmra.mrb[0].mxu0 %v6330
  %v6746 = vpop.f32.mrb[0].mxu0
  %v6747 = vadd.f32 %v6386, %v6746
  %v6748 = vpop.f32.mrb[0].mxu0
  %v6749 = vpop.f32.mrb[0].mxu0
  %v6750 = vadd.f32 %v6386, %v6749
  %v6751 = vpop.f32.mrb[0].mxu0
  %6752 = vmatprep.mubr.bf16.mxu0 %v6334
  %6753 = vmatmul.mubr.bf16.gmra.mrb[0].mxu0 %v6333
  %v6754 = vpop.f32.mrb[0].mxu0
  %v6755 = vadd.f32 %v6386, %v6754
  %v6756 = vpop.f32.mrb[0].mxu0
  %v6757 = vpop.f32.mrb[0].mxu0
  %v6758 = vadd.f32 %v6386, %v6757
  %v6759 = vpop.f32.mrb[0].mxu0
  %6760 = vmatprep.mubr.bf16.mxu0 %v6337
  %6761 = vmatmul.mubr.bf16.gmra.mrb[0].mxu0 %v6336
  %v6762 = vpop.f32.mrb[0].mxu0
  %v6763 = vadd.f32 %v6386, %v6762
  %v6764 = vpop.f32.mrb[0].mxu0
  %v6765 = vpop.f32.mrb[0].mxu0
  %v6766 = vadd.f32 %v6386, %v6765
  %v6767 = vpop.f32.mrb[0].mxu0
  %6768 = vmatprep.mubr.bf16.mxu0 %v6340
  %6769 = vmatmul.mubr.bf16.gmra.mrb[0].mxu0 %v6339
  %v6770 = vpop.f32.mrb[0].mxu0
  %v6771 = vadd.f32 %v6386, %v6770
  %v6772 = vpop.f32.mrb[0].mxu0
  %v6773 = vpop.f32.mrb[0].mxu0
  %v6774 = vadd.f32 %v6386, %v6773
  %v6775 = vpop.f32.mrb[0].mxu0
  %6776 = vmatprep.mubr.bf16.mxu0 %v6343
  %6777 = vmatmul.mubr.bf16.gmra.mrb[0].mxu0 %v6342
  %v6778 = vpop.f32.mrb[0].mxu0
  %v6779 = vadd.f32 %v6386, %v6778
  %v6780 = vpop.f32.mrb[0].mxu0
  %v6781 = vpop.f32.mrb[0].mxu0
  %v6782 = vadd.f32 %v6386, %v6781
  %v6783 = vpop.f32.mrb[0].mxu0
  %6784 = vmatprep.mubr.bf16.mxu0 %v6346
  %6785 = vmatmul.mubr.bf16.gmra.mrb[0].mxu0 %v6345
  %v6786 = vpop.f32.mrb[0].mxu0
  %v6787 = vadd.f32 %v6386, %v6786
  %v6788 = vpop.f32.mrb[0].mxu0
  %v6789 = vpop.f32.mrb[0].mxu0
  %v6790 = vadd.f32 %v6386, %v6789
  %v6791 = vpop.f32.mrb[0].mxu0
  %6792 = vmatprep.mubr.bf16.mxu0 %v6349
  %6793 = vmatmul.mubr.bf16.gmra.mrb[0].mxu0 %v6348
  %v6794 = vpop.f32.mrb[0].mxu0
  %v6795 = vadd.f32 %v6386, %v6794
  %v6796 = vpop.f32.mrb[0].mxu0
  %v6797 = vpop.f32.mrb[0].mxu0
  %v6798 = vadd.f32 %v6386, %v6797
  %v6799 = vpop.f32.mrb[0].mxu0
  %6800 = vmatprep.mubr.bf16.mxu0 %v6352
  %6801 = vmatmul.mubr.bf16.gmra.mrb[0].mxu0 %v6351
  %v6802 = vpop.f32.mrb[0].mxu0
  %v6803 = vadd.f32 %v6386, %v6802
  %v6804 = vpop.f32.mrb[0].mxu0
  %v6805 = vpop.f32.mrb[0].mxu0
  %v6806 = vadd.f32 %v6386, %v6805
  %v6807 = vpop.f32.mrb[0].mxu0
  %6808 = vmatprep.mubr.bf16.mxu0 %v6355
  %6809 = vmatmul.mubr.bf16.gmra.mrb[0].mxu0 %v6354
  %v6810 = vpop.f32.mrb[0].mxu0
  %v6811 = vadd.f32 %v6386, %v6810
  %v6812 = vpop.f32.mrb[0].mxu0
  %v6813 = vpop.f32.mrb[0].mxu0
  %v6814 = vadd.f32 %v6386, %v6813
  %v6815 = vpop.f32.mrb[0].mxu0
  %6816 = vmatprep.mubr.bf16.mxu0 %v6358
  %6817 = vmatmul.mubr.bf16.gmra.mrb[0].mxu0 %v6357
  %v6818 = vpop.f32.mrb[0].mxu0
  %v6819 = vadd.f32 %v6386, %v6818
  %v6820 = vpop.f32.mrb[0].mxu0
  %v6821 = vpop.f32.mrb[0].mxu0
  %v6822 = vadd.f32 %v6386, %v6821
  %v6823 = vpop.f32.mrb[0].mxu0
  %6824 = vmatprep.mubr.bf16.mxu0 %v6361
  %6825 = vmatmul.mubr.bf16.gmra.mrb[0].mxu0 %v6360
  %v6826 = vpop.f32.mrb[0].mxu0
  %v6827 = vadd.f32 %v6386, %v6826
  %v6828 = vpop.f32.mrb[0].mxu0
  %v6829 = vpop.f32.mrb[0].mxu0
  %v6830 = vadd.f32 %v6386, %v6829
  %v6831 = vpop.f32.mrb[0].mxu0
  %6832 = vmatprep.mubr.bf16.mxu0 %v6364
  %6833 = vmatmul.mubr.bf16.gmra.mrb[0].mxu0 %v6363
  %v6834 = vpop.f32.mrb[0].mxu0
  %v6835 = vadd.f32 %v6386, %v6834
  %v6836 = vpop.f32.mrb[0].mxu0
  %v6837 = vpop.f32.mrb[0].mxu0
  %v6838 = vadd.f32 %v6386, %v6837
  %v6839 = vpop.f32.mrb[0].mxu0
  %6840 = vmatprep.mubr.bf16.mxu0 %v6367
  %6841 = vmatmul.mubr.bf16.gmra.mrb[0].mxu0 %v6366
  %v6842 = vpop.f32.mrb[0].mxu0
  %v6843 = vadd.f32 %v6386, %v6842
  %v6844 = vpop.f32.mrb[0].mxu0
  %v6845 = vpop.f32.mrb[0].mxu0
  %v6846 = vadd.f32 %v6386, %v6845
  %v6847 = vpop.f32.mrb[0].mxu0
  %6848 = vmatprep.mubr.bf16.mxu0 %v6370
  %6849 = vmatmul.mubr.bf16.gmra.mrb[0].mxu0 %v6369
  %v6850 = vpop.f32.mrb[0].mxu0
  %v6851 = vadd.f32 %v6386, %v6850
  %v6852 = vpop.f32.mrb[0].mxu0
  %v6853 = vpop.f32.mrb[0].mxu0
  %v6854 = vadd.f32 %v6386, %v6853
  %v6855 = vpop.f32.mrb[0].mxu0
  %6856 = vmatprep.mubr.bf16.mxu0 %v6373
  %6857 = vmatmul.mubr.bf16.gmra.mrb[0].mxu0 %v6372
  %v6858 = vpop.f32.mrb[0].mxu0
  %v6859 = vadd.f32 %v6386, %v6858
  %v6860 = vpop.f32.mrb[0].mxu0
  %v6861 = vpop.f32.mrb[0].mxu0
  %v6862 = vadd.f32 %v6386, %v6861
  %v6863 = vpop.f32.mrb[0].mxu0
  %6864 = vmatprep.mubr.bf16.mxu0 %v6376
  %6865 = vmatmul.mubr.bf16.gmra.mrb[0].mxu0 %v6375
  %v6866 = vpop.f32.mrb[0].mxu0
  %v6867 = vadd.f32 %v6386, %v6866
  %v6868 = vpop.f32.mrb[0].mxu0
  %v6869 = vpop.f32.mrb[0].mxu0
  %v6870 = vadd.f32 %v6386, %v6869
  %v6871 = vpop.f32.mrb[0].mxu0
  %6872 = vmatprep.mubr.bf16.mxu0 %v6379
  %6873 = vmatmul.mubr.bf16.gmra.mrb[0].mxu0 %v6378
  %v6874 = vpop.f32.mrb[0].mxu0
  %v6875 = vadd.f32 %v6386, %v6874
  %v6876 = vpop.f32.mrb[0].mxu0
  %v6877 = vpop.f32.mrb[0].mxu0
  %v6878 = vadd.f32 %v6386, %v6877
  %v6879 = vpop.f32.mrb[0].mxu0
  %6880 = vdwg.mxu0
  %6881 = vmatprep.subr.bf16.mxu0 0
  %6882 = vmatpush1.bf16.msra.mxu0 %v6476
  %6883 = vmatprep.subr.bf16.mxu0 0
  %6884 = vmatpush1.bf16.msra.mxu0 %v6477
  %6885 = vmatprep.subr.bf16.mxu0 0
  %6886 = vmatpush1.bf16.msra.mxu0 0
  %6887 = vmatprep.subr.bf16.mxu0 0
  %6888 = vmatpush1.bf16.msra.mxu0 0
  %6889 = vmatprep.subr.bf16.mxu0 0
  %6890 = vmatpush1.bf16.msra.mxu0 0
  %6891 = vmatprep.subr.bf16.mxu0 0
  %6892 = vmatpush1.bf16.msra.mxu0 0
  %6893 = vmatprep.subr.bf16.mxu0 0
  %6894 = vmatpush1.bf16.msra.mxu0 0
  %6895 = vmatprep.subr.bf16.mxu0 0
  %6896 = vmatpush1.bf16.msra.mxu0 0
  %6897 = vmatprep.subr.bf16.mxu0 0
  %6898 = vmatpush1.bf16.msra.mxu0 0
  %6899 = vmatprep.subr.bf16.mxu0 0
  %6900 = vmatpush1.bf16.msra.mxu0 0
  %6901 = vmatprep.subr.bf16.mxu0 0
  %6902 = vmatpush1.bf16.msra.mxu0 0
  %6903 = vmatprep.subr.bf16.mxu0 0
  %6904 = vmatpush1.bf16.msra.mxu0 0
  %6905 = vmatprep.subr.bf16.mxu0 0
  %6906 = vmatpush1.bf16.msra.mxu0 0
  %6907 = vmatprep.subr.bf16.mxu0 0
  %6908 = vmatpush1.bf16.msra.mxu0 0
  %6909 = vmatprep.subr.bf16.mxu0 0
  %6910 = vmatpush1.bf16.msra.mxu0 0
  %6911 = vmatprep.subr.bf16.mxu0 0
  %6912 = vmatpush1.bf16.msra.mxu0 0
  %6913 = vmatprep.mubr.bf16.mxu0 0
  %6914 = vmatmul.mubr.bf16.gmra.mrb[0].mxu0 %v6497
  %v6915 = vpop.f32.mrb[0].mxu0
  %v6916 = vadd.f32 %v6627, %v6915
  %v6917 = vpop.f32.mrb[0].mxu0
  %v6918 = vpop.f32.mrb[0].mxu0
  %v6919 = vadd.f32 %v6630, %v6918
  %v6920 = vpop.f32.mrb[0].mxu0
  %6921 = vmatprep.mubr.bf16.mxu0 0
  %6922 = vmatmul.mubr.bf16.gmra.mrb[0].mxu0 %v6500
  %v6923 = vpop.f32.mrb[0].mxu0
  %v6924 = vadd.f32 %v6635, %v6923
  %v6925 = vpop.f32.mrb[0].mxu0
  %v6926 = vpop.f32.mrb[0].mxu0
  %v6927 = vadd.f32 %v6638, %v6926
  %v6928 = vpop.f32.mrb[0].mxu0
  %6929 = vmatprep.mubr.bf16.mxu0 0
  %6930 = vmatmul.mubr.bf16.gmra.mrb[0].mxu0 %v6503
  %v6931 = vpop.f32.mrb[0].mxu0
  %v6932 = vadd.f32 %v6643, %v6931
  %v6933 = vpop.f32.mrb[0].mxu0
  %v6934 = vpop.f32.mrb[0].mxu0
  %v6935 = vadd.f32 %v6646, %v6934
  %v6936 = vpop.f32.mrb[0].mxu0
  %6937 = vmatprep.mubr.bf16.mxu0 0
  %6938 = vmatmul.mubr.bf16.gmra.mrb[0].mxu0 %v6506
  %v6939 = vpop.f32.mrb[0].mxu0
  %v6940 = vadd.f32 %v6651, %v6939
  %v6941 = vpop.f32.mrb[0].mxu0
  %v6942 = vpop.f32.mrb[0].mxu0
  %v6943 = vadd.f32 %v6654, %v6942
  %v6944 = vpop.f32.mrb[0].mxu0
  %6945 = vmatprep.mubr.bf16.mxu0 0
  %6946 = vmatmul.mubr.bf16.gmra.mrb[0].mxu0 %v6509
  %v6947 = vpop.f32.mrb[0].mxu0
  %v6948 = vadd.f32 %v6659, %v6947
  %v6949 = vpop.f32.mrb[0].mxu0
  %v6950 = vpop.f32.mrb[0].mxu0
  %v6951 = vadd.f32 %v6662, %v6950
  %v6952 = vpop.f32.mrb[0].mxu0
  %6953 = vmatprep.mubr.bf16.mxu0 0
  %6954 = vmatmul.mubr.bf16.gmra.mrb[0].mxu0 %v6512
  %v6955 = vpop.f32.mrb[0].mxu0
  %v6956 = vadd.f32 %v6667, %v6955
  %v6957 = vpop.f32.mrb[0].mxu0
  %v6958 = vpop.f32.mrb[0].mxu0
  %v6959 = vadd.f32 %v6670, %v6958
  %v6960 = vpop.f32.mrb[0].mxu0
  %6961 = vmatprep.mubr.bf16.mxu0 0
  %6962 = vmatmul.mubr.bf16.gmra.mrb[0].mxu0 %v6515
  %v6963 = vpop.f32.mrb[0].mxu0
  %v6964 = vadd.f32 %v6675, %v6963
  %v6965 = vpop.f32.mrb[0].mxu0
  %v6966 = vpop.f32.mrb[0].mxu0
  %v6967 = vadd.f32 %v6678, %v6966
  %v6968 = vpop.f32.mrb[0].mxu0
  %6969 = vmatprep.mubr.bf16.mxu0 0
  %6970 = vmatmul.mubr.bf16.gmra.mrb[0].mxu0 %v6518
  %v6971 = vpop.f32.mrb[0].mxu0
  %v6972 = vadd.f32 %v6683, %v6971
  %v6973 = vpop.f32.mrb[0].mxu0
  %v6974 = vpop.f32.mrb[0].mxu0
  %v6975 = vadd.f32 %v6686, %v6974
  %v6976 = vpop.f32.mrb[0].mxu0
  %6977 = vmatprep.mubr.bf16.mxu0 0
  %6978 = vmatmul.mubr.bf16.gmra.mrb[0].mxu0 %v6521
  %v6979 = vpop.f32.mrb[0].mxu0
  %v6980 = vadd.f32 %v6691, %v6979
  %v6981 = vpop.f32.mrb[0].mxu0
  %v6982 = vpop.f32.mrb[0].mxu0
  %v6983 = vadd.f32 %v6694, %v6982
  %v6984 = vpop.f32.mrb[0].mxu0
  %6985 = vmatprep.mubr.bf16.mxu0 0
  %6986 = vmatmul.mubr.bf16.gmra.mrb[0].mxu0 %v6524
  %v6987 = vpop.f32.mrb[0].mxu0
  %v6988 = vadd.f32 %v6699, %v6987
  %v6989 = vpop.f32.mrb[0].mxu0
  %v6990 = vpop.f32.mrb[0].mxu0
  %v6991 = vadd.f32 %v6702, %v6990
  %v6992 = vpop.f32.mrb[0].mxu0
  %6993 = vmatprep.mubr.bf16.mxu0 0
  %6994 = vmatmul.mubr.bf16.gmra.mrb[0].mxu0 %v6527
  %v6995 = vpop.f32.mrb[0].mxu0
  %v6996 = vadd.f32 %v6707, %v6995
  %v6997 = vpop.f32.mrb[0].mxu0
  %v6998 = vpop.f32.mrb[0].mxu0
  %v6999 = vadd.f32 %v6710, %v6998
  %v7000 = vpop.f32.mrb[0].mxu0
  %7001 = vmatprep.mubr.bf16.mxu0 0
  %7002 = vmatmul.mubr.bf16.gmra.mrb[0].mxu0 %v6530
  %v7003 = vpop.f32.mrb[0].mxu0
  %v7004 = vadd.f32 %v6715, %v7003
  %v7005 = vpop.f32.mrb[0].mxu0
  %v7006 = vpop.f32.mrb[0].mxu0
  %v7007 = vadd.f32 %v6718, %v7006
  %v7008 = vpop.f32.mrb[0].mxu0
  %7009 = vmatprep.mubr.bf16.mxu0 0
  %7010 = vmatmul.mubr.bf16.gmra.mrb[0].mxu0 %v6533
  %v7011 = vpop.f32.mrb[0].mxu0
  %v7012 = vadd.f32 %v6723, %v7011
  %v7013 = vpop.f32.mrb[0].mxu0
  %v7014 = vpop.f32.mrb[0].mxu0
  %v7015 = vadd.f32 %v6726, %v7014
  %v7016 = vpop.f32.mrb[0].mxu0
  %7017 = vmatprep.mubr.bf16.mxu0 0
  %7018 = vmatmul.mubr.bf16.gmra.mrb[0].mxu0 %v6536
  %v7019 = vpop.f32.mrb[0].mxu0
  %v7020 = vadd.f32 %v6731, %v7019
  %v7021 = vpop.f32.mrb[0].mxu0
  %v7022 = vpop.f32.mrb[0].mxu0
  %v7023 = vadd.f32 %v6734, %v7022
  %v7024 = vpop.f32.mrb[0].mxu0
  %7025 = vmatprep.mubr.bf16.mxu0 0
  %7026 = vmatmul.mubr.bf16.gmra.mrb[0].mxu0 %v6539
  %v7027 = vpop.f32.mrb[0].mxu0
  %v7028 = vadd.f32 %v6739, %v7027
  %v7029 = vpop.f32.mrb[0].mxu0
  %v7030 = vpop.f32.mrb[0].mxu0
  %v7031 = vadd.f32 %v6742, %v7030
  %v7032 = vpop.f32.mrb[0].mxu0
  %7033 = vmatprep.mubr.bf16.mxu0 0
  %7034 = vmatmul.mubr.bf16.gmra.mrb[0].mxu0 %v6542
  %v7035 = vpop.f32.mrb[0].mxu0
  %v7036 = vadd.f32 %v6747, %v7035
  %v7037 = vpop.f32.mrb[0].mxu0
  %v7038 = vpop.f32.mrb[0].mxu0
  %v7039 = vadd.f32 %v6750, %v7038
  %v7040 = vpop.f32.mrb[0].mxu0
  %7041 = vmatprep.mubr.bf16.mxu0 0
  %7042 = vmatmul.mubr.bf16.gmra.mrb[0].mxu0 %v6545
  %v7043 = vpop.f32.mrb[0].mxu0
  %v7044 = vadd.f32 %v6755, %v7043
  %v7045 = vpop.f32.mrb[0].mxu0
  %v7046 = vpop.f32.mrb[0].mxu0
  %v7047 = vadd.f32 %v6758, %v7046
  %v7048 = vpop.f32.mrb[0].mxu0
  %7049 = vmatprep.mubr.bf16.mxu0 0
  %7050 = vmatmul.mubr.bf16.gmra.mrb[0].mxu0 %v6548
  %v7051 = vpop.f32.mrb[0].mxu0
  %v7052 = vadd.f32 %v6763, %v7051
  %v7053 = vpop.f32.mrb[0].mxu0
  %v7054 = vpop.f32.mrb[0].mxu0
  %v7055 = vadd.f32 %v6766, %v7054
  %v7056 = vpop.f32.mrb[0].mxu0
  %7057 = vmatprep.mubr.bf16.mxu0 0
  %7058 = vmatmul.mubr.bf16.gmra.mrb[0].mxu0 %v6551
  %v7059 = vpop.f32.mrb[0].mxu0
  %v7060 = vadd.f32 %v6771, %v7059
  %v7061 = vpop.f32.mrb[0].mxu0
  %v7062 = vpop.f32.mrb[0].mxu0
  %v7063 = vadd.f32 %v6774, %v7062
  %v7064 = vpop.f32.mrb[0].mxu0
  %7065 = vmatprep.mubr.bf16.mxu0 0
  %7066 = vmatmul.mubr.bf16.gmra.mrb[0].mxu0 %v6554
  %v7067 = vpop.f32.mrb[0].mxu0
  %v7068 = vadd.f32 %v6779, %v7067
  %v7069 = vpop.f32.mrb[0].mxu0
  %v7070 = vpop.f32.mrb[0].mxu0
  %v7071 = vadd.f32 %v6782, %v7070
  %v7072 = vpop.f32.mrb[0].mxu0
  %7073 = vmatprep.mubr.bf16.mxu0 0
  %7074 = vmatmul.mubr.bf16.gmra.mrb[0].mxu0 %v6557
  %v7075 = vpop.f32.mrb[0].mxu0
  %v7076 = vadd.f32 %v6787, %v7075
  %v7077 = vpop.f32.mrb[0].mxu0
  %v7078 = vpop.f32.mrb[0].mxu0
  %v7079 = vadd.f32 %v6790, %v7078
  %v7080 = vpop.f32.mrb[0].mxu0
  %7081 = vmatprep.mubr.bf16.mxu0 0
  %7082 = vmatmul.mubr.bf16.gmra.mrb[0].mxu0 %v6560
  %v7083 = vpop.f32.mrb[0].mxu0
  %v7084 = vadd.f32 %v6795, %v7083
  %v7085 = vpop.f32.mrb[0].mxu0
  %v7086 = vpop.f32.mrb[0].mxu0
  %v7087 = vadd.f32 %v6798, %v7086
  %v7088 = vpop.f32.mrb[0].mxu0
  %7089 = vmatprep.mubr.bf16.mxu0 0
  %7090 = vmatmul.mubr.bf16.gmra.mrb[0].mxu0 %v6563
  %v7091 = vpop.f32.mrb[0].mxu0
  %v7092 = vadd.f32 %v6803, %v7091
  %v7093 = vpop.f32.mrb[0].mxu0
  %v7094 = vpop.f32.mrb[0].mxu0
  %v7095 = vadd.f32 %v6806, %v7094
  %v7096 = vpop.f32.mrb[0].mxu0
  %7097 = vmatprep.mubr.bf16.mxu0 0
  %7098 = vmatmul.mubr.bf16.gmra.mrb[0].mxu0 %v6566
  %v7099 = vpop.f32.mrb[0].mxu0
  %v7100 = vadd.f32 %v6811, %v7099
  %v7101 = vpop.f32.mrb[0].mxu0
  %v7102 = vpop.f32.mrb[0].mxu0
  %v7103 = vadd.f32 %v6814, %v7102
  %v7104 = vpop.f32.mrb[0].mxu0
  %7105 = vmatprep.mubr.bf16.mxu0 0
  %7106 = vmatmul.mubr.bf16.gmra.mrb[0].mxu0 %v6569
  %v7107 = vpop.f32.mrb[0].mxu0
  %v7108 = vadd.f32 %v6819, %v7107
  %v7109 = vpop.f32.mrb[0].mxu0
  %v7110 = vpop.f32.mrb[0].mxu0
  %v7111 = vadd.f32 %v6822, %v7110
  %v7112 = vpop.f32.mrb[0].mxu0
  %7113 = vmatprep.mubr.bf16.mxu0 0
  %7114 = vmatmul.mubr.bf16.gmra.mrb[0].mxu0 %v6572
  %v7115 = vpop.f32.mrb[0].mxu0
  %v7116 = vadd.f32 %v6827, %v7115
  %v7117 = vpop.f32.mrb[0].mxu0
  %v7118 = vpop.f32.mrb[0].mxu0
  %v7119 = vadd.f32 %v6830, %v7118
  %v7120 = vpop.f32.mrb[0].mxu0
  %7121 = vmatprep.mubr.bf16.mxu0 0
  %7122 = vmatmul.mubr.bf16.gmra.mrb[0].mxu0 %v6575
  %v7123 = vpop.f32.mrb[0].mxu0
  %v7124 = vadd.f32 %v6835, %v7123
  %v7125 = vpop.f32.mrb[0].mxu0
  %v7126 = vpop.f32.mrb[0].mxu0
  %v7127 = vadd.f32 %v6838, %v7126
  %v7128 = vpop.f32.mrb[0].mxu0
  %7129 = vmatprep.mubr.bf16.mxu0 0
  %7130 = vmatmul.mubr.bf16.gmra.mrb[0].mxu0 %v6578
  %v7131 = vpop.f32.mrb[0].mxu0
  %v7132 = vadd.f32 %v6843, %v7131
  %v7133 = vpop.f32.mrb[0].mxu0
  %v7134 = vpop.f32.mrb[0].mxu0
  %v7135 = vadd.f32 %v6846, %v7134
  %v7136 = vpop.f32.mrb[0].mxu0
  %7137 = vmatprep.mubr.bf16.mxu0 0
  %7138 = vmatmul.mubr.bf16.gmra.mrb[0].mxu0 %v6581
  %v7139 = vpop.f32.mrb[0].mxu0
  %v7140 = vadd.f32 %v6851, %v7139
  %v7141 = vpop.f32.mrb[0].mxu0
  %v7142 = vpop.f32.mrb[0].mxu0
  %v7143 = vadd.f32 %v6854, %v7142
  %v7144 = vpop.f32.mrb[0].mxu0
  %7145 = vmatprep.mubr.bf16.mxu0 0
  %7146 = vmatmul.mubr.bf16.gmra.mrb[0].mxu0 %v6584
  %v7147 = vpop.f32.mrb[0].mxu0
  %v7148 = vadd.f32 %v6859, %v7147
  %v7149 = vpop.f32.mrb[0].mxu0
  %v7150 = vpop.f32.mrb[0].mxu0
  %v7151 = vadd.f32 %v6862, %v7150
  %v7152 = vpop.f32.mrb[0].mxu0
  %7153 = vmatprep.mubr.bf16.mxu0 0
  %7154 = vmatmul.mubr.bf16.gmra.mrb[0].mxu0 %v6587
  %v7155 = vpop.f32.mrb[0].mxu0
  %v7156 = vadd.f32 %v6867, %v7155
  %v7157 = vpop.f32.mrb[0].mxu0
  %v7158 = vpop.f32.mrb[0].mxu0
  %v7159 = vadd.f32 %v6870, %v7158
  %v7160 = vpop.f32.mrb[0].mxu0
  %7161 = vmatprep.mubr.bf16.mxu0 0
  %7162 = vmatmul.mubr.bf16.gmra.mrb[0].mxu0 %v6590
  %v7163 = vpop.f32.mrb[0].mxu0
  %v7164 = vadd.f32 %v6875, %v7163
  %v7165 = vpop.f32.mrb[0].mxu0
  %v7166 = vpop.f32.mrb[0].mxu0
  %v7167 = vadd.f32 %v6878, %v7166
  %v7168 = vpop.f32.mrb[0].mxu0
  %7169 = vdwg.mxu0
  %v7170 = vmax.f32 %v6916, 0.0
  %v7171 = vmax.f32 %v6919, 0.0
  %v7172 = vmax.f32 %v6924, 0.0
  %v7173 = vmax.f32 %v6927, 0.0
  %v7174 = vmax.f32 %v6932, 0.0
  %v7175 = vmax.f32 %v6935, 0.0
  %v7176 = vmax.f32 %v6940, 0.0
  %v7177 = vmax.f32 %v6943, 0.0
  %v7178 = vmax.f32 %v6948, 0.0
  %v7179 = vmax.f32 %v6951, 0.0
  %v7180 = vmax.f32 %v6956, 0.0
  %v7181 = vmax.f32 %v6959, 0.0
  %v7182 = vmax.f32 %v6964, 0.0
  %v7183 = vmax.f32 %v6967, 0.0
  %v7184 = vmax.f32 %v6972, 0.0
  %v7185 = vmax.f32 %v6975, 0.0
  %v7186 = vmax.f32 %v6980, 0.0
  %v7187 = vmax.f32 %v6983, 0.0
  %v7188 = vmax.f32 %v6988, 0.0
  %v7189 = vmax.f32 %v6991, 0.0
  %v7190 = vmax.f32 %v6996, 0.0
  %v7191 = vmax.f32 %v6999, 0.0
  %v7192 = vmax.f32 %v7004, 0.0
  %v7193 = vmax.f32 %v7007, 0.0
  %v7194 = vmax.f32 %v7012, 0.0
  %v7195 = vmax.f32 %v7015, 0.0
  %v7196 = vmax.f32 %v7020, 0.0
  %v7197 = vmax.f32 %v7023, 0.0
  %v7198 = vmax.f32 %v7028, 0.0
  %v7199 = vmax.f32 %v7031, 0.0
  %v7200 = vmax.f32 %v7036, 0.0
  %v7201 = vmax.f32 %v7039, 0.0
  %v7202 = vmax.f32 %v7044, 0.0
  %v7203 = vmax.f32 %v7047, 0.0
  %v7204 = vmax.f32 %v7052, 0.0
  %v7205 = vmax.f32 %v7055, 0.0
  %v7206 = vmax.f32 %v7060, 0.0
  %v7207 = vmax.f32 %v7063, 0.0
  %v7208 = vmax.f32 %v7068, 0.0
  %v7209 = vmax.f32 %v7071, 0.0
  %v7210 = vmax.f32 %v7076, 0.0
  %v7211 = vmax.f32 %v7079, 0.0
  %v7212 = vmax.f32 %v7084, 0.0
  %v7213 = vmax.f32 %v7087, 0.0
  %v7214 = vmax.f32 %v7092, 0.0
  %v7215 = vmax.f32 %v7095, 0.0
  %v7216 = vmax.f32 %v7100, 0.0
  %v7217 = vmax.f32 %v7103, 0.0
  %v7218 = vmax.f32 %v7108, 0.0
  %v7219 = vmax.f32 %v7111, 0.0
  %v7220 = vmax.f32 %v7116, 0.0
  %v7221 = vmax.f32 %v7119, 0.0
  %v7222 = vmax.f32 %v7124, 0.0
  %v7223 = vmax.f32 %v7127, 0.0
  %v7224 = vmax.f32 %v7132, 0.0
  %v7225 = vmax.f32 %v7135, 0.0
  %v7226 = vmax.f32 %v7140, 0.0
  %v7227 = vmax.f32 %v7143, 0.0
  %v7228 = vmax.f32 %v7148, 0.0
  %v7229 = vmax.f32 %v7151, 0.0
  %v7230 = vmax.f32 %v7156, 0.0
  %v7231 = vmax.f32 %v7159, 0.0
  %v7232 = vmax.f32 %v7164, 0.0
  %v7233 = vmax.f32 %v7167, 0.0
  %v7234 = vsel %vm131, %v7170, 0.0
  %v7235 = vsel %vm131, %v7171, 0.0
  %v7236 = vadd.f32 %v7234, %v7235
  %v7237 = vsel %vm131, %v7172, 0.0
  %v7238 = vadd.f32 %v7236, %v7237
  %v7239 = vsel %vm131, %v7173, 0.0
  %v7240 = vadd.f32 %v7238, %v7239
  %v7241 = vsel %vm131, %v7174, 0.0
  %v7242 = vadd.f32 %v7240, %v7241
  %v7243 = vsel %vm131, %v7175, 0.0
  %v7244 = vadd.f32 %v7242, %v7243
  %v7245 = vsel %vm131, %v7176, 0.0
  %v7246 = vadd.f32 %v7244, %v7245
  %v7247 = vsel %vm131, %v7177, 0.0
  %v7248 = vadd.f32 %v7246, %v7247
  %v7249 = vrot.slane %v7248, 4
  %v7250 = vadd.f32 %v7248, %v7249
  %v7251 = vrot.slane %v7250, 2
  %v7252 = vadd.f32 %v7250, %v7251
  %v7253 = vrot.slane %v7252, 1
  %v7254 = vadd.f32 %v7252, %v7253
  %v7255 = vsel %vm131, %v7178, 0.0
  %v7256 = vsel %vm131, %v7179, 0.0
  %v7257 = vadd.f32 %v7255, %v7256
  %v7258 = vsel %vm131, %v7180, 0.0
  %v7259 = vadd.f32 %v7257, %v7258
  %v7260 = vsel %vm131, %v7181, 0.0
  %v7261 = vadd.f32 %v7259, %v7260
  %v7262 = vsel %vm131, %v7182, 0.0
  %v7263 = vadd.f32 %v7261, %v7262
  %v7264 = vsel %vm131, %v7183, 0.0
  %v7265 = vadd.f32 %v7263, %v7264
  %v7266 = vsel %vm131, %v7184, 0.0
  %v7267 = vadd.f32 %v7265, %v7266
  %v7268 = vsel %vm131, %v7185, 0.0
  %v7269 = vadd.f32 %v7267, %v7268
  %v7270 = vrot.slane %v7269, 4
  %v7271 = vadd.f32 %v7269, %v7270
  %v7272 = vrot.slane %v7271, 2
  %v7273 = vadd.f32 %v7271, %v7272
  %v7274 = vrot.slane %v7273, 1
  %v7275 = vadd.f32 %v7273, %v7274
  %v7276 = vsel %vm131, %v7186, 0.0
  %v7277 = vsel %vm131, %v7187, 0.0
  %v7278 = vadd.f32 %v7276, %v7277
  %v7279 = vsel %vm131, %v7188, 0.0
  %v7280 = vadd.f32 %v7278, %v7279
  %v7281 = vsel %vm131, %v7189, 0.0
  %v7282 = vadd.f32 %v7280, %v7281
  %v7283 = vsel %vm131, %v7190, 0.0
  %v7284 = vadd.f32 %v7282, %v7283
  %v7285 = vsel %vm131, %v7191, 0.0
  %v7286 = vadd.f32 %v7284, %v7285
  %v7287 = vsel %vm131, %v7192, 0.0
  %v7288 = vadd.f32 %v7286, %v7287
  %v7289 = vsel %vm131, %v7193, 0.0
  %v7290 = vadd.f32 %v7288, %v7289
  %v7291 = vrot.slane %v7290, 4
  %v7292 = vadd.f32 %v7290, %v7291
  %v7293 = vrot.slane %v7292, 2
  %v7294 = vadd.f32 %v7292, %v7293
  %v7295 = vrot.slane %v7294, 1
  %v7296 = vadd.f32 %v7294, %v7295
  %v7297 = vsel %vm131, %v7194, 0.0
  %v7298 = vsel %vm131, %v7195, 0.0
  %v7299 = vadd.f32 %v7297, %v7298
  %v7300 = vsel %vm131, %v7196, 0.0
  %v7301 = vadd.f32 %v7299, %v7300
  %v7302 = vsel %vm131, %v7197, 0.0
  %v7303 = vadd.f32 %v7301, %v7302
  %v7304 = vsel %vm131, %v7198, 0.0
  %v7305 = vadd.f32 %v7303, %v7304
  %v7306 = vsel %vm131, %v7199, 0.0
  %v7307 = vadd.f32 %v7305, %v7306
  %v7308 = vsel %vm131, %v7200, 0.0
  %v7309 = vadd.f32 %v7307, %v7308
  %v7310 = vsel %vm131, %v7201, 0.0
  %v7311 = vadd.f32 %v7309, %v7310
  %v7312 = vrot.slane %v7311, 4
  %v7313 = vadd.f32 %v7311, %v7312
  %v7314 = vrot.slane %v7313, 2
  %v7315 = vadd.f32 %v7313, %v7314
  %v7316 = vrot.slane %v7315, 1
  %v7317 = vadd.f32 %v7315, %v7316
  %v7318 = vsel %vm131, %v7202, 0.0
  %v7319 = vsel %vm131, %v7203, 0.0
  %v7320 = vadd.f32 %v7318, %v7319
  %v7321 = vsel %vm131, %v7204, 0.0
  %v7322 = vadd.f32 %v7320, %v7321
  %v7323 = vsel %vm131, %v7205, 0.0
  %v7324 = vadd.f32 %v7322, %v7323
  %v7325 = vsel %vm131, %v7206, 0.0
  %v7326 = vadd.f32 %v7324, %v7325
  %v7327 = vsel %vm131, %v7207, 0.0
  %v7328 = vadd.f32 %v7326, %v7327
  %v7329 = vsel %vm131, %v7208, 0.0
  %v7330 = vadd.f32 %v7328, %v7329
  %v7331 = vsel %vm131, %v7209, 0.0
  %v7332 = vadd.f32 %v7330, %v7331
  %v7333 = vrot.slane %v7332, 4
  %v7334 = vadd.f32 %v7332, %v7333
  %v7335 = vrot.slane %v7334, 2
  %v7336 = vadd.f32 %v7334, %v7335
  %v7337 = vrot.slane %v7336, 1
  %v7338 = vadd.f32 %v7336, %v7337
  %v7339 = vsel %vm131, %v7210, 0.0
  %v7340 = vsel %vm131, %v7211, 0.0
  %v7341 = vadd.f32 %v7339, %v7340
  %v7342 = vsel %vm131, %v7212, 0.0
  %v7343 = vadd.f32 %v7341, %v7342
  %v7344 = vsel %vm131, %v7213, 0.0
  %v7345 = vadd.f32 %v7343, %v7344
  %v7346 = vsel %vm131, %v7214, 0.0
  %v7347 = vadd.f32 %v7345, %v7346
  %v7348 = vsel %vm131, %v7215, 0.0
  %v7349 = vadd.f32 %v7347, %v7348
  %v7350 = vsel %vm131, %v7216, 0.0
  %v7351 = vadd.f32 %v7349, %v7350
  %v7352 = vsel %vm131, %v7217, 0.0
  %v7353 = vadd.f32 %v7351, %v7352
  %v7354 = vrot.slane %v7353, 4
  %v7355 = vadd.f32 %v7353, %v7354
  %v7356 = vrot.slane %v7355, 2
  %v7357 = vadd.f32 %v7355, %v7356
  %v7358 = vrot.slane %v7357, 1
  %v7359 = vadd.f32 %v7357, %v7358
  %v7360 = vsel %vm131, %v7218, 0.0
  %v7361 = vsel %vm131, %v7219, 0.0
  %v7362 = vadd.f32 %v7360, %v7361
  %v7363 = vsel %vm131, %v7220, 0.0
  %v7364 = vadd.f32 %v7362, %v7363
  %v7365 = vsel %vm131, %v7221, 0.0
  %v7366 = vadd.f32 %v7364, %v7365
  %v7367 = vsel %vm131, %v7222, 0.0
  %v7368 = vadd.f32 %v7366, %v7367
  %v7369 = vsel %vm131, %v7223, 0.0
  %v7370 = vadd.f32 %v7368, %v7369
  %v7371 = vsel %vm131, %v7224, 0.0
  %v7372 = vadd.f32 %v7370, %v7371
  %v7373 = vsel %vm131, %v7225, 0.0
  %v7374 = vadd.f32 %v7372, %v7373
  %v7375 = vrot.slane %v7374, 4
  %v7376 = vadd.f32 %v7374, %v7375
  %v7377 = vrot.slane %v7376, 2
  %v7378 = vadd.f32 %v7376, %v7377
  %v7379 = vrot.slane %v7378, 1
  %v7380 = vadd.f32 %v7378, %v7379
  %v7381 = vsel %vm131, %v7226, 0.0
  %v7382 = vsel %vm131, %v7227, 0.0
  %v7383 = vadd.f32 %v7381, %v7382
  %v7384 = vsel %vm131, %v7228, 0.0
  %v7385 = vadd.f32 %v7383, %v7384
  %v7386 = vsel %vm131, %v7229, 0.0
  %v7387 = vadd.f32 %v7385, %v7386
  %v7388 = vsel %vm131, %v7230, 0.0
  %v7389 = vadd.f32 %v7387, %v7388
  %v7390 = vsel %vm131, %v7231, 0.0
  %v7391 = vadd.f32 %v7389, %v7390
  %v7392 = vsel %vm131, %v7232, 0.0
  %v7393 = vadd.f32 %v7391, %v7392
  %v7394 = vsel %vm131, %v7233, 0.0
  %v7395 = vadd.f32 %v7393, %v7394
  %v7396 = vrot.slane %v7395, 4
  %v7397 = vadd.f32 %v7395, %v7396
  %v7398 = vrot.slane %v7397, 2
  %v7399 = vadd.f32 %v7397, %v7398
  %v7400 = vrot.slane %v7399, 1
  %v7401 = vadd.f32 %v7399, %v7400
  %v7402 = vrcp.pop 64.0
  %v7403 = vmul.f32 %v7254, %v7402
  %v7404 = vmul.f32 %v7275, %v7402
  %v7405 = vmul.f32 %v7296, %v7402
  %v7406 = vmul.f32 %v7317, %v7402
  %v7407 = vmul.f32 %v7338, %v7402
  %v7408 = vmul.f32 %v7359, %v7402
  %v7409 = vmul.f32 %v7380, %v7402
  %v7410 = vmul.f32 %v7401, %v7402
  %v7411 = vld [vmem:[%s10] sm:$0xf]
  %v7412 = vld [vmem:[%s10 + $0x4] sm:$0xf]
  %v7413 = vld [vmem:[%s10 + $0x8] sm:$0xf]
  %v7414 = vld [vmem:[%s10 + $0xc] sm:$0xf]
  %v7415 = vpack.c.bf16 %v7403, %v7403
  %v7416 = vpack.c.bf16 %v7404, %v7404
  %v7417 = vpack.c.bf16 %v7405, %v7405
  %v7418 = vpack.c.bf16 %v7406, %v7406
  %v7419 = vpack.c.bf16 %v7407, %v7407
  %v7420 = vpack.c.bf16 %v7408, %v7408
  %v7421 = vpack.c.bf16 %v7409, %v7409
  %v7422 = vpack.c.bf16 %v7410, %v7410
  %v7423 = vld [vmem:[%s11] sm:$0x1]
  %v7425 = vlaneseq
  %v7426 = vshrl.u32 %v7425, 7
  %v7427 = vsub.s32 0, %v7426
  %v7428 = vrot.slane %v7423, %v7427
  %v7438 = vunpack.c.l.b16 %v7415
  %v7439 = vunpack.c.l.b16 %v7416
  %v7440 = vunpack.c.l.b16 %v7417
  %v7441 = vunpack.c.l.b16 %v7418
  %v7442 = vunpack.c.l.b16 %v7419
  %v7443 = vunpack.c.l.b16 %v7420
  %v7444 = vunpack.c.l.b16 %v7421
  %v7445 = vunpack.c.l.b16 %v7422
  %vm7446 = vcmask 1041409
  %v7447 = vsel %vm7446, %v7439, %v7438
  %vm7448 = vcmask 1042434
  %v7449 = vsel %vm7448, %v7440, %v7447
  %vm7450 = vcmask 1043459
  %v7451 = vsel %vm7450, %v7441, %v7449
  %vm7452 = vcmask 1044484
  %v7453 = vsel %vm7452, %v7442, %v7451
  %vm7454 = vcmask 1045509
  %v7455 = vsel %vm7454, %v7443, %v7453
  %vm7456 = vcmask 1046534
  %v7457 = vsel %vm7456, %v7444, %v7455
  %vm7458 = vcmask 1047559
  %v7459 = vsel %vm7458, %v7445, %v7457
  %v7460 = vpack.c.b16 %v7459, %v7459
  %v7465 = vunpack.c.l.b16 %v7411
  %v7466 = vunpack.c.l.b16 %v7412
  %v7467 = vunpack.c.l.b16 %v7413
  %v7468 = vunpack.c.l.b16 %v7414
  %v7469 = vpack.c.b16 %v7466, %v7465
  %v7470 = vpack.c.b16 %v7468, %v7467
  %v7474 = vsel %vm131, %v7460, 0
  %7476 = vmatprep.subr.bf16.mxu0 0
  %7477 = vmatpush1.bf16.msra.mxu0 %v7469
  %7478 = vmatprep.subr.bf16.mxu0 0
  %7479 = vmatpush1.bf16.msra.mxu0 %v7470
  %7480 = vmatprep.subr.bf16.mxu0 0
  %7481 = vmatpush1.bf16.msra.mxu0 0
  %7482 = vmatprep.subr.bf16.mxu0 0
  %7483 = vmatpush1.bf16.msra.mxu0 0
  %7484 = vmatprep.subr.bf16.mxu0 0
  %7485 = vmatpush1.bf16.msra.mxu0 0
  %7486 = vmatprep.subr.bf16.mxu0 0
  %7487 = vmatpush1.bf16.msra.mxu0 0
  %7488 = vmatprep.subr.bf16.mxu0 0
  %7489 = vmatpush1.bf16.msra.mxu0 0
  %7490 = vmatprep.subr.bf16.mxu0 0
  %7491 = vmatpush1.bf16.msra.mxu0 0
  %7492 = vmatprep.subr.bf16.mxu0 0
  %7493 = vmatpush1.bf16.msra.mxu0 0
  %7494 = vmatprep.subr.bf16.mxu0 0
  %7495 = vmatpush1.bf16.msra.mxu0 0
  %7496 = vmatprep.subr.bf16.mxu0 0
  %7497 = vmatpush1.bf16.msra.mxu0 0
  %7498 = vmatprep.subr.bf16.mxu0 0
  %7499 = vmatpush1.bf16.msra.mxu0 0
  %7500 = vmatprep.subr.bf16.mxu0 0
  %7501 = vmatpush1.bf16.msra.mxu0 0
  %7502 = vmatprep.subr.bf16.mxu0 0
  %7503 = vmatpush1.bf16.msra.mxu0 0
  %7504 = vmatprep.subr.bf16.mxu0 0
  %7505 = vmatpush1.bf16.msra.mxu0 0
  %7506 = vmatprep.subr.bf16.mxu0 0
  %7507 = vmatpush1.bf16.msra.mxu0 0
  %7508 = vmatprep.mubr.bf16.mxu0 0
  %7509 = vmatmul.mubr.bf16.gmra.mrb[0].mxu0 %v7474
  %v7510 = vpop.f32.mrb[0].mxu0
  %v7511 = vadd.f32 %v7428, %v7510
  %v7512 = vpop.f32.mrb[0].mxu0
  %v7513 = vpop.f32.mrb[0].mxu0
  %v7514 = vpop.f32.mrb[0].mxu0
  %7515 = vdwg.mxu0
  %7517 = vrot.lane.b32.xlu0 %v7511, 32
  %v7518 = vpop.permute.xlu0 %7517
  %v7520 = vsel %vm131, %v170, %v7518
  %7521 = vst.msk [vmem:[%s12] sm:$0xff] %vm5927, %v7520
  // Predicated region
  $region50: #{forward.3} parent=0 // pred_check
    _
  $region51: #{forward.3} parent=0 // pred_check_branch
    %7523 = sbr.rel (0) target = $region53
  $region52: #{forward.3} parent=0 // pred_region
    _
  $region53: #{forward.3} parent=0 // pred_fallthru
    _
  // Predicated region
  $region54: #{forward.3} parent=0 // pred_check
    _
  $region55: #{forward.3} parent=0 // pred_check_branch
    %7525 = sbr.rel (0) target = $region57
  $region56: #{forward.3} parent=0 // pred_region
    _
  $region57: #{forward.3} parent=0 // pred_fallthru
    _

</llo_original>
